<compile_context>
chip_gen: v7x
topology: tpu7x:2x2x1
jax: 0.10.0
libtpu: 0.0.40
codegen_flags: <defaults>
</compile_context>

<pallas_src>
import functools

import jax
import jax.numpy as jnp
from jax.experimental import pallas as pl
from jax.experimental.pallas import tpu as pltpu


def _attention_kernel(x_ref, w1_ref, b1_ref, w2_ref, b2_ref, interp_ref,
                      o_ref, *, scale):
    # ---- fc1 (bf16 MXU, f32 accumulate) + bias + ELU(alpha=1) ---------------
    h = jnp.dot(x_ref[...], w1_ref[...],
                preferred_element_type=jnp.float32) + b1_ref[...]
    # exp on the clamped value so the untaken where-branch never produces inf.
    h = jnp.where(h > 0.0, h, jnp.exp(jnp.minimum(h, 0.0)) - 1.0)
    # ---- fc2: attention logits at (A, A) resolution, flattened --------------
    a = jnp.dot(h.astype(w2_ref.dtype), w2_ref[...],
                preferred_element_type=jnp.float32) + b2_ref[...]
    # ---- bilinear upsample (align_corners=True) as one lane-dense matmul ----
    y = jnp.dot(a.astype(interp_ref.dtype), interp_ref[...],
                preferred_element_type=jnp.float32)
    # ---- softmax over all S*S pixels of each batch row, scaled by S*S -------
    m = jnp.max(y, axis=-1, keepdims=True)
    e = jnp.exp(y - m)
    s = jnp.sum(e, axis=-1, keepdims=True)
    inv = pl.reciprocal(s, approx=True)           # EUP slot, effectively free
    o_ref[...] = (e * (inv * scale)).astype(o_ref.dtype)


def _interp_matrix_1d(src, dst):
    """1-D bilinear interpolation matrix L (dst, src), align_corners=True."""
    if src == 1 or dst == 1:
        return jnp.ones((dst, src), jnp.float32)
    pos = jnp.arange(dst, dtype=jnp.float32) * (float(src - 1) / float(dst - 1))
    p0 = jnp.clip(jnp.floor(pos).astype(jnp.int32), 0, src - 2)
    frac = pos - p0.astype(jnp.float32)
    rows = jnp.arange(dst)
    L = jnp.zeros((dst, src), jnp.float32)
    L = L.at[rows, p0].add(1.0 - frac)
    L = L.at[rows, p0 + 1].add(frac)
    return L


def make_bilinear_kron(att_size, image_size):
    """Returns (L, M): L (S, A) 1-D interp matrix (f32); M (A*A, S*S) f32 such
    that flat(bilinear_resize(img, S, align_corners=True)) == flat(img) @ M."""
    L = _interp_matrix_1d(att_size, image_size)          # (S, A)
    M = jnp.kron(L, L).T                                 # (A*A, S*S)
    return L, M


def attention_forward(x, w1, b1, w2, b2, interp, image_size, *,
                      block_b=128, compute_dtype=jnp.bfloat16):
    """x: (B, D_in); w1: (D_in, H); b1: (1, H); w2: (H, A*A); b2: (1, A*A);
    interp: (A*A, S*S).  Returns (B, 1, S, S) float32."""
    B, d_in = x.shape
    hidden = w1.shape[1]
    att_sq = w2.shape[1]
    img_sq = interp.shape[1]
    assert interp.shape[0] == att_sq
    assert img_sq == image_size * image_size

    block_b = min(block_b, B)
    assert B % block_b == 0, "batch must divide evenly by the batch tile"
    grid = (B // block_b,)

    # bf16 MXU operands, f32 accumulation / elementwise / biases / output.
    xc = x.astype(compute_dtype)
    w1c = w1.astype(compute_dtype)
    w2c = w2.astype(compute_dtype)
    interpc = interp.astype(compute_dtype)
    b1c = b1.astype(jnp.float32)
    b2c = b2.astype(jnp.float32)

    cbytes = jnp.dtype(compute_dtype).itemsize
    cost = pl.CostEstimate(
        flops=2 * B * (d_in * hidden + hidden * att_sq + att_sq * img_sq),
        transcendentals=B * (hidden + img_sq),
        bytes_accessed=(cbytes * (B * d_in + d_in * hidden + hidden * att_sq
                                  + att_sq * img_sq)
                        + 4 * (hidden + att_sq + B * img_sq)),
    )

    kernel = functools.partial(_attention_kernel,
                               scale=float(image_size * image_size))

    out_flat = pl.pallas_call(
        kernel,
        out_shape=jax.ShapeDtypeStruct((B, img_sq), jnp.float32),
        grid_spec=pltpu.PrefetchScalarGridSpec(
            num_scalar_prefetch=0,
            grid=grid,
            in_specs=[
                pl.BlockSpec((block_b, d_in), lambda i: (i, 0)),    # x (tiled)
                pl.BlockSpec((d_in, hidden), lambda i: (0, 0)),     # w1 resident
                pl.BlockSpec((1, hidden), lambda i: (0, 0)),        # b1 resident
                pl.BlockSpec((hidden, att_sq), lambda i: (0, 0)),   # w2 resident
                pl.BlockSpec((1, att_sq), lambda i: (0, 0)),        # b2 resident
                pl.BlockSpec((att_sq, img_sq), lambda i: (0, 0)),   # interp resident
            ],
            out_specs=pl.BlockSpec((block_b, img_sq), lambda i: (i, 0)),
        ),
        compiler_params=pltpu.CompilerParams(
            dimension_semantics=("parallel",),     # batch axis -> megacore
            vmem_limit_bytes=48 * 1024 * 1024,     # room for f32 y/e at block_b
        ),
        cost_estimate=cost,
    )(xc, w1c, b1c, w2c, b2c, interpc)

    return out_flat.reshape(B, 1, image_size, image_size)


def init_attention_params(key, input_dims, att_size, dtype=jnp.float32):
    """Mirrors torch.nn.Linear init: U(-1/sqrt(fan_in), +1/sqrt(fan_in))."""
    hidden = att_size * att_size // 2
    out = att_size * att_size
    k1, k2, k3, k4 = jax.random.split(key, 4)
    bound1 = 1.0 / float(input_dims) ** 0.5
    bound2 = 1.0 / float(hidden) ** 0.5
    w1 = jax.random.uniform(k1, (input_dims, hidden), dtype, -bound1, bound1)
    b1 = jax.random.uniform(k2, (1, hidden), dtype, -bound1, bound1)
    w2 = jax.random.uniform(k3, (hidden, out), dtype, -bound2, bound2)
    b2 = jax.random.uniform(k4, (1, out), dtype, -bound2, bound2)
    return w1, b1, w2, b2


def attention_reference(x, w1, b1, w2, b2, L, image_size):
    """Pure-JAX f32 reference of the PyTorch forward (separable bilinear)."""
    B = x.shape[0]
    S, A = L.shape
    h = x @ w1 + b1
    h = jnp.where(h > 0.0, h, jnp.exp(jnp.minimum(h, 0.0)) - 1.0)
    a = h @ w2 + b2
    img = a.reshape(B, A, A)
    up = jnp.einsum('ip,bpq,jq->bij', L, img, L)   # bilinear, align_corners=True
    flat = up.reshape(B, S * S)
    flat = jax.nn.softmax(flat, axis=1) * float(S * S)
    return flat.reshape(B, 1, S, S)


if __name__ == "__main__":
    key = jax.random.PRNGKey(0)
    kx, kp = jax.random.split(key)

    # Small, lane-friendly shapes consistent with the module
    # (attention_size = image_size // 4, hidden = attention_size**2 // 2).
    batch = 256                    # 2 grid steps at block_b=128 (v7x megacore)
    input_dims = 128
    image_size = 64
    att_size = image_size // 4     # 16 -> hidden=128, A^2=256, S^2=4096

    x = jax.random.normal(kx, (batch, input_dims), dtype=jnp.float32)
    w1, b1, w2, b2 = init_attention_params(kp, input_dims, att_size)
    L, interp = make_bilinear_kron(att_size, image_size)

    out = attention_forward(x, w1, b1, w2, b2, interp, image_size, block_b=128)
    out = jax.block_until_ready(out)

    ref = attention_reference(x, w1, b1, w2, b2, L, image_size)
    assert out.shape == (batch, 1, image_size, image_size)
    # Each attention map integrates to image_size**2 (softmax * S*S).
    row_sums = out.reshape(batch, -1).sum(axis=1)
    assert jnp.allclose(row_sums, float(image_size * image_size), rtol=1e-2)
    # bf16 MXU operands + approx reciprocal vs. a pure-f32 reference.
    assert jnp.allclose(out, ref, atol=5e-2, rtol=5e-2)

    print("KERNEL_OK")
</pallas_src>

<mosaic_0001>
module attributes {stable_mosaic.version = 11 : i64} {
  func.func @_attention_kernel(%arg0: i32, %arg1: memref<128x128xbf16, #tpu.memory_space<vmem>>, %arg2: memref<128x128xbf16, #tpu.memory_space<vmem>>, %arg3: memref<1x128xf32, #tpu.memory_space<vmem>>, %arg4: memref<128x256xbf16, #tpu.memory_space<vmem>>, %arg5: memref<1x256xf32, #tpu.memory_space<vmem>>, %arg6: memref<256x4096xbf16, #tpu.memory_space<vmem>>, %arg7: memref<128x4096xf32, #tpu.memory_space<vmem>>) attributes {dimension_semantics = [#tpu.dimension_semantics<parallel>], iteration_bounds = array<i64: 2>, scalar_prefetch = 0 : i64, scratch_operands = 0 : i64, tpu.core_type = #tpu.core_type<tc>, window_params = [{transform_indices = @transform_0, window_bounds = array<i64: 128, 128>}, {pipeline_mode = #tpu.pipeline_mode<synchronous>, transform_indices = @transform_1, window_bounds = array<i64: 128, 128>}, {pipeline_mode = #tpu.pipeline_mode<synchronous>, transform_indices = @transform_2, window_bounds = array<i64: 1, 128>}, {pipeline_mode = #tpu.pipeline_mode<synchronous>, transform_indices = @transform_3, window_bounds = array<i64: 128, 256>}, {pipeline_mode = #tpu.pipeline_mode<synchronous>, transform_indices = @transform_4, window_bounds = array<i64: 1, 256>}, {pipeline_mode = #tpu.pipeline_mode<synchronous>, transform_indices = @transform_5, window_bounds = array<i64: 256, 4096>}, {transform_indices = @transform_6, window_bounds = array<i64: 128, 4096>}]} {
    %c0 = arith.constant 0 : index
    %c0_0 = arith.constant 0 : index
    %0 = vector.load %arg1[%c0, %c0_0] : memref<128x128xbf16, #tpu.memory_space<vmem>>, vector<128x128xbf16>
    %c0_1 = arith.constant 0 : index
    %c0_2 = arith.constant 0 : index
    %1 = vector.load %arg2[%c0_1, %c0_2] : memref<128x128xbf16, #tpu.memory_space<vmem>>, vector<128x128xbf16>
    %cst = arith.constant dense<0.000000e+00> : vector<128x128xf32>
    %2 = tpu.matmul %0, %1, %cst {dimension_numbers = #tpu.dot_dimension_numbers<[1], [0], [0], [1], [0, 0, 1, 1], [], []>} : vector<128x128xbf16>, vector<128x128xbf16>, vector<128x128xf32> -> vector<128x128xf32>
    %c0_3 = arith.constant 0 : index
    %c0_4 = arith.constant 0 : index
    %3 = vector.load %arg3[%c0_3, %c0_4] : memref<1x128xf32, #tpu.memory_space<vmem>>, vector<1x128xf32>
    %4 = vector.broadcast %3 : vector<1x128xf32> to vector<128x128xf32>
    %5 = arith.addf %2, %4 : vector<128x128xf32>
    %cst_5 = arith.constant 0.000000e+00 : f32
    %6 = vector.broadcast %cst_5 : f32 to vector<128x128xf32>
    %7 = arith.cmpf ogt, %5, %6 : vector<128x128xf32>
    %cst_6 = arith.constant 0.000000e+00 : f32
    %8 = vector.broadcast %cst_6 : f32 to vector<128x128xf32>
    %9 = arith.minimumf %5, %8 : vector<128x128xf32>
    %10 = math.exp %9 : vector<128x128xf32>
    %cst_7 = arith.constant 1.000000e+00 : f32
    %11 = vector.broadcast %cst_7 : f32 to vector<128x128xf32>
    %12 = arith.subf %10, %11 : vector<128x128xf32>
    %13 = arith.select %7, %5, %12 : vector<128x128xi1>, vector<128x128xf32>
    %14 = arith.truncf %13 : vector<128x128xf32> to vector<128x128xbf16>
    %c0_8 = arith.constant 0 : index
    %c0_9 = arith.constant 0 : index
    %15 = vector.load %arg4[%c0_8, %c0_9] : memref<128x256xbf16, #tpu.memory_space<vmem>>, vector<128x256xbf16>
    %cst_10 = arith.constant dense<0.000000e+00> : vector<128x256xf32>
    %16 = tpu.matmul %14, %15, %cst_10 {dimension_numbers = #tpu.dot_dimension_numbers<[1], [0], [0], [1], [0, 0, 1, 1], [], []>} : vector<128x128xbf16>, vector<128x256xbf16>, vector<128x256xf32> -> vector<128x256xf32>
    %c0_11 = arith.constant 0 : index
    %c0_12 = arith.constant 0 : index
    %17 = vector.load %arg5[%c0_11, %c0_12] : memref<1x256xf32, #tpu.memory_space<vmem>>, vector<1x256xf32>
    %18 = vector.broadcast %17 : vector<1x256xf32> to vector<128x256xf32>
    %19 = arith.addf %16, %18 : vector<128x256xf32>
    %20 = arith.truncf %19 : vector<128x256xf32> to vector<128x256xbf16>
    %c0_13 = arith.constant 0 : index
    %c0_14 = arith.constant 0 : index
    %21 = vector.load %arg6[%c0_13, %c0_14] : memref<256x4096xbf16, #tpu.memory_space<vmem>>, vector<256x4096xbf16>
    %cst_15 = arith.constant dense<0.000000e+00> : vector<128x4096xf32>
    %22 = tpu.matmul %20, %21, %cst_15 {dimension_numbers = #tpu.dot_dimension_numbers<[1], [0], [0], [1], [0, 0, 1, 1], [], []>} : vector<128x256xbf16>, vector<256x4096xbf16>, vector<128x4096xf32> -> vector<128x4096xf32>
    %cst_16 = arith.constant dense<0xFF800000> : vector<128xf32>
    %23 = vector.multi_reduction <maximumf>, %22, %cst_16 [1] : vector<128x4096xf32> to vector<128xf32>
    %24 = vector.shape_cast %23 : vector<128xf32> to vector<128x1xf32>
    %25 = vector.broadcast %24 : vector<128x1xf32> to vector<128x4096xf32>
    %26 = arith.subf %22, %25 : vector<128x4096xf32>
    %27 = math.exp %26 : vector<128x4096xf32>
    %cst_17 = arith.constant dense<0.000000e+00> : vector<128xf32>
    %28 = vector.multi_reduction <add>, %27, %cst_17 [1] : vector<128x4096xf32> to vector<128xf32>
    %29 = vector.shape_cast %28 : vector<128xf32> to vector<128x1xf32>
    %30 = tpu.reciprocal %29 {approx = true} : vector<128x1xf32> -> vector<128x1xf32>
    %cst_18 = arith.constant 4.096000e+03 : f32
    %31 = vector.broadcast %cst_18 : f32 to vector<128x1xf32>
    %32 = arith.mulf %30, %31 : vector<128x1xf32>
    %33 = vector.broadcast %32 : vector<128x1xf32> to vector<128x4096xf32>
    %34 = arith.mulf %27, %33 : vector<128x4096xf32>
    %c0_19 = arith.constant 0 : index
    %c0_20 = arith.constant 0 : index
    %35 = vector.load %arg7[%c0_19, %c0_20] : memref<128x4096xf32, #tpu.memory_space<vmem>>, vector<128x4096xf32>
    tpu.vector_store %arg7[%c0_19, %c0_20], %34 {strides = array<i32>} : memref<128x4096xf32, #tpu.memory_space<vmem>>, vector<128x4096xf32>,
    return
  }
  func.func @transform_0(%arg0: i32) -> (i32, i32) {
    %c0_i32 = arith.constant 0 : i32
    %c0_i32_0 = arith.constant 0 : i32
    return %arg0, %c0_i32 : i32, i32
  }
  func.func @transform_1(%arg0: i32) -> (i32, i32) {
    %c0_i32 = arith.constant 0 : i32
    %c0_i32_0 = arith.constant 0 : i32
    %c0_i32_1 = arith.constant 0 : i32
    return %c0_i32, %c0_i32_0 : i32, i32
  }
  func.func @transform_2(%arg0: i32) -> (i32, i32) {
    %c0_i32 = arith.constant 0 : i32
    %c0_i32_0 = arith.constant 0 : i32
    %c0_i32_1 = arith.constant 0 : i32
    return %c0_i32, %c0_i32_0 : i32, i32
  }
  func.func @transform_3(%arg0: i32) -> (i32, i32) {
    %c0_i32 = arith.constant 0 : i32
    %c0_i32_0 = arith.constant 0 : i32
    %c0_i32_1 = arith.constant 0 : i32
    return %c0_i32, %c0_i32_0 : i32, i32
  }
  func.func @transform_4(%arg0: i32) -> (i32, i32) {
    %c0_i32 = arith.constant 0 : i32
    %c0_i32_0 = arith.constant 0 : i32
    %c0_i32_1 = arith.constant 0 : i32
    return %c0_i32, %c0_i32_0 : i32, i32
  }
  func.func @transform_5(%arg0: i32) -> (i32, i32) {
    %c0_i32 = arith.constant 0 : i32
    %c0_i32_0 = arith.constant 0 : i32
    %c0_i32_1 = arith.constant 0 : i32
    return %c0_i32, %c0_i32_0 : i32, i32
  }
  func.func @transform_6(%arg0: i32) -> (i32, i32) {
    %c0_i32 = arith.constant 0 : i32
    %c0_i32_0 = arith.constant 0 : i32
    return %arg0, %c0_i32 : i32, i32
  }
}

</mosaic_0001>

<llo_original>
// kernel: tpu_custom_call.1
$region0: #{tpu_custom_call.1}
  #allocation0 [shape = 'u32[]', space=smem, size = 0x4, offset = 0x4, fixed_abs, tag = 'smem constant byte address 0x4 - core index']
  #allocation1 [shape = 'u32[144,128]{1,0:T(1,128)}', space=vmem, size = 0x12000, scoped, tag = 'internal scratch']
  %s0 = inlined_call_operand.hbm [shape: bf16[256,128], index: 0, kind: input, shape index: {}]
  %s1 = inlined_call_operand.hbm [shape: bf16[128,128], index: 1, kind: input, shape index: {}]
  %s2 = inlined_call_operand.hbm [shape: f32[1,128], index: 2, kind: input, shape index: {}]
  %s3 = inlined_call_operand.hbm [shape: bf16[128,256], index: 3, kind: input, shape index: {}]
  %s4 = inlined_call_operand.hbm [shape: f32[1,256], index: 4, kind: input, shape index: {}]
  %s5 = inlined_call_operand.hbm [shape: bf16[256,4096], index: 5, kind: input, shape index: {}]
  %s6 = inlined_call_operand.hbm [shape: f32[256,4096], index: 6, kind: output, shape index: {}]
  %s7 = sld [smem:[#allocation0]]
  $region81: #{tpu_custom_call.1} parent=0
    _
  %s9 = ssub.s32 1, %s7
  %s10 = scalar_select 0, %s9, %s7
  $region1: #{tpu_custom_call.1} parent=0
    #allocation2 [shape = 'u8[65536]{0}', space=vmem, size = 0x10000, scoped, tag = 'input window, operand 0']
    #allocation3 [shape = 's32[2]{0}', space=sflag, size = 0x8, scoped, tag = 'scoped memory for tpu_custom_call.1']
    #allocation4 [shape = 's32[2]{0}', space=sflag, size = 0x8, scoped, tag = 'scoped memory for tpu_custom_call.1']
    #allocation5 [shape = 'u8[32768]{0}', space=vmem, size = 0x8000, scoped, tag = 'input window, operand 1, single buffered']
    #allocation6 [shape = 's32[1]{0}', space=sflag, size = 0x4, scoped, tag = 'scoped memory for tpu_custom_call.1']
    #allocation7 [shape = 'u8[512]{0}', space=vmem, size = 0x400, scoped, tag = 'input window, operand 2, single buffered']
    #allocation8 [shape = 'u8[65536]{0}', space=vmem, size = 0x10000, scoped, tag = 'input window, operand 3, single buffered']
    #allocation9 [shape = 's32[1]{0}', space=sflag, size = 0x4, scoped, tag = 'scoped memory for tpu_custom_call.1']
    #allocation10 [shape = 'u8[1024]{0}', space=vmem, size = 0x400, scoped, tag = 'input window, operand 4, single buffered']
    #allocation11 [shape = 'u8[2097152]{0}', space=vmem, size = 0x200000, scoped, tag = 'input window, operand 5, single buffered']
    #allocation12 [shape = 's32[1]{0}', space=sflag, size = 0x4, scoped, tag = 'scoped memory for tpu_custom_call.1']
    #allocation13 [shape = 'u8[4194304]{0}', space=vmem, size = 0x400000, scoped, tag = 'output window, operand 0']
    %11 = vsyncpa [#allocation3], 0
    %s12 = scalar_lea.sflag [#allocation3], 1
    %13 = vsyncpa %s12, 0
    %14 = vsyncpa [#allocation6], 0
    %15 = vsyncpa [#allocation9], 0
    %16 = vsyncpa [#allocation12], 0
    %17 = vsyncpa [#allocation4], 0
    %s18 = scalar_lea.sflag [#allocation4], 1
    %19 = vsyncpa %s18, 0
    loop: start=0, step=1, limit=4
    $region2: #{tpu_custom_call.1} parent=1 // loop_pre_header
      _
    $region3: #{tpu_custom_call.1} parent=1 // loop_header
      %s21 = sphi 0, %s25
      %p22 = scmp.ge.s32.totalorder %s21, 4
      %s31 = sphi 0, %s33
      %s34 = sphi 0, %s31
      %s35 = sphi 0, %s34
      %s51 = sphi 0, %s35
      %s55 = sphi 0, %s55
      %s57 = sphi 0, %s55
      %s58 = sphi 0, %s57
      %s72 = sphi 0, %s58
      %s76 = sphi 0, %s76
      %s78 = sphi 0, %s76
      %s79 = sphi 0, %s78
      %s93 = sphi 0, %s79
      %s97 = sphi 0, %s97
      %s99 = sphi 0, %s97
      %s100 = sphi 0, %s99
      %s114 = sphi 0, %s100
      %s118 = sphi 0, %s118
      %s120 = sphi 0, %s118
      %s121 = sphi 0, %s120
      %s135 = sphi 0, %s121
      %s139 = sphi 0, %s139
      %s141 = sphi 0, %s139
      %s142 = sphi 0, %s141
      %s156 = sphi 0, %s142
      %s162 = sphi 0, %s164
      %s165 = sphi 0, %s162
      %s166 = sphi 0, %s165
      %s182 = sphi 0, %s166
    $region4: #{tpu_custom_call.1} parent=1 // loop_header_branch
      %24 = sbr.rel (%p22) target = $region8
    $region5: #{tpu_custom_call.1} parent=1 // loop_body
      %s26 = ssub.s32 %s21, 1
      %s27 = ssub.s32 %s21, 2
      %s28 = sadd.s32 %s21, 1
      %s29 = ssub.s32 %s21, %s28
      %p30 = scmp.eq.s32.totalorder %s29, 0
      %s32 = sadd.s32 %s31, 1
      %s33 = scalar_select %p30, %s31, %s32
      %p36 = pneg %p30
      %p37 = scmp.eq.s32.totalorder %s21, 1
      %p38 = por %p36, %p37
      %p39 = scmp.ne.s32.totalorder %s31, %s34
      %p40 = scmp.eq.s32.totalorder %s21, 0
      %p41 = por %p39, %p40
      %p42 = scmp.ne.s32.totalorder %s31, %s34
      %p43 = scmp.eq.s32.totalorder %s26, 1
      %p44 = por %p42, %p43
      %p45 = scmp.ne.s32.totalorder %s34, %s35
      %p46 = scmp.eq.s32.totalorder %s26, 0
      %p47 = por %p45, %p46
      %p48 = scmp.ne.s32.totalorder %s34, %s35
      %p49 = scmp.eq.s32.totalorder %s27, 1
      %p50 = por %p48, %p49
      %p52 = scmp.ne.s32.totalorder %s35, %s51
      %p53 = scmp.eq.s32.totalorder %s27, 0
      %p54 = por %p52, %p53
      %s56 = sadd.s32 %s55, 1
      %p59 = scmp.eq.s32.totalorder %s21, 1
      %p60 = scmp.ne.s32.totalorder %s55, %s57
      %p61 = scmp.eq.s32.totalorder %s21, 0
      %p62 = por %p60, %p61
      %p63 = scmp.ne.s32.totalorder %s55, %s57
      %p64 = scmp.eq.s32.totalorder %s26, 1
      %p65 = por %p63, %p64
      %p66 = scmp.ne.s32.totalorder %s57, %s58
      %p67 = scmp.eq.s32.totalorder %s26, 0
      %p68 = por %p66, %p67
      %p69 = scmp.ne.s32.totalorder %s57, %s58
      %p70 = scmp.eq.s32.totalorder %s27, 1
      %p71 = por %p69, %p70
      %p73 = scmp.ne.s32.totalorder %s58, %s72
      %p74 = scmp.eq.s32.totalorder %s27, 0
      %p75 = por %p73, %p74
      %s77 = sadd.s32 %s76, 1
      %p80 = scmp.eq.s32.totalorder %s21, 1
      %p81 = scmp.ne.s32.totalorder %s76, %s78
      %p82 = scmp.eq.s32.totalorder %s21, 0
      %p83 = por %p81, %p82
      %p84 = scmp.ne.s32.totalorder %s76, %s78
      %p85 = scmp.eq.s32.totalorder %s26, 1
      %p86 = por %p84, %p85
      %p87 = scmp.ne.s32.totalorder %s78, %s79
      %p88 = scmp.eq.s32.totalorder %s26, 0
      %p89 = por %p87, %p88
      %p90 = scmp.ne.s32.totalorder %s78, %s79
      %p91 = scmp.eq.s32.totalorder %s27, 1
      %p92 = por %p90, %p91
      %p94 = scmp.ne.s32.totalorder %s79, %s93
      %p95 = scmp.eq.s32.totalorder %s27, 0
      %p96 = por %p94, %p95
      %s98 = sadd.s32 %s97, 1
      %p101 = scmp.eq.s32.totalorder %s21, 1
      %p102 = scmp.ne.s32.totalorder %s97, %s99
      %p103 = scmp.eq.s32.totalorder %s21, 0
      %p104 = por %p102, %p103
      %p105 = scmp.ne.s32.totalorder %s97, %s99
      %p106 = scmp.eq.s32.totalorder %s26, 1
      %p107 = por %p105, %p106
      %p108 = scmp.ne.s32.totalorder %s99, %s100
      %p109 = scmp.eq.s32.totalorder %s26, 0
      %p110 = por %p108, %p109
      %p111 = scmp.ne.s32.totalorder %s99, %s100
      %p112 = scmp.eq.s32.totalorder %s27, 1
      %p113 = por %p111, %p112
      %p115 = scmp.ne.s32.totalorder %s100, %s114
      %p116 = scmp.eq.s32.totalorder %s27, 0
      %p117 = por %p115, %p116
      %s119 = sadd.s32 %s118, 1
      %p122 = scmp.eq.s32.totalorder %s21, 1
      %p123 = scmp.ne.s32.totalorder %s118, %s120
      %p124 = scmp.eq.s32.totalorder %s21, 0
      %p125 = por %p123, %p124
      %p126 = scmp.ne.s32.totalorder %s118, %s120
      %p127 = scmp.eq.s32.totalorder %s26, 1
      %p128 = por %p126, %p127
      %p129 = scmp.ne.s32.totalorder %s120, %s121
      %p130 = scmp.eq.s32.totalorder %s26, 0
      %p131 = por %p129, %p130
      %p132 = scmp.ne.s32.totalorder %s120, %s121
      %p133 = scmp.eq.s32.totalorder %s27, 1
      %p134 = por %p132, %p133
      %p136 = scmp.ne.s32.totalorder %s121, %s135
      %p137 = scmp.eq.s32.totalorder %s27, 0
      %p138 = por %p136, %p137
      %s140 = sadd.s32 %s139, 1
      %p143 = scmp.eq.s32.totalorder %s21, 1
      %p144 = scmp.ne.s32.totalorder %s139, %s141
      %p145 = scmp.eq.s32.totalorder %s21, 0
      %p146 = por %p144, %p145
      %p147 = scmp.ne.s32.totalorder %s139, %s141
      %p148 = scmp.eq.s32.totalorder %s26, 1
      %p149 = por %p147, %p148
      %p150 = scmp.ne.s32.totalorder %s141, %s142
      %p151 = scmp.eq.s32.totalorder %s26, 0
      %p152 = por %p150, %p151
      %p153 = scmp.ne.s32.totalorder %s141, %s142
      %p154 = scmp.eq.s32.totalorder %s27, 1
      %p155 = por %p153, %p154
      %p157 = scmp.ne.s32.totalorder %s142, %s156
      %p158 = scmp.eq.s32.totalorder %s27, 0
      %p159 = por %p157, %p158
      %s160 = ssub.s32 %s21, %s28
      %p161 = scmp.eq.s32.totalorder %s160, 0
      %s163 = sadd.s32 %s162, 1
      %s164 = scalar_select %p161, %s162, %s163
      %p167 = pneg %p161
      %p168 = scmp.eq.s32.totalorder %s21, 1
      %p169 = por %p167, %p168
      %p170 = scmp.ne.s32.totalorder %s162, %s165
      %p171 = scmp.eq.s32.totalorder %s21, 0
      %p172 = por %p170, %p171
      %p173 = scmp.ne.s32.totalorder %s162, %s165
      %p174 = scmp.eq.s32.totalorder %s26, 1
      %p175 = por %p173, %p174
      %p176 = scmp.ne.s32.totalorder %s165, %s166
      %p177 = scmp.eq.s32.totalorder %s26, 0
      %p178 = por %p176, %p177
      %p179 = scmp.ne.s32.totalorder %s165, %s166
      %p180 = scmp.eq.s32.totalorder %s27, 1
      %p181 = por %p179, %p180
      %p183 = scmp.ne.s32.totalorder %s166, %s182
      %p184 = scmp.eq.s32.totalorder %s27, 0
      %p185 = por %p183, %p184
      %p186 = scmp.le.s32.totalorder 1, %s21
      %p187 = scmp.lt.s32.totalorder %s21, 3
      %p188 = pnand %p186, %p187
      %p189 = pneg %p188
      // Predicated region
      $region9: #{tpu_custom_call.1} parent=5 // pred_check
        _
      $region10: #{tpu_custom_call.1} parent=5 // pred_check_branch
        %191 = sbr.rel (%p188) target = $region12
      $region11: #{tpu_custom_call.1} parent=5 // pred_region
        %s192 = ssub.s32 %s21, 1
        // Predicated region
        $region13: #{tpu_custom_call.1} parent=11 // pred_check
          %p193 = pneg %p68
        $region14: #{tpu_custom_call.1} parent=11 // pred_check_branch
          %195 = sbr.rel (%p193) target = $region16
        $region15: #{tpu_custom_call.1} parent=11 // pred_region
          %s197 = ssub.s32 1024, 1024
          %198 = vsyncadd [#allocation6], %s197
          %s199 = sshll.u32 [#allocation5], 4
          %s200 = int_to_ptr.vmem [resolvable:$true] %s199
          %205 = dma.hbm_to_vmem [thread:$0]  %s1, 1024, %s200, [#allocation6], 64, 64, 4
        $region16: #{tpu_custom_call.1} parent=11 // pred_fallthru
          _
        // Predicated region
        $region17: #{tpu_custom_call.1} parent=11 // pred_check
          %p206 = pneg %p89
        $region18: #{tpu_custom_call.1} parent=11 // pred_check_branch
          %208 = sbr.rel (%p206) target = $region20
        $region19: #{tpu_custom_call.1} parent=11 // pred_region
          %s210 = ssub.s32 16, 16
          %211 = vsyncadd [#allocation6], %s210
          %s213 = sshll.u32 [#allocation7], 4
          %s214 = int_to_ptr.vmem [resolvable:$true] %s213
          %216 = dma.hbm_to_vmem [thread:$0]  %s2, 16, %s214, [#allocation6]
        $region20: #{tpu_custom_call.1} parent=11 // pred_fallthru
          _
        // Predicated region
        $region21: #{tpu_custom_call.1} parent=11 // pred_check
          %p217 = pneg %p110
        $region22: #{tpu_custom_call.1} parent=11 // pred_check_branch
          %219 = sbr.rel (%p217) target = $region24
        $region23: #{tpu_custom_call.1} parent=11 // pred_region
          %s221 = ssub.s32 2048, 2048
          %222 = vsyncadd [#allocation9], %s221
          %s223 = sshll.u32 [#allocation8], 4
          %s224 = int_to_ptr.vmem [resolvable:$true] %s223
          %229 = dma.hbm_to_vmem [thread:$0]  %s3, 2048, %s224, [#allocation9], 128, 128, 8
        $region24: #{tpu_custom_call.1} parent=11 // pred_fallthru
          _
        // Predicated region
        $region25: #{tpu_custom_call.1} parent=11 // pred_check
          %p230 = pneg %p131
        $region26: #{tpu_custom_call.1} parent=11 // pred_check_branch
          %232 = sbr.rel (%p230) target = $region28
        $region27: #{tpu_custom_call.1} parent=11 // pred_region
          %s234 = ssub.s32 32, 32
          %235 = vsyncadd [#allocation9], %s234
          %s237 = sshll.u32 [#allocation10], 4
          %s238 = int_to_ptr.vmem [resolvable:$true] %s237
          %240 = dma.hbm_to_vmem [thread:$0]  %s4, 32, %s238, [#allocation9]
        $region28: #{tpu_custom_call.1} parent=11 // pred_fallthru
          _
        // Predicated region
        $region29: #{tpu_custom_call.1} parent=11 // pred_check
          %p241 = pneg %p152
        $region30: #{tpu_custom_call.1} parent=11 // pred_check_branch
          %243 = sbr.rel (%p241) target = $region32
        $region31: #{tpu_custom_call.1} parent=11 // pred_region
          %s245 = ssub.s32 65536, 65536
          %246 = vsyncadd [#allocation12], %s245
          %s247 = sshll.u32 [#allocation11], 4
          %s248 = int_to_ptr.vmem [resolvable:$true] %s247
          %253 = dma.hbm_to_vmem [thread:$0]  %s5, 65536, %s248, [#allocation12], 2048, 2048, 128
        $region32: #{tpu_custom_call.1} parent=11 // pred_fallthru
          _
      $region12: #{tpu_custom_call.1} parent=5 // pred_fallthru
        _
      %p254 = scmp.lt.s32.totalorder %s21, 2
      // Predicated region
      $region33: #{tpu_custom_call.1} parent=5 // pred_check
        %p255 = pneg %p254
      $region34: #{tpu_custom_call.1} parent=5 // pred_check_branch
        %257 = sbr.rel (%p255) target = $region36
      $region35: #{tpu_custom_call.1} parent=5 // pred_region
        // Predicated region
        $region37: #{tpu_custom_call.1} parent=35 // pred_check
          %p258 = pneg %p41
        $region38: #{tpu_custom_call.1} parent=35 // pred_check_branch
          %260 = sbr.rel (%p258) target = $region40
        $region39: #{tpu_custom_call.1} parent=35 // pred_region
          %s261 = sand.u32 %s31, 1
          %s262 = scalar_lea.sflag [#allocation3], %s261
          %s263 = sand.u32 %s31, 1
          %s264 = smul.addr %s263, 64
          %s265 = scalar_lea.vmem [#allocation2], %s264
          %s266 = smul.u32 16, %s21
          %s268 = ssub.s32 1024, 1024
          %269 = vsyncadd %s262, %s268
          %s270 = smul.addr %s266, 64
          %s271 = scalar_lea.hbm %s0, %s270
          %s272 = sshll.u32 %s265, 4
          %s273 = int_to_ptr.vmem [resolvable:$true] %s272
          %278 = dma.hbm_to_vmem [thread:$0]  %s271, 1024, %s273, %s262, 64, 64, 4
        $region40: #{tpu_custom_call.1} parent=35 // pred_fallthru
          _
      $region36: #{tpu_custom_call.1} parent=5 // pred_fallthru
        _
      %p279 = scmp.le.s32.totalorder 1, %s21
      %p280 = scmp.lt.s32.totalorder %s21, 3
      %p281 = pnand %p279, %p280
      %p282 = pneg %p281
      // Predicated region
      $region41: #{tpu_custom_call.1} parent=5 // pred_check
        _
      $region42: #{tpu_custom_call.1} parent=5 // pred_check_branch
        %284 = sbr.rel (%p281) target = $region44
      $region43: #{tpu_custom_call.1} parent=5 // pred_region
        %s285 = ssub.s32 %s21, 1
        %s286 = sand.u32 %s34, 1
        %s287 = scalar_lea.sflag [#allocation3], %s286
        %s288 = sand.u32 %s34, 1
        %s289 = smul.addr %s288, 64
        %s290 = scalar_lea.vmem [#allocation2], %s289
        // Predicated region
        $region45: #{tpu_custom_call.1} parent=43 // pred_check
          %p291 = pneg %p47
        $region46: #{tpu_custom_call.1} parent=43 // pred_check_branch
          %293 = sbr.rel (%p291) target = $region48
        $region47: #{tpu_custom_call.1} parent=43 // pred_region
          %294 = dma.done %s287, 1024
        $region48: #{tpu_custom_call.1} parent=43 // pred_fallthru
          _
        // Predicated region
        $region49: #{tpu_custom_call.1} parent=43 // pred_check
          %p295 = pneg %p68
        $region50: #{tpu_custom_call.1} parent=43 // pred_check_branch
          %297 = sbr.rel (%p295) target = $region52
        $region51: #{tpu_custom_call.1} parent=43 // pred_region
          %298 = dma.done [#allocation6], 1024
        $region52: #{tpu_custom_call.1} parent=43 // pred_fallthru
          _
        // Predicated region
        $region53: #{tpu_custom_call.1} parent=43 // pred_check
          %p299 = pneg %p89
        $region54: #{tpu_custom_call.1} parent=43 // pred_check_branch
          %301 = sbr.rel (%p299) target = $region56
        $region55: #{tpu_custom_call.1} parent=43 // pred_region
          %302 = dma.done [#allocation6], 16
        $region56: #{tpu_custom_call.1} parent=43 // pred_fallthru
          _
        // Predicated region
        $region57: #{tpu_custom_call.1} parent=43 // pred_check
          %p303 = pneg %p110
        $region58: #{tpu_custom_call.1} parent=43 // pred_check_branch
          %305 = sbr.rel (%p303) target = $region60
        $region59: #{tpu_custom_call.1} parent=43 // pred_region
          %306 = dma.done [#allocation9], 2048
        $region60: #{tpu_custom_call.1} parent=43 // pred_fallthru
          _
        // Predicated region
        $region61: #{tpu_custom_call.1} parent=43 // pred_check
          %p307 = pneg %p131
        $region62: #{tpu_custom_call.1} parent=43 // pred_check_branch
          %309 = sbr.rel (%p307) target = $region64
        $region63: #{tpu_custom_call.1} parent=43 // pred_region
          %310 = dma.done [#allocation9], 32
        $region64: #{tpu_custom_call.1} parent=43 // pred_fallthru
          _
        // Predicated region
        $region65: #{tpu_custom_call.1} parent=43 // pred_check
          %p311 = pneg %p152
        $region66: #{tpu_custom_call.1} parent=43 // pred_check_branch
          %313 = sbr.rel (%p311) target = $region68
        $region67: #{tpu_custom_call.1} parent=43 // pred_region
          %314 = dma.done [#allocation12], 65536
        $region68: #{tpu_custom_call.1} parent=43 // pred_fallthru
          _
        %s315 = sand.u32 %s34, 1
        %s316 = scalar_lea.sflag [#allocation3], %s315
        %s317 = sand.u32 %s34, 1
        %s318 = smul.addr %s317, 64
        %s319 = scalar_lea.vmem [#allocation2], %s318
        %p320 = pneg %p47
        %p321 = pneg %p44
        %p322 = pneg %p68
        %p323 = pneg %p65
        %p324 = pneg %p89
        %p325 = pneg %p86
        %p326 = pneg %p110
        %p327 = pneg %p107
        %p328 = pneg %p131
        %p329 = pneg %p128
        %p330 = pneg %p152
        %p331 = pneg %p149
        %p332 = pneg %p178
        %p333 = pneg %p175
        %s334 = sand.u32 %s165, 1
        %s335 = scalar_lea.sflag [#allocation4], %s334
        %s336 = sand.u32 %s165, 1
        %s337 = smul.addr %s336, 4096
        %s338 = scalar_lea.vmem [#allocation13], %s337
        %s339 = smul.u32 16, %s26
        %s340 = smul.u32 16, %s26
        %v342 = vld [vmem:[%s290] sm:$0xf]
        %v343 = vld [vmem:[%s290 + $0x4] sm:$0xf]
        %v344 = vld [vmem:[%s290 + $0x8] sm:$0xf]
        %v345 = vld [vmem:[%s290 + $0xc] sm:$0xf]
        %v346 = vld [vmem:[%s290 + $0x10] sm:$0xf]
        %v347 = vld [vmem:[%s290 + $0x14] sm:$0xf]
        %v348 = vld [vmem:[%s290 + $0x18] sm:$0xf]
        %v349 = vld [vmem:[%s290 + $0x1c] sm:$0xf]
        %v350 = vld [vmem:[%s290 + $0x20] sm:$0xf]
        %v351 = vld [vmem:[%s290 + $0x24] sm:$0xf]
        %v352 = vld [vmem:[%s290 + $0x28] sm:$0xf]
        %v353 = vld [vmem:[%s290 + $0x2c] sm:$0xf]
        %v354 = vld [vmem:[%s290 + $0x30] sm:$0xf]
        %v355 = vld [vmem:[%s290 + $0x34] sm:$0xf]
        %v356 = vld [vmem:[%s290 + $0x38] sm:$0xf]
        %v357 = vld [vmem:[%s290 + $0x3c] sm:$0xf]
        %v358 = vld [vmem:[#allocation5] sm:$0xf]
        %v359 = vld [vmem:[#allocation5 + $0x4] sm:$0xf]
        %v360 = vld [vmem:[#allocation5 + $0x8] sm:$0xf]
        %v361 = vld [vmem:[#allocation5 + $0xc] sm:$0xf]
        %v362 = vld [vmem:[#allocation5 + $0x10] sm:$0xf]
        %v363 = vld [vmem:[#allocation5 + $0x14] sm:$0xf]
        %v364 = vld [vmem:[#allocation5 + $0x18] sm:$0xf]
        %v365 = vld [vmem:[#allocation5 + $0x1c] sm:$0xf]
        %v366 = vld [vmem:[#allocation5 + $0x20] sm:$0xf]
        %v367 = vld [vmem:[#allocation5 + $0x24] sm:$0xf]
        %v368 = vld [vmem:[#allocation5 + $0x28] sm:$0xf]
        %v369 = vld [vmem:[#allocation5 + $0x2c] sm:$0xf]
        %v370 = vld [vmem:[#allocation5 + $0x30] sm:$0xf]
        %v371 = vld [vmem:[#allocation5 + $0x34] sm:$0xf]
        %v372 = vld [vmem:[#allocation5 + $0x38] sm:$0xf]
        %v373 = vld [vmem:[#allocation5 + $0x3c] sm:$0xf]
        %v374 = vld [vmem:[#allocation7] sm:$0x1]
        %v376 = vlaneseq
        %v377 = vshrl.u32 %v376, 7
        %v378 = vsub.s32 0, %v377
        %v379 = vrot.slane %v374, %v378
        %v397 = vunpack.c.l.b16 %v342
        %v398 = vunpack.c.l.b16 %v343
        %v399 = vunpack.c.l.b16 %v344
        %v400 = vunpack.c.l.b16 %v345
        %v401 = vunpack.c.l.b16 %v346
        %v402 = vunpack.c.l.b16 %v347
        %v403 = vunpack.c.l.b16 %v348
        %v404 = vunpack.c.l.b16 %v349
        %v405 = vunpack.c.l.b16 %v350
        %v406 = vunpack.c.l.b16 %v351
        %v407 = vunpack.c.l.b16 %v352
        %v408 = vunpack.c.l.b16 %v353
        %v409 = vunpack.c.l.b16 %v354
        %v410 = vunpack.c.l.b16 %v355
        %v411 = vunpack.c.l.b16 %v356
        %v412 = vunpack.c.l.b16 %v357
        %v413 = vpack.c.b16 %v398, %v397
        %v414 = vpack.c.b16 %v400, %v399
        %v415 = vpack.c.b16 %v402, %v401
        %v416 = vpack.c.b16 %v404, %v403
        %v417 = vpack.c.b16 %v406, %v405
        %v418 = vpack.c.b16 %v408, %v407
        %v419 = vpack.c.b16 %v410, %v409
        %v420 = vpack.c.b16 %v412, %v411
        %v445 = vunpack.c.l.b16 %v358
        %v446 = vunpack.c.l.b16 %v359
        %v447 = vunpack.c.l.b16 %v360
        %v448 = vunpack.c.l.b16 %v361
        %v449 = vunpack.c.l.b16 %v362
        %v450 = vunpack.c.l.b16 %v363
        %v451 = vunpack.c.l.b16 %v364
        %v452 = vunpack.c.l.b16 %v365
        %v453 = vunpack.c.l.b16 %v366
        %v454 = vunpack.c.l.b16 %v367
        %v455 = vunpack.c.l.b16 %v368
        %v456 = vunpack.c.l.b16 %v369
        %v457 = vunpack.c.l.b16 %v370
        %v458 = vunpack.c.l.b16 %v371
        %v459 = vunpack.c.l.b16 %v372
        %v460 = vunpack.c.l.b16 %v373
        %v461 = vpack.c.b16 %v446, %v445
        %v462 = vpack.c.b16 %v448, %v447
        %v463 = vpack.c.b16 %v450, %v449
        %v464 = vpack.c.b16 %v452, %v451
        %v465 = vpack.c.b16 %v454, %v453
        %v466 = vpack.c.b16 %v456, %v455
        %v467 = vpack.c.b16 %v458, %v457
        %v468 = vpack.c.b16 %v460, %v459
        %477 = vmatprep.subr.bf16.mxu0 0
        %478 = vmatpush1.bf16.msra.mxu0 %v461
        %479 = vmatprep.subr.bf16.mxu0 0
        %480 = vmatpush1.bf16.msra.mxu0 %v462
        %481 = vmatprep.subr.bf16.mxu0 0
        %482 = vmatpush1.bf16.msra.mxu0 %v463
        %483 = vmatprep.subr.bf16.mxu0 0
        %484 = vmatpush1.bf16.msra.mxu0 %v464
        %485 = vmatprep.subr.bf16.mxu0 0
        %486 = vmatpush1.bf16.msra.mxu0 %v465
        %487 = vmatprep.subr.bf16.mxu0 0
        %488 = vmatpush1.bf16.msra.mxu0 %v466
        %489 = vmatprep.subr.bf16.mxu0 0
        %490 = vmatpush1.bf16.msra.mxu0 %v467
        %491 = vmatprep.subr.bf16.mxu0 0
        %492 = vmatpush1.bf16.msra.mxu0 %v468
        %493 = vmatprep.subr.bf16.mxu0 0
        %494 = vmatpush1.bf16.msra.mxu0 0
        %495 = vmatprep.subr.bf16.mxu0 0
        %496 = vmatpush1.bf16.msra.mxu0 0
        %497 = vmatprep.subr.bf16.mxu0 0
        %498 = vmatpush1.bf16.msra.mxu0 0
        %499 = vmatprep.subr.bf16.mxu0 0
        %500 = vmatpush1.bf16.msra.mxu0 0
        %501 = vmatprep.subr.bf16.mxu0 0
        %502 = vmatpush1.bf16.msra.mxu0 0
        %503 = vmatprep.subr.bf16.mxu0 0
        %504 = vmatpush1.bf16.msra.mxu0 0
        %505 = vmatprep.subr.bf16.mxu0 0
        %506 = vmatpush1.bf16.msra.mxu0 0
        %507 = vmatprep.subr.bf16.mxu0 0
        %508 = vmatpush1.bf16.msra.mxu0 0
        %509 = vmatprep.mubr.bf16.mxu0 0
        %510 = vmatmul.mubr.bf16.gmra.mrb[0].mxu0 %v413
        %v511 = vpop.f32.mrb[0].mxu0
        %v512 = vadd.f32 %v379, %v511
        %v513 = vpop.f32.mrb[0].mxu0
        %v514 = vpop.f32.mrb[0].mxu0
        %v515 = vadd.f32 %v379, %v514
        %v516 = vpop.f32.mrb[0].mxu0
        %517 = vmatprep.mubr.bf16.mxu0 0
        %518 = vmatmul.mubr.bf16.gmra.mrb[0].mxu0 %v414
        %v519 = vpop.f32.mrb[0].mxu0
        %v520 = vadd.f32 %v379, %v519
        %v521 = vpop.f32.mrb[0].mxu0
        %v522 = vpop.f32.mrb[0].mxu0
        %v523 = vadd.f32 %v379, %v522
        %v524 = vpop.f32.mrb[0].mxu0
        %525 = vmatprep.mubr.bf16.mxu0 0
        %526 = vmatmul.mubr.bf16.gmra.mrb[0].mxu0 %v415
        %v527 = vpop.f32.mrb[0].mxu0
        %v528 = vadd.f32 %v379, %v527
        %v529 = vpop.f32.mrb[0].mxu0
        %v530 = vpop.f32.mrb[0].mxu0
        %v531 = vadd.f32 %v379, %v530
        %v532 = vpop.f32.mrb[0].mxu0
        %533 = vmatprep.mubr.bf16.mxu0 0
        %534 = vmatmul.mubr.bf16.gmra.mrb[0].mxu0 %v416
        %v535 = vpop.f32.mrb[0].mxu0
        %v536 = vadd.f32 %v379, %v535
        %v537 = vpop.f32.mrb[0].mxu0
        %v538 = vpop.f32.mrb[0].mxu0
        %v539 = vadd.f32 %v379, %v538
        %v540 = vpop.f32.mrb[0].mxu0
        %541 = vmatprep.mubr.bf16.mxu0 0
        %542 = vmatmul.mubr.bf16.gmra.mrb[0].mxu0 %v417
        %v543 = vpop.f32.mrb[0].mxu0
        %v544 = vadd.f32 %v379, %v543
        %v545 = vpop.f32.mrb[0].mxu0
        %v546 = vpop.f32.mrb[0].mxu0
        %v547 = vadd.f32 %v379, %v546
        %v548 = vpop.f32.mrb[0].mxu0
        %549 = vmatprep.mubr.bf16.mxu0 0
        %550 = vmatmul.mubr.bf16.gmra.mrb[0].mxu0 %v418
        %v551 = vpop.f32.mrb[0].mxu0
        %v552 = vadd.f32 %v379, %v551
        %v553 = vpop.f32.mrb[0].mxu0
        %v554 = vpop.f32.mrb[0].mxu0
        %v555 = vadd.f32 %v379, %v554
        %v556 = vpop.f32.mrb[0].mxu0
        %557 = vmatprep.mubr.bf16.mxu0 0
        %558 = vmatmul.mubr.bf16.gmra.mrb[0].mxu0 %v419
        %v559 = vpop.f32.mrb[0].mxu0
        %v560 = vadd.f32 %v379, %v559
        %v561 = vpop.f32.mrb[0].mxu0
        %v562 = vpop.f32.mrb[0].mxu0
        %v563 = vadd.f32 %v379, %v562
        %v564 = vpop.f32.mrb[0].mxu0
        %565 = vmatprep.mubr.bf16.mxu0 0
        %566 = vmatmul.mubr.bf16.gmra.mrb[0].mxu0 %v420
        %v567 = vpop.f32.mrb[0].mxu0
        %v568 = vadd.f32 %v379, %v567
        %v569 = vpop.f32.mrb[0].mxu0
        %v570 = vpop.f32.mrb[0].mxu0
        %v571 = vadd.f32 %v379, %v570
        %v572 = vpop.f32.mrb[0].mxu0
        %573 = vdwg.mxu0
        %vm574 = vcmp.gt.f32.partialorder %v512, 0.0
        %vm575 = vcmp.gt.f32.partialorder %v515, 0.0
        %vm576 = vcmp.gt.f32.partialorder %v520, 0.0
        %vm577 = vcmp.gt.f32.partialorder %v523, 0.0
        %vm578 = vcmp.gt.f32.partialorder %v528, 0.0
        %vm579 = vcmp.gt.f32.partialorder %v531, 0.0
        %vm580 = vcmp.gt.f32.partialorder %v536, 0.0
        %vm581 = vcmp.gt.f32.partialorder %v539, 0.0
        %vm582 = vcmp.gt.f32.partialorder %v544, 0.0
        %vm583 = vcmp.gt.f32.partialorder %v547, 0.0
        %vm584 = vcmp.gt.f32.partialorder %v552, 0.0
        %vm585 = vcmp.gt.f32.partialorder %v555, 0.0
        %vm586 = vcmp.gt.f32.partialorder %v560, 0.0
        %vm587 = vcmp.gt.f32.partialorder %v563, 0.0
        %vm588 = vcmp.gt.f32.partialorder %v568, 0.0
        %vm589 = vcmp.gt.f32.partialorder %v571, 0.0
        %v590 = vmin.f32 %v512, 0.0
        %v591 = vmin.f32 %v515, 0.0
        %v592 = vmin.f32 %v520, 0.0
        %v593 = vmin.f32 %v523, 0.0
        %v594 = vmin.f32 %v528, 0.0
        %v595 = vmin.f32 %v531, 0.0
        %v596 = vmin.f32 %v536, 0.0
        %v597 = vmin.f32 %v539, 0.0
        %v598 = vmin.f32 %v544, 0.0
        %v599 = vmin.f32 %v547, 0.0
        %v600 = vmin.f32 %v552, 0.0
        %v601 = vmin.f32 %v555, 0.0
        %v602 = vmin.f32 %v560, 0.0
        %v603 = vmin.f32 %v563, 0.0
        %v604 = vmin.f32 %v568, 0.0
        %v605 = vmin.f32 %v571, 0.0
        %v606 = vmul.f32 %v590, 1.442695
        %v607 = vpow.pop %v606
        %v608 = vmul.f32 %v591, 1.442695
        %v609 = vpow.pop %v608
        %v610 = vmul.f32 %v592, 1.442695
        %v611 = vpow.pop %v610
        %v612 = vmul.f32 %v593, 1.442695
        %v613 = vpow.pop %v612
        %v614 = vmul.f32 %v594, 1.442695
        %v615 = vpow.pop %v614
        %v616 = vmul.f32 %v595, 1.442695
        %v617 = vpow.pop %v616
        %v618 = vmul.f32 %v596, 1.442695
        %v619 = vpow.pop %v618
        %v620 = vmul.f32 %v597, 1.442695
        %v621 = vpow.pop %v620
        %v622 = vmul.f32 %v598, 1.442695
        %v623 = vpow.pop %v622
        %v624 = vmul.f32 %v599, 1.442695
        %v625 = vpow.pop %v624
        %v626 = vmul.f32 %v600, 1.442695
        %v627 = vpow.pop %v626
        %v628 = vmul.f32 %v601, 1.442695
        %v629 = vpow.pop %v628
        %v630 = vmul.f32 %v602, 1.442695
        %v631 = vpow.pop %v630
        %v632 = vmul.f32 %v603, 1.442695
        %v633 = vpow.pop %v632
        %v634 = vmul.f32 %v604, 1.442695
        %v635 = vpow.pop %v634
        %v636 = vmul.f32 %v605, 1.442695
        %v637 = vpow.pop %v636
        %v638 = vsub.f32 %v607, 1.0
        %v639 = vsub.f32 %v609, 1.0
        %v640 = vsub.f32 %v611, 1.0
        %v641 = vsub.f32 %v613, 1.0
        %v642 = vsub.f32 %v615, 1.0
        %v643 = vsub.f32 %v617, 1.0
        %v644 = vsub.f32 %v619, 1.0
        %v645 = vsub.f32 %v621, 1.0
        %v646 = vsub.f32 %v623, 1.0
        %v647 = vsub.f32 %v625, 1.0
        %v648 = vsub.f32 %v627, 1.0
        %v649 = vsub.f32 %v629, 1.0
        %v650 = vsub.f32 %v631, 1.0
        %v651 = vsub.f32 %v633, 1.0
        %v652 = vsub.f32 %v635, 1.0
        %v653 = vsub.f32 %v637, 1.0
        %v654 = vsel %vm574, %v512, %v638
        %v655 = vsel %vm575, %v515, %v639
        %v656 = vsel %vm576, %v520, %v640
        %v657 = vsel %vm577, %v523, %v641
        %v658 = vsel %vm578, %v528, %v642
        %v659 = vsel %vm579, %v531, %v643
        %v660 = vsel %vm580, %v536, %v644
        %v661 = vsel %vm581, %v539, %v645
        %v662 = vsel %vm582, %v544, %v646
        %v663 = vsel %vm583, %v547, %v647
        %v664 = vsel %vm584, %v552, %v648
        %v665 = vsel %vm585, %v555, %v649
        %v666 = vsel %vm586, %v560, %v650
        %v667 = vsel %vm587, %v563, %v651
        %v668 = vsel %vm588, %v568, %v652
        %v669 = vsel %vm589, %v571, %v653
        %v670 = vpack.c.bf16 %v655, %v654
        %v671 = vpack.c.bf16 %v657, %v656
        %v672 = vpack.c.bf16 %v659, %v658
        %v673 = vpack.c.bf16 %v661, %v660
        %v674 = vpack.c.bf16 %v663, %v662
        %v675 = vpack.c.bf16 %v665, %v664
        %v676 = vpack.c.bf16 %v667, %v666
        %v677 = vpack.c.bf16 %v669, %v668
        %v678 = vld [vmem:[#allocation8] sm:$0xff]
        %v679 = vld [vmem:[#allocation8 + $0x8] sm:$0xff]
        %v680 = vld [vmem:[#allocation8 + $0x10] sm:$0xff]
        %v681 = vld [vmem:[#allocation8 + $0x18] sm:$0xff]
        %v682 = vld [vmem:[#allocation8 + $0x20] sm:$0xff]
        %v683 = vld [vmem:[#allocation8 + $0x28] sm:$0xff]
        %v684 = vld [vmem:[#allocation8 + $0x30] sm:$0xff]
        %v685 = vld [vmem:[#allocation8 + $0x38] sm:$0xff]
        %v686 = vld [vmem:[#allocation8 + $0x40] sm:$0xff]
        %v687 = vld [vmem:[#allocation8 + $0x48] sm:$0xff]
        %v688 = vld [vmem:[#allocation8 + $0x50] sm:$0xff]
        %v689 = vld [vmem:[#allocation8 + $0x58] sm:$0xff]
        %v690 = vld [vmem:[#allocation8 + $0x60] sm:$0xff]
        %v691 = vld [vmem:[#allocation8 + $0x68] sm:$0xff]
        %v692 = vld [vmem:[#allocation8 + $0x70] sm:$0xff]
        %v693 = vld [vmem:[#allocation8 + $0x78] sm:$0xff]
        %v694 = vld [vmem:[#allocation10] sm:$0x3]
        %v696 = vlaneseq
        %v697 = vshrl.u32 %v696, 7
        %v698 = vsub.s32 0, %v697
        %v699 = vrot.slane %v694, %v698
        %v700 = vlaneseq
        %v701 = vshrl.u32 %v700, 7
        %v702 = vsub.s32 1, %v701
        %v703 = vrot.slane %v694, %v702
        %v722 = vunpack.c.l.b16 %v678
        %v723 = vunpack.c.h.b16 %v678
        %v724 = vunpack.c.l.b16 %v679
        %v725 = vunpack.c.h.b16 %v679
        %v726 = vunpack.c.l.b16 %v680
        %v727 = vunpack.c.h.b16 %v680
        %v728 = vunpack.c.l.b16 %v681
        %v729 = vunpack.c.h.b16 %v681
        %v730 = vunpack.c.l.b16 %v682
        %v731 = vunpack.c.h.b16 %v682
        %v732 = vunpack.c.l.b16 %v683
        %v733 = vunpack.c.h.b16 %v683
        %v734 = vunpack.c.l.b16 %v684
        %v735 = vunpack.c.h.b16 %v684
        %v736 = vunpack.c.l.b16 %v685
        %v737 = vunpack.c.h.b16 %v685
        %v738 = vunpack.c.l.b16 %v686
        %v739 = vunpack.c.h.b16 %v686
        %v740 = vunpack.c.l.b16 %v687
        %v741 = vunpack.c.h.b16 %v687
        %v742 = vunpack.c.l.b16 %v688
        %v743 = vunpack.c.h.b16 %v688
        %v744 = vunpack.c.l.b16 %v689
        %v745 = vunpack.c.h.b16 %v689
        %v746 = vunpack.c.l.b16 %v690
        %v747 = vunpack.c.h.b16 %v690
        %v748 = vunpack.c.l.b16 %v691
        %v749 = vunpack.c.h.b16 %v691
        %v750 = vunpack.c.l.b16 %v692
        %v751 = vunpack.c.h.b16 %v692
        %v752 = vunpack.c.l.b16 %v693
        %v753 = vunpack.c.h.b16 %v693
        %v754 = vpack.c.b16 %v724, %v722
        %v755 = vpack.c.b16 %v725, %v723
        %v756 = vpack.c.b16 %v728, %v726
        %v757 = vpack.c.b16 %v729, %v727
        %v758 = vpack.c.b16 %v732, %v730
        %v759 = vpack.c.b16 %v733, %v731
        %v760 = vpack.c.b16 %v736, %v734
        %v761 = vpack.c.b16 %v737, %v735
        %v762 = vpack.c.b16 %v740, %v738
        %v763 = vpack.c.b16 %v741, %v739
        %v764 = vpack.c.b16 %v744, %v742
        %v765 = vpack.c.b16 %v745, %v743
        %v766 = vpack.c.b16 %v748, %v746
        %v767 = vpack.c.b16 %v749, %v747
        %v768 = vpack.c.b16 %v752, %v750
        %v769 = vpack.c.b16 %v753, %v751
        %786 = vmatprep.subr.bf16.mxu0 %v755
        %787 = vmatpush1.bf16.msra.mxu0 %v754
        %788 = vmatprep.subr.bf16.mxu0 %v757
        %789 = vmatpush1.bf16.msra.mxu0 %v756
        %790 = vmatprep.subr.bf16.mxu0 %v759
        %791 = vmatpush1.bf16.msra.mxu0 %v758
        %792 = vmatprep.subr.bf16.mxu0 %v761
        %793 = vmatpush1.bf16.msra.mxu0 %v760
        %794 = vmatprep.subr.bf16.mxu0 %v763
        %795 = vmatpush1.bf16.msra.mxu0 %v762
        %796 = vmatprep.subr.bf16.mxu0 %v765
        %797 = vmatpush1.bf16.msra.mxu0 %v764
        %798 = vmatprep.subr.bf16.mxu0 %v767
        %799 = vmatpush1.bf16.msra.mxu0 %v766
        %800 = vmatprep.subr.bf16.mxu0 %v769
        %801 = vmatpush1.bf16.msra.mxu0 %v768
        %802 = vmatprep.subr.bf16.mxu0 0
        %803 = vmatpush1.bf16.msra.mxu0 0
        %804 = vmatprep.subr.bf16.mxu0 0
        %805 = vmatpush1.bf16.msra.mxu0 0
        %806 = vmatprep.subr.bf16.mxu0 0
        %807 = vmatpush1.bf16.msra.mxu0 0
        %808 = vmatprep.subr.bf16.mxu0 0
        %809 = vmatpush1.bf16.msra.mxu0 0
        %810 = vmatprep.subr.bf16.mxu0 0
        %811 = vmatpush1.bf16.msra.mxu0 0
        %812 = vmatprep.subr.bf16.mxu0 0
        %813 = vmatpush1.bf16.msra.mxu0 0
        %814 = vmatprep.subr.bf16.mxu0 0
        %815 = vmatpush1.bf16.msra.mxu0 0
        %816 = vmatprep.subr.bf16.mxu0 0
        %817 = vmatpush1.bf16.msra.mxu0 0
        %818 = vmatprep.mubr.bf16.mxu0 0
        %819 = vmatmul.mubr.bf16.gmra.mrb[0].mxu0 %v670
        %v820 = vpop.f32.mrb[0].mxu0
        %v821 = vadd.f32 %v699, %v820
        %v822 = vpop.f32.mrb[0].mxu0
        %v823 = vadd.f32 %v703, %v822
        %v824 = vpop.f32.mrb[0].mxu0
        %v825 = vadd.f32 %v699, %v824
        %v826 = vpop.f32.mrb[0].mxu0
        %v827 = vadd.f32 %v703, %v826
        %828 = vmatprep.mubr.bf16.mxu0 0
        %829 = vmatmul.mubr.bf16.gmra.mrb[0].mxu0 %v671
        %v830 = vpop.f32.mrb[0].mxu0
        %v831 = vadd.f32 %v699, %v830
        %v832 = vpop.f32.mrb[0].mxu0
        %v833 = vadd.f32 %v703, %v832
        %v834 = vpop.f32.mrb[0].mxu0
        %v835 = vadd.f32 %v699, %v834
        %v836 = vpop.f32.mrb[0].mxu0
        %v837 = vadd.f32 %v703, %v836
        %838 = vmatprep.mubr.bf16.mxu0 0
        %839 = vmatmul.mubr.bf16.gmra.mrb[0].mxu0 %v672
        %v840 = vpop.f32.mrb[0].mxu0
        %v841 = vadd.f32 %v699, %v840
        %v842 = vpop.f32.mrb[0].mxu0
        %v843 = vadd.f32 %v703, %v842
        %v844 = vpop.f32.mrb[0].mxu0
        %v845 = vadd.f32 %v699, %v844
        %v846 = vpop.f32.mrb[0].mxu0
        %v847 = vadd.f32 %v703, %v846
        %848 = vmatprep.mubr.bf16.mxu0 0
        %849 = vmatmul.mubr.bf16.gmra.mrb[0].mxu0 %v673
        %v850 = vpop.f32.mrb[0].mxu0
        %v851 = vadd.f32 %v699, %v850
        %v852 = vpop.f32.mrb[0].mxu0
        %v853 = vadd.f32 %v703, %v852
        %v854 = vpop.f32.mrb[0].mxu0
        %v855 = vadd.f32 %v699, %v854
        %v856 = vpop.f32.mrb[0].mxu0
        %v857 = vadd.f32 %v703, %v856
        %858 = vmatprep.mubr.bf16.mxu0 0
        %859 = vmatmul.mubr.bf16.gmra.mrb[0].mxu0 %v674
        %v860 = vpop.f32.mrb[0].mxu0
        %v861 = vadd.f32 %v699, %v860
        %v862 = vpop.f32.mrb[0].mxu0
        %v863 = vadd.f32 %v703, %v862
        %v864 = vpop.f32.mrb[0].mxu0
        %v865 = vadd.f32 %v699, %v864
        %v866 = vpop.f32.mrb[0].mxu0
        %v867 = vadd.f32 %v703, %v866
        %868 = vmatprep.mubr.bf16.mxu0 0
        %869 = vmatmul.mubr.bf16.gmra.mrb[0].mxu0 %v675
        %v870 = vpop.f32.mrb[0].mxu0
        %v871 = vadd.f32 %v699, %v870
        %v872 = vpop.f32.mrb[0].mxu0
        %v873 = vadd.f32 %v703, %v872
        %v874 = vpop.f32.mrb[0].mxu0
        %v875 = vadd.f32 %v699, %v874
        %v876 = vpop.f32.mrb[0].mxu0
        %v877 = vadd.f32 %v703, %v876
        %878 = vmatprep.mubr.bf16.mxu0 0
        %879 = vmatmul.mubr.bf16.gmra.mrb[0].mxu0 %v676
        %v880 = vpop.f32.mrb[0].mxu0
        %v881 = vadd.f32 %v699, %v880
        %v882 = vpop.f32.mrb[0].mxu0
        %v883 = vadd.f32 %v703, %v882
        %v884 = vpop.f32.mrb[0].mxu0
        %v885 = vadd.f32 %v699, %v884
        %v886 = vpop.f32.mrb[0].mxu0
        %v887 = vadd.f32 %v703, %v886
        %888 = vmatprep.mubr.bf16.mxu0 0
        %889 = vmatmul.mubr.bf16.gmra.mrb[0].mxu0 %v677
        %v890 = vpop.f32.mrb[0].mxu0
        %v891 = vadd.f32 %v699, %v890
        %v892 = vpop.f32.mrb[0].mxu0
        %v893 = vadd.f32 %v703, %v892
        %v894 = vpop.f32.mrb[0].mxu0
        %v895 = vadd.f32 %v699, %v894
        %v896 = vpop.f32.mrb[0].mxu0
        %v897 = vadd.f32 %v703, %v896
        %898 = vdwg.mxu0
        %v899 = vpack.c.bf16 %v825, %v821
        %v900 = vpack.c.bf16 %v827, %v823
        %v901 = vpack.c.bf16 %v835, %v831
        %v902 = vpack.c.bf16 %v837, %v833
        %v903 = vpack.c.bf16 %v845, %v841
        %v904 = vpack.c.bf16 %v847, %v843
        %v905 = vpack.c.bf16 %v855, %v851
        %v906 = vpack.c.bf16 %v857, %v853
        %v907 = vpack.c.bf16 %v865, %v861
        %v908 = vpack.c.bf16 %v867, %v863
        %v909 = vpack.c.bf16 %v875, %v871
        %v910 = vpack.c.bf16 %v877, %v873
        %v911 = vpack.c.bf16 %v885, %v881
        %v912 = vpack.c.bf16 %v887, %v883
        %v913 = vpack.c.bf16 %v895, %v891
        %v914 = vpack.c.bf16 %v897, %v893
        %v915 = vld [vmem:[#allocation11] sm:$0xff]
        %v916 = vld [vmem:[#allocation11 + $0x8] sm:$0xff]
        %v917 = vld [vmem:[#allocation11 + $0x10] sm:$0xff]
        %v918 = vld [vmem:[#allocation11 + $0x18] sm:$0xff]
        %v919 = vld [vmem:[#allocation11 + $0x20] sm:$0xff]
        %v920 = vld [vmem:[#allocation11 + $0x28] sm:$0xff]
        %v921 = vld [vmem:[#allocation11 + $0x30] sm:$0xff]
        %v922 = vld [vmem:[#allocation11 + $0x38] sm:$0xff]
        %v923 = vld [vmem:[#allocation11 + $0x40] sm:$0xff]
        %v924 = vld [vmem:[#allocation11 + $0x48] sm:$0xff]
        %v925 = vld [vmem:[#allocation11 + $0x50] sm:$0xff]
        %v926 = vld [vmem:[#allocation11 + $0x58] sm:$0xff]
        %v927 = vld [vmem:[#allocation11 + $0x60] sm:$0xff]
        %v928 = vld [vmem:[#allocation11 + $0x68] sm:$0xff]
        %v929 = vld [vmem:[#allocation11 + $0x70] sm:$0xff]
        %v930 = vld [vmem:[#allocation11 + $0x78] sm:$0xff]
        %v931 = vld [vmem:[#allocation11 + $0x80] sm:$0xff]
        %v932 = vld [vmem:[#allocation11 + $0x88] sm:$0xff]
        %v933 = vld [vmem:[#allocation11 + $0x90] sm:$0xff]
        %v934 = vld [vmem:[#allocation11 + $0x98] sm:$0xff]
        %v935 = vld [vmem:[#allocation11 + $0xa0] sm:$0xff]
        %v936 = vld [vmem:[#allocation11 + $0xa8] sm:$0xff]
        %v937 = vld [vmem:[#allocation11 + $0xb0] sm:$0xff]
        %v938 = vld [vmem:[#allocation11 + $0xb8] sm:$0xff]
        %v939 = vld [vmem:[#allocation11 + $0xc0] sm:$0xff]
        %v940 = vld [vmem:[#allocation11 + $0xc8] sm:$0xff]
        %v941 = vld [vmem:[#allocation11 + $0xd0] sm:$0xff]
        %v942 = vld [vmem:[#allocation11 + $0xd8] sm:$0xff]
        %v943 = vld [vmem:[#allocation11 + $0xe0] sm:$0xff]
        %v944 = vld [vmem:[#allocation11 + $0xe8] sm:$0xff]
        %v945 = vld [vmem:[#allocation11 + $0xf0] sm:$0xff]
        %v946 = vld [vmem:[#allocation11 + $0xf8] sm:$0xff]
        %v947 = vld [vmem:[#allocation11 + $0x100] sm:$0xff]
        %v948 = vld [vmem:[#allocation11 + $0x108] sm:$0xff]
        %v949 = vld [vmem:[#allocation11 + $0x110] sm:$0xff]
        %v950 = vld [vmem:[#allocation11 + $0x118] sm:$0xff]
        %v951 = vld [vmem:[#allocation11 + $0x120] sm:$0xff]
        %v952 = vld [vmem:[#allocation11 + $0x128] sm:$0xff]
        %v953 = vld [vmem:[#allocation11 + $0x130] sm:$0xff]
        %v954 = vld [vmem:[#allocation11 + $0x138] sm:$0xff]
        %v955 = vld [vmem:[#allocation11 + $0x140] sm:$0xff]
        %v956 = vld [vmem:[#allocation11 + $0x148] sm:$0xff]
        %v957 = vld [vmem:[#allocation11 + $0x150] sm:$0xff]
        %v958 = vld [vmem:[#allocation11 + $0x158] sm:$0xff]
        %v959 = vld [vmem:[#allocation11 + $0x160] sm:$0xff]
        %v960 = vld [vmem:[#allocation11 + $0x168] sm:$0xff]
        %v961 = vld [vmem:[#allocation11 + $0x170] sm:$0xff]
        %v962 = vld [vmem:[#allocation11 + $0x178] sm:$0xff]
        %v963 = vld [vmem:[#allocation11 + $0x180] sm:$0xff]
        %v964 = vld [vmem:[#allocation11 + $0x188] sm:$0xff]
        %v965 = vld [vmem:[#allocation11 + $0x190] sm:$0xff]
        %v966 = vld [vmem:[#allocation11 + $0x198] sm:$0xff]
        %v967 = vld [vmem:[#allocation11 + $0x1a0] sm:$0xff]
        %v968 = vld [vmem:[#allocation11 + $0x1a8] sm:$0xff]
        %v969 = vld [vmem:[#allocation11 + $0x1b0] sm:$0xff]
        %v970 = vld [vmem:[#allocation11 + $0x1b8] sm:$0xff]
        %v971 = vld [vmem:[#allocation11 + $0x1c0] sm:$0xff]
        %v972 = vld [vmem:[#allocation11 + $0x1c8] sm:$0xff]
        %v973 = vld [vmem:[#allocation11 + $0x1d0] sm:$0xff]
        %v974 = vld [vmem:[#allocation11 + $0x1d8] sm:$0xff]
        %v975 = vld [vmem:[#allocation11 + $0x1e0] sm:$0xff]
        %v976 = vld [vmem:[#allocation11 + $0x1e8] sm:$0xff]
        %v977 = vld [vmem:[#allocation11 + $0x1f0] sm:$0xff]
        %v978 = vld [vmem:[#allocation11 + $0x1f8] sm:$0xff]
        %v979 = vld [vmem:[#allocation11 + $0x200] sm:$0xff]
        %v980 = vld [vmem:[#allocation11 + $0x208] sm:$0xff]
        %v981 = vld [vmem:[#allocation11 + $0x210] sm:$0xff]
        %v982 = vld [vmem:[#allocation11 + $0x218] sm:$0xff]
        %v983 = vld [vmem:[#allocation11 + $0x220] sm:$0xff]
        %v984 = vld [vmem:[#allocation11 + $0x228] sm:$0xff]
        %v985 = vld [vmem:[#allocation11 + $0x230] sm:$0xff]
        %v986 = vld [vmem:[#allocation11 + $0x238] sm:$0xff]
        %v987 = vld [vmem:[#allocation11 + $0x240] sm:$0xff]
        %v988 = vld [vmem:[#allocation11 + $0x248] sm:$0xff]
        %v989 = vld [vmem:[#allocation11 + $0x250] sm:$0xff]
        %v990 = vld [vmem:[#allocation11 + $0x258] sm:$0xff]
        %v991 = vld [vmem:[#allocation11 + $0x260] sm:$0xff]
        %v992 = vld [vmem:[#allocation11 + $0x268] sm:$0xff]
        %v993 = vld [vmem:[#allocation11 + $0x270] sm:$0xff]
        %v994 = vld [vmem:[#allocation11 + $0x278] sm:$0xff]
        %v995 = vld [vmem:[#allocation11 + $0x280] sm:$0xff]
        %v996 = vld [vmem:[#allocation11 + $0x288] sm:$0xff]
        %v997 = vld [vmem:[#allocation11 + $0x290] sm:$0xff]
        %v998 = vld [vmem:[#allocation11 + $0x298] sm:$0xff]
        %v999 = vld [vmem:[#allocation11 + $0x2a0] sm:$0xff]
        %v1000 = vld [vmem:[#allocation11 + $0x2a8] sm:$0xff]
        %v1001 = vld [vmem:[#allocation11 + $0x2b0] sm:$0xff]
        %v1002 = vld [vmem:[#allocation11 + $0x2b8] sm:$0xff]
        %v1003 = vld [vmem:[#allocation11 + $0x2c0] sm:$0xff]
        %v1004 = vld [vmem:[#allocation11 + $0x2c8] sm:$0xff]
        %v1005 = vld [vmem:[#allocation11 + $0x2d0] sm:$0xff]
        %v1006 = vld [vmem:[#allocation11 + $0x2d8] sm:$0xff]
        %v1007 = vld [vmem:[#allocation11 + $0x2e0] sm:$0xff]
        %v1008 = vld [vmem:[#allocation11 + $0x2e8] sm:$0xff]
        %v1009 = vld [vmem:[#allocation11 + $0x2f0] sm:$0xff]
        %v1010 = vld [vmem:[#allocation11 + $0x2f8] sm:$0xff]
        %v1011 = vld [vmem:[#allocation11 + $0x300] sm:$0xff]
        %v1012 = vld [vmem:[#allocation11 + $0x308] sm:$0xff]
        %v1013 = vld [vmem:[#allocation11 + $0x310] sm:$0xff]
        %v1014 = vld [vmem:[#allocation11 + $0x318] sm:$0xff]
        %v1015 = vld [vmem:[#allocation11 + $0x320] sm:$0xff]
        %v1016 = vld [vmem:[#allocation11 + $0x328] sm:$0xff]
        %v1017 = vld [vmem:[#allocation11 + $0x330] sm:$0xff]
        %v1018 = vld [vmem:[#allocation11 + $0x338] sm:$0xff]
        %v1019 = vld [vmem:[#allocation11 + $0x340] sm:$0xff]
        %v1020 = vld [vmem:[#allocation11 + $0x348] sm:$0xff]
        %v1021 = vld [vmem:[#allocation11 + $0x350] sm:$0xff]
        %v1022 = vld [vmem:[#allocation11 + $0x358] sm:$0xff]
        %v1023 = vld [vmem:[#allocation11 + $0x360] sm:$0xff]
        %v1024 = vld [vmem:[#allocation11 + $0x368] sm:$0xff]
        %v1025 = vld [vmem:[#allocation11 + $0x370] sm:$0xff]
        %v1026 = vld [vmem:[#allocation11 + $0x378] sm:$0xff]
        %v1027 = vld [vmem:[#allocation11 + $0x380] sm:$0xff]
        %v1028 = vld [vmem:[#allocation11 + $0x388] sm:$0xff]
        %v1029 = vld [vmem:[#allocation11 + $0x390] sm:$0xff]
        %v1030 = vld [vmem:[#allocation11 + $0x398] sm:$0xff]
        %v1031 = vld [vmem:[#allocation11 + $0x3a0] sm:$0xff]
        %v1032 = vld [vmem:[#allocation11 + $0x3a8] sm:$0xff]
        %v1033 = vld [vmem:[#allocation11 + $0x3b0] sm:$0xff]
        %v1034 = vld [vmem:[#allocation11 + $0x3b8] sm:$0xff]
        %v1035 = vld [vmem:[#allocation11 + $0x3c0] sm:$0xff]
        %v1036 = vld [vmem:[#allocation11 + $0x3c8] sm:$0xff]
        %v1037 = vld [vmem:[#allocation11 + $0x3d0] sm:$0xff]
        %v1038 = vld [vmem:[#allocation11 + $0x3d8] sm:$0xff]
        %v1039 = vld [vmem:[#allocation11 + $0x3e0] sm:$0xff]
        %v1040 = vld [vmem:[#allocation11 + $0x3e8] sm:$0xff]
        %v1041 = vld [vmem:[#allocation11 + $0x3f0] sm:$0xff]
        %v1042 = vld [vmem:[#allocation11 + $0x3f8] sm:$0xff]
        %v1043 = vld [vmem:[#allocation11 + $0x400] sm:$0xff]
        %v1044 = vld [vmem:[#allocation11 + $0x408] sm:$0xff]
        %v1045 = vld [vmem:[#allocation11 + $0x410] sm:$0xff]
        %v1046 = vld [vmem:[#allocation11 + $0x418] sm:$0xff]
        %v1047 = vld [vmem:[#allocation11 + $0x420] sm:$0xff]
        %v1048 = vld [vmem:[#allocation11 + $0x428] sm:$0xff]
        %v1049 = vld [vmem:[#allocation11 + $0x430] sm:$0xff]
        %v1050 = vld [vmem:[#allocation11 + $0x438] sm:$0xff]
        %v1051 = vld [vmem:[#allocation11 + $0x440] sm:$0xff]
        %v1052 = vld [vmem:[#allocation11 + $0x448] sm:$0xff]
        %v1053 = vld [vmem:[#allocation11 + $0x450] sm:$0xff]
        %v1054 = vld [vmem:[#allocation11 + $0x458] sm:$0xff]
        %v1055 = vld [vmem:[#allocation11 + $0x460] sm:$0xff]
        %v1056 = vld [vmem:[#allocation11 + $0x468] sm:$0xff]
        %v1057 = vld [vmem:[#allocation11 + $0x470] sm:$0xff]
        %v1058 = vld [vmem:[#allocation11 + $0x478] sm:$0xff]
        %v1059 = vld [vmem:[#allocation11 + $0x480] sm:$0xff]
        %v1060 = vld [vmem:[#allocation11 + $0x488] sm:$0xff]
        %v1061 = vld [vmem:[#allocation11 + $0x490] sm:$0xff]
        %v1062 = vld [vmem:[#allocation11 + $0x498] sm:$0xff]
        %v1063 = vld [vmem:[#allocation11 + $0x4a0] sm:$0xff]
        %v1064 = vld [vmem:[#allocation11 + $0x4a8] sm:$0xff]
        %v1065 = vld [vmem:[#allocation11 + $0x4b0] sm:$0xff]
        %v1066 = vld [vmem:[#allocation11 + $0x4b8] sm:$0xff]
        %v1067 = vld [vmem:[#allocation11 + $0x4c0] sm:$0xff]
        %v1068 = vld [vmem:[#allocation11 + $0x4c8] sm:$0xff]
        %v1069 = vld [vmem:[#allocation11 + $0x4d0] sm:$0xff]
        %v1070 = vld [vmem:[#allocation11 + $0x4d8] sm:$0xff]
        %v1071 = vld [vmem:[#allocation11 + $0x4e0] sm:$0xff]
        %v1072 = vld [vmem:[#allocation11 + $0x4e8] sm:$0xff]
        %v1073 = vld [vmem:[#allocation11 + $0x4f0] sm:$0xff]
        %v1074 = vld [vmem:[#allocation11 + $0x4f8] sm:$0xff]
        %v1075 = vld [vmem:[#allocation11 + $0x500] sm:$0xff]
        %v1076 = vld [vmem:[#allocation11 + $0x508] sm:$0xff]
        %v1077 = vld [vmem:[#allocation11 + $0x510] sm:$0xff]
        %v1078 = vld [vmem:[#allocation11 + $0x518] sm:$0xff]
        %v1079 = vld [vmem:[#allocation11 + $0x520] sm:$0xff]
        %v1080 = vld [vmem:[#allocation11 + $0x528] sm:$0xff]
        %v1081 = vld [vmem:[#allocation11 + $0x530] sm:$0xff]
        %v1082 = vld [vmem:[#allocation11 + $0x538] sm:$0xff]
        %v1083 = vld [vmem:[#allocation11 + $0x540] sm:$0xff]
        %v1084 = vld [vmem:[#allocation11 + $0x548] sm:$0xff]
        %v1085 = vld [vmem:[#allocation11 + $0x550] sm:$0xff]
        %v1086 = vld [vmem:[#allocation11 + $0x558] sm:$0xff]
        %v1087 = vld [vmem:[#allocation11 + $0x560] sm:$0xff]
        %v1088 = vld [vmem:[#allocation11 + $0x568] sm:$0xff]
        %v1089 = vld [vmem:[#allocation11 + $0x570] sm:$0xff]
        %v1090 = vld [vmem:[#allocation11 + $0x578] sm:$0xff]
        %v1091 = vld [vmem:[#allocation11 + $0x580] sm:$0xff]
        %v1092 = vld [vmem:[#allocation11 + $0x588] sm:$0xff]
        %v1093 = vld [vmem:[#allocation11 + $0x590] sm:$0xff]
        %v1094 = vld [vmem:[#allocation11 + $0x598] sm:$0xff]
        %v1095 = vld [vmem:[#allocation11 + $0x5a0] sm:$0xff]
        %v1096 = vld [vmem:[#allocation11 + $0x5a8] sm:$0xff]
        %v1097 = vld [vmem:[#allocation11 + $0x5b0] sm:$0xff]
        %v1098 = vld [vmem:[#allocation11 + $0x5b8] sm:$0xff]
        %v1099 = vld [vmem:[#allocation11 + $0x5c0] sm:$0xff]
        %v1100 = vld [vmem:[#allocation11 + $0x5c8] sm:$0xff]
        %v1101 = vld [vmem:[#allocation11 + $0x5d0] sm:$0xff]
        %v1102 = vld [vmem:[#allocation11 + $0x5d8] sm:$0xff]
        %v1103 = vld [vmem:[#allocation11 + $0x5e0] sm:$0xff]
        %v1104 = vld [vmem:[#allocation11 + $0x5e8] sm:$0xff]
        %v1105 = vld [vmem:[#allocation11 + $0x5f0] sm:$0xff]
        %v1106 = vld [vmem:[#allocation11 + $0x5f8] sm:$0xff]
        %v1107 = vld [vmem:[#allocation11 + $0x600] sm:$0xff]
        %v1108 = vld [vmem:[#allocation11 + $0x608] sm:$0xff]
        %v1109 = vld [vmem:[#allocation11 + $0x610] sm:$0xff]
        %v1110 = vld [vmem:[#allocation11 + $0x618] sm:$0xff]
        %v1111 = vld [vmem:[#allocation11 + $0x620] sm:$0xff]
        %v1112 = vld [vmem:[#allocation11 + $0x628] sm:$0xff]
        %v1113 = vld [vmem:[#allocation11 + $0x630] sm:$0xff]
        %v1114 = vld [vmem:[#allocation11 + $0x638] sm:$0xff]
        %v1115 = vld [vmem:[#allocation11 + $0x640] sm:$0xff]
        %v1116 = vld [vmem:[#allocation11 + $0x648] sm:$0xff]
        %v1117 = vld [vmem:[#allocation11 + $0x650] sm:$0xff]
        %v1118 = vld [vmem:[#allocation11 + $0x658] sm:$0xff]
        %v1119 = vld [vmem:[#allocation11 + $0x660] sm:$0xff]
        %v1120 = vld [vmem:[#allocation11 + $0x668] sm:$0xff]
        %v1121 = vld [vmem:[#allocation11 + $0x670] sm:$0xff]
        %v1122 = vld [vmem:[#allocation11 + $0x678] sm:$0xff]
        %v1123 = vld [vmem:[#allocation11 + $0x680] sm:$0xff]
        %v1124 = vld [vmem:[#allocation11 + $0x688] sm:$0xff]
        %v1125 = vld [vmem:[#allocation11 + $0x690] sm:$0xff]
        %v1126 = vld [vmem:[#allocation11 + $0x698] sm:$0xff]
        %v1127 = vld [vmem:[#allocation11 + $0x6a0] sm:$0xff]
        %v1128 = vld [vmem:[#allocation11 + $0x6a8] sm:$0xff]
        %v1129 = vld [vmem:[#allocation11 + $0x6b0] sm:$0xff]
        %v1130 = vld [vmem:[#allocation11 + $0x6b8] sm:$0xff]
        %v1131 = vld [vmem:[#allocation11 + $0x6c0] sm:$0xff]
        %v1132 = vld [vmem:[#allocation11 + $0x6c8] sm:$0xff]
        %v1133 = vld [vmem:[#allocation11 + $0x6d0] sm:$0xff]
        %v1134 = vld [vmem:[#allocation11 + $0x6d8] sm:$0xff]
        %v1135 = vld [vmem:[#allocation11 + $0x6e0] sm:$0xff]
        %v1136 = vld [vmem:[#allocation11 + $0x6e8] sm:$0xff]
        %v1137 = vld [vmem:[#allocation11 + $0x6f0] sm:$0xff]
        %v1138 = vld [vmem:[#allocation11 + $0x6f8] sm:$0xff]
        %v1139 = vld [vmem:[#allocation11 + $0x700] sm:$0xff]
        %v1140 = vld [vmem:[#allocation11 + $0x708] sm:$0xff]
        %v1141 = vld [vmem:[#allocation11 + $0x710] sm:$0xff]
        %v1142 = vld [vmem:[#allocation11 + $0x718] sm:$0xff]
        %v1143 = vld [vmem:[#allocation11 + $0x720] sm:$0xff]
        %v1144 = vld [vmem:[#allocation11 + $0x728] sm:$0xff]
        %v1145 = vld [vmem:[#allocation11 + $0x730] sm:$0xff]
        %v1146 = vld [vmem:[#allocation11 + $0x738] sm:$0xff]
        %v1147 = vld [vmem:[#allocation11 + $0x740] sm:$0xff]
        %v1148 = vld [vmem:[#allocation11 + $0x748] sm:$0xff]
        %v1149 = vld [vmem:[#allocation11 + $0x750] sm:$0xff]
        %v1150 = vld [vmem:[#allocation11 + $0x758] sm:$0xff]
        %v1151 = vld [vmem:[#allocation11 + $0x760] sm:$0xff]
        %v1152 = vld [vmem:[#allocation11 + $0x768] sm:$0xff]
        %v1153 = vld [vmem:[#allocation11 + $0x770] sm:$0xff]
        %v1154 = vld [vmem:[#allocation11 + $0x778] sm:$0xff]
        %v1155 = vld [vmem:[#allocation11 + $0x780] sm:$0xff]
        %v1156 = vld [vmem:[#allocation11 + $0x788] sm:$0xff]
        %v1157 = vld [vmem:[#allocation11 + $0x790] sm:$0xff]
        %v1158 = vld [vmem:[#allocation11 + $0x798] sm:$0xff]
        %v1159 = vld [vmem:[#allocation11 + $0x7a0] sm:$0xff]
        %v1160 = vld [vmem:[#allocation11 + $0x7a8] sm:$0xff]
        %v1161 = vld [vmem:[#allocation11 + $0x7b0] sm:$0xff]
        %v1162 = vld [vmem:[#allocation11 + $0x7b8] sm:$0xff]
        %v1163 = vld [vmem:[#allocation11 + $0x7c0] sm:$0xff]
        %v1164 = vld [vmem:[#allocation11 + $0x7c8] sm:$0xff]
        %v1165 = vld [vmem:[#allocation11 + $0x7d0] sm:$0xff]
        %v1166 = vld [vmem:[#allocation11 + $0x7d8] sm:$0xff]
        %v1167 = vld [vmem:[#allocation11 + $0x7e0] sm:$0xff]
        %v1168 = vld [vmem:[#allocation11 + $0x7e8] sm:$0xff]
        %v1169 = vld [vmem:[#allocation11 + $0x7f0] sm:$0xff]
        %v1170 = vld [vmem:[#allocation11 + $0x7f8] sm:$0xff]
        %v1171 = vld [vmem:[#allocation11 + $0x800] sm:$0xff]
        %v1172 = vld [vmem:[#allocation11 + $0x808] sm:$0xff]
        %v1173 = vld [vmem:[#allocation11 + $0x810] sm:$0xff]
        %v1174 = vld [vmem:[#allocation11 + $0x818] sm:$0xff]
        %v1175 = vld [vmem:[#allocation11 + $0x820] sm:$0xff]
        %v1176 = vld [vmem:[#allocation11 + $0x828] sm:$0xff]
        %v1177 = vld [vmem:[#allocation11 + $0x830] sm:$0xff]
        %v1178 = vld [vmem:[#allocation11 + $0x838] sm:$0xff]
        %v1179 = vld [vmem:[#allocation11 + $0x840] sm:$0xff]
        %v1180 = vld [vmem:[#allocation11 + $0x848] sm:$0xff]
        %v1181 = vld [vmem:[#allocation11 + $0x850] sm:$0xff]
        %v1182 = vld [vmem:[#allocation11 + $0x858] sm:$0xff]
        %v1183 = vld [vmem:[#allocation11 + $0x860] sm:$0xff]
        %v1184 = vld [vmem:[#allocation11 + $0x868] sm:$0xff]
        %v1185 = vld [vmem:[#allocation11 + $0x870] sm:$0xff]
        %v1186 = vld [vmem:[#allocation11 + $0x878] sm:$0xff]
        %v1187 = vld [vmem:[#allocation11 + $0x880] sm:$0xff]
        %v1188 = vld [vmem:[#allocation11 + $0x888] sm:$0xff]
        %v1189 = vld [vmem:[#allocation11 + $0x890] sm:$0xff]
        %v1190 = vld [vmem:[#allocation11 + $0x898] sm:$0xff]
        %v1191 = vld [vmem:[#allocation11 + $0x8a0] sm:$0xff]
        %v1192 = vld [vmem:[#allocation11 + $0x8a8] sm:$0xff]
        %v1193 = vld [vmem:[#allocation11 + $0x8b0] sm:$0xff]
        %v1194 = vld [vmem:[#allocation11 + $0x8b8] sm:$0xff]
        %v1195 = vld [vmem:[#allocation11 + $0x8c0] sm:$0xff]
        %v1196 = vld [vmem:[#allocation11 + $0x8c8] sm:$0xff]
        %v1197 = vld [vmem:[#allocation11 + $0x8d0] sm:$0xff]
        %v1198 = vld [vmem:[#allocation11 + $0x8d8] sm:$0xff]
        %v1199 = vld [vmem:[#allocation11 + $0x8e0] sm:$0xff]
        %v1200 = vld [vmem:[#allocation11 + $0x8e8] sm:$0xff]
        %v1201 = vld [vmem:[#allocation11 + $0x8f0] sm:$0xff]
        %v1202 = vld [vmem:[#allocation11 + $0x8f8] sm:$0xff]
        %v1203 = vld [vmem:[#allocation11 + $0x900] sm:$0xff]
        %v1204 = vld [vmem:[#allocation11 + $0x908] sm:$0xff]
        %v1205 = vld [vmem:[#allocation11 + $0x910] sm:$0xff]
        %v1206 = vld [vmem:[#allocation11 + $0x918] sm:$0xff]
        %v1207 = vld [vmem:[#allocation11 + $0x920] sm:$0xff]
        %v1208 = vld [vmem:[#allocation11 + $0x928] sm:$0xff]
        %v1209 = vld [vmem:[#allocation11 + $0x930] sm:$0xff]
        %v1210 = vld [vmem:[#allocation11 + $0x938] sm:$0xff]
        %v1211 = vld [vmem:[#allocation11 + $0x940] sm:$0xff]
        %v1212 = vld [vmem:[#allocation11 + $0x948] sm:$0xff]
        %v1213 = vld [vmem:[#allocation11 + $0x950] sm:$0xff]
        %v1214 = vld [vmem:[#allocation11 + $0x958] sm:$0xff]
        %v1215 = vld [vmem:[#allocation11 + $0x960] sm:$0xff]
        %v1216 = vld [vmem:[#allocation11 + $0x968] sm:$0xff]
        %v1217 = vld [vmem:[#allocation11 + $0x970] sm:$0xff]
        %v1218 = vld [vmem:[#allocation11 + $0x978] sm:$0xff]
        %v1219 = vld [vmem:[#allocation11 + $0x980] sm:$0xff]
        %v1220 = vld [vmem:[#allocation11 + $0x988] sm:$0xff]
        %v1221 = vld [vmem:[#allocation11 + $0x990] sm:$0xff]
        %v1222 = vld [vmem:[#allocation11 + $0x998] sm:$0xff]
        %v1223 = vld [vmem:[#allocation11 + $0x9a0] sm:$0xff]
        %v1224 = vld [vmem:[#allocation11 + $0x9a8] sm:$0xff]
        %v1225 = vld [vmem:[#allocation11 + $0x9b0] sm:$0xff]
        %v1226 = vld [vmem:[#allocation11 + $0x9b8] sm:$0xff]
        %v1227 = vld [vmem:[#allocation11 + $0x9c0] sm:$0xff]
        %v1228 = vld [vmem:[#allocation11 + $0x9c8] sm:$0xff]
        %v1229 = vld [vmem:[#allocation11 + $0x9d0] sm:$0xff]
        %v1230 = vld [vmem:[#allocation11 + $0x9d8] sm:$0xff]
        %v1231 = vld [vmem:[#allocation11 + $0x9e0] sm:$0xff]
        %v1232 = vld [vmem:[#allocation11 + $0x9e8] sm:$0xff]
        %v1233 = vld [vmem:[#allocation11 + $0x9f0] sm:$0xff]
        %v1234 = vld [vmem:[#allocation11 + $0x9f8] sm:$0xff]
        %v1235 = vld [vmem:[#allocation11 + $0xa00] sm:$0xff]
        %v1236 = vld [vmem:[#allocation11 + $0xa08] sm:$0xff]
        %v1237 = vld [vmem:[#allocation11 + $0xa10] sm:$0xff]
        %v1238 = vld [vmem:[#allocation11 + $0xa18] sm:$0xff]
        %v1239 = vld [vmem:[#allocation11 + $0xa20] sm:$0xff]
        %v1240 = vld [vmem:[#allocation11 + $0xa28] sm:$0xff]
        %v1241 = vld [vmem:[#allocation11 + $0xa30] sm:$0xff]
        %v1242 = vld [vmem:[#allocation11 + $0xa38] sm:$0xff]
        %v1243 = vld [vmem:[#allocation11 + $0xa40] sm:$0xff]
        %v1244 = vld [vmem:[#allocation11 + $0xa48] sm:$0xff]
        %v1245 = vld [vmem:[#allocation11 + $0xa50] sm:$0xff]
        %v1246 = vld [vmem:[#allocation11 + $0xa58] sm:$0xff]
        %v1247 = vld [vmem:[#allocation11 + $0xa60] sm:$0xff]
        %v1248 = vld [vmem:[#allocation11 + $0xa68] sm:$0xff]
        %v1249 = vld [vmem:[#allocation11 + $0xa70] sm:$0xff]
        %v1250 = vld [vmem:[#allocation11 + $0xa78] sm:$0xff]
        %v1251 = vld [vmem:[#allocation11 + $0xa80] sm:$0xff]
        %v1252 = vld [vmem:[#allocation11 + $0xa88] sm:$0xff]
        %v1253 = vld [vmem:[#allocation11 + $0xa90] sm:$0xff]
        %v1254 = vld [vmem:[#allocation11 + $0xa98] sm:$0xff]
        %v1255 = vld [vmem:[#allocation11 + $0xaa0] sm:$0xff]
        %v1256 = vld [vmem:[#allocation11 + $0xaa8] sm:$0xff]
        %v1257 = vld [vmem:[#allocation11 + $0xab0] sm:$0xff]
        %v1258 = vld [vmem:[#allocation11 + $0xab8] sm:$0xff]
        %v1259 = vld [vmem:[#allocation11 + $0xac0] sm:$0xff]
        %v1260 = vld [vmem:[#allocation11 + $0xac8] sm:$0xff]
        %v1261 = vld [vmem:[#allocation11 + $0xad0] sm:$0xff]
        %v1262 = vld [vmem:[#allocation11 + $0xad8] sm:$0xff]
        %v1263 = vld [vmem:[#allocation11 + $0xae0] sm:$0xff]
        %v1264 = vld [vmem:[#allocation11 + $0xae8] sm:$0xff]
        %v1265 = vld [vmem:[#allocation11 + $0xaf0] sm:$0xff]
        %v1266 = vld [vmem:[#allocation11 + $0xaf8] sm:$0xff]
        %v1267 = vld [vmem:[#allocation11 + $0xb00] sm:$0xff]
        %v1268 = vld [vmem:[#allocation11 + $0xb08] sm:$0xff]
        %v1269 = vld [vmem:[#allocation11 + $0xb10] sm:$0xff]
        %v1270 = vld [vmem:[#allocation11 + $0xb18] sm:$0xff]
        %v1271 = vld [vmem:[#allocation11 + $0xb20] sm:$0xff]
        %v1272 = vld [vmem:[#allocation11 + $0xb28] sm:$0xff]
        %v1273 = vld [vmem:[#allocation11 + $0xb30] sm:$0xff]
        %v1274 = vld [vmem:[#allocation11 + $0xb38] sm:$0xff]
        %v1275 = vld [vmem:[#allocation11 + $0xb40] sm:$0xff]
        %v1276 = vld [vmem:[#allocation11 + $0xb48] sm:$0xff]
        %v1277 = vld [vmem:[#allocation11 + $0xb50] sm:$0xff]
        %v1278 = vld [vmem:[#allocation11 + $0xb58] sm:$0xff]
        %v1279 = vld [vmem:[#allocation11 + $0xb60] sm:$0xff]
        %v1280 = vld [vmem:[#allocation11 + $0xb68] sm:$0xff]
        %v1281 = vld [vmem:[#allocation11 + $0xb70] sm:$0xff]
        %v1282 = vld [vmem:[#allocation11 + $0xb78] sm:$0xff]
        %v1283 = vld [vmem:[#allocation11 + $0xb80] sm:$0xff]
        %v1284 = vld [vmem:[#allocation11 + $0xb88] sm:$0xff]
        %v1285 = vld [vmem:[#allocation11 + $0xb90] sm:$0xff]
        %v1286 = vld [vmem:[#allocation11 + $0xb98] sm:$0xff]
        %v1287 = vld [vmem:[#allocation11 + $0xba0] sm:$0xff]
        %v1288 = vld [vmem:[#allocation11 + $0xba8] sm:$0xff]
        %v1289 = vld [vmem:[#allocation11 + $0xbb0] sm:$0xff]
        %v1290 = vld [vmem:[#allocation11 + $0xbb8] sm:$0xff]
        %v1291 = vld [vmem:[#allocation11 + $0xbc0] sm:$0xff]
        %v1292 = vld [vmem:[#allocation11 + $0xbc8] sm:$0xff]
        %v1293 = vld [vmem:[#allocation11 + $0xbd0] sm:$0xff]
        %v1294 = vld [vmem:[#allocation11 + $0xbd8] sm:$0xff]
        %v1295 = vld [vmem:[#allocation11 + $0xbe0] sm:$0xff]
        %v1296 = vld [vmem:[#allocation11 + $0xbe8] sm:$0xff]
        %v1297 = vld [vmem:[#allocation11 + $0xbf0] sm:$0xff]
        %v1298 = vld [vmem:[#allocation11 + $0xbf8] sm:$0xff]
        %v1299 = vld [vmem:[#allocation11 + $0xc00] sm:$0xff]
        %v1300 = vld [vmem:[#allocation11 + $0xc08] sm:$0xff]
        %v1301 = vld [vmem:[#allocation11 + $0xc10] sm:$0xff]
        %v1302 = vld [vmem:[#allocation11 + $0xc18] sm:$0xff]
        %v1303 = vld [vmem:[#allocation11 + $0xc20] sm:$0xff]
        %v1304 = vld [vmem:[#allocation11 + $0xc28] sm:$0xff]
        %v1305 = vld [vmem:[#allocation11 + $0xc30] sm:$0xff]
        %v1306 = vld [vmem:[#allocation11 + $0xc38] sm:$0xff]
        %v1307 = vld [vmem:[#allocation11 + $0xc40] sm:$0xff]
        %v1308 = vld [vmem:[#allocation11 + $0xc48] sm:$0xff]
        %v1309 = vld [vmem:[#allocation11 + $0xc50] sm:$0xff]
        %v1310 = vld [vmem:[#allocation11 + $0xc58] sm:$0xff]
        %v1311 = vld [vmem:[#allocation11 + $0xc60] sm:$0xff]
        %v1312 = vld [vmem:[#allocation11 + $0xc68] sm:$0xff]
        %v1313 = vld [vmem:[#allocation11 + $0xc70] sm:$0xff]
        %v1314 = vld [vmem:[#allocation11 + $0xc78] sm:$0xff]
        %v1315 = vld [vmem:[#allocation11 + $0xc80] sm:$0xff]
        %v1316 = vld [vmem:[#allocation11 + $0xc88] sm:$0xff]
        %v1317 = vld [vmem:[#allocation11 + $0xc90] sm:$0xff]
        %v1318 = vld [vmem:[#allocation11 + $0xc98] sm:$0xff]
        %v1319 = vld [vmem:[#allocation11 + $0xca0] sm:$0xff]
        %v1320 = vld [vmem:[#allocation11 + $0xca8] sm:$0xff]
        %v1321 = vld [vmem:[#allocation11 + $0xcb0] sm:$0xff]
        %v1322 = vld [vmem:[#allocation11 + $0xcb8] sm:$0xff]
        %v1323 = vld [vmem:[#allocation11 + $0xcc0] sm:$0xff]
        %v1324 = vld [vmem:[#allocation11 + $0xcc8] sm:$0xff]
        %v1325 = vld [vmem:[#allocation11 + $0xcd0] sm:$0xff]
        %v1326 = vld [vmem:[#allocation11 + $0xcd8] sm:$0xff]
        %v1327 = vld [vmem:[#allocation11 + $0xce0] sm:$0xff]
        %v1328 = vld [vmem:[#allocation11 + $0xce8] sm:$0xff]
        %v1329 = vld [vmem:[#allocation11 + $0xcf0] sm:$0xff]
        %v1330 = vld [vmem:[#allocation11 + $0xcf8] sm:$0xff]
        %v1331 = vld [vmem:[#allocation11 + $0xd00] sm:$0xff]
        %v1332 = vld [vmem:[#allocation11 + $0xd08] sm:$0xff]
        %v1333 = vld [vmem:[#allocation11 + $0xd10] sm:$0xff]
        %v1334 = vld [vmem:[#allocation11 + $0xd18] sm:$0xff]
        %v1335 = vld [vmem:[#allocation11 + $0xd20] sm:$0xff]
        %v1336 = vld [vmem:[#allocation11 + $0xd28] sm:$0xff]
        %v1337 = vld [vmem:[#allocation11 + $0xd30] sm:$0xff]
        %v1338 = vld [vmem:[#allocation11 + $0xd38] sm:$0xff]
        %v1339 = vld [vmem:[#allocation11 + $0xd40] sm:$0xff]
        %v1340 = vld [vmem:[#allocation11 + $0xd48] sm:$0xff]
        %v1341 = vld [vmem:[#allocation11 + $0xd50] sm:$0xff]
        %v1342 = vld [vmem:[#allocation11 + $0xd58] sm:$0xff]
        %v1343 = vld [vmem:[#allocation11 + $0xd60] sm:$0xff]
        %v1344 = vld [vmem:[#allocation11 + $0xd68] sm:$0xff]
        %v1345 = vld [vmem:[#allocation11 + $0xd70] sm:$0xff]
        %v1346 = vld [vmem:[#allocation11 + $0xd78] sm:$0xff]
        %v1347 = vld [vmem:[#allocation11 + $0xd80] sm:$0xff]
        %v1348 = vld [vmem:[#allocation11 + $0xd88] sm:$0xff]
        %v1349 = vld [vmem:[#allocation11 + $0xd90] sm:$0xff]
        %v1350 = vld [vmem:[#allocation11 + $0xd98] sm:$0xff]
        %v1351 = vld [vmem:[#allocation11 + $0xda0] sm:$0xff]
        %v1352 = vld [vmem:[#allocation11 + $0xda8] sm:$0xff]
        %v1353 = vld [vmem:[#allocation11 + $0xdb0] sm:$0xff]
        %v1354 = vld [vmem:[#allocation11 + $0xdb8] sm:$0xff]
        %v1355 = vld [vmem:[#allocation11 + $0xdc0] sm:$0xff]
        %v1356 = vld [vmem:[#allocation11 + $0xdc8] sm:$0xff]
        %v1357 = vld [vmem:[#allocation11 + $0xdd0] sm:$0xff]
        %v1358 = vld [vmem:[#allocation11 + $0xdd8] sm:$0xff]
        %v1359 = vld [vmem:[#allocation11 + $0xde0] sm:$0xff]
        %v1360 = vld [vmem:[#allocation11 + $0xde8] sm:$0xff]
        %v1361 = vld [vmem:[#allocation11 + $0xdf0] sm:$0xff]
        %v1362 = vld [vmem:[#allocation11 + $0xdf8] sm:$0xff]
        %v1363 = vld [vmem:[#allocation11 + $0xe00] sm:$0xff]
        %v1364 = vld [vmem:[#allocation11 + $0xe08] sm:$0xff]
        %v1365 = vld [vmem:[#allocation11 + $0xe10] sm:$0xff]
        %v1366 = vld [vmem:[#allocation11 + $0xe18] sm:$0xff]
        %v1367 = vld [vmem:[#allocation11 + $0xe20] sm:$0xff]
        %v1368 = vld [vmem:[#allocation11 + $0xe28] sm:$0xff]
        %v1369 = vld [vmem:[#allocation11 + $0xe30] sm:$0xff]
        %v1370 = vld [vmem:[#allocation11 + $0xe38] sm:$0xff]
        %v1371 = vld [vmem:[#allocation11 + $0xe40] sm:$0xff]
        %v1372 = vld [vmem:[#allocation11 + $0xe48] sm:$0xff]
        %v1373 = vld [vmem:[#allocation11 + $0xe50] sm:$0xff]
        %v1374 = vld [vmem:[#allocation11 + $0xe58] sm:$0xff]
        %v1375 = vld [vmem:[#allocation11 + $0xe60] sm:$0xff]
        %v1376 = vld [vmem:[#allocation11 + $0xe68] sm:$0xff]
        %v1377 = vld [vmem:[#allocation11 + $0xe70] sm:$0xff]
        %v1378 = vld [vmem:[#allocation11 + $0xe78] sm:$0xff]
        %v1379 = vld [vmem:[#allocation11 + $0xe80] sm:$0xff]
        %v1380 = vld [vmem:[#allocation11 + $0xe88] sm:$0xff]
        %v1381 = vld [vmem:[#allocation11 + $0xe90] sm:$0xff]
        %v1382 = vld [vmem:[#allocation11 + $0xe98] sm:$0xff]
        %v1383 = vld [vmem:[#allocation11 + $0xea0] sm:$0xff]
        %v1384 = vld [vmem:[#allocation11 + $0xea8] sm:$0xff]
        %v1385 = vld [vmem:[#allocation11 + $0xeb0] sm:$0xff]
        %v1386 = vld [vmem:[#allocation11 + $0xeb8] sm:$0xff]
        %v1387 = vld [vmem:[#allocation11 + $0xec0] sm:$0xff]
        %v1388 = vld [vmem:[#allocation11 + $0xec8] sm:$0xff]
        %v1389 = vld [vmem:[#allocation11 + $0xed0] sm:$0xff]
        %v1390 = vld [vmem:[#allocation11 + $0xed8] sm:$0xff]
        %v1391 = vld [vmem:[#allocation11 + $0xee0] sm:$0xff]
        %v1392 = vld [vmem:[#allocation11 + $0xee8] sm:$0xff]
        %v1393 = vld [vmem:[#allocation11 + $0xef0] sm:$0xff]
        %v1394 = vld [vmem:[#allocation11 + $0xef8] sm:$0xff]
        %v1395 = vld [vmem:[#allocation11 + $0xf00] sm:$0xff]
        %v1396 = vld [vmem:[#allocation11 + $0xf08] sm:$0xff]
        %v1397 = vld [vmem:[#allocation11 + $0xf10] sm:$0xff]
        %v1398 = vld [vmem:[#allocation11 + $0xf18] sm:$0xff]
        %v1399 = vld [vmem:[#allocation11 + $0xf20] sm:$0xff]
        %v1400 = vld [vmem:[#allocation11 + $0xf28] sm:$0xff]
        %v1401 = vld [vmem:[#allocation11 + $0xf30] sm:$0xff]
        %v1402 = vld [vmem:[#allocation11 + $0xf38] sm:$0xff]
        %v1403 = vld [vmem:[#allocation11 + $0xf40] sm:$0xff]
        %v1404 = vld [vmem:[#allocation11 + $0xf48] sm:$0xff]
        %v1405 = vld [vmem:[#allocation11 + $0xf50] sm:$0xff]
        %v1406 = vld [vmem:[#allocation11 + $0xf58] sm:$0xff]
        %v1407 = vld [vmem:[#allocation11 + $0xf60] sm:$0xff]
        %v1408 = vld [vmem:[#allocation11 + $0xf68] sm:$0xff]
        %v1409 = vld [vmem:[#allocation11 + $0xf70] sm:$0xff]
        %v1410 = vld [vmem:[#allocation11 + $0xf78] sm:$0xff]
        %v1411 = vld [vmem:[#allocation11 + $0xf80] sm:$0xff]
        %v1412 = vld [vmem:[#allocation11 + $0xf88] sm:$0xff]
        %v1413 = vld [vmem:[#allocation11 + $0xf90] sm:$0xff]
        %v1414 = vld [vmem:[#allocation11 + $0xf98] sm:$0xff]
        %v1415 = vld [vmem:[#allocation11 + $0xfa0] sm:$0xff]
        %v1416 = vld [vmem:[#allocation11 + $0xfa8] sm:$0xff]
        %v1417 = vld [vmem:[#allocation11 + $0xfb0] sm:$0xff]
        %v1418 = vld [vmem:[#allocation11 + $0xfb8] sm:$0xff]
        %v1419 = vld [vmem:[#allocation11 + $0xfc0] sm:$0xff]
        %v1420 = vld [vmem:[#allocation11 + $0xfc8] sm:$0xff]
        %v1421 = vld [vmem:[#allocation11 + $0xfd0] sm:$0xff]
        %v1422 = vld [vmem:[#allocation11 + $0xfd8] sm:$0xff]
        %v1423 = vld [vmem:[#allocation11 + $0xfe0] sm:$0xff]
        %v1424 = vld [vmem:[#allocation11 + $0xfe8] sm:$0xff]
        %v1425 = vld [vmem:[#allocation11 + $0xff0] sm:$0xff]
        %v1426 = vld [vmem:[#allocation11 + $0xff8] sm:$0xff]
        %v1939 = vunpack.c.l.b16 %v915
        %v1940 = vunpack.c.h.b16 %v915
        %v1941 = vunpack.c.l.b16 %v916
        %v1942 = vunpack.c.h.b16 %v916
        %v1943 = vunpack.c.l.b16 %v917
        %v1944 = vunpack.c.h.b16 %v917
        %v1945 = vunpack.c.l.b16 %v918
        %v1946 = vunpack.c.h.b16 %v918
        %v1947 = vunpack.c.l.b16 %v919
        %v1948 = vunpack.c.h.b16 %v919
        %v1949 = vunpack.c.l.b16 %v920
        %v1950 = vunpack.c.h.b16 %v920
        %v1951 = vunpack.c.l.b16 %v921
        %v1952 = vunpack.c.h.b16 %v921
        %v1953 = vunpack.c.l.b16 %v922
        %v1954 = vunpack.c.h.b16 %v922
        %v1955 = vunpack.c.l.b16 %v923
        %v1956 = vunpack.c.h.b16 %v923
        %v1957 = vunpack.c.l.b16 %v924
        %v1958 = vunpack.c.h.b16 %v924
        %v1959 = vunpack.c.l.b16 %v925
        %v1960 = vunpack.c.h.b16 %v925
        %v1961 = vunpack.c.l.b16 %v926
        %v1962 = vunpack.c.h.b16 %v926
        %v1963 = vunpack.c.l.b16 %v927
        %v1964 = vunpack.c.h.b16 %v927
        %v1965 = vunpack.c.l.b16 %v928
        %v1966 = vunpack.c.h.b16 %v928
        %v1967 = vunpack.c.l.b16 %v929
        %v1968 = vunpack.c.h.b16 %v929
        %v1969 = vunpack.c.l.b16 %v930
        %v1970 = vunpack.c.h.b16 %v930
        %v1971 = vunpack.c.l.b16 %v931
        %v1972 = vunpack.c.h.b16 %v931
        %v1973 = vunpack.c.l.b16 %v932
        %v1974 = vunpack.c.h.b16 %v932
        %v1975 = vunpack.c.l.b16 %v933
        %v1976 = vunpack.c.h.b16 %v933
        %v1977 = vunpack.c.l.b16 %v934
        %v1978 = vunpack.c.h.b16 %v934
        %v1979 = vunpack.c.l.b16 %v935
        %v1980 = vunpack.c.h.b16 %v935
        %v1981 = vunpack.c.l.b16 %v936
        %v1982 = vunpack.c.h.b16 %v936
        %v1983 = vunpack.c.l.b16 %v937
        %v1984 = vunpack.c.h.b16 %v937
        %v1985 = vunpack.c.l.b16 %v938
        %v1986 = vunpack.c.h.b16 %v938
        %v1987 = vunpack.c.l.b16 %v939
        %v1988 = vunpack.c.h.b16 %v939
        %v1989 = vunpack.c.l.b16 %v940
        %v1990 = vunpack.c.h.b16 %v940
        %v1991 = vunpack.c.l.b16 %v941
        %v1992 = vunpack.c.h.b16 %v941
        %v1993 = vunpack.c.l.b16 %v942
        %v1994 = vunpack.c.h.b16 %v942
        %v1995 = vunpack.c.l.b16 %v943
        %v1996 = vunpack.c.h.b16 %v943
        %v1997 = vunpack.c.l.b16 %v944
        %v1998 = vunpack.c.h.b16 %v944
        %v1999 = vunpack.c.l.b16 %v945
        %v2000 = vunpack.c.h.b16 %v945
        %v2001 = vunpack.c.l.b16 %v946
        %v2002 = vunpack.c.h.b16 %v946
        %v2003 = vunpack.c.l.b16 %v947
        %v2004 = vunpack.c.h.b16 %v947
        %v2005 = vunpack.c.l.b16 %v948
        %v2006 = vunpack.c.h.b16 %v948
        %v2007 = vunpack.c.l.b16 %v949
        %v2008 = vunpack.c.h.b16 %v949
        %v2009 = vunpack.c.l.b16 %v950
        %v2010 = vunpack.c.h.b16 %v950
        %v2011 = vunpack.c.l.b16 %v951
        %v2012 = vunpack.c.h.b16 %v951
        %v2013 = vunpack.c.l.b16 %v952
        %v2014 = vunpack.c.h.b16 %v952
        %v2015 = vunpack.c.l.b16 %v953
        %v2016 = vunpack.c.h.b16 %v953
        %v2017 = vunpack.c.l.b16 %v954
        %v2018 = vunpack.c.h.b16 %v954
        %v2019 = vunpack.c.l.b16 %v955
        %v2020 = vunpack.c.h.b16 %v955
        %v2021 = vunpack.c.l.b16 %v956
        %v2022 = vunpack.c.h.b16 %v956
        %v2023 = vunpack.c.l.b16 %v957
        %v2024 = vunpack.c.h.b16 %v957
        %v2025 = vunpack.c.l.b16 %v958
        %v2026 = vunpack.c.h.b16 %v958
        %v2027 = vunpack.c.l.b16 %v959
        %v2028 = vunpack.c.h.b16 %v959
        %v2029 = vunpack.c.l.b16 %v960
        %v2030 = vunpack.c.h.b16 %v960
        %v2031 = vunpack.c.l.b16 %v961
        %v2032 = vunpack.c.h.b16 %v961
        %v2033 = vunpack.c.l.b16 %v962
        %v2034 = vunpack.c.h.b16 %v962
        %v2035 = vunpack.c.l.b16 %v963
        %v2036 = vunpack.c.h.b16 %v963
        %v2037 = vunpack.c.l.b16 %v964
        %v2038 = vunpack.c.h.b16 %v964
        %v2039 = vunpack.c.l.b16 %v965
        %v2040 = vunpack.c.h.b16 %v965
        %v2041 = vunpack.c.l.b16 %v966
        %v2042 = vunpack.c.h.b16 %v966
        %v2043 = vunpack.c.l.b16 %v967
        %v2044 = vunpack.c.h.b16 %v967
        %v2045 = vunpack.c.l.b16 %v968
        %v2046 = vunpack.c.h.b16 %v968
        %v2047 = vunpack.c.l.b16 %v969
        %v2048 = vunpack.c.h.b16 %v969
        %v2049 = vunpack.c.l.b16 %v970
        %v2050 = vunpack.c.h.b16 %v970
        %v2051 = vunpack.c.l.b16 %v971
        %v2052 = vunpack.c.h.b16 %v971
        %v2053 = vunpack.c.l.b16 %v972
        %v2054 = vunpack.c.h.b16 %v972
        %v2055 = vunpack.c.l.b16 %v973
        %v2056 = vunpack.c.h.b16 %v973
        %v2057 = vunpack.c.l.b16 %v974
        %v2058 = vunpack.c.h.b16 %v974
        %v2059 = vunpack.c.l.b16 %v975
        %v2060 = vunpack.c.h.b16 %v975
        %v2061 = vunpack.c.l.b16 %v976
        %v2062 = vunpack.c.h.b16 %v976
        %v2063 = vunpack.c.l.b16 %v977
        %v2064 = vunpack.c.h.b16 %v977
        %v2065 = vunpack.c.l.b16 %v978
        %v2066 = vunpack.c.h.b16 %v978
        %v2067 = vunpack.c.l.b16 %v979
        %v2068 = vunpack.c.h.b16 %v979
        %v2069 = vunpack.c.l.b16 %v980
        %v2070 = vunpack.c.h.b16 %v980
        %v2071 = vunpack.c.l.b16 %v981
        %v2072 = vunpack.c.h.b16 %v981
        %v2073 = vunpack.c.l.b16 %v982
        %v2074 = vunpack.c.h.b16 %v982
        %v2075 = vunpack.c.l.b16 %v983
        %v2076 = vunpack.c.h.b16 %v983
        %v2077 = vunpack.c.l.b16 %v984
        %v2078 = vunpack.c.h.b16 %v984
        %v2079 = vunpack.c.l.b16 %v985
        %v2080 = vunpack.c.h.b16 %v985
        %v2081 = vunpack.c.l.b16 %v986
        %v2082 = vunpack.c.h.b16 %v986
        %v2083 = vunpack.c.l.b16 %v987
        %v2084 = vunpack.c.h.b16 %v987
        %v2085 = vunpack.c.l.b16 %v988
        %v2086 = vunpack.c.h.b16 %v988
        %v2087 = vunpack.c.l.b16 %v989
        %v2088 = vunpack.c.h.b16 %v989
        %v2089 = vunpack.c.l.b16 %v990
        %v2090 = vunpack.c.h.b16 %v990
        %v2091 = vunpack.c.l.b16 %v991
        %v2092 = vunpack.c.h.b16 %v991
        %v2093 = vunpack.c.l.b16 %v992
        %v2094 = vunpack.c.h.b16 %v992
        %v2095 = vunpack.c.l.b16 %v993
        %v2096 = vunpack.c.h.b16 %v993
        %v2097 = vunpack.c.l.b16 %v994
        %v2098 = vunpack.c.h.b16 %v994
        %v2099 = vunpack.c.l.b16 %v995
        %v2100 = vunpack.c.h.b16 %v995
        %v2101 = vunpack.c.l.b16 %v996
        %v2102 = vunpack.c.h.b16 %v996
        %v2103 = vunpack.c.l.b16 %v997
        %v2104 = vunpack.c.h.b16 %v997
        %v2105 = vunpack.c.l.b16 %v998
        %v2106 = vunpack.c.h.b16 %v998
        %v2107 = vunpack.c.l.b16 %v999
        %v2108 = vunpack.c.h.b16 %v999
        %v2109 = vunpack.c.l.b16 %v1000
        %v2110 = vunpack.c.h.b16 %v1000
        %v2111 = vunpack.c.l.b16 %v1001
        %v2112 = vunpack.c.h.b16 %v1001
        %v2113 = vunpack.c.l.b16 %v1002
        %v2114 = vunpack.c.h.b16 %v1002
        %v2115 = vunpack.c.l.b16 %v1003
        %v2116 = vunpack.c.h.b16 %v1003
        %v2117 = vunpack.c.l.b16 %v1004
        %v2118 = vunpack.c.h.b16 %v1004
        %v2119 = vunpack.c.l.b16 %v1005
        %v2120 = vunpack.c.h.b16 %v1005
        %v2121 = vunpack.c.l.b16 %v1006
        %v2122 = vunpack.c.h.b16 %v1006
        %v2123 = vunpack.c.l.b16 %v1007
        %v2124 = vunpack.c.h.b16 %v1007
        %v2125 = vunpack.c.l.b16 %v1008
        %v2126 = vunpack.c.h.b16 %v1008
        %v2127 = vunpack.c.l.b16 %v1009
        %v2128 = vunpack.c.h.b16 %v1009
        %v2129 = vunpack.c.l.b16 %v1010
        %v2130 = vunpack.c.h.b16 %v1010
        %v2131 = vunpack.c.l.b16 %v1011
        %v2132 = vunpack.c.h.b16 %v1011
        %v2133 = vunpack.c.l.b16 %v1012
        %v2134 = vunpack.c.h.b16 %v1012
        %v2135 = vunpack.c.l.b16 %v1013
        %v2136 = vunpack.c.h.b16 %v1013
        %v2137 = vunpack.c.l.b16 %v1014
        %v2138 = vunpack.c.h.b16 %v1014
        %v2139 = vunpack.c.l.b16 %v1015
        %v2140 = vunpack.c.h.b16 %v1015
        %v2141 = vunpack.c.l.b16 %v1016
        %v2142 = vunpack.c.h.b16 %v1016
        %v2143 = vunpack.c.l.b16 %v1017
        %v2144 = vunpack.c.h.b16 %v1017
        %v2145 = vunpack.c.l.b16 %v1018
        %v2146 = vunpack.c.h.b16 %v1018
        %v2147 = vunpack.c.l.b16 %v1019
        %v2148 = vunpack.c.h.b16 %v1019
        %v2149 = vunpack.c.l.b16 %v1020
        %v2150 = vunpack.c.h.b16 %v1020
        %v2151 = vunpack.c.l.b16 %v1021
        %v2152 = vunpack.c.h.b16 %v1021
        %v2153 = vunpack.c.l.b16 %v1022
        %v2154 = vunpack.c.h.b16 %v1022
        %v2155 = vunpack.c.l.b16 %v1023
        %v2156 = vunpack.c.h.b16 %v1023
        %v2157 = vunpack.c.l.b16 %v1024
        %v2158 = vunpack.c.h.b16 %v1024
        %v2159 = vunpack.c.l.b16 %v1025
        %v2160 = vunpack.c.h.b16 %v1025
        %v2161 = vunpack.c.l.b16 %v1026
        %v2162 = vunpack.c.h.b16 %v1026
        %v2163 = vunpack.c.l.b16 %v1027
        %v2164 = vunpack.c.h.b16 %v1027
        %v2165 = vunpack.c.l.b16 %v1028
        %v2166 = vunpack.c.h.b16 %v1028
        %v2167 = vunpack.c.l.b16 %v1029
        %v2168 = vunpack.c.h.b16 %v1029
        %v2169 = vunpack.c.l.b16 %v1030
        %v2170 = vunpack.c.h.b16 %v1030
        %v2171 = vunpack.c.l.b16 %v1031
        %v2172 = vunpack.c.h.b16 %v1031
        %v2173 = vunpack.c.l.b16 %v1032
        %v2174 = vunpack.c.h.b16 %v1032
        %v2175 = vunpack.c.l.b16 %v1033
        %v2176 = vunpack.c.h.b16 %v1033
        %v2177 = vunpack.c.l.b16 %v1034
        %v2178 = vunpack.c.h.b16 %v1034
        %v2179 = vunpack.c.l.b16 %v1035
        %v2180 = vunpack.c.h.b16 %v1035
        %v2181 = vunpack.c.l.b16 %v1036
        %v2182 = vunpack.c.h.b16 %v1036
        %v2183 = vunpack.c.l.b16 %v1037
        %v2184 = vunpack.c.h.b16 %v1037
        %v2185 = vunpack.c.l.b16 %v1038
        %v2186 = vunpack.c.h.b16 %v1038
        %v2187 = vunpack.c.l.b16 %v1039
        %v2188 = vunpack.c.h.b16 %v1039
        %v2189 = vunpack.c.l.b16 %v1040
        %v2190 = vunpack.c.h.b16 %v1040
        %v2191 = vunpack.c.l.b16 %v1041
        %v2192 = vunpack.c.h.b16 %v1041
        %v2193 = vunpack.c.l.b16 %v1042
        %v2194 = vunpack.c.h.b16 %v1042
        %v2195 = vunpack.c.l.b16 %v1043
        %v2196 = vunpack.c.h.b16 %v1043
        %v2197 = vunpack.c.l.b16 %v1044
        %v2198 = vunpack.c.h.b16 %v1044
        %v2199 = vunpack.c.l.b16 %v1045
        %v2200 = vunpack.c.h.b16 %v1045
        %v2201 = vunpack.c.l.b16 %v1046
        %v2202 = vunpack.c.h.b16 %v1046
        %v2203 = vunpack.c.l.b16 %v1047
        %v2204 = vunpack.c.h.b16 %v1047
        %v2205 = vunpack.c.l.b16 %v1048
        %v2206 = vunpack.c.h.b16 %v1048
        %v2207 = vunpack.c.l.b16 %v1049
        %v2208 = vunpack.c.h.b16 %v1049
        %v2209 = vunpack.c.l.b16 %v1050
        %v2210 = vunpack.c.h.b16 %v1050
        %v2211 = vunpack.c.l.b16 %v1051
        %v2212 = vunpack.c.h.b16 %v1051
        %v2213 = vunpack.c.l.b16 %v1052
        %v2214 = vunpack.c.h.b16 %v1052
        %v2215 = vunpack.c.l.b16 %v1053
        %v2216 = vunpack.c.h.b16 %v1053
        %v2217 = vunpack.c.l.b16 %v1054
        %v2218 = vunpack.c.h.b16 %v1054
        %v2219 = vunpack.c.l.b16 %v1055
        %v2220 = vunpack.c.h.b16 %v1055
        %v2221 = vunpack.c.l.b16 %v1056
        %v2222 = vunpack.c.h.b16 %v1056
        %v2223 = vunpack.c.l.b16 %v1057
        %v2224 = vunpack.c.h.b16 %v1057
        %v2225 = vunpack.c.l.b16 %v1058
        %v2226 = vunpack.c.h.b16 %v1058
        %v2227 = vunpack.c.l.b16 %v1059
        %v2228 = vunpack.c.h.b16 %v1059
        %v2229 = vunpack.c.l.b16 %v1060
        %v2230 = vunpack.c.h.b16 %v1060
        %v2231 = vunpack.c.l.b16 %v1061
        %v2232 = vunpack.c.h.b16 %v1061
        %v2233 = vunpack.c.l.b16 %v1062
        %v2234 = vunpack.c.h.b16 %v1062
        %v2235 = vunpack.c.l.b16 %v1063
        %v2236 = vunpack.c.h.b16 %v1063
        %v2237 = vunpack.c.l.b16 %v1064
        %v2238 = vunpack.c.h.b16 %v1064
        %v2239 = vunpack.c.l.b16 %v1065
        %v2240 = vunpack.c.h.b16 %v1065
        %v2241 = vunpack.c.l.b16 %v1066
        %v2242 = vunpack.c.h.b16 %v1066
        %v2243 = vunpack.c.l.b16 %v1067
        %v2244 = vunpack.c.h.b16 %v1067
        %v2245 = vunpack.c.l.b16 %v1068
        %v2246 = vunpack.c.h.b16 %v1068
        %v2247 = vunpack.c.l.b16 %v1069
        %v2248 = vunpack.c.h.b16 %v1069
        %v2249 = vunpack.c.l.b16 %v1070
        %v2250 = vunpack.c.h.b16 %v1070
        %v2251 = vunpack.c.l.b16 %v1071
        %v2252 = vunpack.c.h.b16 %v1071
        %v2253 = vunpack.c.l.b16 %v1072
        %v2254 = vunpack.c.h.b16 %v1072
        %v2255 = vunpack.c.l.b16 %v1073
        %v2256 = vunpack.c.h.b16 %v1073
        %v2257 = vunpack.c.l.b16 %v1074
        %v2258 = vunpack.c.h.b16 %v1074
        %v2259 = vunpack.c.l.b16 %v1075
        %v2260 = vunpack.c.h.b16 %v1075
        %v2261 = vunpack.c.l.b16 %v1076
        %v2262 = vunpack.c.h.b16 %v1076
        %v2263 = vunpack.c.l.b16 %v1077
        %v2264 = vunpack.c.h.b16 %v1077
        %v2265 = vunpack.c.l.b16 %v1078
        %v2266 = vunpack.c.h.b16 %v1078
        %v2267 = vunpack.c.l.b16 %v1079
        %v2268 = vunpack.c.h.b16 %v1079
        %v2269 = vunpack.c.l.b16 %v1080
        %v2270 = vunpack.c.h.b16 %v1080
        %v2271 = vunpack.c.l.b16 %v1081
        %v2272 = vunpack.c.h.b16 %v1081
        %v2273 = vunpack.c.l.b16 %v1082
        %v2274 = vunpack.c.h.b16 %v1082
        %v2275 = vunpack.c.l.b16 %v1083
        %v2276 = vunpack.c.h.b16 %v1083
        %v2277 = vunpack.c.l.b16 %v1084
        %v2278 = vunpack.c.h.b16 %v1084
        %v2279 = vunpack.c.l.b16 %v1085
        %v2280 = vunpack.c.h.b16 %v1085
        %v2281 = vunpack.c.l.b16 %v1086
        %v2282 = vunpack.c.h.b16 %v1086
        %v2283 = vunpack.c.l.b16 %v1087
        %v2284 = vunpack.c.h.b16 %v1087
        %v2285 = vunpack.c.l.b16 %v1088
        %v2286 = vunpack.c.h.b16 %v1088
        %v2287 = vunpack.c.l.b16 %v1089
        %v2288 = vunpack.c.h.b16 %v1089
        %v2289 = vunpack.c.l.b16 %v1090
        %v2290 = vunpack.c.h.b16 %v1090
        %v2291 = vunpack.c.l.b16 %v1091
        %v2292 = vunpack.c.h.b16 %v1091
        %v2293 = vunpack.c.l.b16 %v1092
        %v2294 = vunpack.c.h.b16 %v1092
        %v2295 = vunpack.c.l.b16 %v1093
        %v2296 = vunpack.c.h.b16 %v1093
        %v2297 = vunpack.c.l.b16 %v1094
        %v2298 = vunpack.c.h.b16 %v1094
        %v2299 = vunpack.c.l.b16 %v1095
        %v2300 = vunpack.c.h.b16 %v1095
        %v2301 = vunpack.c.l.b16 %v1096
        %v2302 = vunpack.c.h.b16 %v1096
        %v2303 = vunpack.c.l.b16 %v1097
        %v2304 = vunpack.c.h.b16 %v1097
        %v2305 = vunpack.c.l.b16 %v1098
        %v2306 = vunpack.c.h.b16 %v1098
        %v2307 = vunpack.c.l.b16 %v1099
        %v2308 = vunpack.c.h.b16 %v1099
        %v2309 = vunpack.c.l.b16 %v1100
        %v2310 = vunpack.c.h.b16 %v1100
        %v2311 = vunpack.c.l.b16 %v1101
        %v2312 = vunpack.c.h.b16 %v1101
        %v2313 = vunpack.c.l.b16 %v1102
        %v2314 = vunpack.c.h.b16 %v1102
        %v2315 = vunpack.c.l.b16 %v1103
        %v2316 = vunpack.c.h.b16 %v1103
        %v2317 = vunpack.c.l.b16 %v1104
        %v2318 = vunpack.c.h.b16 %v1104
        %v2319 = vunpack.c.l.b16 %v1105
        %v2320 = vunpack.c.h.b16 %v1105
        %v2321 = vunpack.c.l.b16 %v1106
        %v2322 = vunpack.c.h.b16 %v1106
        %v2323 = vunpack.c.l.b16 %v1107
        %v2324 = vunpack.c.h.b16 %v1107
        %v2325 = vunpack.c.l.b16 %v1108
        %v2326 = vunpack.c.h.b16 %v1108
        %v2327 = vunpack.c.l.b16 %v1109
        %v2328 = vunpack.c.h.b16 %v1109
        %v2329 = vunpack.c.l.b16 %v1110
        %v2330 = vunpack.c.h.b16 %v1110
        %v2331 = vunpack.c.l.b16 %v1111
        %v2332 = vunpack.c.h.b16 %v1111
        %v2333 = vunpack.c.l.b16 %v1112
        %v2334 = vunpack.c.h.b16 %v1112
        %v2335 = vunpack.c.l.b16 %v1113
        %v2336 = vunpack.c.h.b16 %v1113
        %v2337 = vunpack.c.l.b16 %v1114
        %v2338 = vunpack.c.h.b16 %v1114
        %v2339 = vunpack.c.l.b16 %v1115
        %v2340 = vunpack.c.h.b16 %v1115
        %v2341 = vunpack.c.l.b16 %v1116
        %v2342 = vunpack.c.h.b16 %v1116
        %v2343 = vunpack.c.l.b16 %v1117
        %v2344 = vunpack.c.h.b16 %v1117
        %v2345 = vunpack.c.l.b16 %v1118
        %v2346 = vunpack.c.h.b16 %v1118
        %v2347 = vunpack.c.l.b16 %v1119
        %v2348 = vunpack.c.h.b16 %v1119
        %v2349 = vunpack.c.l.b16 %v1120
        %v2350 = vunpack.c.h.b16 %v1120
        %v2351 = vunpack.c.l.b16 %v1121
        %v2352 = vunpack.c.h.b16 %v1121
        %v2353 = vunpack.c.l.b16 %v1122
        %v2354 = vunpack.c.h.b16 %v1122
        %v2355 = vunpack.c.l.b16 %v1123
        %v2356 = vunpack.c.h.b16 %v1123
        %v2357 = vunpack.c.l.b16 %v1124
        %v2358 = vunpack.c.h.b16 %v1124
        %v2359 = vunpack.c.l.b16 %v1125
        %v2360 = vunpack.c.h.b16 %v1125
        %v2361 = vunpack.c.l.b16 %v1126
        %v2362 = vunpack.c.h.b16 %v1126
        %v2363 = vunpack.c.l.b16 %v1127
        %v2364 = vunpack.c.h.b16 %v1127
        %v2365 = vunpack.c.l.b16 %v1128
        %v2366 = vunpack.c.h.b16 %v1128
        %v2367 = vunpack.c.l.b16 %v1129
        %v2368 = vunpack.c.h.b16 %v1129
        %v2369 = vunpack.c.l.b16 %v1130
        %v2370 = vunpack.c.h.b16 %v1130
        %v2371 = vunpack.c.l.b16 %v1131
        %v2372 = vunpack.c.h.b16 %v1131
        %v2373 = vunpack.c.l.b16 %v1132
        %v2374 = vunpack.c.h.b16 %v1132
        %v2375 = vunpack.c.l.b16 %v1133
        %v2376 = vunpack.c.h.b16 %v1133
        %v2377 = vunpack.c.l.b16 %v1134
        %v2378 = vunpack.c.h.b16 %v1134
        %v2379 = vunpack.c.l.b16 %v1135
        %v2380 = vunpack.c.h.b16 %v1135
        %v2381 = vunpack.c.l.b16 %v1136
        %v2382 = vunpack.c.h.b16 %v1136
        %v2383 = vunpack.c.l.b16 %v1137
        %v2384 = vunpack.c.h.b16 %v1137
        %v2385 = vunpack.c.l.b16 %v1138
        %v2386 = vunpack.c.h.b16 %v1138
        %v2387 = vunpack.c.l.b16 %v1139
        %v2388 = vunpack.c.h.b16 %v1139
        %v2389 = vunpack.c.l.b16 %v1140
        %v2390 = vunpack.c.h.b16 %v1140
        %v2391 = vunpack.c.l.b16 %v1141
        %v2392 = vunpack.c.h.b16 %v1141
        %v2393 = vunpack.c.l.b16 %v1142
        %v2394 = vunpack.c.h.b16 %v1142
        %v2395 = vunpack.c.l.b16 %v1143
        %v2396 = vunpack.c.h.b16 %v1143
        %v2397 = vunpack.c.l.b16 %v1144
        %v2398 = vunpack.c.h.b16 %v1144
        %v2399 = vunpack.c.l.b16 %v1145
        %v2400 = vunpack.c.h.b16 %v1145
        %v2401 = vunpack.c.l.b16 %v1146
        %v2402 = vunpack.c.h.b16 %v1146
        %v2403 = vunpack.c.l.b16 %v1147
        %v2404 = vunpack.c.h.b16 %v1147
        %v2405 = vunpack.c.l.b16 %v1148
        %v2406 = vunpack.c.h.b16 %v1148
        %v2407 = vunpack.c.l.b16 %v1149
        %v2408 = vunpack.c.h.b16 %v1149
        %v2409 = vunpack.c.l.b16 %v1150
        %v2410 = vunpack.c.h.b16 %v1150
        %v2411 = vunpack.c.l.b16 %v1151
        %v2412 = vunpack.c.h.b16 %v1151
        %v2413 = vunpack.c.l.b16 %v1152
        %v2414 = vunpack.c.h.b16 %v1152
        %v2415 = vunpack.c.l.b16 %v1153
        %v2416 = vunpack.c.h.b16 %v1153
        %v2417 = vunpack.c.l.b16 %v1154
        %v2418 = vunpack.c.h.b16 %v1154
        %v2419 = vunpack.c.l.b16 %v1155
        %v2420 = vunpack.c.h.b16 %v1155
        %v2421 = vunpack.c.l.b16 %v1156
        %v2422 = vunpack.c.h.b16 %v1156
        %v2423 = vunpack.c.l.b16 %v1157
        %v2424 = vunpack.c.h.b16 %v1157
        %v2425 = vunpack.c.l.b16 %v1158
        %v2426 = vunpack.c.h.b16 %v1158
        %v2427 = vunpack.c.l.b16 %v1159
        %v2428 = vunpack.c.h.b16 %v1159
        %v2429 = vunpack.c.l.b16 %v1160
        %v2430 = vunpack.c.h.b16 %v1160
        %v2431 = vunpack.c.l.b16 %v1161
        %v2432 = vunpack.c.h.b16 %v1161
        %v2433 = vunpack.c.l.b16 %v1162
        %v2434 = vunpack.c.h.b16 %v1162
        %v2435 = vunpack.c.l.b16 %v1163
        %v2436 = vunpack.c.h.b16 %v1163
        %v2437 = vunpack.c.l.b16 %v1164
        %v2438 = vunpack.c.h.b16 %v1164
        %v2439 = vunpack.c.l.b16 %v1165
        %v2440 = vunpack.c.h.b16 %v1165
        %v2441 = vunpack.c.l.b16 %v1166
        %v2442 = vunpack.c.h.b16 %v1166
        %v2443 = vunpack.c.l.b16 %v1167
        %v2444 = vunpack.c.h.b16 %v1167
        %v2445 = vunpack.c.l.b16 %v1168
        %v2446 = vunpack.c.h.b16 %v1168
        %v2447 = vunpack.c.l.b16 %v1169
        %v2448 = vunpack.c.h.b16 %v1169
        %v2449 = vunpack.c.l.b16 %v1170
        %v2450 = vunpack.c.h.b16 %v1170
        %v2451 = vunpack.c.l.b16 %v1171
        %v2452 = vunpack.c.h.b16 %v1171
        %v2453 = vunpack.c.l.b16 %v1172
        %v2454 = vunpack.c.h.b16 %v1172
        %v2455 = vunpack.c.l.b16 %v1173
        %v2456 = vunpack.c.h.b16 %v1173
        %v2457 = vunpack.c.l.b16 %v1174
        %v2458 = vunpack.c.h.b16 %v1174
        %v2459 = vunpack.c.l.b16 %v1175
        %v2460 = vunpack.c.h.b16 %v1175
        %v2461 = vunpack.c.l.b16 %v1176
        %v2462 = vunpack.c.h.b16 %v1176
        %v2463 = vunpack.c.l.b16 %v1177
        %v2464 = vunpack.c.h.b16 %v1177
        %v2465 = vunpack.c.l.b16 %v1178
        %v2466 = vunpack.c.h.b16 %v1178
        %v2467 = vunpack.c.l.b16 %v1179
        %v2468 = vunpack.c.h.b16 %v1179
        %v2469 = vunpack.c.l.b16 %v1180
        %v2470 = vunpack.c.h.b16 %v1180
        %v2471 = vunpack.c.l.b16 %v1181
        %v2472 = vunpack.c.h.b16 %v1181
        %v2473 = vunpack.c.l.b16 %v1182
        %v2474 = vunpack.c.h.b16 %v1182
        %v2475 = vunpack.c.l.b16 %v1183
        %v2476 = vunpack.c.h.b16 %v1183
        %v2477 = vunpack.c.l.b16 %v1184
        %v2478 = vunpack.c.h.b16 %v1184
        %v2479 = vunpack.c.l.b16 %v1185
        %v2480 = vunpack.c.h.b16 %v1185
        %v2481 = vunpack.c.l.b16 %v1186
        %v2482 = vunpack.c.h.b16 %v1186
        %v2483 = vunpack.c.l.b16 %v1187
        %v2484 = vunpack.c.h.b16 %v1187
        %v2485 = vunpack.c.l.b16 %v1188
        %v2486 = vunpack.c.h.b16 %v1188
        %v2487 = vunpack.c.l.b16 %v1189
        %v2488 = vunpack.c.h.b16 %v1189
        %v2489 = vunpack.c.l.b16 %v1190
        %v2490 = vunpack.c.h.b16 %v1190
        %v2491 = vunpack.c.l.b16 %v1191
        %v2492 = vunpack.c.h.b16 %v1191
        %v2493 = vunpack.c.l.b16 %v1192
        %v2494 = vunpack.c.h.b16 %v1192
        %v2495 = vunpack.c.l.b16 %v1193
        %v2496 = vunpack.c.h.b16 %v1193
        %v2497 = vunpack.c.l.b16 %v1194
        %v2498 = vunpack.c.h.b16 %v1194
        %v2499 = vunpack.c.l.b16 %v1195
        %v2500 = vunpack.c.h.b16 %v1195
        %v2501 = vunpack.c.l.b16 %v1196
        %v2502 = vunpack.c.h.b16 %v1196
        %v2503 = vunpack.c.l.b16 %v1197
        %v2504 = vunpack.c.h.b16 %v1197
        %v2505 = vunpack.c.l.b16 %v1198
        %v2506 = vunpack.c.h.b16 %v1198
        %v2507 = vunpack.c.l.b16 %v1199
        %v2508 = vunpack.c.h.b16 %v1199
        %v2509 = vunpack.c.l.b16 %v1200
        %v2510 = vunpack.c.h.b16 %v1200
        %v2511 = vunpack.c.l.b16 %v1201
        %v2512 = vunpack.c.h.b16 %v1201
        %v2513 = vunpack.c.l.b16 %v1202
        %v2514 = vunpack.c.h.b16 %v1202
        %v2515 = vunpack.c.l.b16 %v1203
        %v2516 = vunpack.c.h.b16 %v1203
        %v2517 = vunpack.c.l.b16 %v1204
        %v2518 = vunpack.c.h.b16 %v1204
        %v2519 = vunpack.c.l.b16 %v1205
        %v2520 = vunpack.c.h.b16 %v1205
        %v2521 = vunpack.c.l.b16 %v1206
        %v2522 = vunpack.c.h.b16 %v1206
        %v2523 = vunpack.c.l.b16 %v1207
        %v2524 = vunpack.c.h.b16 %v1207
        %v2525 = vunpack.c.l.b16 %v1208
        %v2526 = vunpack.c.h.b16 %v1208
        %v2527 = vunpack.c.l.b16 %v1209
        %v2528 = vunpack.c.h.b16 %v1209
        %v2529 = vunpack.c.l.b16 %v1210
        %v2530 = vunpack.c.h.b16 %v1210
        %v2531 = vunpack.c.l.b16 %v1211
        %v2532 = vunpack.c.h.b16 %v1211
        %v2533 = vunpack.c.l.b16 %v1212
        %v2534 = vunpack.c.h.b16 %v1212
        %v2535 = vunpack.c.l.b16 %v1213
        %v2536 = vunpack.c.h.b16 %v1213
        %v2537 = vunpack.c.l.b16 %v1214
        %v2538 = vunpack.c.h.b16 %v1214
        %v2539 = vunpack.c.l.b16 %v1215
        %v2540 = vunpack.c.h.b16 %v1215
        %v2541 = vunpack.c.l.b16 %v1216
        %v2542 = vunpack.c.h.b16 %v1216
        %v2543 = vunpack.c.l.b16 %v1217
        %v2544 = vunpack.c.h.b16 %v1217
        %v2545 = vunpack.c.l.b16 %v1218
        %v2546 = vunpack.c.h.b16 %v1218
        %v2547 = vunpack.c.l.b16 %v1219
        %v2548 = vunpack.c.h.b16 %v1219
        %v2549 = vunpack.c.l.b16 %v1220
        %v2550 = vunpack.c.h.b16 %v1220
        %v2551 = vunpack.c.l.b16 %v1221
        %v2552 = vunpack.c.h.b16 %v1221
        %v2553 = vunpack.c.l.b16 %v1222
        %v2554 = vunpack.c.h.b16 %v1222
        %v2555 = vunpack.c.l.b16 %v1223
        %v2556 = vunpack.c.h.b16 %v1223
        %v2557 = vunpack.c.l.b16 %v1224
        %v2558 = vunpack.c.h.b16 %v1224
        %v2559 = vunpack.c.l.b16 %v1225
        %v2560 = vunpack.c.h.b16 %v1225
        %v2561 = vunpack.c.l.b16 %v1226
        %v2562 = vunpack.c.h.b16 %v1226
        %v2563 = vunpack.c.l.b16 %v1227
        %v2564 = vunpack.c.h.b16 %v1227
        %v2565 = vunpack.c.l.b16 %v1228
        %v2566 = vunpack.c.h.b16 %v1228
        %v2567 = vunpack.c.l.b16 %v1229
        %v2568 = vunpack.c.h.b16 %v1229
        %v2569 = vunpack.c.l.b16 %v1230
        %v2570 = vunpack.c.h.b16 %v1230
        %v2571 = vunpack.c.l.b16 %v1231
        %v2572 = vunpack.c.h.b16 %v1231
        %v2573 = vunpack.c.l.b16 %v1232
        %v2574 = vunpack.c.h.b16 %v1232
        %v2575 = vunpack.c.l.b16 %v1233
        %v2576 = vunpack.c.h.b16 %v1233
        %v2577 = vunpack.c.l.b16 %v1234
        %v2578 = vunpack.c.h.b16 %v1234
        %v2579 = vunpack.c.l.b16 %v1235
        %v2580 = vunpack.c.h.b16 %v1235
        %v2581 = vunpack.c.l.b16 %v1236
        %v2582 = vunpack.c.h.b16 %v1236
        %v2583 = vunpack.c.l.b16 %v1237
        %v2584 = vunpack.c.h.b16 %v1237
        %v2585 = vunpack.c.l.b16 %v1238
        %v2586 = vunpack.c.h.b16 %v1238
        %v2587 = vunpack.c.l.b16 %v1239
        %v2588 = vunpack.c.h.b16 %v1239
        %v2589 = vunpack.c.l.b16 %v1240
        %v2590 = vunpack.c.h.b16 %v1240
        %v2591 = vunpack.c.l.b16 %v1241
        %v2592 = vunpack.c.h.b16 %v1241
        %v2593 = vunpack.c.l.b16 %v1242
        %v2594 = vunpack.c.h.b16 %v1242
        %v2595 = vunpack.c.l.b16 %v1243
        %v2596 = vunpack.c.h.b16 %v1243
        %v2597 = vunpack.c.l.b16 %v1244
        %v2598 = vunpack.c.h.b16 %v1244
        %v2599 = vunpack.c.l.b16 %v1245
        %v2600 = vunpack.c.h.b16 %v1245
        %v2601 = vunpack.c.l.b16 %v1246
        %v2602 = vunpack.c.h.b16 %v1246
        %v2603 = vunpack.c.l.b16 %v1247
        %v2604 = vunpack.c.h.b16 %v1247
        %v2605 = vunpack.c.l.b16 %v1248
        %v2606 = vunpack.c.h.b16 %v1248
        %v2607 = vunpack.c.l.b16 %v1249
        %v2608 = vunpack.c.h.b16 %v1249
        %v2609 = vunpack.c.l.b16 %v1250
        %v2610 = vunpack.c.h.b16 %v1250
        %v2611 = vunpack.c.l.b16 %v1251
        %v2612 = vunpack.c.h.b16 %v1251
        %v2613 = vunpack.c.l.b16 %v1252
        %v2614 = vunpack.c.h.b16 %v1252
        %v2615 = vunpack.c.l.b16 %v1253
        %v2616 = vunpack.c.h.b16 %v1253
        %v2617 = vunpack.c.l.b16 %v1254
        %v2618 = vunpack.c.h.b16 %v1254
        %v2619 = vunpack.c.l.b16 %v1255
        %v2620 = vunpack.c.h.b16 %v1255
        %v2621 = vunpack.c.l.b16 %v1256
        %v2622 = vunpack.c.h.b16 %v1256
        %v2623 = vunpack.c.l.b16 %v1257
        %v2624 = vunpack.c.h.b16 %v1257
        %v2625 = vunpack.c.l.b16 %v1258
        %v2626 = vunpack.c.h.b16 %v1258
        %v2627 = vunpack.c.l.b16 %v1259
        %v2628 = vunpack.c.h.b16 %v1259
        %v2629 = vunpack.c.l.b16 %v1260
        %v2630 = vunpack.c.h.b16 %v1260
        %v2631 = vunpack.c.l.b16 %v1261
        %v2632 = vunpack.c.h.b16 %v1261
        %v2633 = vunpack.c.l.b16 %v1262
        %v2634 = vunpack.c.h.b16 %v1262
        %v2635 = vunpack.c.l.b16 %v1263
        %v2636 = vunpack.c.h.b16 %v1263
        %v2637 = vunpack.c.l.b16 %v1264
        %v2638 = vunpack.c.h.b16 %v1264
        %v2639 = vunpack.c.l.b16 %v1265
        %v2640 = vunpack.c.h.b16 %v1265
        %v2641 = vunpack.c.l.b16 %v1266
        %v2642 = vunpack.c.h.b16 %v1266
        %v2643 = vunpack.c.l.b16 %v1267
        %v2644 = vunpack.c.h.b16 %v1267
        %v2645 = vunpack.c.l.b16 %v1268
        %v2646 = vunpack.c.h.b16 %v1268
        %v2647 = vunpack.c.l.b16 %v1269
        %v2648 = vunpack.c.h.b16 %v1269
        %v2649 = vunpack.c.l.b16 %v1270
        %v2650 = vunpack.c.h.b16 %v1270
        %v2651 = vunpack.c.l.b16 %v1271
        %v2652 = vunpack.c.h.b16 %v1271
        %v2653 = vunpack.c.l.b16 %v1272
        %v2654 = vunpack.c.h.b16 %v1272
        %v2655 = vunpack.c.l.b16 %v1273
        %v2656 = vunpack.c.h.b16 %v1273
        %v2657 = vunpack.c.l.b16 %v1274
        %v2658 = vunpack.c.h.b16 %v1274
        %v2659 = vunpack.c.l.b16 %v1275
        %v2660 = vunpack.c.h.b16 %v1275
        %v2661 = vunpack.c.l.b16 %v1276
        %v2662 = vunpack.c.h.b16 %v1276
        %v2663 = vunpack.c.l.b16 %v1277
        %v2664 = vunpack.c.h.b16 %v1277
        %v2665 = vunpack.c.l.b16 %v1278
        %v2666 = vunpack.c.h.b16 %v1278
        %v2667 = vunpack.c.l.b16 %v1279
        %v2668 = vunpack.c.h.b16 %v1279
        %v2669 = vunpack.c.l.b16 %v1280
        %v2670 = vunpack.c.h.b16 %v1280
        %v2671 = vunpack.c.l.b16 %v1281
        %v2672 = vunpack.c.h.b16 %v1281
        %v2673 = vunpack.c.l.b16 %v1282
        %v2674 = vunpack.c.h.b16 %v1282
        %v2675 = vunpack.c.l.b16 %v1283
        %v2676 = vunpack.c.h.b16 %v1283
        %v2677 = vunpack.c.l.b16 %v1284
        %v2678 = vunpack.c.h.b16 %v1284
        %v2679 = vunpack.c.l.b16 %v1285
        %v2680 = vunpack.c.h.b16 %v1285
        %v2681 = vunpack.c.l.b16 %v1286
        %v2682 = vunpack.c.h.b16 %v1286
        %v2683 = vunpack.c.l.b16 %v1287
        %v2684 = vunpack.c.h.b16 %v1287
        %v2685 = vunpack.c.l.b16 %v1288
        %v2686 = vunpack.c.h.b16 %v1288
        %v2687 = vunpack.c.l.b16 %v1289
        %v2688 = vunpack.c.h.b16 %v1289
        %v2689 = vunpack.c.l.b16 %v1290
        %v2690 = vunpack.c.h.b16 %v1290
        %v2691 = vunpack.c.l.b16 %v1291
        %v2692 = vunpack.c.h.b16 %v1291
        %v2693 = vunpack.c.l.b16 %v1292
        %v2694 = vunpack.c.h.b16 %v1292
        %v2695 = vunpack.c.l.b16 %v1293
        %v2696 = vunpack.c.h.b16 %v1293
        %v2697 = vunpack.c.l.b16 %v1294
        %v2698 = vunpack.c.h.b16 %v1294
        %v2699 = vunpack.c.l.b16 %v1295
        %v2700 = vunpack.c.h.b16 %v1295
        %v2701 = vunpack.c.l.b16 %v1296
        %v2702 = vunpack.c.h.b16 %v1296
        %v2703 = vunpack.c.l.b16 %v1297
        %v2704 = vunpack.c.h.b16 %v1297
        %v2705 = vunpack.c.l.b16 %v1298
        %v2706 = vunpack.c.h.b16 %v1298
        %v2707 = vunpack.c.l.b16 %v1299
        %v2708 = vunpack.c.h.b16 %v1299
        %v2709 = vunpack.c.l.b16 %v1300
        %v2710 = vunpack.c.h.b16 %v1300
        %v2711 = vunpack.c.l.b16 %v1301
        %v2712 = vunpack.c.h.b16 %v1301
        %v2713 = vunpack.c.l.b16 %v1302
        %v2714 = vunpack.c.h.b16 %v1302
        %v2715 = vunpack.c.l.b16 %v1303
        %v2716 = vunpack.c.h.b16 %v1303
        %v2717 = vunpack.c.l.b16 %v1304
        %v2718 = vunpack.c.h.b16 %v1304
        %v2719 = vunpack.c.l.b16 %v1305
        %v2720 = vunpack.c.h.b16 %v1305
        %v2721 = vunpack.c.l.b16 %v1306
        %v2722 = vunpack.c.h.b16 %v1306
        %v2723 = vunpack.c.l.b16 %v1307
        %v2724 = vunpack.c.h.b16 %v1307
        %v2725 = vunpack.c.l.b16 %v1308
        %v2726 = vunpack.c.h.b16 %v1308
        %v2727 = vunpack.c.l.b16 %v1309
        %v2728 = vunpack.c.h.b16 %v1309
        %v2729 = vunpack.c.l.b16 %v1310
        %v2730 = vunpack.c.h.b16 %v1310
        %v2731 = vunpack.c.l.b16 %v1311
        %v2732 = vunpack.c.h.b16 %v1311
        %v2733 = vunpack.c.l.b16 %v1312
        %v2734 = vunpack.c.h.b16 %v1312
        %v2735 = vunpack.c.l.b16 %v1313
        %v2736 = vunpack.c.h.b16 %v1313
        %v2737 = vunpack.c.l.b16 %v1314
        %v2738 = vunpack.c.h.b16 %v1314
        %v2739 = vunpack.c.l.b16 %v1315
        %v2740 = vunpack.c.h.b16 %v1315
        %v2741 = vunpack.c.l.b16 %v1316
        %v2742 = vunpack.c.h.b16 %v1316
        %v2743 = vunpack.c.l.b16 %v1317
        %v2744 = vunpack.c.h.b16 %v1317
        %v2745 = vunpack.c.l.b16 %v1318
        %v2746 = vunpack.c.h.b16 %v1318
        %v2747 = vunpack.c.l.b16 %v1319
        %v2748 = vunpack.c.h.b16 %v1319
        %v2749 = vunpack.c.l.b16 %v1320
        %v2750 = vunpack.c.h.b16 %v1320
        %v2751 = vunpack.c.l.b16 %v1321
        %v2752 = vunpack.c.h.b16 %v1321
        %v2753 = vunpack.c.l.b16 %v1322
        %v2754 = vunpack.c.h.b16 %v1322
        %v2755 = vunpack.c.l.b16 %v1323
        %v2756 = vunpack.c.h.b16 %v1323
        %v2757 = vunpack.c.l.b16 %v1324
        %v2758 = vunpack.c.h.b16 %v1324
        %v2759 = vunpack.c.l.b16 %v1325
        %v2760 = vunpack.c.h.b16 %v1325
        %v2761 = vunpack.c.l.b16 %v1326
        %v2762 = vunpack.c.h.b16 %v1326
        %v2763 = vunpack.c.l.b16 %v1327
        %v2764 = vunpack.c.h.b16 %v1327
        %v2765 = vunpack.c.l.b16 %v1328
        %v2766 = vunpack.c.h.b16 %v1328
        %v2767 = vunpack.c.l.b16 %v1329
        %v2768 = vunpack.c.h.b16 %v1329
        %v2769 = vunpack.c.l.b16 %v1330
        %v2770 = vunpack.c.h.b16 %v1330
        %v2771 = vunpack.c.l.b16 %v1331
        %v2772 = vunpack.c.h.b16 %v1331
        %v2773 = vunpack.c.l.b16 %v1332
        %v2774 = vunpack.c.h.b16 %v1332
        %v2775 = vunpack.c.l.b16 %v1333
        %v2776 = vunpack.c.h.b16 %v1333
        %v2777 = vunpack.c.l.b16 %v1334
        %v2778 = vunpack.c.h.b16 %v1334
        %v2779 = vunpack.c.l.b16 %v1335
        %v2780 = vunpack.c.h.b16 %v1335
        %v2781 = vunpack.c.l.b16 %v1336
        %v2782 = vunpack.c.h.b16 %v1336
        %v2783 = vunpack.c.l.b16 %v1337
        %v2784 = vunpack.c.h.b16 %v1337
        %v2785 = vunpack.c.l.b16 %v1338
        %v2786 = vunpack.c.h.b16 %v1338
        %v2787 = vunpack.c.l.b16 %v1339
        %v2788 = vunpack.c.h.b16 %v1339
        %v2789 = vunpack.c.l.b16 %v1340
        %v2790 = vunpack.c.h.b16 %v1340
        %v2791 = vunpack.c.l.b16 %v1341
        %v2792 = vunpack.c.h.b16 %v1341
        %v2793 = vunpack.c.l.b16 %v1342
        %v2794 = vunpack.c.h.b16 %v1342
        %v2795 = vunpack.c.l.b16 %v1343
        %v2796 = vunpack.c.h.b16 %v1343
        %v2797 = vunpack.c.l.b16 %v1344
        %v2798 = vunpack.c.h.b16 %v1344
        %v2799 = vunpack.c.l.b16 %v1345
        %v2800 = vunpack.c.h.b16 %v1345
        %v2801 = vunpack.c.l.b16 %v1346
        %v2802 = vunpack.c.h.b16 %v1346
        %v2803 = vunpack.c.l.b16 %v1347
        %v2804 = vunpack.c.h.b16 %v1347
        %v2805 = vunpack.c.l.b16 %v1348
        %v2806 = vunpack.c.h.b16 %v1348
        %v2807 = vunpack.c.l.b16 %v1349
        %v2808 = vunpack.c.h.b16 %v1349
        %v2809 = vunpack.c.l.b16 %v1350
        %v2810 = vunpack.c.h.b16 %v1350
        %v2811 = vunpack.c.l.b16 %v1351
        %v2812 = vunpack.c.h.b16 %v1351
        %v2813 = vunpack.c.l.b16 %v1352
        %v2814 = vunpack.c.h.b16 %v1352
        %v2815 = vunpack.c.l.b16 %v1353
        %v2816 = vunpack.c.h.b16 %v1353
        %v2817 = vunpack.c.l.b16 %v1354
        %v2818 = vunpack.c.h.b16 %v1354
        %v2819 = vunpack.c.l.b16 %v1355
        %v2820 = vunpack.c.h.b16 %v1355
        %v2821 = vunpack.c.l.b16 %v1356
        %v2822 = vunpack.c.h.b16 %v1356
        %v2823 = vunpack.c.l.b16 %v1357
        %v2824 = vunpack.c.h.b16 %v1357
        %v2825 = vunpack.c.l.b16 %v1358
        %v2826 = vunpack.c.h.b16 %v1358
        %v2827 = vunpack.c.l.b16 %v1359
        %v2828 = vunpack.c.h.b16 %v1359
        %v2829 = vunpack.c.l.b16 %v1360
        %v2830 = vunpack.c.h.b16 %v1360
        %v2831 = vunpack.c.l.b16 %v1361
        %v2832 = vunpack.c.h.b16 %v1361
        %v2833 = vunpack.c.l.b16 %v1362
        %v2834 = vunpack.c.h.b16 %v1362
        %v2835 = vunpack.c.l.b16 %v1363
        %v2836 = vunpack.c.h.b16 %v1363
        %v2837 = vunpack.c.l.b16 %v1364
        %v2838 = vunpack.c.h.b16 %v1364
        %v2839 = vunpack.c.l.b16 %v1365
        %v2840 = vunpack.c.h.b16 %v1365
        %v2841 = vunpack.c.l.b16 %v1366
        %v2842 = vunpack.c.h.b16 %v1366
        %v2843 = vunpack.c.l.b16 %v1367
        %v2844 = vunpack.c.h.b16 %v1367
        %v2845 = vunpack.c.l.b16 %v1368
        %v2846 = vunpack.c.h.b16 %v1368
        %v2847 = vunpack.c.l.b16 %v1369
        %v2848 = vunpack.c.h.b16 %v1369
        %v2849 = vunpack.c.l.b16 %v1370
        %v2850 = vunpack.c.h.b16 %v1370
        %v2851 = vunpack.c.l.b16 %v1371
        %v2852 = vunpack.c.h.b16 %v1371
        %v2853 = vunpack.c.l.b16 %v1372
        %v2854 = vunpack.c.h.b16 %v1372
        %v2855 = vunpack.c.l.b16 %v1373
        %v2856 = vunpack.c.h.b16 %v1373
        %v2857 = vunpack.c.l.b16 %v1374
        %v2858 = vunpack.c.h.b16 %v1374
        %v2859 = vunpack.c.l.b16 %v1375
        %v2860 = vunpack.c.h.b16 %v1375
        %v2861 = vunpack.c.l.b16 %v1376
        %v2862 = vunpack.c.h.b16 %v1376
        %v2863 = vunpack.c.l.b16 %v1377
        %v2864 = vunpack.c.h.b16 %v1377
        %v2865 = vunpack.c.l.b16 %v1378
        %v2866 = vunpack.c.h.b16 %v1378
        %v2867 = vunpack.c.l.b16 %v1379
        %v2868 = vunpack.c.h.b16 %v1379
        %v2869 = vunpack.c.l.b16 %v1380
        %v2870 = vunpack.c.h.b16 %v1380
        %v2871 = vunpack.c.l.b16 %v1381
        %v2872 = vunpack.c.h.b16 %v1381
        %v2873 = vunpack.c.l.b16 %v1382
        %v2874 = vunpack.c.h.b16 %v1382
        %v2875 = vunpack.c.l.b16 %v1383
        %v2876 = vunpack.c.h.b16 %v1383
        %v2877 = vunpack.c.l.b16 %v1384
        %v2878 = vunpack.c.h.b16 %v1384
        %v2879 = vunpack.c.l.b16 %v1385
        %v2880 = vunpack.c.h.b16 %v1385
        %v2881 = vunpack.c.l.b16 %v1386
        %v2882 = vunpack.c.h.b16 %v1386
        %v2883 = vunpack.c.l.b16 %v1387
        %v2884 = vunpack.c.h.b16 %v1387
        %v2885 = vunpack.c.l.b16 %v1388
        %v2886 = vunpack.c.h.b16 %v1388
        %v2887 = vunpack.c.l.b16 %v1389
        %v2888 = vunpack.c.h.b16 %v1389
        %v2889 = vunpack.c.l.b16 %v1390
        %v2890 = vunpack.c.h.b16 %v1390
        %v2891 = vunpack.c.l.b16 %v1391
        %v2892 = vunpack.c.h.b16 %v1391
        %v2893 = vunpack.c.l.b16 %v1392
        %v2894 = vunpack.c.h.b16 %v1392
        %v2895 = vunpack.c.l.b16 %v1393
        %v2896 = vunpack.c.h.b16 %v1393
        %v2897 = vunpack.c.l.b16 %v1394
        %v2898 = vunpack.c.h.b16 %v1394
        %v2899 = vunpack.c.l.b16 %v1395
        %v2900 = vunpack.c.h.b16 %v1395
        %v2901 = vunpack.c.l.b16 %v1396
        %v2902 = vunpack.c.h.b16 %v1396
        %v2903 = vunpack.c.l.b16 %v1397
        %v2904 = vunpack.c.h.b16 %v1397
        %v2905 = vunpack.c.l.b16 %v1398
        %v2906 = vunpack.c.h.b16 %v1398
        %v2907 = vunpack.c.l.b16 %v1399
        %v2908 = vunpack.c.h.b16 %v1399
        %v2909 = vunpack.c.l.b16 %v1400
        %v2910 = vunpack.c.h.b16 %v1400
        %v2911 = vunpack.c.l.b16 %v1401
        %v2912 = vunpack.c.h.b16 %v1401
        %v2913 = vunpack.c.l.b16 %v1402
        %v2914 = vunpack.c.h.b16 %v1402
        %v2915 = vunpack.c.l.b16 %v1403
        %v2916 = vunpack.c.h.b16 %v1403
        %v2917 = vunpack.c.l.b16 %v1404
        %v2918 = vunpack.c.h.b16 %v1404
        %v2919 = vunpack.c.l.b16 %v1405
        %v2920 = vunpack.c.h.b16 %v1405
        %v2921 = vunpack.c.l.b16 %v1406
        %v2922 = vunpack.c.h.b16 %v1406
        %v2923 = vunpack.c.l.b16 %v1407
        %v2924 = vunpack.c.h.b16 %v1407
        %v2925 = vunpack.c.l.b16 %v1408
        %v2926 = vunpack.c.h.b16 %v1408
        %v2927 = vunpack.c.l.b16 %v1409
        %v2928 = vunpack.c.h.b16 %v1409
        %v2929 = vunpack.c.l.b16 %v1410
        %v2930 = vunpack.c.h.b16 %v1410
        %v2931 = vunpack.c.l.b16 %v1411
        %v2932 = vunpack.c.h.b16 %v1411
        %v2933 = vunpack.c.l.b16 %v1412
        %v2934 = vunpack.c.h.b16 %v1412
        %v2935 = vunpack.c.l.b16 %v1413
        %v2936 = vunpack.c.h.b16 %v1413
        %v2937 = vunpack.c.l.b16 %v1414
        %v2938 = vunpack.c.h.b16 %v1414
        %v2939 = vunpack.c.l.b16 %v1415
        %v2940 = vunpack.c.h.b16 %v1415
        %v2941 = vunpack.c.l.b16 %v1416
        %v2942 = vunpack.c.h.b16 %v1416
        %v2943 = vunpack.c.l.b16 %v1417
        %v2944 = vunpack.c.h.b16 %v1417
        %v2945 = vunpack.c.l.b16 %v1418
        %v2946 = vunpack.c.h.b16 %v1418
        %v2947 = vunpack.c.l.b16 %v1419
        %v2948 = vunpack.c.h.b16 %v1419
        %v2949 = vunpack.c.l.b16 %v1420
        %v2950 = vunpack.c.h.b16 %v1420
        %v2951 = vunpack.c.l.b16 %v1421
        %v2952 = vunpack.c.h.b16 %v1421
        %v2953 = vunpack.c.l.b16 %v1422
        %v2954 = vunpack.c.h.b16 %v1422
        %v2955 = vunpack.c.l.b16 %v1423
        %v2956 = vunpack.c.h.b16 %v1423
        %v2957 = vunpack.c.l.b16 %v1424
        %v2958 = vunpack.c.h.b16 %v1424
        %v2959 = vunpack.c.l.b16 %v1425
        %v2960 = vunpack.c.h.b16 %v1425
        %v2961 = vunpack.c.l.b16 %v1426
        %v2962 = vunpack.c.h.b16 %v1426
        %v2963 = vpack.c.b16 %v1971, %v1939
        %v2964 = vpack.c.b16 %v1972, %v1940
        %v2965 = vpack.c.b16 %v1973, %v1941
        %v2966 = vpack.c.b16 %v1974, %v1942
        %v2967 = vpack.c.b16 %v1975, %v1943
        %v2968 = vpack.c.b16 %v1976, %v1944
        %v2969 = vpack.c.b16 %v1977, %v1945
        %v2970 = vpack.c.b16 %v1978, %v1946
        %v2971 = vpack.c.b16 %v1979, %v1947
        %v2972 = vpack.c.b16 %v1980, %v1948
        %v2973 = vpack.c.b16 %v1981, %v1949
        %v2974 = vpack.c.b16 %v1982, %v1950
        %v2975 = vpack.c.b16 %v1983, %v1951
        %v2976 = vpack.c.b16 %v1984, %v1952
        %v2977 = vpack.c.b16 %v1985, %v1953
        %v2978 = vpack.c.b16 %v1986, %v1954
        %v2979 = vpack.c.b16 %v1987, %v1955
        %v2980 = vpack.c.b16 %v1988, %v1956
        %v2981 = vpack.c.b16 %v1989, %v1957
        %v2982 = vpack.c.b16 %v1990, %v1958
        %v2983 = vpack.c.b16 %v1991, %v1959
        %v2984 = vpack.c.b16 %v1992, %v1960
        %v2985 = vpack.c.b16 %v1993, %v1961
        %v2986 = vpack.c.b16 %v1994, %v1962
        %v2987 = vpack.c.b16 %v1995, %v1963
        %v2988 = vpack.c.b16 %v1996, %v1964
        %v2989 = vpack.c.b16 %v1997, %v1965
        %v2990 = vpack.c.b16 %v1998, %v1966
        %v2991 = vpack.c.b16 %v1999, %v1967
        %v2992 = vpack.c.b16 %v2000, %v1968
        %v2993 = vpack.c.b16 %v2001, %v1969
        %v2994 = vpack.c.b16 %v2002, %v1970
        %v2995 = vpack.c.b16 %v2035, %v2003
        %v2996 = vpack.c.b16 %v2036, %v2004
        %v2997 = vpack.c.b16 %v2037, %v2005
        %v2998 = vpack.c.b16 %v2038, %v2006
        %v2999 = vpack.c.b16 %v2039, %v2007
        %v3000 = vpack.c.b16 %v2040, %v2008
        %v3001 = vpack.c.b16 %v2041, %v2009
        %v3002 = vpack.c.b16 %v2042, %v2010
        %v3003 = vpack.c.b16 %v2043, %v2011
        %v3004 = vpack.c.b16 %v2044, %v2012
        %v3005 = vpack.c.b16 %v2045, %v2013
        %v3006 = vpack.c.b16 %v2046, %v2014
        %v3007 = vpack.c.b16 %v2047, %v2015
        %v3008 = vpack.c.b16 %v2048, %v2016
        %v3009 = vpack.c.b16 %v2049, %v2017
        %v3010 = vpack.c.b16 %v2050, %v2018
        %v3011 = vpack.c.b16 %v2051, %v2019
        %v3012 = vpack.c.b16 %v2052, %v2020
        %v3013 = vpack.c.b16 %v2053, %v2021
        %v3014 = vpack.c.b16 %v2054, %v2022
        %v3015 = vpack.c.b16 %v2055, %v2023
        %v3016 = vpack.c.b16 %v2056, %v2024
        %v3017 = vpack.c.b16 %v2057, %v2025
        %v3018 = vpack.c.b16 %v2058, %v2026
        %v3019 = vpack.c.b16 %v2059, %v2027
        %v3020 = vpack.c.b16 %v2060, %v2028
        %v3021 = vpack.c.b16 %v2061, %v2029
        %v3022 = vpack.c.b16 %v2062, %v2030
        %v3023 = vpack.c.b16 %v2063, %v2031
        %v3024 = vpack.c.b16 %v2064, %v2032
        %v3025 = vpack.c.b16 %v2065, %v2033
        %v3026 = vpack.c.b16 %v2066, %v2034
        %v3027 = vpack.c.b16 %v2099, %v2067
        %v3028 = vpack.c.b16 %v2100, %v2068
        %v3029 = vpack.c.b16 %v2101, %v2069
        %v3030 = vpack.c.b16 %v2102, %v2070
        %v3031 = vpack.c.b16 %v2103, %v2071
        %v3032 = vpack.c.b16 %v2104, %v2072
        %v3033 = vpack.c.b16 %v2105, %v2073
        %v3034 = vpack.c.b16 %v2106, %v2074
        %v3035 = vpack.c.b16 %v2107, %v2075
        %v3036 = vpack.c.b16 %v2108, %v2076
        %v3037 = vpack.c.b16 %v2109, %v2077
        %v3038 = vpack.c.b16 %v2110, %v2078
        %v3039 = vpack.c.b16 %v2111, %v2079
        %v3040 = vpack.c.b16 %v2112, %v2080
        %v3041 = vpack.c.b16 %v2113, %v2081
        %v3042 = vpack.c.b16 %v2114, %v2082
        %v3043 = vpack.c.b16 %v2115, %v2083
        %v3044 = vpack.c.b16 %v2116, %v2084
        %v3045 = vpack.c.b16 %v2117, %v2085
        %v3046 = vpack.c.b16 %v2118, %v2086
        %v3047 = vpack.c.b16 %v2119, %v2087
        %v3048 = vpack.c.b16 %v2120, %v2088
        %v3049 = vpack.c.b16 %v2121, %v2089
        %v3050 = vpack.c.b16 %v2122, %v2090
        %v3051 = vpack.c.b16 %v2123, %v2091
        %v3052 = vpack.c.b16 %v2124, %v2092
        %v3053 = vpack.c.b16 %v2125, %v2093
        %v3054 = vpack.c.b16 %v2126, %v2094
        %v3055 = vpack.c.b16 %v2127, %v2095
        %v3056 = vpack.c.b16 %v2128, %v2096
        %v3057 = vpack.c.b16 %v2129, %v2097
        %v3058 = vpack.c.b16 %v2130, %v2098
        %v3059 = vpack.c.b16 %v2163, %v2131
        %v3060 = vpack.c.b16 %v2164, %v2132
        %v3061 = vpack.c.b16 %v2165, %v2133
        %v3062 = vpack.c.b16 %v2166, %v2134
        %v3063 = vpack.c.b16 %v2167, %v2135
        %v3064 = vpack.c.b16 %v2168, %v2136
        %v3065 = vpack.c.b16 %v2169, %v2137
        %v3066 = vpack.c.b16 %v2170, %v2138
        %v3067 = vpack.c.b16 %v2171, %v2139
        %v3068 = vpack.c.b16 %v2172, %v2140
        %v3069 = vpack.c.b16 %v2173, %v2141
        %v3070 = vpack.c.b16 %v2174, %v2142
        %v3071 = vpack.c.b16 %v2175, %v2143
        %v3072 = vpack.c.b16 %v2176, %v2144
        %v3073 = vpack.c.b16 %v2177, %v2145
        %v3074 = vpack.c.b16 %v2178, %v2146
        %v3075 = vpack.c.b16 %v2179, %v2147
        %v3076 = vpack.c.b16 %v2180, %v2148
        %v3077 = vpack.c.b16 %v2181, %v2149
        %v3078 = vpack.c.b16 %v2182, %v2150
        %v3079 = vpack.c.b16 %v2183, %v2151
        %v3080 = vpack.c.b16 %v2184, %v2152
        %v3081 = vpack.c.b16 %v2185, %v2153
        %v3082 = vpack.c.b16 %v2186, %v2154
        %v3083 = vpack.c.b16 %v2187, %v2155
        %v3084 = vpack.c.b16 %v2188, %v2156
        %v3085 = vpack.c.b16 %v2189, %v2157
        %v3086 = vpack.c.b16 %v2190, %v2158
        %v3087 = vpack.c.b16 %v2191, %v2159
        %v3088 = vpack.c.b16 %v2192, %v2160
        %v3089 = vpack.c.b16 %v2193, %v2161
        %v3090 = vpack.c.b16 %v2194, %v2162
        %v3091 = vpack.c.b16 %v2227, %v2195
        %v3092 = vpack.c.b16 %v2228, %v2196
        %v3093 = vpack.c.b16 %v2229, %v2197
        %v3094 = vpack.c.b16 %v2230, %v2198
        %v3095 = vpack.c.b16 %v2231, %v2199
        %v3096 = vpack.c.b16 %v2232, %v2200
        %v3097 = vpack.c.b16 %v2233, %v2201
        %v3098 = vpack.c.b16 %v2234, %v2202
        %v3099 = vpack.c.b16 %v2235, %v2203
        %v3100 = vpack.c.b16 %v2236, %v2204
        %v3101 = vpack.c.b16 %v2237, %v2205
        %v3102 = vpack.c.b16 %v2238, %v2206
        %v3103 = vpack.c.b16 %v2239, %v2207
        %v3104 = vpack.c.b16 %v2240, %v2208
        %v3105 = vpack.c.b16 %v2241, %v2209
        %v3106 = vpack.c.b16 %v2242, %v2210
        %v3107 = vpack.c.b16 %v2243, %v2211
        %v3108 = vpack.c.b16 %v2244, %v2212
        %v3109 = vpack.c.b16 %v2245, %v2213
        %v3110 = vpack.c.b16 %v2246, %v2214
        %v3111 = vpack.c.b16 %v2247, %v2215
        %v3112 = vpack.c.b16 %v2248, %v2216
        %v3113 = vpack.c.b16 %v2249, %v2217
        %v3114 = vpack.c.b16 %v2250, %v2218
        %v3115 = vpack.c.b16 %v2251, %v2219
        %v3116 = vpack.c.b16 %v2252, %v2220
        %v3117 = vpack.c.b16 %v2253, %v2221
        %v3118 = vpack.c.b16 %v2254, %v2222
        %v3119 = vpack.c.b16 %v2255, %v2223
        %v3120 = vpack.c.b16 %v2256, %v2224
        %v3121 = vpack.c.b16 %v2257, %v2225
        %v3122 = vpack.c.b16 %v2258, %v2226
        %v3123 = vpack.c.b16 %v2291, %v2259
        %v3124 = vpack.c.b16 %v2292, %v2260
        %v3125 = vpack.c.b16 %v2293, %v2261
        %v3126 = vpack.c.b16 %v2294, %v2262
        %v3127 = vpack.c.b16 %v2295, %v2263
        %v3128 = vpack.c.b16 %v2296, %v2264
        %v3129 = vpack.c.b16 %v2297, %v2265
        %v3130 = vpack.c.b16 %v2298, %v2266
        %v3131 = vpack.c.b16 %v2299, %v2267
        %v3132 = vpack.c.b16 %v2300, %v2268
        %v3133 = vpack.c.b16 %v2301, %v2269
        %v3134 = vpack.c.b16 %v2302, %v2270
        %v3135 = vpack.c.b16 %v2303, %v2271
        %v3136 = vpack.c.b16 %v2304, %v2272
        %v3137 = vpack.c.b16 %v2305, %v2273
        %v3138 = vpack.c.b16 %v2306, %v2274
        %v3139 = vpack.c.b16 %v2307, %v2275
        %v3140 = vpack.c.b16 %v2308, %v2276
        %v3141 = vpack.c.b16 %v2309, %v2277
        %v3142 = vpack.c.b16 %v2310, %v2278
        %v3143 = vpack.c.b16 %v2311, %v2279
        %v3144 = vpack.c.b16 %v2312, %v2280
        %v3145 = vpack.c.b16 %v2313, %v2281
        %v3146 = vpack.c.b16 %v2314, %v2282
        %v3147 = vpack.c.b16 %v2315, %v2283
        %v3148 = vpack.c.b16 %v2316, %v2284
        %v3149 = vpack.c.b16 %v2317, %v2285
        %v3150 = vpack.c.b16 %v2318, %v2286
        %v3151 = vpack.c.b16 %v2319, %v2287
        %v3152 = vpack.c.b16 %v2320, %v2288
        %v3153 = vpack.c.b16 %v2321, %v2289
        %v3154 = vpack.c.b16 %v2322, %v2290
        %v3155 = vpack.c.b16 %v2355, %v2323
        %v3156 = vpack.c.b16 %v2356, %v2324
        %v3157 = vpack.c.b16 %v2357, %v2325
        %v3158 = vpack.c.b16 %v2358, %v2326
        %v3159 = vpack.c.b16 %v2359, %v2327
        %v3160 = vpack.c.b16 %v2360, %v2328
        %v3161 = vpack.c.b16 %v2361, %v2329
        %v3162 = vpack.c.b16 %v2362, %v2330
        %v3163 = vpack.c.b16 %v2363, %v2331
        %v3164 = vpack.c.b16 %v2364, %v2332
        %v3165 = vpack.c.b16 %v2365, %v2333
        %v3166 = vpack.c.b16 %v2366, %v2334
        %v3167 = vpack.c.b16 %v2367, %v2335
        %v3168 = vpack.c.b16 %v2368, %v2336
        %v3169 = vpack.c.b16 %v2369, %v2337
        %v3170 = vpack.c.b16 %v2370, %v2338
        %v3171 = vpack.c.b16 %v2371, %v2339
        %v3172 = vpack.c.b16 %v2372, %v2340
        %v3173 = vpack.c.b16 %v2373, %v2341
        %v3174 = vpack.c.b16 %v2374, %v2342
        %v3175 = vpack.c.b16 %v2375, %v2343
        %v3176 = vpack.c.b16 %v2376, %v2344
        %v3177 = vpack.c.b16 %v2377, %v2345
        %v3178 = vpack.c.b16 %v2378, %v2346
        %v3179 = vpack.c.b16 %v2379, %v2347
        %v3180 = vpack.c.b16 %v2380, %v2348
        %v3181 = vpack.c.b16 %v2381, %v2349
        %v3182 = vpack.c.b16 %v2382, %v2350
        %v3183 = vpack.c.b16 %v2383, %v2351
        %v3184 = vpack.c.b16 %v2384, %v2352
        %v3185 = vpack.c.b16 %v2385, %v2353
        %v3186 = vpack.c.b16 %v2386, %v2354
        %v3187 = vpack.c.b16 %v2419, %v2387
        %v3188 = vpack.c.b16 %v2420, %v2388
        %v3189 = vpack.c.b16 %v2421, %v2389
        %v3190 = vpack.c.b16 %v2422, %v2390
        %v3191 = vpack.c.b16 %v2423, %v2391
        %v3192 = vpack.c.b16 %v2424, %v2392
        %v3193 = vpack.c.b16 %v2425, %v2393
        %v3194 = vpack.c.b16 %v2426, %v2394
        %v3195 = vpack.c.b16 %v2427, %v2395
        %v3196 = vpack.c.b16 %v2428, %v2396
        %v3197 = vpack.c.b16 %v2429, %v2397
        %v3198 = vpack.c.b16 %v2430, %v2398
        %v3199 = vpack.c.b16 %v2431, %v2399
        %v3200 = vpack.c.b16 %v2432, %v2400
        %v3201 = vpack.c.b16 %v2433, %v2401
        %v3202 = vpack.c.b16 %v2434, %v2402
        %v3203 = vpack.c.b16 %v2435, %v2403
        %v3204 = vpack.c.b16 %v2436, %v2404
        %v3205 = vpack.c.b16 %v2437, %v2405
        %v3206 = vpack.c.b16 %v2438, %v2406
        %v3207 = vpack.c.b16 %v2439, %v2407
        %v3208 = vpack.c.b16 %v2440, %v2408
        %v3209 = vpack.c.b16 %v2441, %v2409
        %v3210 = vpack.c.b16 %v2442, %v2410
        %v3211 = vpack.c.b16 %v2443, %v2411
        %v3212 = vpack.c.b16 %v2444, %v2412
        %v3213 = vpack.c.b16 %v2445, %v2413
        %v3214 = vpack.c.b16 %v2446, %v2414
        %v3215 = vpack.c.b16 %v2447, %v2415
        %v3216 = vpack.c.b16 %v2448, %v2416
        %v3217 = vpack.c.b16 %v2449, %v2417
        %v3218 = vpack.c.b16 %v2450, %v2418
        %v3219 = vpack.c.b16 %v2483, %v2451
        %v3220 = vpack.c.b16 %v2484, %v2452
        %v3221 = vpack.c.b16 %v2485, %v2453
        %v3222 = vpack.c.b16 %v2486, %v2454
        %v3223 = vpack.c.b16 %v2487, %v2455
        %v3224 = vpack.c.b16 %v2488, %v2456
        %v3225 = vpack.c.b16 %v2489, %v2457
        %v3226 = vpack.c.b16 %v2490, %v2458
        %v3227 = vpack.c.b16 %v2491, %v2459
        %v3228 = vpack.c.b16 %v2492, %v2460
        %v3229 = vpack.c.b16 %v2493, %v2461
        %v3230 = vpack.c.b16 %v2494, %v2462
        %v3231 = vpack.c.b16 %v2495, %v2463
        %v3232 = vpack.c.b16 %v2496, %v2464
        %v3233 = vpack.c.b16 %v2497, %v2465
        %v3234 = vpack.c.b16 %v2498, %v2466
        %v3235 = vpack.c.b16 %v2499, %v2467
        %v3236 = vpack.c.b16 %v2500, %v2468
        %v3237 = vpack.c.b16 %v2501, %v2469
        %v3238 = vpack.c.b16 %v2502, %v2470
        %v3239 = vpack.c.b16 %v2503, %v2471
        %v3240 = vpack.c.b16 %v2504, %v2472
        %v3241 = vpack.c.b16 %v2505, %v2473
        %v3242 = vpack.c.b16 %v2506, %v2474
        %v3243 = vpack.c.b16 %v2507, %v2475
        %v3244 = vpack.c.b16 %v2508, %v2476
        %v3245 = vpack.c.b16 %v2509, %v2477
        %v3246 = vpack.c.b16 %v2510, %v2478
        %v3247 = vpack.c.b16 %v2511, %v2479
        %v3248 = vpack.c.b16 %v2512, %v2480
        %v3249 = vpack.c.b16 %v2513, %v2481
        %v3250 = vpack.c.b16 %v2514, %v2482
        %v3251 = vpack.c.b16 %v2547, %v2515
        %v3252 = vpack.c.b16 %v2548, %v2516
        %v3253 = vpack.c.b16 %v2549, %v2517
        %v3254 = vpack.c.b16 %v2550, %v2518
        %v3255 = vpack.c.b16 %v2551, %v2519
        %v3256 = vpack.c.b16 %v2552, %v2520
        %v3257 = vpack.c.b16 %v2553, %v2521
        %v3258 = vpack.c.b16 %v2554, %v2522
        %v3259 = vpack.c.b16 %v2555, %v2523
        %v3260 = vpack.c.b16 %v2556, %v2524
        %v3261 = vpack.c.b16 %v2557, %v2525
        %v3262 = vpack.c.b16 %v2558, %v2526
        %v3263 = vpack.c.b16 %v2559, %v2527
        %v3264 = vpack.c.b16 %v2560, %v2528
        %v3265 = vpack.c.b16 %v2561, %v2529
        %v3266 = vpack.c.b16 %v2562, %v2530
        %v3267 = vpack.c.b16 %v2563, %v2531
        %v3268 = vpack.c.b16 %v2564, %v2532
        %v3269 = vpack.c.b16 %v2565, %v2533
        %v3270 = vpack.c.b16 %v2566, %v2534
        %v3271 = vpack.c.b16 %v2567, %v2535
        %v3272 = vpack.c.b16 %v2568, %v2536
        %v3273 = vpack.c.b16 %v2569, %v2537
        %v3274 = vpack.c.b16 %v2570, %v2538
        %v3275 = vpack.c.b16 %v2571, %v2539
        %v3276 = vpack.c.b16 %v2572, %v2540
        %v3277 = vpack.c.b16 %v2573, %v2541
        %v3278 = vpack.c.b16 %v2574, %v2542
        %v3279 = vpack.c.b16 %v2575, %v2543
        %v3280 = vpack.c.b16 %v2576, %v2544
        %v3281 = vpack.c.b16 %v2577, %v2545
        %v3282 = vpack.c.b16 %v2578, %v2546
        %v3283 = vpack.c.b16 %v2611, %v2579
        %v3284 = vpack.c.b16 %v2612, %v2580
        %v3285 = vpack.c.b16 %v2613, %v2581
        %v3286 = vpack.c.b16 %v2614, %v2582
        %v3287 = vpack.c.b16 %v2615, %v2583
        %v3288 = vpack.c.b16 %v2616, %v2584
        %v3289 = vpack.c.b16 %v2617, %v2585
        %v3290 = vpack.c.b16 %v2618, %v2586
        %v3291 = vpack.c.b16 %v2619, %v2587
        %v3292 = vpack.c.b16 %v2620, %v2588
        %v3293 = vpack.c.b16 %v2621, %v2589
        %v3294 = vpack.c.b16 %v2622, %v2590
        %v3295 = vpack.c.b16 %v2623, %v2591
        %v3296 = vpack.c.b16 %v2624, %v2592
        %v3297 = vpack.c.b16 %v2625, %v2593
        %v3298 = vpack.c.b16 %v2626, %v2594
        %v3299 = vpack.c.b16 %v2627, %v2595
        %v3300 = vpack.c.b16 %v2628, %v2596
        %v3301 = vpack.c.b16 %v2629, %v2597
        %v3302 = vpack.c.b16 %v2630, %v2598
        %v3303 = vpack.c.b16 %v2631, %v2599
        %v3304 = vpack.c.b16 %v2632, %v2600
        %v3305 = vpack.c.b16 %v2633, %v2601
        %v3306 = vpack.c.b16 %v2634, %v2602
        %v3307 = vpack.c.b16 %v2635, %v2603
        %v3308 = vpack.c.b16 %v2636, %v2604
        %v3309 = vpack.c.b16 %v2637, %v2605
        %v3310 = vpack.c.b16 %v2638, %v2606
        %v3311 = vpack.c.b16 %v2639, %v2607
        %v3312 = vpack.c.b16 %v2640, %v2608
        %v3313 = vpack.c.b16 %v2641, %v2609
        %v3314 = vpack.c.b16 %v2642, %v2610
        %v3315 = vpack.c.b16 %v2675, %v2643
        %v3316 = vpack.c.b16 %v2676, %v2644
        %v3317 = vpack.c.b16 %v2677, %v2645
        %v3318 = vpack.c.b16 %v2678, %v2646
        %v3319 = vpack.c.b16 %v2679, %v2647
        %v3320 = vpack.c.b16 %v2680, %v2648
        %v3321 = vpack.c.b16 %v2681, %v2649
        %v3322 = vpack.c.b16 %v2682, %v2650
        %v3323 = vpack.c.b16 %v2683, %v2651
        %v3324 = vpack.c.b16 %v2684, %v2652
        %v3325 = vpack.c.b16 %v2685, %v2653
        %v3326 = vpack.c.b16 %v2686, %v2654
        %v3327 = vpack.c.b16 %v2687, %v2655
        %v3328 = vpack.c.b16 %v2688, %v2656
        %v3329 = vpack.c.b16 %v2689, %v2657
        %v3330 = vpack.c.b16 %v2690, %v2658
        %v3331 = vpack.c.b16 %v2691, %v2659
        %v3332 = vpack.c.b16 %v2692, %v2660
        %v3333 = vpack.c.b16 %v2693, %v2661
        %v3334 = vpack.c.b16 %v2694, %v2662
        %v3335 = vpack.c.b16 %v2695, %v2663
        %v3336 = vpack.c.b16 %v2696, %v2664
        %v3337 = vpack.c.b16 %v2697, %v2665
        %v3338 = vpack.c.b16 %v2698, %v2666
        %v3339 = vpack.c.b16 %v2699, %v2667
        %v3340 = vpack.c.b16 %v2700, %v2668
        %v3341 = vpack.c.b16 %v2701, %v2669
        %v3342 = vpack.c.b16 %v2702, %v2670
        %v3343 = vpack.c.b16 %v2703, %v2671
        %v3344 = vpack.c.b16 %v2704, %v2672
        %v3345 = vpack.c.b16 %v2705, %v2673
        %v3346 = vpack.c.b16 %v2706, %v2674
        %v3347 = vpack.c.b16 %v2739, %v2707
        %v3348 = vpack.c.b16 %v2740, %v2708
        %v3349 = vpack.c.b16 %v2741, %v2709
        %v3350 = vpack.c.b16 %v2742, %v2710
        %v3351 = vpack.c.b16 %v2743, %v2711
        %v3352 = vpack.c.b16 %v2744, %v2712
        %v3353 = vpack.c.b16 %v2745, %v2713
        %v3354 = vpack.c.b16 %v2746, %v2714
        %v3355 = vpack.c.b16 %v2747, %v2715
        %v3356 = vpack.c.b16 %v2748, %v2716
        %v3357 = vpack.c.b16 %v2749, %v2717
        %v3358 = vpack.c.b16 %v2750, %v2718
        %v3359 = vpack.c.b16 %v2751, %v2719
        %v3360 = vpack.c.b16 %v2752, %v2720
        %v3361 = vpack.c.b16 %v2753, %v2721
        %v3362 = vpack.c.b16 %v2754, %v2722
        %v3363 = vpack.c.b16 %v2755, %v2723
        %v3364 = vpack.c.b16 %v2756, %v2724
        %v3365 = vpack.c.b16 %v2757, %v2725
        %v3366 = vpack.c.b16 %v2758, %v2726
        %v3367 = vpack.c.b16 %v2759, %v2727
        %v3368 = vpack.c.b16 %v2760, %v2728
        %v3369 = vpack.c.b16 %v2761, %v2729
        %v3370 = vpack.c.b16 %v2762, %v2730
        %v3371 = vpack.c.b16 %v2763, %v2731
        %v3372 = vpack.c.b16 %v2764, %v2732
        %v3373 = vpack.c.b16 %v2765, %v2733
        %v3374 = vpack.c.b16 %v2766, %v2734
        %v3375 = vpack.c.b16 %v2767, %v2735
        %v3376 = vpack.c.b16 %v2768, %v2736
        %v3377 = vpack.c.b16 %v2769, %v2737
        %v3378 = vpack.c.b16 %v2770, %v2738
        %v3379 = vpack.c.b16 %v2803, %v2771
        %v3380 = vpack.c.b16 %v2804, %v2772
        %v3381 = vpack.c.b16 %v2805, %v2773
        %v3382 = vpack.c.b16 %v2806, %v2774
        %v3383 = vpack.c.b16 %v2807, %v2775
        %v3384 = vpack.c.b16 %v2808, %v2776
        %v3385 = vpack.c.b16 %v2809, %v2777
        %v3386 = vpack.c.b16 %v2810, %v2778
        %v3387 = vpack.c.b16 %v2811, %v2779
        %v3388 = vpack.c.b16 %v2812, %v2780
        %v3389 = vpack.c.b16 %v2813, %v2781
        %v3390 = vpack.c.b16 %v2814, %v2782
        %v3391 = vpack.c.b16 %v2815, %v2783
        %v3392 = vpack.c.b16 %v2816, %v2784
        %v3393 = vpack.c.b16 %v2817, %v2785
        %v3394 = vpack.c.b16 %v2818, %v2786
        %v3395 = vpack.c.b16 %v2819, %v2787
        %v3396 = vpack.c.b16 %v2820, %v2788
        %v3397 = vpack.c.b16 %v2821, %v2789
        %v3398 = vpack.c.b16 %v2822, %v2790
        %v3399 = vpack.c.b16 %v2823, %v2791
        %v3400 = vpack.c.b16 %v2824, %v2792
        %v3401 = vpack.c.b16 %v2825, %v2793
        %v3402 = vpack.c.b16 %v2826, %v2794
        %v3403 = vpack.c.b16 %v2827, %v2795
        %v3404 = vpack.c.b16 %v2828, %v2796
        %v3405 = vpack.c.b16 %v2829, %v2797
        %v3406 = vpack.c.b16 %v2830, %v2798
        %v3407 = vpack.c.b16 %v2831, %v2799
        %v3408 = vpack.c.b16 %v2832, %v2800
        %v3409 = vpack.c.b16 %v2833, %v2801
        %v3410 = vpack.c.b16 %v2834, %v2802
        %v3411 = vpack.c.b16 %v2867, %v2835
        %v3412 = vpack.c.b16 %v2868, %v2836
        %v3413 = vpack.c.b16 %v2869, %v2837
        %v3414 = vpack.c.b16 %v2870, %v2838
        %v3415 = vpack.c.b16 %v2871, %v2839
        %v3416 = vpack.c.b16 %v2872, %v2840
        %v3417 = vpack.c.b16 %v2873, %v2841
        %v3418 = vpack.c.b16 %v2874, %v2842
        %v3419 = vpack.c.b16 %v2875, %v2843
        %v3420 = vpack.c.b16 %v2876, %v2844
        %v3421 = vpack.c.b16 %v2877, %v2845
        %v3422 = vpack.c.b16 %v2878, %v2846
        %v3423 = vpack.c.b16 %v2879, %v2847
        %v3424 = vpack.c.b16 %v2880, %v2848
        %v3425 = vpack.c.b16 %v2881, %v2849
        %v3426 = vpack.c.b16 %v2882, %v2850
        %v3427 = vpack.c.b16 %v2883, %v2851
        %v3428 = vpack.c.b16 %v2884, %v2852
        %v3429 = vpack.c.b16 %v2885, %v2853
        %v3430 = vpack.c.b16 %v2886, %v2854
        %v3431 = vpack.c.b16 %v2887, %v2855
        %v3432 = vpack.c.b16 %v2888, %v2856
        %v3433 = vpack.c.b16 %v2889, %v2857
        %v3434 = vpack.c.b16 %v2890, %v2858
        %v3435 = vpack.c.b16 %v2891, %v2859
        %v3436 = vpack.c.b16 %v2892, %v2860
        %v3437 = vpack.c.b16 %v2893, %v2861
        %v3438 = vpack.c.b16 %v2894, %v2862
        %v3439 = vpack.c.b16 %v2895, %v2863
        %v3440 = vpack.c.b16 %v2896, %v2864
        %v3441 = vpack.c.b16 %v2897, %v2865
        %v3442 = vpack.c.b16 %v2898, %v2866
        %v3443 = vpack.c.b16 %v2931, %v2899
        %v3444 = vpack.c.b16 %v2932, %v2900
        %v3445 = vpack.c.b16 %v2933, %v2901
        %v3446 = vpack.c.b16 %v2934, %v2902
        %v3447 = vpack.c.b16 %v2935, %v2903
        %v3448 = vpack.c.b16 %v2936, %v2904
        %v3449 = vpack.c.b16 %v2937, %v2905
        %v3450 = vpack.c.b16 %v2938, %v2906
        %v3451 = vpack.c.b16 %v2939, %v2907
        %v3452 = vpack.c.b16 %v2940, %v2908
        %v3453 = vpack.c.b16 %v2941, %v2909
        %v3454 = vpack.c.b16 %v2942, %v2910
        %v3455 = vpack.c.b16 %v2943, %v2911
        %v3456 = vpack.c.b16 %v2944, %v2912
        %v3457 = vpack.c.b16 %v2945, %v2913
        %v3458 = vpack.c.b16 %v2946, %v2914
        %v3459 = vpack.c.b16 %v2947, %v2915
        %v3460 = vpack.c.b16 %v2948, %v2916
        %v3461 = vpack.c.b16 %v2949, %v2917
        %v3462 = vpack.c.b16 %v2950, %v2918
        %v3463 = vpack.c.b16 %v2951, %v2919
        %v3464 = vpack.c.b16 %v2952, %v2920
        %v3465 = vpack.c.b16 %v2953, %v2921
        %v3466 = vpack.c.b16 %v2954, %v2922
        %v3467 = vpack.c.b16 %v2955, %v2923
        %v3468 = vpack.c.b16 %v2956, %v2924
        %v3469 = vpack.c.b16 %v2957, %v2925
        %v3470 = vpack.c.b16 %v2958, %v2926
        %v3471 = vpack.c.b16 %v2959, %v2927
        %v3472 = vpack.c.b16 %v2960, %v2928
        %v3473 = vpack.c.b16 %v2961, %v2929
        %v3474 = vpack.c.b16 %v2962, %v2930
        %3987 = vmatprep.subr.bf16.mxu0 %v2964
        %3988 = vmatpush1.bf16.msra.mxu0 %v2963
        %3989 = vmatprep.subr.bf16.mxu0 %v2996
        %3990 = vmatpush1.bf16.msra.mxu0 %v2995
        %3991 = vmatprep.subr.bf16.mxu0 %v3028
        %3992 = vmatpush1.bf16.msra.mxu0 %v3027
        %3993 = vmatprep.subr.bf16.mxu0 %v3060
        %3994 = vmatpush1.bf16.msra.mxu0 %v3059
        %3995 = vmatprep.subr.bf16.mxu0 %v3092
        %3996 = vmatpush1.bf16.msra.mxu0 %v3091
        %3997 = vmatprep.subr.bf16.mxu0 %v3124
        %3998 = vmatpush1.bf16.msra.mxu0 %v3123
        %3999 = vmatprep.subr.bf16.mxu0 %v3156
        %4000 = vmatpush1.bf16.msra.mxu0 %v3155
        %4001 = vmatprep.subr.bf16.mxu0 %v3188
        %4002 = vmatpush1.bf16.msra.mxu0 %v3187
        %4003 = vmatprep.subr.bf16.mxu0 %v3220
        %4004 = vmatpush1.bf16.msra.mxu0 %v3219
        %4005 = vmatprep.subr.bf16.mxu0 %v3252
        %4006 = vmatpush1.bf16.msra.mxu0 %v3251
        %4007 = vmatprep.subr.bf16.mxu0 %v3284
        %4008 = vmatpush1.bf16.msra.mxu0 %v3283
        %4009 = vmatprep.subr.bf16.mxu0 %v3316
        %4010 = vmatpush1.bf16.msra.mxu0 %v3315
        %4011 = vmatprep.subr.bf16.mxu0 %v3348
        %4012 = vmatpush1.bf16.msra.mxu0 %v3347
        %4013 = vmatprep.subr.bf16.mxu0 %v3380
        %4014 = vmatpush1.bf16.msra.mxu0 %v3379
        %4015 = vmatprep.subr.bf16.mxu0 %v3412
        %4016 = vmatpush1.bf16.msra.mxu0 %v3411
        %4017 = vmatprep.subr.bf16.mxu0 %v3444
        %4018 = vmatpush1.bf16.msra.mxu0 %v3443
        %4019 = vmatprep.mubr.bf16.mxu0 %v900
        %4020 = vmatmul.mubr.bf16.gmra.mrb[0].mxu0 %v899
        %v4021 = vpop.f32.mrb[0].mxu0
        %v4022 = vadd.f32 0.0, %v4021
        %v4023 = vpop.f32.mrb[0].mxu0
        %v4024 = vadd.f32 0.0, %v4023
        %v4025 = vpop.f32.mrb[0].mxu0
        %v4026 = vadd.f32 0.0, %v4025
        %v4027 = vpop.f32.mrb[0].mxu0
        %v4028 = vadd.f32 0.0, %v4027
        %4029 = vmatprep.mubr.bf16.mxu0 %v902
        %4030 = vmatmul.mubr.bf16.gmra.mrb[0].mxu0 %v901
        %v4031 = vpop.f32.mrb[0].mxu0
        %v4032 = vadd.f32 0.0, %v4031
        %v4033 = vpop.f32.mrb[0].mxu0
        %v4034 = vadd.f32 0.0, %v4033
        %v4035 = vpop.f32.mrb[0].mxu0
        %v4036 = vadd.f32 0.0, %v4035
        %v4037 = vpop.f32.mrb[0].mxu0
        %v4038 = vadd.f32 0.0, %v4037
        %4039 = vmatprep.mubr.bf16.mxu0 %v904
        %4040 = vmatmul.mubr.bf16.gmra.mrb[0].mxu0 %v903
        %v4041 = vpop.f32.mrb[0].mxu0
        %v4042 = vadd.f32 0.0, %v4041
        %v4043 = vpop.f32.mrb[0].mxu0
        %v4044 = vadd.f32 0.0, %v4043
        %v4045 = vpop.f32.mrb[0].mxu0
        %v4046 = vadd.f32 0.0, %v4045
        %v4047 = vpop.f32.mrb[0].mxu0
        %v4048 = vadd.f32 0.0, %v4047
        %4049 = vmatprep.mubr.bf16.mxu0 %v906
        %4050 = vmatmul.mubr.bf16.gmra.mrb[0].mxu0 %v905
        %v4051 = vpop.f32.mrb[0].mxu0
        %v4052 = vadd.f32 0.0, %v4051
        %v4053 = vpop.f32.mrb[0].mxu0
        %v4054 = vadd.f32 0.0, %v4053
        %v4055 = vpop.f32.mrb[0].mxu0
        %v4056 = vadd.f32 0.0, %v4055
        %v4057 = vpop.f32.mrb[0].mxu0
        %v4058 = vadd.f32 0.0, %v4057
        %4059 = vmatprep.mubr.bf16.mxu0 %v908
        %4060 = vmatmul.mubr.bf16.gmra.mrb[0].mxu0 %v907
        %v4061 = vpop.f32.mrb[0].mxu0
        %v4062 = vadd.f32 0.0, %v4061
        %v4063 = vpop.f32.mrb[0].mxu0
        %v4064 = vadd.f32 0.0, %v4063
        %v4065 = vpop.f32.mrb[0].mxu0
        %v4066 = vadd.f32 0.0, %v4065
        %v4067 = vpop.f32.mrb[0].mxu0
        %v4068 = vadd.f32 0.0, %v4067
        %4069 = vmatprep.mubr.bf16.mxu0 %v910
        %4070 = vmatmul.mubr.bf16.gmra.mrb[0].mxu0 %v909
        %v4071 = vpop.f32.mrb[0].mxu0
        %v4072 = vadd.f32 0.0, %v4071
        %v4073 = vpop.f32.mrb[0].mxu0
        %v4074 = vadd.f32 0.0, %v4073
        %v4075 = vpop.f32.mrb[0].mxu0
        %v4076 = vadd.f32 0.0, %v4075
        %v4077 = vpop.f32.mrb[0].mxu0
        %v4078 = vadd.f32 0.0, %v4077
        %4079 = vmatprep.mubr.bf16.mxu0 %v912
        %4080 = vmatmul.mubr.bf16.gmra.mrb[0].mxu0 %v911
        %v4081 = vpop.f32.mrb[0].mxu0
        %v4082 = vadd.f32 0.0, %v4081
        %v4083 = vpop.f32.mrb[0].mxu0
        %v4084 = vadd.f32 0.0, %v4083
        %v4085 = vpop.f32.mrb[0].mxu0
        %v4086 = vadd.f32 0.0, %v4085
        %v4087 = vpop.f32.mrb[0].mxu0
        %v4088 = vadd.f32 0.0, %v4087
        %4089 = vmatprep.mubr.bf16.mxu0 %v914
        %4090 = vmatmul.mubr.bf16.gmra.mrb[0].mxu0 %v913
        %v4091 = vpop.f32.mrb[0].mxu0
        %v4092 = vadd.f32 0.0, %v4091
        %v4093 = vpop.f32.mrb[0].mxu0
        %v4094 = vadd.f32 0.0, %v4093
        %v4095 = vpop.f32.mrb[0].mxu0
        %v4096 = vadd.f32 0.0, %v4095
        %v4097 = vpop.f32.mrb[0].mxu0
        %v4098 = vadd.f32 0.0, %v4097
        %4099 = vdwg.mxu0
        %4100 = vmatprep.subr.bf16.mxu0 %v2966
        %4101 = vmatpush1.bf16.msra.mxu0 %v2965
        %4102 = vmatprep.subr.bf16.mxu0 %v2998
        %4103 = vmatpush1.bf16.msra.mxu0 %v2997
        %4104 = vmatprep.subr.bf16.mxu0 %v3030
        %4105 = vmatpush1.bf16.msra.mxu0 %v3029
        %4106 = vmatprep.subr.bf16.mxu0 %v3062
        %4107 = vmatpush1.bf16.msra.mxu0 %v3061
        %4108 = vmatprep.subr.bf16.mxu0 %v3094
        %4109 = vmatpush1.bf16.msra.mxu0 %v3093
        %4110 = vmatprep.subr.bf16.mxu0 %v3126
        %4111 = vmatpush1.bf16.msra.mxu0 %v3125
        %4112 = vmatprep.subr.bf16.mxu0 %v3158
        %4113 = vmatpush1.bf16.msra.mxu0 %v3157
        %4114 = vmatprep.subr.bf16.mxu0 %v3190
        %4115 = vmatpush1.bf16.msra.mxu0 %v3189
        %4116 = vmatprep.subr.bf16.mxu0 %v3222
        %4117 = vmatpush1.bf16.msra.mxu0 %v3221
        %4118 = vmatprep.subr.bf16.mxu0 %v3254
        %4119 = vmatpush1.bf16.msra.mxu0 %v3253
        %4120 = vmatprep.subr.bf16.mxu0 %v3286
        %4121 = vmatpush1.bf16.msra.mxu0 %v3285
        %4122 = vmatprep.subr.bf16.mxu0 %v3318
        %4123 = vmatpush1.bf16.msra.mxu0 %v3317
        %4124 = vmatprep.subr.bf16.mxu0 %v3350
        %4125 = vmatpush1.bf16.msra.mxu0 %v3349
        %4126 = vmatprep.subr.bf16.mxu0 %v3382
        %4127 = vmatpush1.bf16.msra.mxu0 %v3381
        %4128 = vmatprep.subr.bf16.mxu0 %v3414
        %4129 = vmatpush1.bf16.msra.mxu0 %v3413
        %4130 = vmatprep.subr.bf16.mxu0 %v3446
        %4131 = vmatpush1.bf16.msra.mxu0 %v3445
        %4132 = vmatprep.mubr.bf16.mxu0 %v900
        %4133 = vmatmul.mubr.bf16.gmra.mrb[0].mxu0 %v899
        %v4134 = vpop.f32.mrb[0].mxu0
        %v4135 = vadd.f32 0.0, %v4134
        %v4136 = vpop.f32.mrb[0].mxu0
        %v4137 = vadd.f32 0.0, %v4136
        %v4138 = vpop.f32.mrb[0].mxu0
        %v4139 = vadd.f32 0.0, %v4138
        %v4140 = vpop.f32.mrb[0].mxu0
        %v4141 = vadd.f32 0.0, %v4140
        %4142 = vmatprep.mubr.bf16.mxu0 %v902
        %4143 = vmatmul.mubr.bf16.gmra.mrb[0].mxu0 %v901
        %v4144 = vpop.f32.mrb[0].mxu0
        %v4145 = vadd.f32 0.0, %v4144
        %v4146 = vpop.f32.mrb[0].mxu0
        %v4147 = vadd.f32 0.0, %v4146
        %v4148 = vpop.f32.mrb[0].mxu0
        %v4149 = vadd.f32 0.0, %v4148
        %v4150 = vpop.f32.mrb[0].mxu0
        %v4151 = vadd.f32 0.0, %v4150
        %4152 = vmatprep.mubr.bf16.mxu0 %v904
        %4153 = vmatmul.mubr.bf16.gmra.mrb[0].mxu0 %v903
        %v4154 = vpop.f32.mrb[0].mxu0
        %v4155 = vadd.f32 0.0, %v4154
        %v4156 = vpop.f32.mrb[0].mxu0
        %v4157 = vadd.f32 0.0, %v4156
        %v4158 = vpop.f32.mrb[0].mxu0
        %v4159 = vadd.f32 0.0, %v4158
        %v4160 = vpop.f32.mrb[0].mxu0
        %v4161 = vadd.f32 0.0, %v4160
        %4162 = vmatprep.mubr.bf16.mxu0 %v906
        %4163 = vmatmul.mubr.bf16.gmra.mrb[0].mxu0 %v905
        %v4164 = vpop.f32.mrb[0].mxu0
        %v4165 = vadd.f32 0.0, %v4164
        %v4166 = vpop.f32.mrb[0].mxu0
        %v4167 = vadd.f32 0.0, %v4166
        %v4168 = vpop.f32.mrb[0].mxu0
        %v4169 = vadd.f32 0.0, %v4168
        %v4170 = vpop.f32.mrb[0].mxu0
        %v4171 = vadd.f32 0.0, %v4170
        %4172 = vmatprep.mubr.bf16.mxu0 %v908
        %4173 = vmatmul.mubr.bf16.gmra.mrb[0].mxu0 %v907
        %v4174 = vpop.f32.mrb[0].mxu0
        %v4175 = vadd.f32 0.0, %v4174
        %v4176 = vpop.f32.mrb[0].mxu0
        %v4177 = vadd.f32 0.0, %v4176
        %v4178 = vpop.f32.mrb[0].mxu0
        %v4179 = vadd.f32 0.0, %v4178
        %v4180 = vpop.f32.mrb[0].mxu0
        %v4181 = vadd.f32 0.0, %v4180
        %4182 = vmatprep.mubr.bf16.mxu0 %v910
        %4183 = vmatmul.mubr.bf16.gmra.mrb[0].mxu0 %v909
        %v4184 = vpop.f32.mrb[0].mxu0
        %v4185 = vadd.f32 0.0, %v4184
        %v4186 = vpop.f32.mrb[0].mxu0
        %v4187 = vadd.f32 0.0, %v4186
        %v4188 = vpop.f32.mrb[0].mxu0
        %v4189 = vadd.f32 0.0, %v4188
        %v4190 = vpop.f32.mrb[0].mxu0
        %v4191 = vadd.f32 0.0, %v4190
        %4192 = vmatprep.mubr.bf16.mxu0 %v912
        %4193 = vmatmul.mubr.bf16.gmra.mrb[0].mxu0 %v911
        %v4194 = vpop.f32.mrb[0].mxu0
        %v4195 = vadd.f32 0.0, %v4194
        %v4196 = vpop.f32.mrb[0].mxu0
        %v4197 = vadd.f32 0.0, %v4196
        %v4198 = vpop.f32.mrb[0].mxu0
        %v4199 = vadd.f32 0.0, %v4198
        %v4200 = vpop.f32.mrb[0].mxu0
        %v4201 = vadd.f32 0.0, %v4200
        %4202 = vmatprep.mubr.bf16.mxu0 %v914
        %4203 = vmatmul.mubr.bf16.gmra.mrb[0].mxu0 %v913
        %v4204 = vpop.f32.mrb[0].mxu0
        %v4205 = vadd.f32 0.0, %v4204
        %v4206 = vpop.f32.mrb[0].mxu0
        %v4207 = vadd.f32 0.0, %v4206
        %v4208 = vpop.f32.mrb[0].mxu0
        %v4209 = vadd.f32 0.0, %v4208
        %v4210 = vpop.f32.mrb[0].mxu0
        %v4211 = vadd.f32 0.0, %v4210
        %4212 = vdwg.mxu0
        %4213 = vmatprep.subr.bf16.mxu0 %v2968
        %4214 = vmatpush1.bf16.msra.mxu0 %v2967
        %4215 = vmatprep.subr.bf16.mxu0 %v3000
        %4216 = vmatpush1.bf16.msra.mxu0 %v2999
        %4217 = vmatprep.subr.bf16.mxu0 %v3032
        %4218 = vmatpush1.bf16.msra.mxu0 %v3031
        %4219 = vmatprep.subr.bf16.mxu0 %v3064
        %4220 = vmatpush1.bf16.msra.mxu0 %v3063
        %4221 = vmatprep.subr.bf16.mxu0 %v3096
        %4222 = vmatpush1.bf16.msra.mxu0 %v3095
        %4223 = vmatprep.subr.bf16.mxu0 %v3128
        %4224 = vmatpush1.bf16.msra.mxu0 %v3127
        %4225 = vmatprep.subr.bf16.mxu0 %v3160
        %4226 = vmatpush1.bf16.msra.mxu0 %v3159
        %4227 = vmatprep.subr.bf16.mxu0 %v3192
        %4228 = vmatpush1.bf16.msra.mxu0 %v3191
        %4229 = vmatprep.subr.bf16.mxu0 %v3224
        %4230 = vmatpush1.bf16.msra.mxu0 %v3223
        %4231 = vmatprep.subr.bf16.mxu0 %v3256
        %4232 = vmatpush1.bf16.msra.mxu0 %v3255
        %4233 = vmatprep.subr.bf16.mxu0 %v3288
        %4234 = vmatpush1.bf16.msra.mxu0 %v3287
        %4235 = vmatprep.subr.bf16.mxu0 %v3320
        %4236 = vmatpush1.bf16.msra.mxu0 %v3319
        %4237 = vmatprep.subr.bf16.mxu0 %v3352
        %4238 = vmatpush1.bf16.msra.mxu0 %v3351
        %4239 = vmatprep.subr.bf16.mxu0 %v3384
        %4240 = vmatpush1.bf16.msra.mxu0 %v3383
        %4241 = vmatprep.subr.bf16.mxu0 %v3416
        %4242 = vmatpush1.bf16.msra.mxu0 %v3415
        %4243 = vmatprep.subr.bf16.mxu0 %v3448
        %4244 = vmatpush1.bf16.msra.mxu0 %v3447
        %4245 = vmatprep.mubr.bf16.mxu0 %v900
        %4246 = vmatmul.mubr.bf16.gmra.mrb[0].mxu0 %v899
        %v4247 = vpop.f32.mrb[0].mxu0
        %v4248 = vadd.f32 0.0, %v4247
        %v4249 = vpop.f32.mrb[0].mxu0
        %v4250 = vadd.f32 0.0, %v4249
        %v4251 = vpop.f32.mrb[0].mxu0
        %v4252 = vadd.f32 0.0, %v4251
        %v4253 = vpop.f32.mrb[0].mxu0
        %v4254 = vadd.f32 0.0, %v4253
        %4255 = vmatprep.mubr.bf16.mxu0 %v902
        %4256 = vmatmul.mubr.bf16.gmra.mrb[0].mxu0 %v901
        %v4257 = vpop.f32.mrb[0].mxu0
        %v4258 = vadd.f32 0.0, %v4257
        %v4259 = vpop.f32.mrb[0].mxu0
        %v4260 = vadd.f32 0.0, %v4259
        %v4261 = vpop.f32.mrb[0].mxu0
        %v4262 = vadd.f32 0.0, %v4261
        %v4263 = vpop.f32.mrb[0].mxu0
        %v4264 = vadd.f32 0.0, %v4263
        %4265 = vmatprep.mubr.bf16.mxu0 %v904
        %4266 = vmatmul.mubr.bf16.gmra.mrb[0].mxu0 %v903
        %v4267 = vpop.f32.mrb[0].mxu0
        %v4268 = vadd.f32 0.0, %v4267
        %v4269 = vpop.f32.mrb[0].mxu0
        %v4270 = vadd.f32 0.0, %v4269
        %v4271 = vpop.f32.mrb[0].mxu0
        %v4272 = vadd.f32 0.0, %v4271
        %v4273 = vpop.f32.mrb[0].mxu0
        %v4274 = vadd.f32 0.0, %v4273
        %4275 = vmatprep.mubr.bf16.mxu0 %v906
        %4276 = vmatmul.mubr.bf16.gmra.mrb[0].mxu0 %v905
        %v4277 = vpop.f32.mrb[0].mxu0
        %v4278 = vadd.f32 0.0, %v4277
        %v4279 = vpop.f32.mrb[0].mxu0
        %v4280 = vadd.f32 0.0, %v4279
        %v4281 = vpop.f32.mrb[0].mxu0
        %v4282 = vadd.f32 0.0, %v4281
        %v4283 = vpop.f32.mrb[0].mxu0
        %v4284 = vadd.f32 0.0, %v4283
        %4285 = vmatprep.mubr.bf16.mxu0 %v908
        %4286 = vmatmul.mubr.bf16.gmra.mrb[0].mxu0 %v907
        %v4287 = vpop.f32.mrb[0].mxu0
        %v4288 = vadd.f32 0.0, %v4287
        %v4289 = vpop.f32.mrb[0].mxu0
        %v4290 = vadd.f32 0.0, %v4289
        %v4291 = vpop.f32.mrb[0].mxu0
        %v4292 = vadd.f32 0.0, %v4291
        %v4293 = vpop.f32.mrb[0].mxu0
        %v4294 = vadd.f32 0.0, %v4293
        %4295 = vmatprep.mubr.bf16.mxu0 %v910
        %4296 = vmatmul.mubr.bf16.gmra.mrb[0].mxu0 %v909
        %v4297 = vpop.f32.mrb[0].mxu0
        %v4298 = vadd.f32 0.0, %v4297
        %v4299 = vpop.f32.mrb[0].mxu0
        %v4300 = vadd.f32 0.0, %v4299
        %v4301 = vpop.f32.mrb[0].mxu0
        %v4302 = vadd.f32 0.0, %v4301
        %v4303 = vpop.f32.mrb[0].mxu0
        %v4304 = vadd.f32 0.0, %v4303
        %4305 = vmatprep.mubr.bf16.mxu0 %v912
        %4306 = vmatmul.mubr.bf16.gmra.mrb[0].mxu0 %v911
        %v4307 = vpop.f32.mrb[0].mxu0
        %v4308 = vadd.f32 0.0, %v4307
        %v4309 = vpop.f32.mrb[0].mxu0
        %v4310 = vadd.f32 0.0, %v4309
        %v4311 = vpop.f32.mrb[0].mxu0
        %v4312 = vadd.f32 0.0, %v4311
        %v4313 = vpop.f32.mrb[0].mxu0
        %v4314 = vadd.f32 0.0, %v4313
        %4315 = vmatprep.mubr.bf16.mxu0 %v914
        %4316 = vmatmul.mubr.bf16.gmra.mrb[0].mxu0 %v913
        %v4317 = vpop.f32.mrb[0].mxu0
        %v4318 = vadd.f32 0.0, %v4317
        %v4319 = vpop.f32.mrb[0].mxu0
        %v4320 = vadd.f32 0.0, %v4319
        %v4321 = vpop.f32.mrb[0].mxu0
        %v4322 = vadd.f32 0.0, %v4321
        %v4323 = vpop.f32.mrb[0].mxu0
        %v4324 = vadd.f32 0.0, %v4323
        %4325 = vdwg.mxu0
        %4326 = vmatprep.subr.bf16.mxu0 %v2970
        %4327 = vmatpush1.bf16.msra.mxu0 %v2969
        %4328 = vmatprep.subr.bf16.mxu0 %v3002
        %4329 = vmatpush1.bf16.msra.mxu0 %v3001
        %4330 = vmatprep.subr.bf16.mxu0 %v3034
        %4331 = vmatpush1.bf16.msra.mxu0 %v3033
        %4332 = vmatprep.subr.bf16.mxu0 %v3066
        %4333 = vmatpush1.bf16.msra.mxu0 %v3065
        %4334 = vmatprep.subr.bf16.mxu0 %v3098
        %4335 = vmatpush1.bf16.msra.mxu0 %v3097
        %4336 = vmatprep.subr.bf16.mxu0 %v3130
        %4337 = vmatpush1.bf16.msra.mxu0 %v3129
        %4338 = vmatprep.subr.bf16.mxu0 %v3162
        %4339 = vmatpush1.bf16.msra.mxu0 %v3161
        %4340 = vmatprep.subr.bf16.mxu0 %v3194
        %4341 = vmatpush1.bf16.msra.mxu0 %v3193
        %4342 = vmatprep.subr.bf16.mxu0 %v3226
        %4343 = vmatpush1.bf16.msra.mxu0 %v3225
        %4344 = vmatprep.subr.bf16.mxu0 %v3258
        %4345 = vmatpush1.bf16.msra.mxu0 %v3257
        %4346 = vmatprep.subr.bf16.mxu0 %v3290
        %4347 = vmatpush1.bf16.msra.mxu0 %v3289
        %4348 = vmatprep.subr.bf16.mxu0 %v3322
        %4349 = vmatpush1.bf16.msra.mxu0 %v3321
        %4350 = vmatprep.subr.bf16.mxu0 %v3354
        %4351 = vmatpush1.bf16.msra.mxu0 %v3353
        %4352 = vmatprep.subr.bf16.mxu0 %v3386
        %4353 = vmatpush1.bf16.msra.mxu0 %v3385
        %4354 = vmatprep.subr.bf16.mxu0 %v3418
        %4355 = vmatpush1.bf16.msra.mxu0 %v3417
        %4356 = vmatprep.subr.bf16.mxu0 %v3450
        %4357 = vmatpush1.bf16.msra.mxu0 %v3449
        %4358 = vmatprep.mubr.bf16.mxu0 %v900
        %4359 = vmatmul.mubr.bf16.gmra.mrb[0].mxu0 %v899
        %v4360 = vpop.f32.mrb[0].mxu0
        %v4361 = vadd.f32 0.0, %v4360
        %v4362 = vpop.f32.mrb[0].mxu0
        %v4363 = vadd.f32 0.0, %v4362
        %v4364 = vpop.f32.mrb[0].mxu0
        %v4365 = vadd.f32 0.0, %v4364
        %v4366 = vpop.f32.mrb[0].mxu0
        %v4367 = vadd.f32 0.0, %v4366
        %4368 = vmatprep.mubr.bf16.mxu0 %v902
        %4369 = vmatmul.mubr.bf16.gmra.mrb[0].mxu0 %v901
        %v4370 = vpop.f32.mrb[0].mxu0
        %v4371 = vadd.f32 0.0, %v4370
        %v4372 = vpop.f32.mrb[0].mxu0
        %v4373 = vadd.f32 0.0, %v4372
        %v4374 = vpop.f32.mrb[0].mxu0
        %v4375 = vadd.f32 0.0, %v4374
        %v4376 = vpop.f32.mrb[0].mxu0
        %v4377 = vadd.f32 0.0, %v4376
        %4378 = vmatprep.mubr.bf16.mxu0 %v904
        %4379 = vmatmul.mubr.bf16.gmra.mrb[0].mxu0 %v903
        %v4380 = vpop.f32.mrb[0].mxu0
        %v4381 = vadd.f32 0.0, %v4380
        %v4382 = vpop.f32.mrb[0].mxu0
        %v4383 = vadd.f32 0.0, %v4382
        %v4384 = vpop.f32.mrb[0].mxu0
        %v4385 = vadd.f32 0.0, %v4384
        %v4386 = vpop.f32.mrb[0].mxu0
        %v4387 = vadd.f32 0.0, %v4386
        %4388 = vmatprep.mubr.bf16.mxu0 %v906
        %4389 = vmatmul.mubr.bf16.gmra.mrb[0].mxu0 %v905
        %v4390 = vpop.f32.mrb[0].mxu0
        %v4391 = vadd.f32 0.0, %v4390
        %v4392 = vpop.f32.mrb[0].mxu0
        %v4393 = vadd.f32 0.0, %v4392
        %v4394 = vpop.f32.mrb[0].mxu0
        %v4395 = vadd.f32 0.0, %v4394
        %v4396 = vpop.f32.mrb[0].mxu0
        %v4397 = vadd.f32 0.0, %v4396
        %4398 = vmatprep.mubr.bf16.mxu0 %v908
        %4399 = vmatmul.mubr.bf16.gmra.mrb[0].mxu0 %v907
        %v4400 = vpop.f32.mrb[0].mxu0
        %v4401 = vadd.f32 0.0, %v4400
        %v4402 = vpop.f32.mrb[0].mxu0
        %v4403 = vadd.f32 0.0, %v4402
        %v4404 = vpop.f32.mrb[0].mxu0
        %v4405 = vadd.f32 0.0, %v4404
        %v4406 = vpop.f32.mrb[0].mxu0
        %v4407 = vadd.f32 0.0, %v4406
        %4408 = vmatprep.mubr.bf16.mxu0 %v910
        %4409 = vmatmul.mubr.bf16.gmra.mrb[0].mxu0 %v909
        %v4410 = vpop.f32.mrb[0].mxu0
        %v4411 = vadd.f32 0.0, %v4410
        %v4412 = vpop.f32.mrb[0].mxu0
        %v4413 = vadd.f32 0.0, %v4412
        %v4414 = vpop.f32.mrb[0].mxu0
        %v4415 = vadd.f32 0.0, %v4414
        %v4416 = vpop.f32.mrb[0].mxu0
        %v4417 = vadd.f32 0.0, %v4416
        %4418 = vmatprep.mubr.bf16.mxu0 %v912
        %4419 = vmatmul.mubr.bf16.gmra.mrb[0].mxu0 %v911
        %v4420 = vpop.f32.mrb[0].mxu0
        %v4421 = vadd.f32 0.0, %v4420
        %v4422 = vpop.f32.mrb[0].mxu0
        %v4423 = vadd.f32 0.0, %v4422
        %v4424 = vpop.f32.mrb[0].mxu0
        %v4425 = vadd.f32 0.0, %v4424
        %v4426 = vpop.f32.mrb[0].mxu0
        %v4427 = vadd.f32 0.0, %v4426
        %4428 = vmatprep.mubr.bf16.mxu0 %v914
        %4429 = vmatmul.mubr.bf16.gmra.mrb[0].mxu0 %v913
        %v4430 = vpop.f32.mrb[0].mxu0
        %v4431 = vadd.f32 0.0, %v4430
        %v4432 = vpop.f32.mrb[0].mxu0
        %v4433 = vadd.f32 0.0, %v4432
        %v4434 = vpop.f32.mrb[0].mxu0
        %v4435 = vadd.f32 0.0, %v4434
        %v4436 = vpop.f32.mrb[0].mxu0
        %v4437 = vadd.f32 0.0, %v4436
        %4438 = vdwg.mxu0
        %4439 = vmatprep.subr.bf16.mxu0 %v2972
        %4440 = vmatpush1.bf16.msra.mxu0 %v2971
        %4441 = vmatprep.subr.bf16.mxu0 %v3004
        %4442 = vmatpush1.bf16.msra.mxu0 %v3003
        %4443 = vmatprep.subr.bf16.mxu0 %v3036
        %4444 = vmatpush1.bf16.msra.mxu0 %v3035
        %4445 = vmatprep.subr.bf16.mxu0 %v3068
        %4446 = vmatpush1.bf16.msra.mxu0 %v3067
        %4447 = vmatprep.subr.bf16.mxu0 %v3100
        %4448 = vmatpush1.bf16.msra.mxu0 %v3099
        %4449 = vmatprep.subr.bf16.mxu0 %v3132
        %4450 = vmatpush1.bf16.msra.mxu0 %v3131
        %4451 = vmatprep.subr.bf16.mxu0 %v3164
        %4452 = vmatpush1.bf16.msra.mxu0 %v3163
        %4453 = vmatprep.subr.bf16.mxu0 %v3196
        %4454 = vmatpush1.bf16.msra.mxu0 %v3195
        %4455 = vmatprep.subr.bf16.mxu0 %v3228
        %4456 = vmatpush1.bf16.msra.mxu0 %v3227
        %4457 = vmatprep.subr.bf16.mxu0 %v3260
        %4458 = vmatpush1.bf16.msra.mxu0 %v3259
        %4459 = vmatprep.subr.bf16.mxu0 %v3292
        %4460 = vmatpush1.bf16.msra.mxu0 %v3291
        %4461 = vmatprep.subr.bf16.mxu0 %v3324
        %4462 = vmatpush1.bf16.msra.mxu0 %v3323
        %4463 = vmatprep.subr.bf16.mxu0 %v3356
        %4464 = vmatpush1.bf16.msra.mxu0 %v3355
        %4465 = vmatprep.subr.bf16.mxu0 %v3388
        %4466 = vmatpush1.bf16.msra.mxu0 %v3387
        %4467 = vmatprep.subr.bf16.mxu0 %v3420
        %4468 = vmatpush1.bf16.msra.mxu0 %v3419
        %4469 = vmatprep.subr.bf16.mxu0 %v3452
        %4470 = vmatpush1.bf16.msra.mxu0 %v3451
        %4471 = vmatprep.mubr.bf16.mxu0 %v900
        %4472 = vmatmul.mubr.bf16.gmra.mrb[0].mxu0 %v899
        %v4473 = vpop.f32.mrb[0].mxu0
        %v4474 = vadd.f32 0.0, %v4473
        %v4475 = vpop.f32.mrb[0].mxu0
        %v4476 = vadd.f32 0.0, %v4475
        %v4477 = vpop.f32.mrb[0].mxu0
        %v4478 = vadd.f32 0.0, %v4477
        %v4479 = vpop.f32.mrb[0].mxu0
        %v4480 = vadd.f32 0.0, %v4479
        %4481 = vmatprep.mubr.bf16.mxu0 %v902
        %4482 = vmatmul.mubr.bf16.gmra.mrb[0].mxu0 %v901
        %v4483 = vpop.f32.mrb[0].mxu0
        %v4484 = vadd.f32 0.0, %v4483
        %v4485 = vpop.f32.mrb[0].mxu0
        %v4486 = vadd.f32 0.0, %v4485
        %v4487 = vpop.f32.mrb[0].mxu0
        %v4488 = vadd.f32 0.0, %v4487
        %v4489 = vpop.f32.mrb[0].mxu0
        %v4490 = vadd.f32 0.0, %v4489
        %4491 = vmatprep.mubr.bf16.mxu0 %v904
        %4492 = vmatmul.mubr.bf16.gmra.mrb[0].mxu0 %v903
        %v4493 = vpop.f32.mrb[0].mxu0
        %v4494 = vadd.f32 0.0, %v4493
        %v4495 = vpop.f32.mrb[0].mxu0
        %v4496 = vadd.f32 0.0, %v4495
        %v4497 = vpop.f32.mrb[0].mxu0
        %v4498 = vadd.f32 0.0, %v4497
        %v4499 = vpop.f32.mrb[0].mxu0
        %v4500 = vadd.f32 0.0, %v4499
        %4501 = vmatprep.mubr.bf16.mxu0 %v906
        %4502 = vmatmul.mubr.bf16.gmra.mrb[0].mxu0 %v905
        %v4503 = vpop.f32.mrb[0].mxu0
        %v4504 = vadd.f32 0.0, %v4503
        %v4505 = vpop.f32.mrb[0].mxu0
        %v4506 = vadd.f32 0.0, %v4505
        %v4507 = vpop.f32.mrb[0].mxu0
        %v4508 = vadd.f32 0.0, %v4507
        %v4509 = vpop.f32.mrb[0].mxu0
        %v4510 = vadd.f32 0.0, %v4509
        %4511 = vmatprep.mubr.bf16.mxu0 %v908
        %4512 = vmatmul.mubr.bf16.gmra.mrb[0].mxu0 %v907
        %v4513 = vpop.f32.mrb[0].mxu0
        %v4514 = vadd.f32 0.0, %v4513
        %v4515 = vpop.f32.mrb[0].mxu0
        %v4516 = vadd.f32 0.0, %v4515
        %v4517 = vpop.f32.mrb[0].mxu0
        %v4518 = vadd.f32 0.0, %v4517
        %v4519 = vpop.f32.mrb[0].mxu0
        %v4520 = vadd.f32 0.0, %v4519
        %4521 = vmatprep.mubr.bf16.mxu0 %v910
        %4522 = vmatmul.mubr.bf16.gmra.mrb[0].mxu0 %v909
        %v4523 = vpop.f32.mrb[0].mxu0
        %v4524 = vadd.f32 0.0, %v4523
        %v4525 = vpop.f32.mrb[0].mxu0
        %v4526 = vadd.f32 0.0, %v4525
        %v4527 = vpop.f32.mrb[0].mxu0
        %v4528 = vadd.f32 0.0, %v4527
        %v4529 = vpop.f32.mrb[0].mxu0
        %v4530 = vadd.f32 0.0, %v4529
        %4531 = vmatprep.mubr.bf16.mxu0 %v912
        %4532 = vmatmul.mubr.bf16.gmra.mrb[0].mxu0 %v911
        %v4533 = vpop.f32.mrb[0].mxu0
        %v4534 = vadd.f32 0.0, %v4533
        %v4535 = vpop.f32.mrb[0].mxu0
        %v4536 = vadd.f32 0.0, %v4535
        %v4537 = vpop.f32.mrb[0].mxu0
        %v4538 = vadd.f32 0.0, %v4537
        %v4539 = vpop.f32.mrb[0].mxu0
        %v4540 = vadd.f32 0.0, %v4539
        %4541 = vmatprep.mubr.bf16.mxu0 %v914
        %4542 = vmatmul.mubr.bf16.gmra.mrb[0].mxu0 %v913
        %v4543 = vpop.f32.mrb[0].mxu0
        %v4544 = vadd.f32 0.0, %v4543
        %v4545 = vpop.f32.mrb[0].mxu0
        %v4546 = vadd.f32 0.0, %v4545
        %v4547 = vpop.f32.mrb[0].mxu0
        %v4548 = vadd.f32 0.0, %v4547
        %v4549 = vpop.f32.mrb[0].mxu0
        %v4550 = vadd.f32 0.0, %v4549
        %4551 = vdwg.mxu0
        %4552 = vmatprep.subr.bf16.mxu0 %v2974
        %4553 = vmatpush1.bf16.msra.mxu0 %v2973
        %4554 = vmatprep.subr.bf16.mxu0 %v3006
        %4555 = vmatpush1.bf16.msra.mxu0 %v3005
        %4556 = vmatprep.subr.bf16.mxu0 %v3038
        %4557 = vmatpush1.bf16.msra.mxu0 %v3037
        %4558 = vmatprep.subr.bf16.mxu0 %v3070
        %4559 = vmatpush1.bf16.msra.mxu0 %v3069
        %4560 = vmatprep.subr.bf16.mxu0 %v3102
        %4561 = vmatpush1.bf16.msra.mxu0 %v3101
        %4562 = vmatprep.subr.bf16.mxu0 %v3134
        %4563 = vmatpush1.bf16.msra.mxu0 %v3133
        %4564 = vmatprep.subr.bf16.mxu0 %v3166
        %4565 = vmatpush1.bf16.msra.mxu0 %v3165
        %4566 = vmatprep.subr.bf16.mxu0 %v3198
        %4567 = vmatpush1.bf16.msra.mxu0 %v3197
        %4568 = vmatprep.subr.bf16.mxu0 %v3230
        %4569 = vmatpush1.bf16.msra.mxu0 %v3229
        %4570 = vmatprep.subr.bf16.mxu0 %v3262
        %4571 = vmatpush1.bf16.msra.mxu0 %v3261
        %4572 = vmatprep.subr.bf16.mxu0 %v3294
        %4573 = vmatpush1.bf16.msra.mxu0 %v3293
        %4574 = vmatprep.subr.bf16.mxu0 %v3326
        %4575 = vmatpush1.bf16.msra.mxu0 %v3325
        %4576 = vmatprep.subr.bf16.mxu0 %v3358
        %4577 = vmatpush1.bf16.msra.mxu0 %v3357
        %4578 = vmatprep.subr.bf16.mxu0 %v3390
        %4579 = vmatpush1.bf16.msra.mxu0 %v3389
        %4580 = vmatprep.subr.bf16.mxu0 %v3422
        %4581 = vmatpush1.bf16.msra.mxu0 %v3421
        %4582 = vmatprep.subr.bf16.mxu0 %v3454
        %4583 = vmatpush1.bf16.msra.mxu0 %v3453
        %4584 = vmatprep.mubr.bf16.mxu0 %v900
        %4585 = vmatmul.mubr.bf16.gmra.mrb[0].mxu0 %v899
        %v4586 = vpop.f32.mrb[0].mxu0
        %v4587 = vadd.f32 0.0, %v4586
        %v4588 = vpop.f32.mrb[0].mxu0
        %v4589 = vadd.f32 0.0, %v4588
        %v4590 = vpop.f32.mrb[0].mxu0
        %v4591 = vadd.f32 0.0, %v4590
        %v4592 = vpop.f32.mrb[0].mxu0
        %v4593 = vadd.f32 0.0, %v4592
        %4594 = vmatprep.mubr.bf16.mxu0 %v902
        %4595 = vmatmul.mubr.bf16.gmra.mrb[0].mxu0 %v901
        %v4596 = vpop.f32.mrb[0].mxu0
        %v4597 = vadd.f32 0.0, %v4596
        %v4598 = vpop.f32.mrb[0].mxu0
        %v4599 = vadd.f32 0.0, %v4598
        %v4600 = vpop.f32.mrb[0].mxu0
        %v4601 = vadd.f32 0.0, %v4600
        %v4602 = vpop.f32.mrb[0].mxu0
        %v4603 = vadd.f32 0.0, %v4602
        %4604 = vmatprep.mubr.bf16.mxu0 %v904
        %4605 = vmatmul.mubr.bf16.gmra.mrb[0].mxu0 %v903
        %v4606 = vpop.f32.mrb[0].mxu0
        %v4607 = vadd.f32 0.0, %v4606
        %v4608 = vpop.f32.mrb[0].mxu0
        %v4609 = vadd.f32 0.0, %v4608
        %v4610 = vpop.f32.mrb[0].mxu0
        %v4611 = vadd.f32 0.0, %v4610
        %v4612 = vpop.f32.mrb[0].mxu0
        %v4613 = vadd.f32 0.0, %v4612
        %4614 = vmatprep.mubr.bf16.mxu0 %v906
        %4615 = vmatmul.mubr.bf16.gmra.mrb[0].mxu0 %v905
        %v4616 = vpop.f32.mrb[0].mxu0
        %v4617 = vadd.f32 0.0, %v4616
        %v4618 = vpop.f32.mrb[0].mxu0
        %v4619 = vadd.f32 0.0, %v4618
        %v4620 = vpop.f32.mrb[0].mxu0
        %v4621 = vadd.f32 0.0, %v4620
        %v4622 = vpop.f32.mrb[0].mxu0
        %v4623 = vadd.f32 0.0, %v4622
        %4624 = vmatprep.mubr.bf16.mxu0 %v908
        %4625 = vmatmul.mubr.bf16.gmra.mrb[0].mxu0 %v907
        %v4626 = vpop.f32.mrb[0].mxu0
        %v4627 = vadd.f32 0.0, %v4626
        %v4628 = vpop.f32.mrb[0].mxu0
        %v4629 = vadd.f32 0.0, %v4628
        %v4630 = vpop.f32.mrb[0].mxu0
        %v4631 = vadd.f32 0.0, %v4630
        %v4632 = vpop.f32.mrb[0].mxu0
        %v4633 = vadd.f32 0.0, %v4632
        %4634 = vmatprep.mubr.bf16.mxu0 %v910
        %4635 = vmatmul.mubr.bf16.gmra.mrb[0].mxu0 %v909
        %v4636 = vpop.f32.mrb[0].mxu0
        %v4637 = vadd.f32 0.0, %v4636
        %v4638 = vpop.f32.mrb[0].mxu0
        %v4639 = vadd.f32 0.0, %v4638
        %v4640 = vpop.f32.mrb[0].mxu0
        %v4641 = vadd.f32 0.0, %v4640
        %v4642 = vpop.f32.mrb[0].mxu0
        %v4643 = vadd.f32 0.0, %v4642
        %4644 = vmatprep.mubr.bf16.mxu0 %v912
        %4645 = vmatmul.mubr.bf16.gmra.mrb[0].mxu0 %v911
        %v4646 = vpop.f32.mrb[0].mxu0
        %v4647 = vadd.f32 0.0, %v4646
        %v4648 = vpop.f32.mrb[0].mxu0
        %v4649 = vadd.f32 0.0, %v4648
        %v4650 = vpop.f32.mrb[0].mxu0
        %v4651 = vadd.f32 0.0, %v4650
        %v4652 = vpop.f32.mrb[0].mxu0
        %v4653 = vadd.f32 0.0, %v4652
        %4654 = vmatprep.mubr.bf16.mxu0 %v914
        %4655 = vmatmul.mubr.bf16.gmra.mrb[0].mxu0 %v913
        %v4656 = vpop.f32.mrb[0].mxu0
        %v4657 = vadd.f32 0.0, %v4656
        %v4658 = vpop.f32.mrb[0].mxu0
        %v4659 = vadd.f32 0.0, %v4658
        %v4660 = vpop.f32.mrb[0].mxu0
        %v4661 = vadd.f32 0.0, %v4660
        %v4662 = vpop.f32.mrb[0].mxu0
        %v4663 = vadd.f32 0.0, %v4662
        %4664 = vdwg.mxu0
        %4665 = vmatprep.subr.bf16.mxu0 %v2976
        %4666 = vmatpush1.bf16.msra.mxu0 %v2975
        %4667 = vmatprep.subr.bf16.mxu0 %v3008
        %4668 = vmatpush1.bf16.msra.mxu0 %v3007
        %4669 = vmatprep.subr.bf16.mxu0 %v3040
        %4670 = vmatpush1.bf16.msra.mxu0 %v3039
        %4671 = vmatprep.subr.bf16.mxu0 %v3072
        %4672 = vmatpush1.bf16.msra.mxu0 %v3071
        %4673 = vmatprep.subr.bf16.mxu0 %v3104
        %4674 = vmatpush1.bf16.msra.mxu0 %v3103
        %4675 = vmatprep.subr.bf16.mxu0 %v3136
        %4676 = vmatpush1.bf16.msra.mxu0 %v3135
        %4677 = vmatprep.subr.bf16.mxu0 %v3168
        %4678 = vmatpush1.bf16.msra.mxu0 %v3167
        %4679 = vmatprep.subr.bf16.mxu0 %v3200
        %4680 = vmatpush1.bf16.msra.mxu0 %v3199
        %4681 = vmatprep.subr.bf16.mxu0 %v3232
        %4682 = vmatpush1.bf16.msra.mxu0 %v3231
        %4683 = vmatprep.subr.bf16.mxu0 %v3264
        %4684 = vmatpush1.bf16.msra.mxu0 %v3263
        %4685 = vmatprep.subr.bf16.mxu0 %v3296
        %4686 = vmatpush1.bf16.msra.mxu0 %v3295
        %4687 = vmatprep.subr.bf16.mxu0 %v3328
        %4688 = vmatpush1.bf16.msra.mxu0 %v3327
        %4689 = vmatprep.subr.bf16.mxu0 %v3360
        %4690 = vmatpush1.bf16.msra.mxu0 %v3359
        %4691 = vmatprep.subr.bf16.mxu0 %v3392
        %4692 = vmatpush1.bf16.msra.mxu0 %v3391
        %4693 = vmatprep.subr.bf16.mxu0 %v3424
        %4694 = vmatpush1.bf16.msra.mxu0 %v3423
        %4695 = vmatprep.subr.bf16.mxu0 %v3456
        %4696 = vmatpush1.bf16.msra.mxu0 %v3455
        %4697 = vmatprep.mubr.bf16.mxu0 %v900
        %4698 = vmatmul.mubr.bf16.gmra.mrb[0].mxu0 %v899
        %v4699 = vpop.f32.mrb[0].mxu0
        %v4700 = vadd.f32 0.0, %v4699
        %v4701 = vpop.f32.mrb[0].mxu0
        %v4702 = vadd.f32 0.0, %v4701
        %v4703 = vpop.f32.mrb[0].mxu0
        %v4704 = vadd.f32 0.0, %v4703
        %v4705 = vpop.f32.mrb[0].mxu0
        %v4706 = vadd.f32 0.0, %v4705
        %4707 = vmatprep.mubr.bf16.mxu0 %v902
        %4708 = vmatmul.mubr.bf16.gmra.mrb[0].mxu0 %v901
        %v4709 = vpop.f32.mrb[0].mxu0
        %v4710 = vadd.f32 0.0, %v4709
        %v4711 = vpop.f32.mrb[0].mxu0
        %v4712 = vadd.f32 0.0, %v4711
        %v4713 = vpop.f32.mrb[0].mxu0
        %v4714 = vadd.f32 0.0, %v4713
        %v4715 = vpop.f32.mrb[0].mxu0
        %v4716 = vadd.f32 0.0, %v4715
        %4717 = vmatprep.mubr.bf16.mxu0 %v904
        %4718 = vmatmul.mubr.bf16.gmra.mrb[0].mxu0 %v903
        %v4719 = vpop.f32.mrb[0].mxu0
        %v4720 = vadd.f32 0.0, %v4719
        %v4721 = vpop.f32.mrb[0].mxu0
        %v4722 = vadd.f32 0.0, %v4721
        %v4723 = vpop.f32.mrb[0].mxu0
        %v4724 = vadd.f32 0.0, %v4723
        %v4725 = vpop.f32.mrb[0].mxu0
        %v4726 = vadd.f32 0.0, %v4725
        %4727 = vmatprep.mubr.bf16.mxu0 %v906
        %4728 = vmatmul.mubr.bf16.gmra.mrb[0].mxu0 %v905
        %v4729 = vpop.f32.mrb[0].mxu0
        %v4730 = vadd.f32 0.0, %v4729
        %v4731 = vpop.f32.mrb[0].mxu0
        %v4732 = vadd.f32 0.0, %v4731
        %v4733 = vpop.f32.mrb[0].mxu0
        %v4734 = vadd.f32 0.0, %v4733
        %v4735 = vpop.f32.mrb[0].mxu0
        %v4736 = vadd.f32 0.0, %v4735
        %4737 = vmatprep.mubr.bf16.mxu0 %v908
        %4738 = vmatmul.mubr.bf16.gmra.mrb[0].mxu0 %v907
        %v4739 = vpop.f32.mrb[0].mxu0
        %v4740 = vadd.f32 0.0, %v4739
        %v4741 = vpop.f32.mrb[0].mxu0
        %v4742 = vadd.f32 0.0, %v4741
        %v4743 = vpop.f32.mrb[0].mxu0
        %v4744 = vadd.f32 0.0, %v4743
        %v4745 = vpop.f32.mrb[0].mxu0
        %v4746 = vadd.f32 0.0, %v4745
        %4747 = vmatprep.mubr.bf16.mxu0 %v910
        %4748 = vmatmul.mubr.bf16.gmra.mrb[0].mxu0 %v909
        %v4749 = vpop.f32.mrb[0].mxu0
        %v4750 = vadd.f32 0.0, %v4749
        %v4751 = vpop.f32.mrb[0].mxu0
        %v4752 = vadd.f32 0.0, %v4751
        %v4753 = vpop.f32.mrb[0].mxu0
        %v4754 = vadd.f32 0.0, %v4753
        %v4755 = vpop.f32.mrb[0].mxu0
        %v4756 = vadd.f32 0.0, %v4755
        %4757 = vmatprep.mubr.bf16.mxu0 %v912
        %4758 = vmatmul.mubr.bf16.gmra.mrb[0].mxu0 %v911
        %v4759 = vpop.f32.mrb[0].mxu0
        %v4760 = vadd.f32 0.0, %v4759
        %v4761 = vpop.f32.mrb[0].mxu0
        %v4762 = vadd.f32 0.0, %v4761
        %v4763 = vpop.f32.mrb[0].mxu0
        %v4764 = vadd.f32 0.0, %v4763
        %v4765 = vpop.f32.mrb[0].mxu0
        %v4766 = vadd.f32 0.0, %v4765
        %4767 = vmatprep.mubr.bf16.mxu0 %v914
        %4768 = vmatmul.mubr.bf16.gmra.mrb[0].mxu0 %v913
        %v4769 = vpop.f32.mrb[0].mxu0
        %v4770 = vadd.f32 0.0, %v4769
        %v4771 = vpop.f32.mrb[0].mxu0
        %v4772 = vadd.f32 0.0, %v4771
        %v4773 = vpop.f32.mrb[0].mxu0
        %v4774 = vadd.f32 0.0, %v4773
        %v4775 = vpop.f32.mrb[0].mxu0
        %v4776 = vadd.f32 0.0, %v4775
        %4777 = vdwg.mxu0
        %4778 = vmatprep.subr.bf16.mxu0 %v2978
        %4779 = vmatpush1.bf16.msra.mxu0 %v2977
        %4780 = vmatprep.subr.bf16.mxu0 %v3010
        %4781 = vmatpush1.bf16.msra.mxu0 %v3009
        %4782 = vmatprep.subr.bf16.mxu0 %v3042
        %4783 = vmatpush1.bf16.msra.mxu0 %v3041
        %4784 = vmatprep.subr.bf16.mxu0 %v3074
        %4785 = vmatpush1.bf16.msra.mxu0 %v3073
        %4786 = vmatprep.subr.bf16.mxu0 %v3106
        %4787 = vmatpush1.bf16.msra.mxu0 %v3105
        %4788 = vmatprep.subr.bf16.mxu0 %v3138
        %4789 = vmatpush1.bf16.msra.mxu0 %v3137
        %4790 = vmatprep.subr.bf16.mxu0 %v3170
        %4791 = vmatpush1.bf16.msra.mxu0 %v3169
        %4792 = vmatprep.subr.bf16.mxu0 %v3202
        %4793 = vmatpush1.bf16.msra.mxu0 %v3201
        %4794 = vmatprep.subr.bf16.mxu0 %v3234
        %4795 = vmatpush1.bf16.msra.mxu0 %v3233
        %4796 = vmatprep.subr.bf16.mxu0 %v3266
        %4797 = vmatpush1.bf16.msra.mxu0 %v3265
        %4798 = vmatprep.subr.bf16.mxu0 %v3298
        %4799 = vmatpush1.bf16.msra.mxu0 %v3297
        %4800 = vmatprep.subr.bf16.mxu0 %v3330
        %4801 = vmatpush1.bf16.msra.mxu0 %v3329
        %4802 = vmatprep.subr.bf16.mxu0 %v3362
        %4803 = vmatpush1.bf16.msra.mxu0 %v3361
        %4804 = vmatprep.subr.bf16.mxu0 %v3394
        %4805 = vmatpush1.bf16.msra.mxu0 %v3393
        %4806 = vmatprep.subr.bf16.mxu0 %v3426
        %4807 = vmatpush1.bf16.msra.mxu0 %v3425
        %4808 = vmatprep.subr.bf16.mxu0 %v3458
        %4809 = vmatpush1.bf16.msra.mxu0 %v3457
        %4810 = vmatprep.mubr.bf16.mxu0 %v900
        %4811 = vmatmul.mubr.bf16.gmra.mrb[0].mxu0 %v899
        %v4812 = vpop.f32.mrb[0].mxu0
        %v4813 = vadd.f32 0.0, %v4812
        %v4814 = vpop.f32.mrb[0].mxu0
        %v4815 = vadd.f32 0.0, %v4814
        %v4816 = vpop.f32.mrb[0].mxu0
        %v4817 = vadd.f32 0.0, %v4816
        %v4818 = vpop.f32.mrb[0].mxu0
        %v4819 = vadd.f32 0.0, %v4818
        %4820 = vmatprep.mubr.bf16.mxu0 %v902
        %4821 = vmatmul.mubr.bf16.gmra.mrb[0].mxu0 %v901
        %v4822 = vpop.f32.mrb[0].mxu0
        %v4823 = vadd.f32 0.0, %v4822
        %v4824 = vpop.f32.mrb[0].mxu0
        %v4825 = vadd.f32 0.0, %v4824
        %v4826 = vpop.f32.mrb[0].mxu0
        %v4827 = vadd.f32 0.0, %v4826
        %v4828 = vpop.f32.mrb[0].mxu0
        %v4829 = vadd.f32 0.0, %v4828
        %4830 = vmatprep.mubr.bf16.mxu0 %v904
        %4831 = vmatmul.mubr.bf16.gmra.mrb[0].mxu0 %v903
        %v4832 = vpop.f32.mrb[0].mxu0
        %v4833 = vadd.f32 0.0, %v4832
        %v4834 = vpop.f32.mrb[0].mxu0
        %v4835 = vadd.f32 0.0, %v4834
        %v4836 = vpop.f32.mrb[0].mxu0
        %v4837 = vadd.f32 0.0, %v4836
        %v4838 = vpop.f32.mrb[0].mxu0
        %v4839 = vadd.f32 0.0, %v4838
        %4840 = vmatprep.mubr.bf16.mxu0 %v906
        %4841 = vmatmul.mubr.bf16.gmra.mrb[0].mxu0 %v905
        %v4842 = vpop.f32.mrb[0].mxu0
        %v4843 = vadd.f32 0.0, %v4842
        %v4844 = vpop.f32.mrb[0].mxu0
        %v4845 = vadd.f32 0.0, %v4844
        %v4846 = vpop.f32.mrb[0].mxu0
        %v4847 = vadd.f32 0.0, %v4846
        %v4848 = vpop.f32.mrb[0].mxu0
        %v4849 = vadd.f32 0.0, %v4848
        %4850 = vmatprep.mubr.bf16.mxu0 %v908
        %4851 = vmatmul.mubr.bf16.gmra.mrb[0].mxu0 %v907
        %v4852 = vpop.f32.mrb[0].mxu0
        %v4853 = vadd.f32 0.0, %v4852
        %v4854 = vpop.f32.mrb[0].mxu0
        %v4855 = vadd.f32 0.0, %v4854
        %v4856 = vpop.f32.mrb[0].mxu0
        %v4857 = vadd.f32 0.0, %v4856
        %v4858 = vpop.f32.mrb[0].mxu0
        %v4859 = vadd.f32 0.0, %v4858
        %4860 = vmatprep.mubr.bf16.mxu0 %v910
        %4861 = vmatmul.mubr.bf16.gmra.mrb[0].mxu0 %v909
        %v4862 = vpop.f32.mrb[0].mxu0
        %v4863 = vadd.f32 0.0, %v4862
        %v4864 = vpop.f32.mrb[0].mxu0
        %v4865 = vadd.f32 0.0, %v4864
        %v4866 = vpop.f32.mrb[0].mxu0
        %v4867 = vadd.f32 0.0, %v4866
        %v4868 = vpop.f32.mrb[0].mxu0
        %v4869 = vadd.f32 0.0, %v4868
        %4870 = vmatprep.mubr.bf16.mxu0 %v912
        %4871 = vmatmul.mubr.bf16.gmra.mrb[0].mxu0 %v911
        %v4872 = vpop.f32.mrb[0].mxu0
        %v4873 = vadd.f32 0.0, %v4872
        %v4874 = vpop.f32.mrb[0].mxu0
        %v4875 = vadd.f32 0.0, %v4874
        %v4876 = vpop.f32.mrb[0].mxu0
        %v4877 = vadd.f32 0.0, %v4876
        %v4878 = vpop.f32.mrb[0].mxu0
        %v4879 = vadd.f32 0.0, %v4878
        %4880 = vmatprep.mubr.bf16.mxu0 %v914
        %4881 = vmatmul.mubr.bf16.gmra.mrb[0].mxu0 %v913
        %v4882 = vpop.f32.mrb[0].mxu0
        %v4883 = vadd.f32 0.0, %v4882
        %v4884 = vpop.f32.mrb[0].mxu0
        %v4885 = vadd.f32 0.0, %v4884
        %v4886 = vpop.f32.mrb[0].mxu0
        %v4887 = vadd.f32 0.0, %v4886
        %v4888 = vpop.f32.mrb[0].mxu0
        %v4889 = vadd.f32 0.0, %v4888
        %4890 = vdwg.mxu0
        %4891 = vmatprep.subr.bf16.mxu0 %v2980
        %4892 = vmatpush1.bf16.msra.mxu0 %v2979
        %4893 = vmatprep.subr.bf16.mxu0 %v3012
        %4894 = vmatpush1.bf16.msra.mxu0 %v3011
        %4895 = vmatprep.subr.bf16.mxu0 %v3044
        %4896 = vmatpush1.bf16.msra.mxu0 %v3043
        %4897 = vmatprep.subr.bf16.mxu0 %v3076
        %4898 = vmatpush1.bf16.msra.mxu0 %v3075
        %4899 = vmatprep.subr.bf16.mxu0 %v3108
        %4900 = vmatpush1.bf16.msra.mxu0 %v3107
        %4901 = vmatprep.subr.bf16.mxu0 %v3140
        %4902 = vmatpush1.bf16.msra.mxu0 %v3139
        %4903 = vmatprep.subr.bf16.mxu0 %v3172
        %4904 = vmatpush1.bf16.msra.mxu0 %v3171
        %4905 = vmatprep.subr.bf16.mxu0 %v3204
        %4906 = vmatpush1.bf16.msra.mxu0 %v3203
        %4907 = vmatprep.subr.bf16.mxu0 %v3236
        %4908 = vmatpush1.bf16.msra.mxu0 %v3235
        %4909 = vmatprep.subr.bf16.mxu0 %v3268
        %4910 = vmatpush1.bf16.msra.mxu0 %v3267
        %4911 = vmatprep.subr.bf16.mxu0 %v3300
        %4912 = vmatpush1.bf16.msra.mxu0 %v3299
        %4913 = vmatprep.subr.bf16.mxu0 %v3332
        %4914 = vmatpush1.bf16.msra.mxu0 %v3331
        %4915 = vmatprep.subr.bf16.mxu0 %v3364
        %4916 = vmatpush1.bf16.msra.mxu0 %v3363
        %4917 = vmatprep.subr.bf16.mxu0 %v3396
        %4918 = vmatpush1.bf16.msra.mxu0 %v3395
        %4919 = vmatprep.subr.bf16.mxu0 %v3428
        %4920 = vmatpush1.bf16.msra.mxu0 %v3427
        %4921 = vmatprep.subr.bf16.mxu0 %v3460
        %4922 = vmatpush1.bf16.msra.mxu0 %v3459
        %4923 = vmatprep.mubr.bf16.mxu0 %v900
        %4924 = vmatmul.mubr.bf16.gmra.mrb[0].mxu0 %v899
        %v4925 = vpop.f32.mrb[0].mxu0
        %v4926 = vadd.f32 0.0, %v4925
        %v4927 = vpop.f32.mrb[0].mxu0
        %v4928 = vadd.f32 0.0, %v4927
        %v4929 = vpop.f32.mrb[0].mxu0
        %v4930 = vadd.f32 0.0, %v4929
        %v4931 = vpop.f32.mrb[0].mxu0
        %v4932 = vadd.f32 0.0, %v4931
        %4933 = vmatprep.mubr.bf16.mxu0 %v902
        %4934 = vmatmul.mubr.bf16.gmra.mrb[0].mxu0 %v901
        %v4935 = vpop.f32.mrb[0].mxu0
        %v4936 = vadd.f32 0.0, %v4935
        %v4937 = vpop.f32.mrb[0].mxu0
        %v4938 = vadd.f32 0.0, %v4937
        %v4939 = vpop.f32.mrb[0].mxu0
        %v4940 = vadd.f32 0.0, %v4939
        %v4941 = vpop.f32.mrb[0].mxu0
        %v4942 = vadd.f32 0.0, %v4941
        %4943 = vmatprep.mubr.bf16.mxu0 %v904
        %4944 = vmatmul.mubr.bf16.gmra.mrb[0].mxu0 %v903
        %v4945 = vpop.f32.mrb[0].mxu0
        %v4946 = vadd.f32 0.0, %v4945
        %v4947 = vpop.f32.mrb[0].mxu0
        %v4948 = vadd.f32 0.0, %v4947
        %v4949 = vpop.f32.mrb[0].mxu0
        %v4950 = vadd.f32 0.0, %v4949
        %v4951 = vpop.f32.mrb[0].mxu0
        %v4952 = vadd.f32 0.0, %v4951
        %4953 = vmatprep.mubr.bf16.mxu0 %v906
        %4954 = vmatmul.mubr.bf16.gmra.mrb[0].mxu0 %v905
        %v4955 = vpop.f32.mrb[0].mxu0
        %v4956 = vadd.f32 0.0, %v4955
        %v4957 = vpop.f32.mrb[0].mxu0
        %v4958 = vadd.f32 0.0, %v4957
        %v4959 = vpop.f32.mrb[0].mxu0
        %v4960 = vadd.f32 0.0, %v4959
        %v4961 = vpop.f32.mrb[0].mxu0
        %v4962 = vadd.f32 0.0, %v4961
        %4963 = vmatprep.mubr.bf16.mxu0 %v908
        %4964 = vmatmul.mubr.bf16.gmra.mrb[0].mxu0 %v907
        %v4965 = vpop.f32.mrb[0].mxu0
        %v4966 = vadd.f32 0.0, %v4965
        %v4967 = vpop.f32.mrb[0].mxu0
        %v4968 = vadd.f32 0.0, %v4967
        %v4969 = vpop.f32.mrb[0].mxu0
        %v4970 = vadd.f32 0.0, %v4969
        %v4971 = vpop.f32.mrb[0].mxu0
        %v4972 = vadd.f32 0.0, %v4971
        %4973 = vmatprep.mubr.bf16.mxu0 %v910
        %4974 = vmatmul.mubr.bf16.gmra.mrb[0].mxu0 %v909
        %v4975 = vpop.f32.mrb[0].mxu0
        %v4976 = vadd.f32 0.0, %v4975
        %v4977 = vpop.f32.mrb[0].mxu0
        %v4978 = vadd.f32 0.0, %v4977
        %v4979 = vpop.f32.mrb[0].mxu0
        %v4980 = vadd.f32 0.0, %v4979
        %v4981 = vpop.f32.mrb[0].mxu0
        %v4982 = vadd.f32 0.0, %v4981
        %4983 = vmatprep.mubr.bf16.mxu0 %v912
        %4984 = vmatmul.mubr.bf16.gmra.mrb[0].mxu0 %v911
        %v4985 = vpop.f32.mrb[0].mxu0
        %v4986 = vadd.f32 0.0, %v4985
        %v4987 = vpop.f32.mrb[0].mxu0
        %v4988 = vadd.f32 0.0, %v4987
        %v4989 = vpop.f32.mrb[0].mxu0
        %v4990 = vadd.f32 0.0, %v4989
        %v4991 = vpop.f32.mrb[0].mxu0
        %v4992 = vadd.f32 0.0, %v4991
        %4993 = vmatprep.mubr.bf16.mxu0 %v914
        %4994 = vmatmul.mubr.bf16.gmra.mrb[0].mxu0 %v913
        %v4995 = vpop.f32.mrb[0].mxu0
        %v4996 = vadd.f32 0.0, %v4995
        %v4997 = vpop.f32.mrb[0].mxu0
        %v4998 = vadd.f32 0.0, %v4997
        %v4999 = vpop.f32.mrb[0].mxu0
        %v5000 = vadd.f32 0.0, %v4999
        %v5001 = vpop.f32.mrb[0].mxu0
        %v5002 = vadd.f32 0.0, %v5001
        %5003 = vdwg.mxu0
        %5004 = vmatprep.subr.bf16.mxu0 %v2982
        %5005 = vmatpush1.bf16.msra.mxu0 %v2981
        %5006 = vmatprep.subr.bf16.mxu0 %v3014
        %5007 = vmatpush1.bf16.msra.mxu0 %v3013
        %5008 = vmatprep.subr.bf16.mxu0 %v3046
        %5009 = vmatpush1.bf16.msra.mxu0 %v3045
        %5010 = vmatprep.subr.bf16.mxu0 %v3078
        %5011 = vmatpush1.bf16.msra.mxu0 %v3077
        %5012 = vmatprep.subr.bf16.mxu0 %v3110
        %5013 = vmatpush1.bf16.msra.mxu0 %v3109
        %5014 = vmatprep.subr.bf16.mxu0 %v3142
        %5015 = vmatpush1.bf16.msra.mxu0 %v3141
        %5016 = vmatprep.subr.bf16.mxu0 %v3174
        %5017 = vmatpush1.bf16.msra.mxu0 %v3173
        %5018 = vmatprep.subr.bf16.mxu0 %v3206
        %5019 = vmatpush1.bf16.msra.mxu0 %v3205
        %5020 = vmatprep.subr.bf16.mxu0 %v3238
        %5021 = vmatpush1.bf16.msra.mxu0 %v3237
        %5022 = vmatprep.subr.bf16.mxu0 %v3270
        %5023 = vmatpush1.bf16.msra.mxu0 %v3269
        %5024 = vmatprep.subr.bf16.mxu0 %v3302
        %5025 = vmatpush1.bf16.msra.mxu0 %v3301
        %5026 = vmatprep.subr.bf16.mxu0 %v3334
        %5027 = vmatpush1.bf16.msra.mxu0 %v3333
        %5028 = vmatprep.subr.bf16.mxu0 %v3366
        %5029 = vmatpush1.bf16.msra.mxu0 %v3365
        %5030 = vmatprep.subr.bf16.mxu0 %v3398
        %5031 = vmatpush1.bf16.msra.mxu0 %v3397
        %5032 = vmatprep.subr.bf16.mxu0 %v3430
        %5033 = vmatpush1.bf16.msra.mxu0 %v3429
        %5034 = vmatprep.subr.bf16.mxu0 %v3462
        %5035 = vmatpush1.bf16.msra.mxu0 %v3461
        %5036 = vmatprep.mubr.bf16.mxu0 %v900
        %5037 = vmatmul.mubr.bf16.gmra.mrb[0].mxu0 %v899
        %v5038 = vpop.f32.mrb[0].mxu0
        %v5039 = vadd.f32 0.0, %v5038
        %v5040 = vpop.f32.mrb[0].mxu0
        %v5041 = vadd.f32 0.0, %v5040
        %v5042 = vpop.f32.mrb[0].mxu0
        %v5043 = vadd.f32 0.0, %v5042
        %v5044 = vpop.f32.mrb[0].mxu0
        %v5045 = vadd.f32 0.0, %v5044
        %5046 = vmatprep.mubr.bf16.mxu0 %v902
        %5047 = vmatmul.mubr.bf16.gmra.mrb[0].mxu0 %v901
        %v5048 = vpop.f32.mrb[0].mxu0
        %v5049 = vadd.f32 0.0, %v5048
        %v5050 = vpop.f32.mrb[0].mxu0
        %v5051 = vadd.f32 0.0, %v5050
        %v5052 = vpop.f32.mrb[0].mxu0
        %v5053 = vadd.f32 0.0, %v5052
        %v5054 = vpop.f32.mrb[0].mxu0
        %v5055 = vadd.f32 0.0, %v5054
        %5056 = vmatprep.mubr.bf16.mxu0 %v904
        %5057 = vmatmul.mubr.bf16.gmra.mrb[0].mxu0 %v903
        %v5058 = vpop.f32.mrb[0].mxu0
        %v5059 = vadd.f32 0.0, %v5058
        %v5060 = vpop.f32.mrb[0].mxu0
        %v5061 = vadd.f32 0.0, %v5060
        %v5062 = vpop.f32.mrb[0].mxu0
        %v5063 = vadd.f32 0.0, %v5062
        %v5064 = vpop.f32.mrb[0].mxu0
        %v5065 = vadd.f32 0.0, %v5064
        %5066 = vmatprep.mubr.bf16.mxu0 %v906
        %5067 = vmatmul.mubr.bf16.gmra.mrb[0].mxu0 %v905
        %v5068 = vpop.f32.mrb[0].mxu0
        %v5069 = vadd.f32 0.0, %v5068
        %v5070 = vpop.f32.mrb[0].mxu0
        %v5071 = vadd.f32 0.0, %v5070
        %v5072 = vpop.f32.mrb[0].mxu0
        %v5073 = vadd.f32 0.0, %v5072
        %v5074 = vpop.f32.mrb[0].mxu0
        %v5075 = vadd.f32 0.0, %v5074
        %5076 = vmatprep.mubr.bf16.mxu0 %v908
        %5077 = vmatmul.mubr.bf16.gmra.mrb[0].mxu0 %v907
        %v5078 = vpop.f32.mrb[0].mxu0
        %v5079 = vadd.f32 0.0, %v5078
        %v5080 = vpop.f32.mrb[0].mxu0
        %v5081 = vadd.f32 0.0, %v5080
        %v5082 = vpop.f32.mrb[0].mxu0
        %v5083 = vadd.f32 0.0, %v5082
        %v5084 = vpop.f32.mrb[0].mxu0
        %v5085 = vadd.f32 0.0, %v5084
        %5086 = vmatprep.mubr.bf16.mxu0 %v910
        %5087 = vmatmul.mubr.bf16.gmra.mrb[0].mxu0 %v909
        %v5088 = vpop.f32.mrb[0].mxu0
        %v5089 = vadd.f32 0.0, %v5088
        %v5090 = vpop.f32.mrb[0].mxu0
        %v5091 = vadd.f32 0.0, %v5090
        %v5092 = vpop.f32.mrb[0].mxu0
        %v5093 = vadd.f32 0.0, %v5092
        %v5094 = vpop.f32.mrb[0].mxu0
        %v5095 = vadd.f32 0.0, %v5094
        %5096 = vmatprep.mubr.bf16.mxu0 %v912
        %5097 = vmatmul.mubr.bf16.gmra.mrb[0].mxu0 %v911
        %v5098 = vpop.f32.mrb[0].mxu0
        %v5099 = vadd.f32 0.0, %v5098
        %v5100 = vpop.f32.mrb[0].mxu0
        %v5101 = vadd.f32 0.0, %v5100
        %v5102 = vpop.f32.mrb[0].mxu0
        %v5103 = vadd.f32 0.0, %v5102
        %v5104 = vpop.f32.mrb[0].mxu0
        %v5105 = vadd.f32 0.0, %v5104
        %5106 = vmatprep.mubr.bf16.mxu0 %v914
        %5107 = vmatmul.mubr.bf16.gmra.mrb[0].mxu0 %v913
        %v5108 = vpop.f32.mrb[0].mxu0
        %v5109 = vadd.f32 0.0, %v5108
        %v5110 = vpop.f32.mrb[0].mxu0
        %v5111 = vadd.f32 0.0, %v5110
        %v5112 = vpop.f32.mrb[0].mxu0
        %v5113 = vadd.f32 0.0, %v5112
        %v5114 = vpop.f32.mrb[0].mxu0
        %v5115 = vadd.f32 0.0, %v5114
        %5116 = vdwg.mxu0
        %5117 = vmatprep.subr.bf16.mxu0 %v2984
        %5118 = vmatpush1.bf16.msra.mxu0 %v2983
        %5119 = vmatprep.subr.bf16.mxu0 %v3016
        %5120 = vmatpush1.bf16.msra.mxu0 %v3015
        %5121 = vmatprep.subr.bf16.mxu0 %v3048
        %5122 = vmatpush1.bf16.msra.mxu0 %v3047
        %5123 = vmatprep.subr.bf16.mxu0 %v3080
        %5124 = vmatpush1.bf16.msra.mxu0 %v3079
        %5125 = vmatprep.subr.bf16.mxu0 %v3112
        %5126 = vmatpush1.bf16.msra.mxu0 %v3111
        %5127 = vmatprep.subr.bf16.mxu0 %v3144
        %5128 = vmatpush1.bf16.msra.mxu0 %v3143
        %5129 = vmatprep.subr.bf16.mxu0 %v3176
        %5130 = vmatpush1.bf16.msra.mxu0 %v3175
        %5131 = vmatprep.subr.bf16.mxu0 %v3208
        %5132 = vmatpush1.bf16.msra.mxu0 %v3207
        %5133 = vmatprep.subr.bf16.mxu0 %v3240
        %5134 = vmatpush1.bf16.msra.mxu0 %v3239
        %5135 = vmatprep.subr.bf16.mxu0 %v3272
        %5136 = vmatpush1.bf16.msra.mxu0 %v3271
        %5137 = vmatprep.subr.bf16.mxu0 %v3304
        %5138 = vmatpush1.bf16.msra.mxu0 %v3303
        %5139 = vmatprep.subr.bf16.mxu0 %v3336
        %5140 = vmatpush1.bf16.msra.mxu0 %v3335
        %5141 = vmatprep.subr.bf16.mxu0 %v3368
        %5142 = vmatpush1.bf16.msra.mxu0 %v3367
        %5143 = vmatprep.subr.bf16.mxu0 %v3400
        %5144 = vmatpush1.bf16.msra.mxu0 %v3399
        %5145 = vmatprep.subr.bf16.mxu0 %v3432
        %5146 = vmatpush1.bf16.msra.mxu0 %v3431
        %5147 = vmatprep.subr.bf16.mxu0 %v3464
        %5148 = vmatpush1.bf16.msra.mxu0 %v3463
        %5149 = vmatprep.mubr.bf16.mxu0 %v900
        %5150 = vmatmul.mubr.bf16.gmra.mrb[0].mxu0 %v899
        %v5151 = vpop.f32.mrb[0].mxu0
        %v5152 = vadd.f32 0.0, %v5151
        %v5153 = vpop.f32.mrb[0].mxu0
        %v5154 = vadd.f32 0.0, %v5153
        %v5155 = vpop.f32.mrb[0].mxu0
        %v5156 = vadd.f32 0.0, %v5155
        %v5157 = vpop.f32.mrb[0].mxu0
        %v5158 = vadd.f32 0.0, %v5157
        %5159 = vmatprep.mubr.bf16.mxu0 %v902
        %5160 = vmatmul.mubr.bf16.gmra.mrb[0].mxu0 %v901
        %v5161 = vpop.f32.mrb[0].mxu0
        %v5162 = vadd.f32 0.0, %v5161
        %v5163 = vpop.f32.mrb[0].mxu0
        %v5164 = vadd.f32 0.0, %v5163
        %v5165 = vpop.f32.mrb[0].mxu0
        %v5166 = vadd.f32 0.0, %v5165
        %v5167 = vpop.f32.mrb[0].mxu0
        %v5168 = vadd.f32 0.0, %v5167
        %5169 = vmatprep.mubr.bf16.mxu0 %v904
        %5170 = vmatmul.mubr.bf16.gmra.mrb[0].mxu0 %v903
        %v5171 = vpop.f32.mrb[0].mxu0
        %v5172 = vadd.f32 0.0, %v5171
        %v5173 = vpop.f32.mrb[0].mxu0
        %v5174 = vadd.f32 0.0, %v5173
        %v5175 = vpop.f32.mrb[0].mxu0
        %v5176 = vadd.f32 0.0, %v5175
        %v5177 = vpop.f32.mrb[0].mxu0
        %v5178 = vadd.f32 0.0, %v5177
        %5179 = vmatprep.mubr.bf16.mxu0 %v906
        %5180 = vmatmul.mubr.bf16.gmra.mrb[0].mxu0 %v905
        %v5181 = vpop.f32.mrb[0].mxu0
        %v5182 = vadd.f32 0.0, %v5181
        %v5183 = vpop.f32.mrb[0].mxu0
        %v5184 = vadd.f32 0.0, %v5183
        %v5185 = vpop.f32.mrb[0].mxu0
        %v5186 = vadd.f32 0.0, %v5185
        %v5187 = vpop.f32.mrb[0].mxu0
        %v5188 = vadd.f32 0.0, %v5187
        %5189 = vmatprep.mubr.bf16.mxu0 %v908
        %5190 = vmatmul.mubr.bf16.gmra.mrb[0].mxu0 %v907
        %v5191 = vpop.f32.mrb[0].mxu0
        %v5192 = vadd.f32 0.0, %v5191
        %v5193 = vpop.f32.mrb[0].mxu0
        %v5194 = vadd.f32 0.0, %v5193
        %v5195 = vpop.f32.mrb[0].mxu0
        %v5196 = vadd.f32 0.0, %v5195
        %v5197 = vpop.f32.mrb[0].mxu0
        %v5198 = vadd.f32 0.0, %v5197
        %5199 = vmatprep.mubr.bf16.mxu0 %v910
        %5200 = vmatmul.mubr.bf16.gmra.mrb[0].mxu0 %v909
        %v5201 = vpop.f32.mrb[0].mxu0
        %v5202 = vadd.f32 0.0, %v5201
        %v5203 = vpop.f32.mrb[0].mxu0
        %v5204 = vadd.f32 0.0, %v5203
        %v5205 = vpop.f32.mrb[0].mxu0
        %v5206 = vadd.f32 0.0, %v5205
        %v5207 = vpop.f32.mrb[0].mxu0
        %v5208 = vadd.f32 0.0, %v5207
        %5209 = vmatprep.mubr.bf16.mxu0 %v912
        %5210 = vmatmul.mubr.bf16.gmra.mrb[0].mxu0 %v911
        %v5211 = vpop.f32.mrb[0].mxu0
        %v5212 = vadd.f32 0.0, %v5211
        %v5213 = vpop.f32.mrb[0].mxu0
        %v5214 = vadd.f32 0.0, %v5213
        %v5215 = vpop.f32.mrb[0].mxu0
        %v5216 = vadd.f32 0.0, %v5215
        %v5217 = vpop.f32.mrb[0].mxu0
        %v5218 = vadd.f32 0.0, %v5217
        %5219 = vmatprep.mubr.bf16.mxu0 %v914
        %5220 = vmatmul.mubr.bf16.gmra.mrb[0].mxu0 %v913
        %v5221 = vpop.f32.mrb[0].mxu0
        %v5222 = vadd.f32 0.0, %v5221
        %v5223 = vpop.f32.mrb[0].mxu0
        %v5224 = vadd.f32 0.0, %v5223
        %v5225 = vpop.f32.mrb[0].mxu0
        %v5226 = vadd.f32 0.0, %v5225
        %v5227 = vpop.f32.mrb[0].mxu0
        %v5228 = vadd.f32 0.0, %v5227
        %5229 = vdwg.mxu0
        %5230 = vmatprep.subr.bf16.mxu0 %v2986
        %5231 = vmatpush1.bf16.msra.mxu0 %v2985
        %5232 = vmatprep.subr.bf16.mxu0 %v3018
        %5233 = vmatpush1.bf16.msra.mxu0 %v3017
        %5234 = vmatprep.subr.bf16.mxu0 %v3050
        %5235 = vmatpush1.bf16.msra.mxu0 %v3049
        %5236 = vmatprep.subr.bf16.mxu0 %v3082
        %5237 = vmatpush1.bf16.msra.mxu0 %v3081
        %5238 = vmatprep.subr.bf16.mxu0 %v3114
        %5239 = vmatpush1.bf16.msra.mxu0 %v3113
        %5240 = vmatprep.subr.bf16.mxu0 %v3146
        %5241 = vmatpush1.bf16.msra.mxu0 %v3145
        %5242 = vmatprep.subr.bf16.mxu0 %v3178
        %5243 = vmatpush1.bf16.msra.mxu0 %v3177
        %5244 = vmatprep.subr.bf16.mxu0 %v3210
        %5245 = vmatpush1.bf16.msra.mxu0 %v3209
        %5246 = vmatprep.subr.bf16.mxu0 %v3242
        %5247 = vmatpush1.bf16.msra.mxu0 %v3241
        %5248 = vmatprep.subr.bf16.mxu0 %v3274
        %5249 = vmatpush1.bf16.msra.mxu0 %v3273
        %5250 = vmatprep.subr.bf16.mxu0 %v3306
        %5251 = vmatpush1.bf16.msra.mxu0 %v3305
        %5252 = vmatprep.subr.bf16.mxu0 %v3338
        %5253 = vmatpush1.bf16.msra.mxu0 %v3337
        %5254 = vmatprep.subr.bf16.mxu0 %v3370
        %5255 = vmatpush1.bf16.msra.mxu0 %v3369
        %5256 = vmatprep.subr.bf16.mxu0 %v3402
        %5257 = vmatpush1.bf16.msra.mxu0 %v3401
        %5258 = vmatprep.subr.bf16.mxu0 %v3434
        %5259 = vmatpush1.bf16.msra.mxu0 %v3433
        %5260 = vmatprep.subr.bf16.mxu0 %v3466
        %5261 = vmatpush1.bf16.msra.mxu0 %v3465
        %5262 = vmatprep.mubr.bf16.mxu0 %v900
        %5263 = vmatmul.mubr.bf16.gmra.mrb[0].mxu0 %v899
        %v5264 = vpop.f32.mrb[0].mxu0
        %v5265 = vadd.f32 0.0, %v5264
        %v5266 = vpop.f32.mrb[0].mxu0
        %v5267 = vadd.f32 0.0, %v5266
        %v5268 = vpop.f32.mrb[0].mxu0
        %v5269 = vadd.f32 0.0, %v5268
        %v5270 = vpop.f32.mrb[0].mxu0
        %v5271 = vadd.f32 0.0, %v5270
        %5272 = vmatprep.mubr.bf16.mxu0 %v902
        %5273 = vmatmul.mubr.bf16.gmra.mrb[0].mxu0 %v901
        %v5274 = vpop.f32.mrb[0].mxu0
        %v5275 = vadd.f32 0.0, %v5274
        %v5276 = vpop.f32.mrb[0].mxu0
        %v5277 = vadd.f32 0.0, %v5276
        %v5278 = vpop.f32.mrb[0].mxu0
        %v5279 = vadd.f32 0.0, %v5278
        %v5280 = vpop.f32.mrb[0].mxu0
        %v5281 = vadd.f32 0.0, %v5280
        %5282 = vmatprep.mubr.bf16.mxu0 %v904
        %5283 = vmatmul.mubr.bf16.gmra.mrb[0].mxu0 %v903
        %v5284 = vpop.f32.mrb[0].mxu0
        %v5285 = vadd.f32 0.0, %v5284
        %v5286 = vpop.f32.mrb[0].mxu0
        %v5287 = vadd.f32 0.0, %v5286
        %v5288 = vpop.f32.mrb[0].mxu0
        %v5289 = vadd.f32 0.0, %v5288
        %v5290 = vpop.f32.mrb[0].mxu0
        %v5291 = vadd.f32 0.0, %v5290
        %5292 = vmatprep.mubr.bf16.mxu0 %v906
        %5293 = vmatmul.mubr.bf16.gmra.mrb[0].mxu0 %v905
        %v5294 = vpop.f32.mrb[0].mxu0
        %v5295 = vadd.f32 0.0, %v5294
        %v5296 = vpop.f32.mrb[0].mxu0
        %v5297 = vadd.f32 0.0, %v5296
        %v5298 = vpop.f32.mrb[0].mxu0
        %v5299 = vadd.f32 0.0, %v5298
        %v5300 = vpop.f32.mrb[0].mxu0
        %v5301 = vadd.f32 0.0, %v5300
        %5302 = vmatprep.mubr.bf16.mxu0 %v908
        %5303 = vmatmul.mubr.bf16.gmra.mrb[0].mxu0 %v907
        %v5304 = vpop.f32.mrb[0].mxu0
        %v5305 = vadd.f32 0.0, %v5304
        %v5306 = vpop.f32.mrb[0].mxu0
        %v5307 = vadd.f32 0.0, %v5306
        %v5308 = vpop.f32.mrb[0].mxu0
        %v5309 = vadd.f32 0.0, %v5308
        %v5310 = vpop.f32.mrb[0].mxu0
        %v5311 = vadd.f32 0.0, %v5310
        %5312 = vmatprep.mubr.bf16.mxu0 %v910
        %5313 = vmatmul.mubr.bf16.gmra.mrb[0].mxu0 %v909
        %v5314 = vpop.f32.mrb[0].mxu0
        %v5315 = vadd.f32 0.0, %v5314
        %v5316 = vpop.f32.mrb[0].mxu0
        %v5317 = vadd.f32 0.0, %v5316
        %v5318 = vpop.f32.mrb[0].mxu0
        %v5319 = vadd.f32 0.0, %v5318
        %v5320 = vpop.f32.mrb[0].mxu0
        %v5321 = vadd.f32 0.0, %v5320
        %5322 = vmatprep.mubr.bf16.mxu0 %v912
        %5323 = vmatmul.mubr.bf16.gmra.mrb[0].mxu0 %v911
        %v5324 = vpop.f32.mrb[0].mxu0
        %v5325 = vadd.f32 0.0, %v5324
        %v5326 = vpop.f32.mrb[0].mxu0
        %v5327 = vadd.f32 0.0, %v5326
        %v5328 = vpop.f32.mrb[0].mxu0
        %v5329 = vadd.f32 0.0, %v5328
        %v5330 = vpop.f32.mrb[0].mxu0
        %v5331 = vadd.f32 0.0, %v5330
        %5332 = vmatprep.mubr.bf16.mxu0 %v914
        %5333 = vmatmul.mubr.bf16.gmra.mrb[0].mxu0 %v913
        %v5334 = vpop.f32.mrb[0].mxu0
        %v5335 = vadd.f32 0.0, %v5334
        %v5336 = vpop.f32.mrb[0].mxu0
        %v5337 = vadd.f32 0.0, %v5336
        %v5338 = vpop.f32.mrb[0].mxu0
        %v5339 = vadd.f32 0.0, %v5338
        %v5340 = vpop.f32.mrb[0].mxu0
        %v5341 = vadd.f32 0.0, %v5340
        %5342 = vdwg.mxu0
        %5343 = vmatprep.subr.bf16.mxu0 %v2988
        %5344 = vmatpush1.bf16.msra.mxu0 %v2987
        %5345 = vmatprep.subr.bf16.mxu0 %v3020
        %5346 = vmatpush1.bf16.msra.mxu0 %v3019
        %5347 = vmatprep.subr.bf16.mxu0 %v3052
        %5348 = vmatpush1.bf16.msra.mxu0 %v3051
        %5349 = vmatprep.subr.bf16.mxu0 %v3084
        %5350 = vmatpush1.bf16.msra.mxu0 %v3083
        %5351 = vmatprep.subr.bf16.mxu0 %v3116
        %5352 = vmatpush1.bf16.msra.mxu0 %v3115
        %5353 = vmatprep.subr.bf16.mxu0 %v3148
        %5354 = vmatpush1.bf16.msra.mxu0 %v3147
        %5355 = vmatprep.subr.bf16.mxu0 %v3180
        %5356 = vmatpush1.bf16.msra.mxu0 %v3179
        %5357 = vmatprep.subr.bf16.mxu0 %v3212
        %5358 = vmatpush1.bf16.msra.mxu0 %v3211
        %5359 = vmatprep.subr.bf16.mxu0 %v3244
        %5360 = vmatpush1.bf16.msra.mxu0 %v3243
        %5361 = vmatprep.subr.bf16.mxu0 %v3276
        %5362 = vmatpush1.bf16.msra.mxu0 %v3275
        %5363 = vmatprep.subr.bf16.mxu0 %v3308
        %5364 = vmatpush1.bf16.msra.mxu0 %v3307
        %5365 = vmatprep.subr.bf16.mxu0 %v3340
        %5366 = vmatpush1.bf16.msra.mxu0 %v3339
        %5367 = vmatprep.subr.bf16.mxu0 %v3372
        %5368 = vmatpush1.bf16.msra.mxu0 %v3371
        %5369 = vmatprep.subr.bf16.mxu0 %v3404
        %5370 = vmatpush1.bf16.msra.mxu0 %v3403
        %5371 = vmatprep.subr.bf16.mxu0 %v3436
        %5372 = vmatpush1.bf16.msra.mxu0 %v3435
        %5373 = vmatprep.subr.bf16.mxu0 %v3468
        %5374 = vmatpush1.bf16.msra.mxu0 %v3467
        %5375 = vmatprep.mubr.bf16.mxu0 %v900
        %5376 = vmatmul.mubr.bf16.gmra.mrb[0].mxu0 %v899
        %v5377 = vpop.f32.mrb[0].mxu0
        %v5378 = vadd.f32 0.0, %v5377
        %v5379 = vpop.f32.mrb[0].mxu0
        %v5380 = vadd.f32 0.0, %v5379
        %v5381 = vpop.f32.mrb[0].mxu0
        %v5382 = vadd.f32 0.0, %v5381
        %v5383 = vpop.f32.mrb[0].mxu0
        %v5384 = vadd.f32 0.0, %v5383
        %5385 = vmatprep.mubr.bf16.mxu0 %v902
        %5386 = vmatmul.mubr.bf16.gmra.mrb[0].mxu0 %v901
        %v5387 = vpop.f32.mrb[0].mxu0
        %v5388 = vadd.f32 0.0, %v5387
        %v5389 = vpop.f32.mrb[0].mxu0
        %v5390 = vadd.f32 0.0, %v5389
        %v5391 = vpop.f32.mrb[0].mxu0
        %v5392 = vadd.f32 0.0, %v5391
        %v5393 = vpop.f32.mrb[0].mxu0
        %v5394 = vadd.f32 0.0, %v5393
        %5395 = vmatprep.mubr.bf16.mxu0 %v904
        %5396 = vmatmul.mubr.bf16.gmra.mrb[0].mxu0 %v903
        %v5397 = vpop.f32.mrb[0].mxu0
        %v5398 = vadd.f32 0.0, %v5397
        %v5399 = vpop.f32.mrb[0].mxu0
        %v5400 = vadd.f32 0.0, %v5399
        %v5401 = vpop.f32.mrb[0].mxu0
        %v5402 = vadd.f32 0.0, %v5401
        %v5403 = vpop.f32.mrb[0].mxu0
        %v5404 = vadd.f32 0.0, %v5403
        %5405 = vmatprep.mubr.bf16.mxu0 %v906
        %5406 = vmatmul.mubr.bf16.gmra.mrb[0].mxu0 %v905
        %v5407 = vpop.f32.mrb[0].mxu0
        %v5408 = vadd.f32 0.0, %v5407
        %v5409 = vpop.f32.mrb[0].mxu0
        %v5410 = vadd.f32 0.0, %v5409
        %v5411 = vpop.f32.mrb[0].mxu0
        %v5412 = vadd.f32 0.0, %v5411
        %v5413 = vpop.f32.mrb[0].mxu0
        %v5414 = vadd.f32 0.0, %v5413
        %5415 = vmatprep.mubr.bf16.mxu0 %v908
        %5416 = vmatmul.mubr.bf16.gmra.mrb[0].mxu0 %v907
        %v5417 = vpop.f32.mrb[0].mxu0
        %v5418 = vadd.f32 0.0, %v5417
        %v5419 = vpop.f32.mrb[0].mxu0
        %v5420 = vadd.f32 0.0, %v5419
        %v5421 = vpop.f32.mrb[0].mxu0
        %v5422 = vadd.f32 0.0, %v5421
        %v5423 = vpop.f32.mrb[0].mxu0
        %v5424 = vadd.f32 0.0, %v5423
        %5425 = vmatprep.mubr.bf16.mxu0 %v910
        %5426 = vmatmul.mubr.bf16.gmra.mrb[0].mxu0 %v909
        %v5427 = vpop.f32.mrb[0].mxu0
        %v5428 = vadd.f32 0.0, %v5427
        %v5429 = vpop.f32.mrb[0].mxu0
        %v5430 = vadd.f32 0.0, %v5429
        %v5431 = vpop.f32.mrb[0].mxu0
        %v5432 = vadd.f32 0.0, %v5431
        %v5433 = vpop.f32.mrb[0].mxu0
        %v5434 = vadd.f32 0.0, %v5433
        %5435 = vmatprep.mubr.bf16.mxu0 %v912
        %5436 = vmatmul.mubr.bf16.gmra.mrb[0].mxu0 %v911
        %v5437 = vpop.f32.mrb[0].mxu0
        %v5438 = vadd.f32 0.0, %v5437
        %v5439 = vpop.f32.mrb[0].mxu0
        %v5440 = vadd.f32 0.0, %v5439
        %v5441 = vpop.f32.mrb[0].mxu0
        %v5442 = vadd.f32 0.0, %v5441
        %v5443 = vpop.f32.mrb[0].mxu0
        %v5444 = vadd.f32 0.0, %v5443
        %5445 = vmatprep.mubr.bf16.mxu0 %v914
        %5446 = vmatmul.mubr.bf16.gmra.mrb[0].mxu0 %v913
        %v5447 = vpop.f32.mrb[0].mxu0
        %v5448 = vadd.f32 0.0, %v5447
        %v5449 = vpop.f32.mrb[0].mxu0
        %v5450 = vadd.f32 0.0, %v5449
        %v5451 = vpop.f32.mrb[0].mxu0
        %v5452 = vadd.f32 0.0, %v5451
        %v5453 = vpop.f32.mrb[0].mxu0
        %v5454 = vadd.f32 0.0, %v5453
        %5455 = vdwg.mxu0
        %5456 = vmatprep.subr.bf16.mxu0 %v2990
        %5457 = vmatpush1.bf16.msra.mxu0 %v2989
        %5458 = vmatprep.subr.bf16.mxu0 %v3022
        %5459 = vmatpush1.bf16.msra.mxu0 %v3021
        %5460 = vmatprep.subr.bf16.mxu0 %v3054
        %5461 = vmatpush1.bf16.msra.mxu0 %v3053
        %5462 = vmatprep.subr.bf16.mxu0 %v3086
        %5463 = vmatpush1.bf16.msra.mxu0 %v3085
        %5464 = vmatprep.subr.bf16.mxu0 %v3118
        %5465 = vmatpush1.bf16.msra.mxu0 %v3117
        %5466 = vmatprep.subr.bf16.mxu0 %v3150
        %5467 = vmatpush1.bf16.msra.mxu0 %v3149
        %5468 = vmatprep.subr.bf16.mxu0 %v3182
        %5469 = vmatpush1.bf16.msra.mxu0 %v3181
        %5470 = vmatprep.subr.bf16.mxu0 %v3214
        %5471 = vmatpush1.bf16.msra.mxu0 %v3213
        %5472 = vmatprep.subr.bf16.mxu0 %v3246
        %5473 = vmatpush1.bf16.msra.mxu0 %v3245
        %5474 = vmatprep.subr.bf16.mxu0 %v3278
        %5475 = vmatpush1.bf16.msra.mxu0 %v3277
        %5476 = vmatprep.subr.bf16.mxu0 %v3310
        %5477 = vmatpush1.bf16.msra.mxu0 %v3309
        %5478 = vmatprep.subr.bf16.mxu0 %v3342
        %5479 = vmatpush1.bf16.msra.mxu0 %v3341
        %5480 = vmatprep.subr.bf16.mxu0 %v3374
        %5481 = vmatpush1.bf16.msra.mxu0 %v3373
        %5482 = vmatprep.subr.bf16.mxu0 %v3406
        %5483 = vmatpush1.bf16.msra.mxu0 %v3405
        %5484 = vmatprep.subr.bf16.mxu0 %v3438
        %5485 = vmatpush1.bf16.msra.mxu0 %v3437
        %5486 = vmatprep.subr.bf16.mxu0 %v3470
        %5487 = vmatpush1.bf16.msra.mxu0 %v3469
        %5488 = vmatprep.mubr.bf16.mxu0 %v900
        %5489 = vmatmul.mubr.bf16.gmra.mrb[0].mxu0 %v899
        %v5490 = vpop.f32.mrb[0].mxu0
        %v5491 = vadd.f32 0.0, %v5490
        %v5492 = vpop.f32.mrb[0].mxu0
        %v5493 = vadd.f32 0.0, %v5492
        %v5494 = vpop.f32.mrb[0].mxu0
        %v5495 = vadd.f32 0.0, %v5494
        %v5496 = vpop.f32.mrb[0].mxu0
        %v5497 = vadd.f32 0.0, %v5496
        %5498 = vmatprep.mubr.bf16.mxu0 %v902
        %5499 = vmatmul.mubr.bf16.gmra.mrb[0].mxu0 %v901
        %v5500 = vpop.f32.mrb[0].mxu0
        %v5501 = vadd.f32 0.0, %v5500
        %v5502 = vpop.f32.mrb[0].mxu0
        %v5503 = vadd.f32 0.0, %v5502
        %v5504 = vpop.f32.mrb[0].mxu0
        %v5505 = vadd.f32 0.0, %v5504
        %v5506 = vpop.f32.mrb[0].mxu0
        %v5507 = vadd.f32 0.0, %v5506
        %5508 = vmatprep.mubr.bf16.mxu0 %v904
        %5509 = vmatmul.mubr.bf16.gmra.mrb[0].mxu0 %v903
        %v5510 = vpop.f32.mrb[0].mxu0
        %v5511 = vadd.f32 0.0, %v5510
        %v5512 = vpop.f32.mrb[0].mxu0
        %v5513 = vadd.f32 0.0, %v5512
        %v5514 = vpop.f32.mrb[0].mxu0
        %v5515 = vadd.f32 0.0, %v5514
        %v5516 = vpop.f32.mrb[0].mxu0
        %v5517 = vadd.f32 0.0, %v5516
        %5518 = vmatprep.mubr.bf16.mxu0 %v906
        %5519 = vmatmul.mubr.bf16.gmra.mrb[0].mxu0 %v905
        %v5520 = vpop.f32.mrb[0].mxu0
        %v5521 = vadd.f32 0.0, %v5520
        %v5522 = vpop.f32.mrb[0].mxu0
        %v5523 = vadd.f32 0.0, %v5522
        %v5524 = vpop.f32.mrb[0].mxu0
        %v5525 = vadd.f32 0.0, %v5524
        %v5526 = vpop.f32.mrb[0].mxu0
        %v5527 = vadd.f32 0.0, %v5526
        %5528 = vmatprep.mubr.bf16.mxu0 %v908
        %5529 = vmatmul.mubr.bf16.gmra.mrb[0].mxu0 %v907
        %v5530 = vpop.f32.mrb[0].mxu0
        %v5531 = vadd.f32 0.0, %v5530
        %v5532 = vpop.f32.mrb[0].mxu0
        %v5533 = vadd.f32 0.0, %v5532
        %v5534 = vpop.f32.mrb[0].mxu0
        %v5535 = vadd.f32 0.0, %v5534
        %v5536 = vpop.f32.mrb[0].mxu0
        %v5537 = vadd.f32 0.0, %v5536
        %5538 = vmatprep.mubr.bf16.mxu0 %v910
        %5539 = vmatmul.mubr.bf16.gmra.mrb[0].mxu0 %v909
        %v5540 = vpop.f32.mrb[0].mxu0
        %v5541 = vadd.f32 0.0, %v5540
        %v5542 = vpop.f32.mrb[0].mxu0
        %v5543 = vadd.f32 0.0, %v5542
        %v5544 = vpop.f32.mrb[0].mxu0
        %v5545 = vadd.f32 0.0, %v5544
        %v5546 = vpop.f32.mrb[0].mxu0
        %v5547 = vadd.f32 0.0, %v5546
        %5548 = vmatprep.mubr.bf16.mxu0 %v912
        %5549 = vmatmul.mubr.bf16.gmra.mrb[0].mxu0 %v911
        %v5550 = vpop.f32.mrb[0].mxu0
        %v5551 = vadd.f32 0.0, %v5550
        %v5552 = vpop.f32.mrb[0].mxu0
        %v5553 = vadd.f32 0.0, %v5552
        %v5554 = vpop.f32.mrb[0].mxu0
        %v5555 = vadd.f32 0.0, %v5554
        %v5556 = vpop.f32.mrb[0].mxu0
        %v5557 = vadd.f32 0.0, %v5556
        %5558 = vmatprep.mubr.bf16.mxu0 %v914
        %5559 = vmatmul.mubr.bf16.gmra.mrb[0].mxu0 %v913
        %v5560 = vpop.f32.mrb[0].mxu0
        %v5561 = vadd.f32 0.0, %v5560
        %v5562 = vpop.f32.mrb[0].mxu0
        %v5563 = vadd.f32 0.0, %v5562
        %v5564 = vpop.f32.mrb[0].mxu0
        %v5565 = vadd.f32 0.0, %v5564
        %v5566 = vpop.f32.mrb[0].mxu0
        %v5567 = vadd.f32 0.0, %v5566
        %5568 = vdwg.mxu0
        %5569 = vmatprep.subr.bf16.mxu0 %v2992
        %5570 = vmatpush1.bf16.msra.mxu0 %v2991
        %5571 = vmatprep.subr.bf16.mxu0 %v3024
        %5572 = vmatpush1.bf16.msra.mxu0 %v3023
        %5573 = vmatprep.subr.bf16.mxu0 %v3056
        %5574 = vmatpush1.bf16.msra.mxu0 %v3055
        %5575 = vmatprep.subr.bf16.mxu0 %v3088
        %5576 = vmatpush1.bf16.msra.mxu0 %v3087
        %5577 = vmatprep.subr.bf16.mxu0 %v3120
        %5578 = vmatpush1.bf16.msra.mxu0 %v3119
        %5579 = vmatprep.subr.bf16.mxu0 %v3152
        %5580 = vmatpush1.bf16.msra.mxu0 %v3151
        %5581 = vmatprep.subr.bf16.mxu0 %v3184
        %5582 = vmatpush1.bf16.msra.mxu0 %v3183
        %5583 = vmatprep.subr.bf16.mxu0 %v3216
        %5584 = vmatpush1.bf16.msra.mxu0 %v3215
        %5585 = vmatprep.subr.bf16.mxu0 %v3248
        %5586 = vmatpush1.bf16.msra.mxu0 %v3247
        %5587 = vmatprep.subr.bf16.mxu0 %v3280
        %5588 = vmatpush1.bf16.msra.mxu0 %v3279
        %5589 = vmatprep.subr.bf16.mxu0 %v3312
        %5590 = vmatpush1.bf16.msra.mxu0 %v3311
        %5591 = vmatprep.subr.bf16.mxu0 %v3344
        %5592 = vmatpush1.bf16.msra.mxu0 %v3343
        %5593 = vmatprep.subr.bf16.mxu0 %v3376
        %5594 = vmatpush1.bf16.msra.mxu0 %v3375
        %5595 = vmatprep.subr.bf16.mxu0 %v3408
        %5596 = vmatpush1.bf16.msra.mxu0 %v3407
        %5597 = vmatprep.subr.bf16.mxu0 %v3440
        %5598 = vmatpush1.bf16.msra.mxu0 %v3439
        %5599 = vmatprep.subr.bf16.mxu0 %v3472
        %5600 = vmatpush1.bf16.msra.mxu0 %v3471
        %5601 = vmatprep.mubr.bf16.mxu0 %v900
        %5602 = vmatmul.mubr.bf16.gmra.mrb[0].mxu0 %v899
        %v5603 = vpop.f32.mrb[0].mxu0
        %v5604 = vadd.f32 0.0, %v5603
        %v5605 = vpop.f32.mrb[0].mxu0
        %v5606 = vadd.f32 0.0, %v5605
        %v5607 = vpop.f32.mrb[0].mxu0
        %v5608 = vadd.f32 0.0, %v5607
        %v5609 = vpop.f32.mrb[0].mxu0
        %v5610 = vadd.f32 0.0, %v5609
        %5611 = vmatprep.mubr.bf16.mxu0 %v902
        %5612 = vmatmul.mubr.bf16.gmra.mrb[0].mxu0 %v901
        %v5613 = vpop.f32.mrb[0].mxu0
        %v5614 = vadd.f32 0.0, %v5613
        %v5615 = vpop.f32.mrb[0].mxu0
        %v5616 = vadd.f32 0.0, %v5615
        %v5617 = vpop.f32.mrb[0].mxu0
        %v5618 = vadd.f32 0.0, %v5617
        %v5619 = vpop.f32.mrb[0].mxu0
        %v5620 = vadd.f32 0.0, %v5619
        %5621 = vmatprep.mubr.bf16.mxu0 %v904
        %5622 = vmatmul.mubr.bf16.gmra.mrb[0].mxu0 %v903
        %v5623 = vpop.f32.mrb[0].mxu0
        %v5624 = vadd.f32 0.0, %v5623
        %v5625 = vpop.f32.mrb[0].mxu0
        %v5626 = vadd.f32 0.0, %v5625
        %v5627 = vpop.f32.mrb[0].mxu0
        %v5628 = vadd.f32 0.0, %v5627
        %v5629 = vpop.f32.mrb[0].mxu0
        %v5630 = vadd.f32 0.0, %v5629
        %5631 = vmatprep.mubr.bf16.mxu0 %v906
        %5632 = vmatmul.mubr.bf16.gmra.mrb[0].mxu0 %v905
        %v5633 = vpop.f32.mrb[0].mxu0
        %v5634 = vadd.f32 0.0, %v5633
        %v5635 = vpop.f32.mrb[0].mxu0
        %v5636 = vadd.f32 0.0, %v5635
        %v5637 = vpop.f32.mrb[0].mxu0
        %v5638 = vadd.f32 0.0, %v5637
        %v5639 = vpop.f32.mrb[0].mxu0
        %v5640 = vadd.f32 0.0, %v5639
        %5641 = vmatprep.mubr.bf16.mxu0 %v908
        %5642 = vmatmul.mubr.bf16.gmra.mrb[0].mxu0 %v907
        %v5643 = vpop.f32.mrb[0].mxu0
        %v5644 = vadd.f32 0.0, %v5643
        %v5645 = vpop.f32.mrb[0].mxu0
        %v5646 = vadd.f32 0.0, %v5645
        %v5647 = vpop.f32.mrb[0].mxu0
        %v5648 = vadd.f32 0.0, %v5647
        %v5649 = vpop.f32.mrb[0].mxu0
        %v5650 = vadd.f32 0.0, %v5649
        %5651 = vmatprep.mubr.bf16.mxu0 %v910
        %5652 = vmatmul.mubr.bf16.gmra.mrb[0].mxu0 %v909
        %v5653 = vpop.f32.mrb[0].mxu0
        %v5654 = vadd.f32 0.0, %v5653
        %v5655 = vpop.f32.mrb[0].mxu0
        %v5656 = vadd.f32 0.0, %v5655
        %v5657 = vpop.f32.mrb[0].mxu0
        %v5658 = vadd.f32 0.0, %v5657
        %v5659 = vpop.f32.mrb[0].mxu0
        %v5660 = vadd.f32 0.0, %v5659
        %5661 = vmatprep.mubr.bf16.mxu0 %v912
        %5662 = vmatmul.mubr.bf16.gmra.mrb[0].mxu0 %v911
        %v5663 = vpop.f32.mrb[0].mxu0
        %v5664 = vadd.f32 0.0, %v5663
        %v5665 = vpop.f32.mrb[0].mxu0
        %v5666 = vadd.f32 0.0, %v5665
        %v5667 = vpop.f32.mrb[0].mxu0
        %v5668 = vadd.f32 0.0, %v5667
        %v5669 = vpop.f32.mrb[0].mxu0
        %v5670 = vadd.f32 0.0, %v5669
        %5671 = vmatprep.mubr.bf16.mxu0 %v914
        %5672 = vmatmul.mubr.bf16.gmra.mrb[0].mxu0 %v913
        %v5673 = vpop.f32.mrb[0].mxu0
        %v5674 = vadd.f32 0.0, %v5673
        %v5675 = vpop.f32.mrb[0].mxu0
        %v5676 = vadd.f32 0.0, %v5675
        %v5677 = vpop.f32.mrb[0].mxu0
        %v5678 = vadd.f32 0.0, %v5677
        %v5679 = vpop.f32.mrb[0].mxu0
        %v5680 = vadd.f32 0.0, %v5679
        %5681 = vdwg.mxu0
        %5682 = vmatprep.subr.bf16.mxu0 %v2994
        %5683 = vmatpush1.bf16.msra.mxu0 %v2993
        %5684 = vmatprep.subr.bf16.mxu0 %v3026
        %5685 = vmatpush1.bf16.msra.mxu0 %v3025
        %5686 = vmatprep.subr.bf16.mxu0 %v3058
        %5687 = vmatpush1.bf16.msra.mxu0 %v3057
        %5688 = vmatprep.subr.bf16.mxu0 %v3090
        %5689 = vmatpush1.bf16.msra.mxu0 %v3089
        %5690 = vmatprep.subr.bf16.mxu0 %v3122
        %5691 = vmatpush1.bf16.msra.mxu0 %v3121
        %5692 = vmatprep.subr.bf16.mxu0 %v3154
        %5693 = vmatpush1.bf16.msra.mxu0 %v3153
        %5694 = vmatprep.subr.bf16.mxu0 %v3186
        %5695 = vmatpush1.bf16.msra.mxu0 %v3185
        %5696 = vmatprep.subr.bf16.mxu0 %v3218
        %5697 = vmatpush1.bf16.msra.mxu0 %v3217
        %5698 = vmatprep.subr.bf16.mxu0 %v3250
        %5699 = vmatpush1.bf16.msra.mxu0 %v3249
        %5700 = vmatprep.subr.bf16.mxu0 %v3282
        %5701 = vmatpush1.bf16.msra.mxu0 %v3281
        %5702 = vmatprep.subr.bf16.mxu0 %v3314
        %5703 = vmatpush1.bf16.msra.mxu0 %v3313
        %5704 = vmatprep.subr.bf16.mxu0 %v3346
        %5705 = vmatpush1.bf16.msra.mxu0 %v3345
        %5706 = vmatprep.subr.bf16.mxu0 %v3378
        %5707 = vmatpush1.bf16.msra.mxu0 %v3377
        %5708 = vmatprep.subr.bf16.mxu0 %v3410
        %5709 = vmatpush1.bf16.msra.mxu0 %v3409
        %5710 = vmatprep.subr.bf16.mxu0 %v3442
        %5711 = vmatpush1.bf16.msra.mxu0 %v3441
        %5712 = vmatprep.subr.bf16.mxu0 %v3474
        %5713 = vmatpush1.bf16.msra.mxu0 %v3473
        %5714 = vmatprep.mubr.bf16.mxu0 %v900
        %5715 = vmatmul.mubr.bf16.gmra.mrb[0].mxu0 %v899
        %v5716 = vpop.f32.mrb[0].mxu0
        %v5717 = vadd.f32 0.0, %v5716
        %v5718 = vpop.f32.mrb[0].mxu0
        %v5719 = vadd.f32 0.0, %v5718
        %v5720 = vpop.f32.mrb[0].mxu0
        %v5721 = vadd.f32 0.0, %v5720
        %v5722 = vpop.f32.mrb[0].mxu0
        %v5723 = vadd.f32 0.0, %v5722
        %5724 = vmatprep.mubr.bf16.mxu0 %v902
        %5725 = vmatmul.mubr.bf16.gmra.mrb[0].mxu0 %v901
        %v5726 = vpop.f32.mrb[0].mxu0
        %v5727 = vadd.f32 0.0, %v5726
        %v5728 = vpop.f32.mrb[0].mxu0
        %v5729 = vadd.f32 0.0, %v5728
        %v5730 = vpop.f32.mrb[0].mxu0
        %v5731 = vadd.f32 0.0, %v5730
        %v5732 = vpop.f32.mrb[0].mxu0
        %v5733 = vadd.f32 0.0, %v5732
        %5734 = vmatprep.mubr.bf16.mxu0 %v904
        %5735 = vmatmul.mubr.bf16.gmra.mrb[0].mxu0 %v903
        %v5736 = vpop.f32.mrb[0].mxu0
        %v5737 = vadd.f32 0.0, %v5736
        %v5738 = vpop.f32.mrb[0].mxu0
        %v5739 = vadd.f32 0.0, %v5738
        %v5740 = vpop.f32.mrb[0].mxu0
        %v5741 = vadd.f32 0.0, %v5740
        %v5742 = vpop.f32.mrb[0].mxu0
        %v5743 = vadd.f32 0.0, %v5742
        %5744 = vmatprep.mubr.bf16.mxu0 %v906
        %5745 = vmatmul.mubr.bf16.gmra.mrb[0].mxu0 %v905
        %v5746 = vpop.f32.mrb[0].mxu0
        %v5747 = vadd.f32 0.0, %v5746
        %v5748 = vpop.f32.mrb[0].mxu0
        %v5749 = vadd.f32 0.0, %v5748
        %v5750 = vpop.f32.mrb[0].mxu0
        %v5751 = vadd.f32 0.0, %v5750
        %v5752 = vpop.f32.mrb[0].mxu0
        %v5753 = vadd.f32 0.0, %v5752
        %5754 = vmatprep.mubr.bf16.mxu0 %v908
        %5755 = vmatmul.mubr.bf16.gmra.mrb[0].mxu0 %v907
        %v5756 = vpop.f32.mrb[0].mxu0
        %v5757 = vadd.f32 0.0, %v5756
        %v5758 = vpop.f32.mrb[0].mxu0
        %v5759 = vadd.f32 0.0, %v5758
        %v5760 = vpop.f32.mrb[0].mxu0
        %v5761 = vadd.f32 0.0, %v5760
        %v5762 = vpop.f32.mrb[0].mxu0
        %v5763 = vadd.f32 0.0, %v5762
        %5764 = vmatprep.mubr.bf16.mxu0 %v910
        %5765 = vmatmul.mubr.bf16.gmra.mrb[0].mxu0 %v909
        %v5766 = vpop.f32.mrb[0].mxu0
        %v5767 = vadd.f32 0.0, %v5766
        %v5768 = vpop.f32.mrb[0].mxu0
        %v5769 = vadd.f32 0.0, %v5768
        %v5770 = vpop.f32.mrb[0].mxu0
        %v5771 = vadd.f32 0.0, %v5770
        %v5772 = vpop.f32.mrb[0].mxu0
        %v5773 = vadd.f32 0.0, %v5772
        %5774 = vmatprep.mubr.bf16.mxu0 %v912
        %5775 = vmatmul.mubr.bf16.gmra.mrb[0].mxu0 %v911
        %v5776 = vpop.f32.mrb[0].mxu0
        %v5777 = vadd.f32 0.0, %v5776
        %v5778 = vpop.f32.mrb[0].mxu0
        %v5779 = vadd.f32 0.0, %v5778
        %v5780 = vpop.f32.mrb[0].mxu0
        %v5781 = vadd.f32 0.0, %v5780
        %v5782 = vpop.f32.mrb[0].mxu0
        %v5783 = vadd.f32 0.0, %v5782
        %5784 = vmatprep.mubr.bf16.mxu0 %v914
        %5785 = vmatmul.mubr.bf16.gmra.mrb[0].mxu0 %v913
        %v5786 = vpop.f32.mrb[0].mxu0
        %v5787 = vadd.f32 0.0, %v5786
        %v5788 = vpop.f32.mrb[0].mxu0
        %v5789 = vadd.f32 0.0, %v5788
        %v5790 = vpop.f32.mrb[0].mxu0
        %v5791 = vadd.f32 0.0, %v5790
        %v5792 = vpop.f32.mrb[0].mxu0
        %v5793 = vadd.f32 0.0, %v5792
        %5794 = vdwg.mxu0
        %v5795 = vmax.f32 %v4022, %v4024
        %v5796 = vmax.f32 %v5795, %v4135
        %v5797 = vmax.f32 %v5796, %v4137
        %v5798 = vmax.f32 %v5797, %v4248
        %v5799 = vmax.f32 %v5798, %v4250
        %v5800 = vmax.f32 %v5799, %v4361
        %v5801 = vmax.f32 %v5800, %v4363
        %v5802 = vmax.f32 %v5801, %v4474
        %v5803 = vmax.f32 %v5802, %v4476
        %v5804 = vmax.f32 %v5803, %v4587
        %v5805 = vmax.f32 %v5804, %v4589
        %v5806 = vmax.f32 %v5805, %v4700
        %v5807 = vmax.f32 %v5806, %v4702
        %v5808 = vmax.f32 %v5807, %v4813
        %v5809 = vmax.f32 %v5808, %v4815
        %v5810 = vmax.f32 %v5809, %v4926
        %v5811 = vmax.f32 %v5810, %v4928
        %v5812 = vmax.f32 %v5811, %v5039
        %v5813 = vmax.f32 %v5812, %v5041
        %v5814 = vmax.f32 %v5813, %v5152
        %v5815 = vmax.f32 %v5814, %v5154
        %v5816 = vmax.f32 %v5815, %v5265
        %v5817 = vmax.f32 %v5816, %v5267
        %v5818 = vmax.f32 %v5817, %v5378
        %v5819 = vmax.f32 %v5818, %v5380
        %v5820 = vmax.f32 %v5819, %v5491
        %v5821 = vmax.f32 %v5820, %v5493
        %v5822 = vmax.f32 %v5821, %v5604
        %v5823 = vmax.f32 %v5822, %v5606
        %v5824 = vmax.f32 %v5823, %v5717
        %v5825 = vmax.f32 %v5824, %v5719
        %5826 = vmax.xlane.f32.xlu0 %v5825
        %v5827 = vpop.xlane.xlu0 %5826
        %v5828 = vmax.f32 %v4026, %v4028
        %v5829 = vmax.f32 %v5828, %v4139
        %v5830 = vmax.f32 %v5829, %v4141
        %v5831 = vmax.f32 %v5830, %v4252
        %v5832 = vmax.f32 %v5831, %v4254
        %v5833 = vmax.f32 %v5832, %v4365
        %v5834 = vmax.f32 %v5833, %v4367
        %v5835 = vmax.f32 %v5834, %v4478
        %v5836 = vmax.f32 %v5835, %v4480
        %v5837 = vmax.f32 %v5836, %v4591
        %v5838 = vmax.f32 %v5837, %v4593
        %v5839 = vmax.f32 %v5838, %v4704
        %v5840 = vmax.f32 %v5839, %v4706
        %v5841 = vmax.f32 %v5840, %v4817
        %v5842 = vmax.f32 %v5841, %v4819
        %v5843 = vmax.f32 %v5842, %v4930
        %v5844 = vmax.f32 %v5843, %v4932
        %v5845 = vmax.f32 %v5844, %v5043
        %v5846 = vmax.f32 %v5845, %v5045
        %v5847 = vmax.f32 %v5846, %v5156
        %v5848 = vmax.f32 %v5847, %v5158
        %v5849 = vmax.f32 %v5848, %v5269
        %v5850 = vmax.f32 %v5849, %v5271
        %v5851 = vmax.f32 %v5850, %v5382
        %v5852 = vmax.f32 %v5851, %v5384
        %v5853 = vmax.f32 %v5852, %v5495
        %v5854 = vmax.f32 %v5853, %v5497
        %v5855 = vmax.f32 %v5854, %v5608
        %v5856 = vmax.f32 %v5855, %v5610
        %v5857 = vmax.f32 %v5856, %v5721
        %v5858 = vmax.f32 %v5857, %v5723
        %5859 = vmax.xlane.f32.xlu0 %v5858
        %v5860 = vpop.xlane.xlu0 %5859
        %v5861 = vmax.f32 %v4032, %v4034
        %v5862 = vmax.f32 %v5861, %v4145
        %v5863 = vmax.f32 %v5862, %v4147
        %v5864 = vmax.f32 %v5863, %v4258
        %v5865 = vmax.f32 %v5864, %v4260
        %v5866 = vmax.f32 %v5865, %v4371
        %v5867 = vmax.f32 %v5866, %v4373
        %v5868 = vmax.f32 %v5867, %v4484
        %v5869 = vmax.f32 %v5868, %v4486
        %v5870 = vmax.f32 %v5869, %v4597
        %v5871 = vmax.f32 %v5870, %v4599
        %v5872 = vmax.f32 %v5871, %v4710
        %v5873 = vmax.f32 %v5872, %v4712
        %v5874 = vmax.f32 %v5873, %v4823
        %v5875 = vmax.f32 %v5874, %v4825
        %v5876 = vmax.f32 %v5875, %v4936
        %v5877 = vmax.f32 %v5876, %v4938
        %v5878 = vmax.f32 %v5877, %v5049
        %v5879 = vmax.f32 %v5878, %v5051
        %v5880 = vmax.f32 %v5879, %v5162
        %v5881 = vmax.f32 %v5880, %v5164
        %v5882 = vmax.f32 %v5881, %v5275
        %v5883 = vmax.f32 %v5882, %v5277
        %v5884 = vmax.f32 %v5883, %v5388
        %v5885 = vmax.f32 %v5884, %v5390
        %v5886 = vmax.f32 %v5885, %v5501
        %v5887 = vmax.f32 %v5886, %v5503
        %v5888 = vmax.f32 %v5887, %v5614
        %v5889 = vmax.f32 %v5888, %v5616
        %v5890 = vmax.f32 %v5889, %v5727
        %v5891 = vmax.f32 %v5890, %v5729
        %5892 = vmax.xlane.f32.xlu0 %v5891
        %v5893 = vpop.xlane.xlu0 %5892
        %v5894 = vmax.f32 %v4036, %v4038
        %v5895 = vmax.f32 %v5894, %v4149
        %v5896 = vmax.f32 %v5895, %v4151
        %v5897 = vmax.f32 %v5896, %v4262
        %v5898 = vmax.f32 %v5897, %v4264
        %v5899 = vmax.f32 %v5898, %v4375
        %v5900 = vmax.f32 %v5899, %v4377
        %v5901 = vmax.f32 %v5900, %v4488
        %v5902 = vmax.f32 %v5901, %v4490
        %v5903 = vmax.f32 %v5902, %v4601
        %v5904 = vmax.f32 %v5903, %v4603
        %v5905 = vmax.f32 %v5904, %v4714
        %v5906 = vmax.f32 %v5905, %v4716
        %v5907 = vmax.f32 %v5906, %v4827
        %v5908 = vmax.f32 %v5907, %v4829
        %v5909 = vmax.f32 %v5908, %v4940
        %v5910 = vmax.f32 %v5909, %v4942
        %v5911 = vmax.f32 %v5910, %v5053
        %v5912 = vmax.f32 %v5911, %v5055
        %v5913 = vmax.f32 %v5912, %v5166
        %v5914 = vmax.f32 %v5913, %v5168
        %v5915 = vmax.f32 %v5914, %v5279
        %v5916 = vmax.f32 %v5915, %v5281
        %v5917 = vmax.f32 %v5916, %v5392
        %v5918 = vmax.f32 %v5917, %v5394
        %v5919 = vmax.f32 %v5918, %v5505
        %v5920 = vmax.f32 %v5919, %v5507
        %v5921 = vmax.f32 %v5920, %v5618
        %v5922 = vmax.f32 %v5921, %v5620
        %v5923 = vmax.f32 %v5922, %v5731
        %v5924 = vmax.f32 %v5923, %v5733
        %5925 = vmax.xlane.f32.xlu0 %v5924
        %v5926 = vpop.xlane.xlu0 %5925
        %v5927 = vmax.f32 %v4042, %v4044
        %v5928 = vmax.f32 %v5927, %v4155
        %v5929 = vmax.f32 %v5928, %v4157
        %v5930 = vmax.f32 %v5929, %v4268
        %v5931 = vmax.f32 %v5930, %v4270
        %v5932 = vmax.f32 %v5931, %v4381
        %v5933 = vmax.f32 %v5932, %v4383
        %v5934 = vmax.f32 %v5933, %v4494
        %v5935 = vmax.f32 %v5934, %v4496
        %v5936 = vmax.f32 %v5935, %v4607
        %v5937 = vmax.f32 %v5936, %v4609
        %v5938 = vmax.f32 %v5937, %v4720
        %v5939 = vmax.f32 %v5938, %v4722
        %v5940 = vmax.f32 %v5939, %v4833
        %v5941 = vmax.f32 %v5940, %v4835
        %v5942 = vmax.f32 %v5941, %v4946
        %v5943 = vmax.f32 %v5942, %v4948
        %v5944 = vmax.f32 %v5943, %v5059
        %v5945 = vmax.f32 %v5944, %v5061
        %v5946 = vmax.f32 %v5945, %v5172
        %v5947 = vmax.f32 %v5946, %v5174
        %v5948 = vmax.f32 %v5947, %v5285
        %v5949 = vmax.f32 %v5948, %v5287
        %v5950 = vmax.f32 %v5949, %v5398
        %v5951 = vmax.f32 %v5950, %v5400
        %v5952 = vmax.f32 %v5951, %v5511
        %v5953 = vmax.f32 %v5952, %v5513
        %v5954 = vmax.f32 %v5953, %v5624
        %v5955 = vmax.f32 %v5954, %v5626
        %v5956 = vmax.f32 %v5955, %v5737
        %v5957 = vmax.f32 %v5956, %v5739
        %5958 = vmax.xlane.f32.xlu0 %v5957
        %v5959 = vpop.xlane.xlu0 %5958
        %v5960 = vmax.f32 %v4046, %v4048
        %v5961 = vmax.f32 %v5960, %v4159
        %v5962 = vmax.f32 %v5961, %v4161
        %v5963 = vmax.f32 %v5962, %v4272
        %v5964 = vmax.f32 %v5963, %v4274
        %v5965 = vmax.f32 %v5964, %v4385
        %v5966 = vmax.f32 %v5965, %v4387
        %v5967 = vmax.f32 %v5966, %v4498
        %v5968 = vmax.f32 %v5967, %v4500
        %v5969 = vmax.f32 %v5968, %v4611
        %v5970 = vmax.f32 %v5969, %v4613
        %v5971 = vmax.f32 %v5970, %v4724
        %v5972 = vmax.f32 %v5971, %v4726
        %v5973 = vmax.f32 %v5972, %v4837
        %v5974 = vmax.f32 %v5973, %v4839
        %v5975 = vmax.f32 %v5974, %v4950
        %v5976 = vmax.f32 %v5975, %v4952
        %v5977 = vmax.f32 %v5976, %v5063
        %v5978 = vmax.f32 %v5977, %v5065
        %v5979 = vmax.f32 %v5978, %v5176
        %v5980 = vmax.f32 %v5979, %v5178
        %v5981 = vmax.f32 %v5980, %v5289
        %v5982 = vmax.f32 %v5981, %v5291
        %v5983 = vmax.f32 %v5982, %v5402
        %v5984 = vmax.f32 %v5983, %v5404
        %v5985 = vmax.f32 %v5984, %v5515
        %v5986 = vmax.f32 %v5985, %v5517
        %v5987 = vmax.f32 %v5986, %v5628
        %v5988 = vmax.f32 %v5987, %v5630
        %v5989 = vmax.f32 %v5988, %v5741
        %v5990 = vmax.f32 %v5989, %v5743
        %5991 = vmax.xlane.f32.xlu0 %v5990
        %v5992 = vpop.xlane.xlu0 %5991
        %v5993 = vmax.f32 %v4052, %v4054
        %v5994 = vmax.f32 %v5993, %v4165
        %v5995 = vmax.f32 %v5994, %v4167
        %v5996 = vmax.f32 %v5995, %v4278
        %v5997 = vmax.f32 %v5996, %v4280
        %v5998 = vmax.f32 %v5997, %v4391
        %v5999 = vmax.f32 %v5998, %v4393
        %v6000 = vmax.f32 %v5999, %v4504
        %v6001 = vmax.f32 %v6000, %v4506
        %v6002 = vmax.f32 %v6001, %v4617
        %v6003 = vmax.f32 %v6002, %v4619
        %v6004 = vmax.f32 %v6003, %v4730
        %v6005 = vmax.f32 %v6004, %v4732
        %v6006 = vmax.f32 %v6005, %v4843
        %v6007 = vmax.f32 %v6006, %v4845
        %v6008 = vmax.f32 %v6007, %v4956
        %v6009 = vmax.f32 %v6008, %v4958
        %v6010 = vmax.f32 %v6009, %v5069
        %v6011 = vmax.f32 %v6010, %v5071
        %v6012 = vmax.f32 %v6011, %v5182
        %v6013 = vmax.f32 %v6012, %v5184
        %v6014 = vmax.f32 %v6013, %v5295
        %v6015 = vmax.f32 %v6014, %v5297
        %v6016 = vmax.f32 %v6015, %v5408
        %v6017 = vmax.f32 %v6016, %v5410
        %v6018 = vmax.f32 %v6017, %v5521
        %v6019 = vmax.f32 %v6018, %v5523
        %v6020 = vmax.f32 %v6019, %v5634
        %v6021 = vmax.f32 %v6020, %v5636
        %v6022 = vmax.f32 %v6021, %v5747
        %v6023 = vmax.f32 %v6022, %v5749
        %6024 = vmax.xlane.f32.xlu0 %v6023
        %v6025 = vpop.xlane.xlu0 %6024
        %v6026 = vmax.f32 %v4056, %v4058
        %v6027 = vmax.f32 %v6026, %v4169
        %v6028 = vmax.f32 %v6027, %v4171
        %v6029 = vmax.f32 %v6028, %v4282
        %v6030 = vmax.f32 %v6029, %v4284
        %v6031 = vmax.f32 %v6030, %v4395
        %v6032 = vmax.f32 %v6031, %v4397
        %v6033 = vmax.f32 %v6032, %v4508
        %v6034 = vmax.f32 %v6033, %v4510
        %v6035 = vmax.f32 %v6034, %v4621
        %v6036 = vmax.f32 %v6035, %v4623
        %v6037 = vmax.f32 %v6036, %v4734
        %v6038 = vmax.f32 %v6037, %v4736
        %v6039 = vmax.f32 %v6038, %v4847
        %v6040 = vmax.f32 %v6039, %v4849
        %v6041 = vmax.f32 %v6040, %v4960
        %v6042 = vmax.f32 %v6041, %v4962
        %v6043 = vmax.f32 %v6042, %v5073
        %v6044 = vmax.f32 %v6043, %v5075
        %v6045 = vmax.f32 %v6044, %v5186
        %v6046 = vmax.f32 %v6045, %v5188
        %v6047 = vmax.f32 %v6046, %v5299
        %v6048 = vmax.f32 %v6047, %v5301
        %v6049 = vmax.f32 %v6048, %v5412
        %v6050 = vmax.f32 %v6049, %v5414
        %v6051 = vmax.f32 %v6050, %v5525
        %v6052 = vmax.f32 %v6051, %v5527
        %v6053 = vmax.f32 %v6052, %v5638
        %v6054 = vmax.f32 %v6053, %v5640
        %v6055 = vmax.f32 %v6054, %v5751
        %v6056 = vmax.f32 %v6055, %v5753
        %6057 = vmax.xlane.f32.xlu0 %v6056
        %v6058 = vpop.xlane.xlu0 %6057
        %v6059 = vmax.f32 %v4062, %v4064
        %v6060 = vmax.f32 %v6059, %v4175
        %v6061 = vmax.f32 %v6060, %v4177
        %v6062 = vmax.f32 %v6061, %v4288
        %v6063 = vmax.f32 %v6062, %v4290
        %v6064 = vmax.f32 %v6063, %v4401
        %v6065 = vmax.f32 %v6064, %v4403
        %v6066 = vmax.f32 %v6065, %v4514
        %v6067 = vmax.f32 %v6066, %v4516
        %v6068 = vmax.f32 %v6067, %v4627
        %v6069 = vmax.f32 %v6068, %v4629
        %v6070 = vmax.f32 %v6069, %v4740
        %v6071 = vmax.f32 %v6070, %v4742
        %v6072 = vmax.f32 %v6071, %v4853
        %v6073 = vmax.f32 %v6072, %v4855
        %v6074 = vmax.f32 %v6073, %v4966
        %v6075 = vmax.f32 %v6074, %v4968
        %v6076 = vmax.f32 %v6075, %v5079
        %v6077 = vmax.f32 %v6076, %v5081
        %v6078 = vmax.f32 %v6077, %v5192
        %v6079 = vmax.f32 %v6078, %v5194
        %v6080 = vmax.f32 %v6079, %v5305
        %v6081 = vmax.f32 %v6080, %v5307
        %v6082 = vmax.f32 %v6081, %v5418
        %v6083 = vmax.f32 %v6082, %v5420
        %v6084 = vmax.f32 %v6083, %v5531
        %v6085 = vmax.f32 %v6084, %v5533
        %v6086 = vmax.f32 %v6085, %v5644
        %v6087 = vmax.f32 %v6086, %v5646
        %v6088 = vmax.f32 %v6087, %v5757
        %v6089 = vmax.f32 %v6088, %v5759
        %6090 = vmax.xlane.f32.xlu0 %v6089
        %v6091 = vpop.xlane.xlu0 %6090
        %v6092 = vmax.f32 %v4066, %v4068
        %v6093 = vmax.f32 %v6092, %v4179
        %v6094 = vmax.f32 %v6093, %v4181
        %v6095 = vmax.f32 %v6094, %v4292
        %v6096 = vmax.f32 %v6095, %v4294
        %v6097 = vmax.f32 %v6096, %v4405
        %v6098 = vmax.f32 %v6097, %v4407
        %v6099 = vmax.f32 %v6098, %v4518
        %v6100 = vmax.f32 %v6099, %v4520
        %v6101 = vmax.f32 %v6100, %v4631
        %v6102 = vmax.f32 %v6101, %v4633
        %v6103 = vmax.f32 %v6102, %v4744
        %v6104 = vmax.f32 %v6103, %v4746
        %v6105 = vmax.f32 %v6104, %v4857
        %v6106 = vmax.f32 %v6105, %v4859
        %v6107 = vmax.f32 %v6106, %v4970
        %v6108 = vmax.f32 %v6107, %v4972
        %v6109 = vmax.f32 %v6108, %v5083
        %v6110 = vmax.f32 %v6109, %v5085
        %v6111 = vmax.f32 %v6110, %v5196
        %v6112 = vmax.f32 %v6111, %v5198
        %v6113 = vmax.f32 %v6112, %v5309
        %v6114 = vmax.f32 %v6113, %v5311
        %v6115 = vmax.f32 %v6114, %v5422
        %v6116 = vmax.f32 %v6115, %v5424
        %v6117 = vmax.f32 %v6116, %v5535
        %v6118 = vmax.f32 %v6117, %v5537
        %v6119 = vmax.f32 %v6118, %v5648
        %v6120 = vmax.f32 %v6119, %v5650
        %v6121 = vmax.f32 %v6120, %v5761
        %v6122 = vmax.f32 %v6121, %v5763
        %6123 = vmax.xlane.f32.xlu0 %v6122
        %v6124 = vpop.xlane.xlu0 %6123
        %v6125 = vmax.f32 %v4072, %v4074
        %v6126 = vmax.f32 %v6125, %v4185
        %v6127 = vmax.f32 %v6126, %v4187
        %v6128 = vmax.f32 %v6127, %v4298
        %v6129 = vmax.f32 %v6128, %v4300
        %v6130 = vmax.f32 %v6129, %v4411
        %v6131 = vmax.f32 %v6130, %v4413
        %v6132 = vmax.f32 %v6131, %v4524
        %v6133 = vmax.f32 %v6132, %v4526
        %v6134 = vmax.f32 %v6133, %v4637
        %v6135 = vmax.f32 %v6134, %v4639
        %v6136 = vmax.f32 %v6135, %v4750
        %v6137 = vmax.f32 %v6136, %v4752
        %v6138 = vmax.f32 %v6137, %v4863
        %v6139 = vmax.f32 %v6138, %v4865
        %v6140 = vmax.f32 %v6139, %v4976
        %v6141 = vmax.f32 %v6140, %v4978
        %v6142 = vmax.f32 %v6141, %v5089
        %v6143 = vmax.f32 %v6142, %v5091
        %v6144 = vmax.f32 %v6143, %v5202
        %v6145 = vmax.f32 %v6144, %v5204
        %v6146 = vmax.f32 %v6145, %v5315
        %v6147 = vmax.f32 %v6146, %v5317
        %v6148 = vmax.f32 %v6147, %v5428
        %v6149 = vmax.f32 %v6148, %v5430
        %v6150 = vmax.f32 %v6149, %v5541
        %v6151 = vmax.f32 %v6150, %v5543
        %v6152 = vmax.f32 %v6151, %v5654
        %v6153 = vmax.f32 %v6152, %v5656
        %v6154 = vmax.f32 %v6153, %v5767
        %v6155 = vmax.f32 %v6154, %v5769
        %6156 = vmax.xlane.f32.xlu0 %v6155
        %v6157 = vpop.xlane.xlu0 %6156
        %v6158 = vmax.f32 %v4076, %v4078
        %v6159 = vmax.f32 %v6158, %v4189
        %v6160 = vmax.f32 %v6159, %v4191
        %v6161 = vmax.f32 %v6160, %v4302
        %v6162 = vmax.f32 %v6161, %v4304
        %v6163 = vmax.f32 %v6162, %v4415
        %v6164 = vmax.f32 %v6163, %v4417
        %v6165 = vmax.f32 %v6164, %v4528
        %v6166 = vmax.f32 %v6165, %v4530
        %v6167 = vmax.f32 %v6166, %v4641
        %v6168 = vmax.f32 %v6167, %v4643
        %v6169 = vmax.f32 %v6168, %v4754
        %v6170 = vmax.f32 %v6169, %v4756
        %v6171 = vmax.f32 %v6170, %v4867
        %v6172 = vmax.f32 %v6171, %v4869
        %v6173 = vmax.f32 %v6172, %v4980
        %v6174 = vmax.f32 %v6173, %v4982
        %v6175 = vmax.f32 %v6174, %v5093
        %v6176 = vmax.f32 %v6175, %v5095
        %v6177 = vmax.f32 %v6176, %v5206
        %v6178 = vmax.f32 %v6177, %v5208
        %v6179 = vmax.f32 %v6178, %v5319
        %v6180 = vmax.f32 %v6179, %v5321
        %v6181 = vmax.f32 %v6180, %v5432
        %v6182 = vmax.f32 %v6181, %v5434
        %v6183 = vmax.f32 %v6182, %v5545
        %v6184 = vmax.f32 %v6183, %v5547
        %v6185 = vmax.f32 %v6184, %v5658
        %v6186 = vmax.f32 %v6185, %v5660
        %v6187 = vmax.f32 %v6186, %v5771
        %v6188 = vmax.f32 %v6187, %v5773
        %6189 = vmax.xlane.f32.xlu0 %v6188
        %v6190 = vpop.xlane.xlu0 %6189
        %v6191 = vmax.f32 %v4082, %v4084
        %v6192 = vmax.f32 %v6191, %v4195
        %v6193 = vmax.f32 %v6192, %v4197
        %v6194 = vmax.f32 %v6193, %v4308
        %v6195 = vmax.f32 %v6194, %v4310
        %v6196 = vmax.f32 %v6195, %v4421
        %v6197 = vmax.f32 %v6196, %v4423
        %v6198 = vmax.f32 %v6197, %v4534
        %v6199 = vmax.f32 %v6198, %v4536
        %v6200 = vmax.f32 %v6199, %v4647
        %v6201 = vmax.f32 %v6200, %v4649
        %v6202 = vmax.f32 %v6201, %v4760
        %v6203 = vmax.f32 %v6202, %v4762
        %v6204 = vmax.f32 %v6203, %v4873
        %v6205 = vmax.f32 %v6204, %v4875
        %v6206 = vmax.f32 %v6205, %v4986
        %v6207 = vmax.f32 %v6206, %v4988
        %v6208 = vmax.f32 %v6207, %v5099
        %v6209 = vmax.f32 %v6208, %v5101
        %v6210 = vmax.f32 %v6209, %v5212
        %v6211 = vmax.f32 %v6210, %v5214
        %v6212 = vmax.f32 %v6211, %v5325
        %v6213 = vmax.f32 %v6212, %v5327
        %v6214 = vmax.f32 %v6213, %v5438
        %v6215 = vmax.f32 %v6214, %v5440
        %v6216 = vmax.f32 %v6215, %v5551
        %v6217 = vmax.f32 %v6216, %v5553
        %v6218 = vmax.f32 %v6217, %v5664
        %v6219 = vmax.f32 %v6218, %v5666
        %v6220 = vmax.f32 %v6219, %v5777
        %v6221 = vmax.f32 %v6220, %v5779
        %6222 = vmax.xlane.f32.xlu0 %v6221
        %v6223 = vpop.xlane.xlu0 %6222
        %v6224 = vmax.f32 %v4086, %v4088
        %v6225 = vmax.f32 %v6224, %v4199
        %v6226 = vmax.f32 %v6225, %v4201
        %v6227 = vmax.f32 %v6226, %v4312
        %v6228 = vmax.f32 %v6227, %v4314
        %v6229 = vmax.f32 %v6228, %v4425
        %v6230 = vmax.f32 %v6229, %v4427
        %v6231 = vmax.f32 %v6230, %v4538
        %v6232 = vmax.f32 %v6231, %v4540
        %v6233 = vmax.f32 %v6232, %v4651
        %v6234 = vmax.f32 %v6233, %v4653
        %v6235 = vmax.f32 %v6234, %v4764
        %v6236 = vmax.f32 %v6235, %v4766
        %v6237 = vmax.f32 %v6236, %v4877
        %v6238 = vmax.f32 %v6237, %v4879
        %v6239 = vmax.f32 %v6238, %v4990
        %v6240 = vmax.f32 %v6239, %v4992
        %v6241 = vmax.f32 %v6240, %v5103
        %v6242 = vmax.f32 %v6241, %v5105
        %v6243 = vmax.f32 %v6242, %v5216
        %v6244 = vmax.f32 %v6243, %v5218
        %v6245 = vmax.f32 %v6244, %v5329
        %v6246 = vmax.f32 %v6245, %v5331
        %v6247 = vmax.f32 %v6246, %v5442
        %v6248 = vmax.f32 %v6247, %v5444
        %v6249 = vmax.f32 %v6248, %v5555
        %v6250 = vmax.f32 %v6249, %v5557
        %v6251 = vmax.f32 %v6250, %v5668
        %v6252 = vmax.f32 %v6251, %v5670
        %v6253 = vmax.f32 %v6252, %v5781
        %v6254 = vmax.f32 %v6253, %v5783
        %6255 = vmax.xlane.f32.xlu0 %v6254
        %v6256 = vpop.xlane.xlu0 %6255
        %v6257 = vmax.f32 %v4092, %v4094
        %v6258 = vmax.f32 %v6257, %v4205
        %v6259 = vmax.f32 %v6258, %v4207
        %v6260 = vmax.f32 %v6259, %v4318
        %v6261 = vmax.f32 %v6260, %v4320
        %v6262 = vmax.f32 %v6261, %v4431
        %v6263 = vmax.f32 %v6262, %v4433
        %v6264 = vmax.f32 %v6263, %v4544
        %v6265 = vmax.f32 %v6264, %v4546
        %v6266 = vmax.f32 %v6265, %v4657
        %v6267 = vmax.f32 %v6266, %v4659
        %v6268 = vmax.f32 %v6267, %v4770
        %v6269 = vmax.f32 %v6268, %v4772
        %v6270 = vmax.f32 %v6269, %v4883
        %v6271 = vmax.f32 %v6270, %v4885
        %v6272 = vmax.f32 %v6271, %v4996
        %v6273 = vmax.f32 %v6272, %v4998
        %v6274 = vmax.f32 %v6273, %v5109
        %v6275 = vmax.f32 %v6274, %v5111
        %v6276 = vmax.f32 %v6275, %v5222
        %v6277 = vmax.f32 %v6276, %v5224
        %v6278 = vmax.f32 %v6277, %v5335
        %v6279 = vmax.f32 %v6278, %v5337
        %v6280 = vmax.f32 %v6279, %v5448
        %v6281 = vmax.f32 %v6280, %v5450
        %v6282 = vmax.f32 %v6281, %v5561
        %v6283 = vmax.f32 %v6282, %v5563
        %v6284 = vmax.f32 %v6283, %v5674
        %v6285 = vmax.f32 %v6284, %v5676
        %v6286 = vmax.f32 %v6285, %v5787
        %v6287 = vmax.f32 %v6286, %v5789
        %6288 = vmax.xlane.f32.xlu0 %v6287
        %v6289 = vpop.xlane.xlu0 %6288
        %v6290 = vmax.f32 %v4096, %v4098
        %v6291 = vmax.f32 %v6290, %v4209
        %v6292 = vmax.f32 %v6291, %v4211
        %v6293 = vmax.f32 %v6292, %v4322
        %v6294 = vmax.f32 %v6293, %v4324
        %v6295 = vmax.f32 %v6294, %v4435
        %v6296 = vmax.f32 %v6295, %v4437
        %v6297 = vmax.f32 %v6296, %v4548
        %v6298 = vmax.f32 %v6297, %v4550
        %v6299 = vmax.f32 %v6298, %v4661
        %v6300 = vmax.f32 %v6299, %v4663
        %v6301 = vmax.f32 %v6300, %v4774
        %v6302 = vmax.f32 %v6301, %v4776
        %v6303 = vmax.f32 %v6302, %v4887
        %v6304 = vmax.f32 %v6303, %v4889
        %v6305 = vmax.f32 %v6304, %v5000
        %v6306 = vmax.f32 %v6305, %v5002
        %v6307 = vmax.f32 %v6306, %v5113
        %v6308 = vmax.f32 %v6307, %v5115
        %v6309 = vmax.f32 %v6308, %v5226
        %v6310 = vmax.f32 %v6309, %v5228
        %v6311 = vmax.f32 %v6310, %v5339
        %v6312 = vmax.f32 %v6311, %v5341
        %v6313 = vmax.f32 %v6312, %v5452
        %v6314 = vmax.f32 %v6313, %v5454
        %v6315 = vmax.f32 %v6314, %v5565
        %v6316 = vmax.f32 %v6315, %v5567
        %v6317 = vmax.f32 %v6316, %v5678
        %v6318 = vmax.f32 %v6317, %v5680
        %v6319 = vmax.f32 %v6318, %v5791
        %v6320 = vmax.f32 %v6319, %v5793
        %6321 = vmax.xlane.f32.xlu0 %v6320
        %v6322 = vpop.xlane.xlu0 %6321
        %v6323 = vsub.f32 %v4022, %v5827
        %v6324 = vsub.f32 %v4024, %v5827
        %v6325 = vsub.f32 %v4135, %v5827
        %v6326 = vsub.f32 %v4137, %v5827
        %v6327 = vsub.f32 %v4248, %v5827
        %v6328 = vsub.f32 %v4250, %v5827
        %v6329 = vsub.f32 %v4361, %v5827
        %v6330 = vsub.f32 %v4363, %v5827
        %v6331 = vsub.f32 %v4474, %v5827
        %v6332 = vsub.f32 %v4476, %v5827
        %v6333 = vsub.f32 %v4587, %v5827
        %v6334 = vsub.f32 %v4589, %v5827
        %v6335 = vsub.f32 %v4700, %v5827
        %v6336 = vsub.f32 %v4702, %v5827
        %v6337 = vsub.f32 %v4813, %v5827
        %v6338 = vsub.f32 %v4815, %v5827
        %v6339 = vsub.f32 %v4926, %v5827
        %v6340 = vsub.f32 %v4928, %v5827
        %v6341 = vsub.f32 %v5039, %v5827
        %v6342 = vsub.f32 %v5041, %v5827
        %v6343 = vsub.f32 %v5152, %v5827
        %v6344 = vsub.f32 %v5154, %v5827
        %v6345 = vsub.f32 %v5265, %v5827
        %v6346 = vsub.f32 %v5267, %v5827
        %v6347 = vsub.f32 %v5378, %v5827
        %v6348 = vsub.f32 %v5380, %v5827
        %v6349 = vsub.f32 %v5491, %v5827
        %v6350 = vsub.f32 %v5493, %v5827
        %v6351 = vsub.f32 %v5604, %v5827
        %v6352 = vsub.f32 %v5606, %v5827
        %v6353 = vsub.f32 %v5717, %v5827
        %v6354 = vsub.f32 %v5719, %v5827
        %v6355 = vsub.f32 %v4026, %v5860
        %v6356 = vsub.f32 %v4028, %v5860
        %v6357 = vsub.f32 %v4139, %v5860
        %v6358 = vsub.f32 %v4141, %v5860
        %v6359 = vsub.f32 %v4252, %v5860
        %v6360 = vsub.f32 %v4254, %v5860
        %v6361 = vsub.f32 %v4365, %v5860
        %v6362 = vsub.f32 %v4367, %v5860
        %v6363 = vsub.f32 %v4478, %v5860
        %v6364 = vsub.f32 %v4480, %v5860
        %v6365 = vsub.f32 %v4591, %v5860
        %v6366 = vsub.f32 %v4593, %v5860
        %v6367 = vsub.f32 %v4704, %v5860
        %v6368 = vsub.f32 %v4706, %v5860
        %v6369 = vsub.f32 %v4817, %v5860
        %v6370 = vsub.f32 %v4819, %v5860
        %v6371 = vsub.f32 %v4930, %v5860
        %v6372 = vsub.f32 %v4932, %v5860
        %v6373 = vsub.f32 %v5043, %v5860
        %v6374 = vsub.f32 %v5045, %v5860
        %v6375 = vsub.f32 %v5156, %v5860
        %v6376 = vsub.f32 %v5158, %v5860
        %v6377 = vsub.f32 %v5269, %v5860
        %v6378 = vsub.f32 %v5271, %v5860
        %v6379 = vsub.f32 %v5382, %v5860
        %v6380 = vsub.f32 %v5384, %v5860
        %v6381 = vsub.f32 %v5495, %v5860
        %v6382 = vsub.f32 %v5497, %v5860
        %v6383 = vsub.f32 %v5608, %v5860
        %v6384 = vsub.f32 %v5610, %v5860
        %v6385 = vsub.f32 %v5721, %v5860
        %v6386 = vsub.f32 %v5723, %v5860
        %v6387 = vsub.f32 %v4032, %v5893
        %v6388 = vsub.f32 %v4034, %v5893
        %v6389 = vsub.f32 %v4145, %v5893
        %v6390 = vsub.f32 %v4147, %v5893
        %v6391 = vsub.f32 %v4258, %v5893
        %v6392 = vsub.f32 %v4260, %v5893
        %v6393 = vsub.f32 %v4371, %v5893
        %v6394 = vsub.f32 %v4373, %v5893
        %v6395 = vsub.f32 %v4484, %v5893
        %v6396 = vsub.f32 %v4486, %v5893
        %v6397 = vsub.f32 %v4597, %v5893
        %v6398 = vsub.f32 %v4599, %v5893
        %v6399 = vsub.f32 %v4710, %v5893
        %v6400 = vsub.f32 %v4712, %v5893
        %v6401 = vsub.f32 %v4823, %v5893
        %v6402 = vsub.f32 %v4825, %v5893
        %v6403 = vsub.f32 %v4936, %v5893
        %v6404 = vsub.f32 %v4938, %v5893
        %v6405 = vsub.f32 %v5049, %v5893
        %v6406 = vsub.f32 %v5051, %v5893
        %v6407 = vsub.f32 %v5162, %v5893
        %v6408 = vsub.f32 %v5164, %v5893
        %v6409 = vsub.f32 %v5275, %v5893
        %v6410 = vsub.f32 %v5277, %v5893
        %v6411 = vsub.f32 %v5388, %v5893
        %v6412 = vsub.f32 %v5390, %v5893
        %v6413 = vsub.f32 %v5501, %v5893
        %v6414 = vsub.f32 %v5503, %v5893
        %v6415 = vsub.f32 %v5614, %v5893
        %v6416 = vsub.f32 %v5616, %v5893
        %v6417 = vsub.f32 %v5727, %v5893
        %v6418 = vsub.f32 %v5729, %v5893
        %v6419 = vsub.f32 %v4036, %v5926
        %v6420 = vsub.f32 %v4038, %v5926
        %v6421 = vsub.f32 %v4149, %v5926
        %v6422 = vsub.f32 %v4151, %v5926
        %v6423 = vsub.f32 %v4262, %v5926
        %v6424 = vsub.f32 %v4264, %v5926
        %v6425 = vsub.f32 %v4375, %v5926
        %v6426 = vsub.f32 %v4377, %v5926
        %v6427 = vsub.f32 %v4488, %v5926
        %v6428 = vsub.f32 %v4490, %v5926
        %v6429 = vsub.f32 %v4601, %v5926
        %v6430 = vsub.f32 %v4603, %v5926
        %v6431 = vsub.f32 %v4714, %v5926
        %v6432 = vsub.f32 %v4716, %v5926
        %v6433 = vsub.f32 %v4827, %v5926
        %v6434 = vsub.f32 %v4829, %v5926
        %v6435 = vsub.f32 %v4940, %v5926
        %v6436 = vsub.f32 %v4942, %v5926
        %v6437 = vsub.f32 %v5053, %v5926
        %v6438 = vsub.f32 %v5055, %v5926
        %v6439 = vsub.f32 %v5166, %v5926
        %v6440 = vsub.f32 %v5168, %v5926
        %v6441 = vsub.f32 %v5279, %v5926
        %v6442 = vsub.f32 %v5281, %v5926
        %v6443 = vsub.f32 %v5392, %v5926
        %v6444 = vsub.f32 %v5394, %v5926
        %v6445 = vsub.f32 %v5505, %v5926
        %v6446 = vsub.f32 %v5507, %v5926
        %v6447 = vsub.f32 %v5618, %v5926
        %v6448 = vsub.f32 %v5620, %v5926
        %v6449 = vsub.f32 %v5731, %v5926
        %v6450 = vsub.f32 %v5733, %v5926
        %v6451 = vsub.f32 %v4042, %v5959
        %v6452 = vsub.f32 %v4044, %v5959
        %v6453 = vsub.f32 %v4155, %v5959
        %v6454 = vsub.f32 %v4157, %v5959
        %v6455 = vsub.f32 %v4268, %v5959
        %v6456 = vsub.f32 %v4270, %v5959
        %v6457 = vsub.f32 %v4381, %v5959
        %v6458 = vsub.f32 %v4383, %v5959
        %v6459 = vsub.f32 %v4494, %v5959
        %v6460 = vsub.f32 %v4496, %v5959
        %v6461 = vsub.f32 %v4607, %v5959
        %v6462 = vsub.f32 %v4609, %v5959
        %v6463 = vsub.f32 %v4720, %v5959
        %v6464 = vsub.f32 %v4722, %v5959
        %v6465 = vsub.f32 %v4833, %v5959
        %v6466 = vsub.f32 %v4835, %v5959
        %v6467 = vsub.f32 %v4946, %v5959
        %v6468 = vsub.f32 %v4948, %v5959
        %v6469 = vsub.f32 %v5059, %v5959
        %v6470 = vsub.f32 %v5061, %v5959
        %v6471 = vsub.f32 %v5172, %v5959
        %v6472 = vsub.f32 %v5174, %v5959
        %v6473 = vsub.f32 %v5285, %v5959
        %v6474 = vsub.f32 %v5287, %v5959
        %v6475 = vsub.f32 %v5398, %v5959
        %v6476 = vsub.f32 %v5400, %v5959
        %v6477 = vsub.f32 %v5511, %v5959
        %v6478 = vsub.f32 %v5513, %v5959
        %v6479 = vsub.f32 %v5624, %v5959
        %v6480 = vsub.f32 %v5626, %v5959
        %v6481 = vsub.f32 %v5737, %v5959
        %v6482 = vsub.f32 %v5739, %v5959
        %v6483 = vsub.f32 %v4046, %v5992
        %v6484 = vsub.f32 %v4048, %v5992
        %v6485 = vsub.f32 %v4159, %v5992
        %v6486 = vsub.f32 %v4161, %v5992
        %v6487 = vsub.f32 %v4272, %v5992
        %v6488 = vsub.f32 %v4274, %v5992
        %v6489 = vsub.f32 %v4385, %v5992
        %v6490 = vsub.f32 %v4387, %v5992
        %v6491 = vsub.f32 %v4498, %v5992
        %v6492 = vsub.f32 %v4500, %v5992
        %v6493 = vsub.f32 %v4611, %v5992
        %v6494 = vsub.f32 %v4613, %v5992
        %v6495 = vsub.f32 %v4724, %v5992
        %v6496 = vsub.f32 %v4726, %v5992
        %v6497 = vsub.f32 %v4837, %v5992
        %v6498 = vsub.f32 %v4839, %v5992
        %v6499 = vsub.f32 %v4950, %v5992
        %v6500 = vsub.f32 %v4952, %v5992
        %v6501 = vsub.f32 %v5063, %v5992
        %v6502 = vsub.f32 %v5065, %v5992
        %v6503 = vsub.f32 %v5176, %v5992
        %v6504 = vsub.f32 %v5178, %v5992
        %v6505 = vsub.f32 %v5289, %v5992
        %v6506 = vsub.f32 %v5291, %v5992
        %v6507 = vsub.f32 %v5402, %v5992
        %v6508 = vsub.f32 %v5404, %v5992
        %v6509 = vsub.f32 %v5515, %v5992
        %v6510 = vsub.f32 %v5517, %v5992
        %v6511 = vsub.f32 %v5628, %v5992
        %v6512 = vsub.f32 %v5630, %v5992
        %v6513 = vsub.f32 %v5741, %v5992
        %v6514 = vsub.f32 %v5743, %v5992
        %v6515 = vsub.f32 %v4052, %v6025
        %v6516 = vsub.f32 %v4054, %v6025
        %v6517 = vsub.f32 %v4165, %v6025
        %v6518 = vsub.f32 %v4167, %v6025
        %v6519 = vsub.f32 %v4278, %v6025
        %v6520 = vsub.f32 %v4280, %v6025
        %v6521 = vsub.f32 %v4391, %v6025
        %v6522 = vsub.f32 %v4393, %v6025
        %v6523 = vsub.f32 %v4504, %v6025
        %v6524 = vsub.f32 %v4506, %v6025
        %v6525 = vsub.f32 %v4617, %v6025
        %v6526 = vsub.f32 %v4619, %v6025
        %v6527 = vsub.f32 %v4730, %v6025
        %v6528 = vsub.f32 %v4732, %v6025
        %v6529 = vsub.f32 %v4843, %v6025
        %v6530 = vsub.f32 %v4845, %v6025
        %v6531 = vsub.f32 %v4956, %v6025
        %v6532 = vsub.f32 %v4958, %v6025
        %v6533 = vsub.f32 %v5069, %v6025
        %v6534 = vsub.f32 %v5071, %v6025
        %v6535 = vsub.f32 %v5182, %v6025
        %v6536 = vsub.f32 %v5184, %v6025
        %v6537 = vsub.f32 %v5295, %v6025
        %v6538 = vsub.f32 %v5297, %v6025
        %v6539 = vsub.f32 %v5408, %v6025
        %v6540 = vsub.f32 %v5410, %v6025
        %v6541 = vsub.f32 %v5521, %v6025
        %v6542 = vsub.f32 %v5523, %v6025
        %v6543 = vsub.f32 %v5634, %v6025
        %v6544 = vsub.f32 %v5636, %v6025
        %v6545 = vsub.f32 %v5747, %v6025
        %v6546 = vsub.f32 %v5749, %v6025
        %v6547 = vsub.f32 %v4056, %v6058
        %v6548 = vsub.f32 %v4058, %v6058
        %v6549 = vsub.f32 %v4169, %v6058
        %v6550 = vsub.f32 %v4171, %v6058
        %v6551 = vsub.f32 %v4282, %v6058
        %v6552 = vsub.f32 %v4284, %v6058
        %v6553 = vsub.f32 %v4395, %v6058
        %v6554 = vsub.f32 %v4397, %v6058
        %v6555 = vsub.f32 %v4508, %v6058
        %v6556 = vsub.f32 %v4510, %v6058
        %v6557 = vsub.f32 %v4621, %v6058
        %v6558 = vsub.f32 %v4623, %v6058
        %v6559 = vsub.f32 %v4734, %v6058
        %v6560 = vsub.f32 %v4736, %v6058
        %v6561 = vsub.f32 %v4847, %v6058
        %v6562 = vsub.f32 %v4849, %v6058
        %v6563 = vsub.f32 %v4960, %v6058
        %v6564 = vsub.f32 %v4962, %v6058
        %v6565 = vsub.f32 %v5073, %v6058
        %v6566 = vsub.f32 %v5075, %v6058
        %v6567 = vsub.f32 %v5186, %v6058
        %v6568 = vsub.f32 %v5188, %v6058
        %v6569 = vsub.f32 %v5299, %v6058
        %v6570 = vsub.f32 %v5301, %v6058
        %v6571 = vsub.f32 %v5412, %v6058
        %v6572 = vsub.f32 %v5414, %v6058
        %v6573 = vsub.f32 %v5525, %v6058
        %v6574 = vsub.f32 %v5527, %v6058
        %v6575 = vsub.f32 %v5638, %v6058
        %v6576 = vsub.f32 %v5640, %v6058
        %v6577 = vsub.f32 %v5751, %v6058
        %v6578 = vsub.f32 %v5753, %v6058
        %v6579 = vsub.f32 %v4062, %v6091
        %v6580 = vsub.f32 %v4064, %v6091
        %v6581 = vsub.f32 %v4175, %v6091
        %v6582 = vsub.f32 %v4177, %v6091
        %v6583 = vsub.f32 %v4288, %v6091
        %v6584 = vsub.f32 %v4290, %v6091
        %v6585 = vsub.f32 %v4401, %v6091
        %v6586 = vsub.f32 %v4403, %v6091
        %v6587 = vsub.f32 %v4514, %v6091
        %v6588 = vsub.f32 %v4516, %v6091
        %v6589 = vsub.f32 %v4627, %v6091
        %v6590 = vsub.f32 %v4629, %v6091
        %v6591 = vsub.f32 %v4740, %v6091
        %v6592 = vsub.f32 %v4742, %v6091
        %v6593 = vsub.f32 %v4853, %v6091
        %v6594 = vsub.f32 %v4855, %v6091
        %v6595 = vsub.f32 %v4966, %v6091
        %v6596 = vsub.f32 %v4968, %v6091
        %v6597 = vsub.f32 %v5079, %v6091
        %v6598 = vsub.f32 %v5081, %v6091
        %v6599 = vsub.f32 %v5192, %v6091
        %v6600 = vsub.f32 %v5194, %v6091
        %v6601 = vsub.f32 %v5305, %v6091
        %v6602 = vsub.f32 %v5307, %v6091
        %v6603 = vsub.f32 %v5418, %v6091
        %v6604 = vsub.f32 %v5420, %v6091
        %v6605 = vsub.f32 %v5531, %v6091
        %v6606 = vsub.f32 %v5533, %v6091
        %v6607 = vsub.f32 %v5644, %v6091
        %v6608 = vsub.f32 %v5646, %v6091
        %v6609 = vsub.f32 %v5757, %v6091
        %v6610 = vsub.f32 %v5759, %v6091
        %v6611 = vsub.f32 %v4066, %v6124
        %v6612 = vsub.f32 %v4068, %v6124
        %v6613 = vsub.f32 %v4179, %v6124
        %v6614 = vsub.f32 %v4181, %v6124
        %v6615 = vsub.f32 %v4292, %v6124
        %v6616 = vsub.f32 %v4294, %v6124
        %v6617 = vsub.f32 %v4405, %v6124
        %v6618 = vsub.f32 %v4407, %v6124
        %v6619 = vsub.f32 %v4518, %v6124
        %v6620 = vsub.f32 %v4520, %v6124
        %v6621 = vsub.f32 %v4631, %v6124
        %v6622 = vsub.f32 %v4633, %v6124
        %v6623 = vsub.f32 %v4744, %v6124
        %v6624 = vsub.f32 %v4746, %v6124
        %v6625 = vsub.f32 %v4857, %v6124
        %v6626 = vsub.f32 %v4859, %v6124
        %v6627 = vsub.f32 %v4970, %v6124
        %v6628 = vsub.f32 %v4972, %v6124
        %v6629 = vsub.f32 %v5083, %v6124
        %v6630 = vsub.f32 %v5085, %v6124
        %v6631 = vsub.f32 %v5196, %v6124
        %v6632 = vsub.f32 %v5198, %v6124
        %v6633 = vsub.f32 %v5309, %v6124
        %v6634 = vsub.f32 %v5311, %v6124
        %v6635 = vsub.f32 %v5422, %v6124
        %v6636 = vsub.f32 %v5424, %v6124
        %v6637 = vsub.f32 %v5535, %v6124
        %v6638 = vsub.f32 %v5537, %v6124
        %v6639 = vsub.f32 %v5648, %v6124
        %v6640 = vsub.f32 %v5650, %v6124
        %v6641 = vsub.f32 %v5761, %v6124
        %v6642 = vsub.f32 %v5763, %v6124
        %v6643 = vsub.f32 %v4072, %v6157
        %v6644 = vsub.f32 %v4074, %v6157
        %v6645 = vsub.f32 %v4185, %v6157
        %v6646 = vsub.f32 %v4187, %v6157
        %v6647 = vsub.f32 %v4298, %v6157
        %v6648 = vsub.f32 %v4300, %v6157
        %v6649 = vsub.f32 %v4411, %v6157
        %v6650 = vsub.f32 %v4413, %v6157
        %v6651 = vsub.f32 %v4524, %v6157
        %v6652 = vsub.f32 %v4526, %v6157
        %v6653 = vsub.f32 %v4637, %v6157
        %v6654 = vsub.f32 %v4639, %v6157
        %v6655 = vsub.f32 %v4750, %v6157
        %v6656 = vsub.f32 %v4752, %v6157
        %v6657 = vsub.f32 %v4863, %v6157
        %v6658 = vsub.f32 %v4865, %v6157
        %v6659 = vsub.f32 %v4976, %v6157
        %v6660 = vsub.f32 %v4978, %v6157
        %v6661 = vsub.f32 %v5089, %v6157
        %v6662 = vsub.f32 %v5091, %v6157
        %v6663 = vsub.f32 %v5202, %v6157
        %v6664 = vsub.f32 %v5204, %v6157
        %v6665 = vsub.f32 %v5315, %v6157
        %v6666 = vsub.f32 %v5317, %v6157
        %v6667 = vsub.f32 %v5428, %v6157
        %v6668 = vsub.f32 %v5430, %v6157
        %v6669 = vsub.f32 %v5541, %v6157
        %v6670 = vsub.f32 %v5543, %v6157
        %v6671 = vsub.f32 %v5654, %v6157
        %v6672 = vsub.f32 %v5656, %v6157
        %v6673 = vsub.f32 %v5767, %v6157
        %v6674 = vsub.f32 %v5769, %v6157
        %v6675 = vsub.f32 %v4076, %v6190
        %v6676 = vsub.f32 %v4078, %v6190
        %v6677 = vsub.f32 %v4189, %v6190
        %v6678 = vsub.f32 %v4191, %v6190
        %v6679 = vsub.f32 %v4302, %v6190
        %v6680 = vsub.f32 %v4304, %v6190
        %v6681 = vsub.f32 %v4415, %v6190
        %v6682 = vsub.f32 %v4417, %v6190
        %v6683 = vsub.f32 %v4528, %v6190
        %v6684 = vsub.f32 %v4530, %v6190
        %v6685 = vsub.f32 %v4641, %v6190
        %v6686 = vsub.f32 %v4643, %v6190
        %v6687 = vsub.f32 %v4754, %v6190
        %v6688 = vsub.f32 %v4756, %v6190
        %v6689 = vsub.f32 %v4867, %v6190
        %v6690 = vsub.f32 %v4869, %v6190
        %v6691 = vsub.f32 %v4980, %v6190
        %v6692 = vsub.f32 %v4982, %v6190
        %v6693 = vsub.f32 %v5093, %v6190
        %v6694 = vsub.f32 %v5095, %v6190
        %v6695 = vsub.f32 %v5206, %v6190
        %v6696 = vsub.f32 %v5208, %v6190
        %v6697 = vsub.f32 %v5319, %v6190
        %v6698 = vsub.f32 %v5321, %v6190
        %v6699 = vsub.f32 %v5432, %v6190
        %v6700 = vsub.f32 %v5434, %v6190
        %v6701 = vsub.f32 %v5545, %v6190
        %v6702 = vsub.f32 %v5547, %v6190
        %v6703 = vsub.f32 %v5658, %v6190
        %v6704 = vsub.f32 %v5660, %v6190
        %v6705 = vsub.f32 %v5771, %v6190
        %v6706 = vsub.f32 %v5773, %v6190
        %v6707 = vsub.f32 %v4082, %v6223
        %v6708 = vsub.f32 %v4084, %v6223
        %v6709 = vsub.f32 %v4195, %v6223
        %v6710 = vsub.f32 %v4197, %v6223
        %v6711 = vsub.f32 %v4308, %v6223
        %v6712 = vsub.f32 %v4310, %v6223
        %v6713 = vsub.f32 %v4421, %v6223
        %v6714 = vsub.f32 %v4423, %v6223
        %v6715 = vsub.f32 %v4534, %v6223
        %v6716 = vsub.f32 %v4536, %v6223
        %v6717 = vsub.f32 %v4647, %v6223
        %v6718 = vsub.f32 %v4649, %v6223
        %v6719 = vsub.f32 %v4760, %v6223
        %v6720 = vsub.f32 %v4762, %v6223
        %v6721 = vsub.f32 %v4873, %v6223
        %v6722 = vsub.f32 %v4875, %v6223
        %v6723 = vsub.f32 %v4986, %v6223
        %v6724 = vsub.f32 %v4988, %v6223
        %v6725 = vsub.f32 %v5099, %v6223
        %v6726 = vsub.f32 %v5101, %v6223
        %v6727 = vsub.f32 %v5212, %v6223
        %v6728 = vsub.f32 %v5214, %v6223
        %v6729 = vsub.f32 %v5325, %v6223
        %v6730 = vsub.f32 %v5327, %v6223
        %v6731 = vsub.f32 %v5438, %v6223
        %v6732 = vsub.f32 %v5440, %v6223
        %v6733 = vsub.f32 %v5551, %v6223
        %v6734 = vsub.f32 %v5553, %v6223
        %v6735 = vsub.f32 %v5664, %v6223
        %v6736 = vsub.f32 %v5666, %v6223
        %v6737 = vsub.f32 %v5777, %v6223
        %v6738 = vsub.f32 %v5779, %v6223
        %v6739 = vsub.f32 %v4086, %v6256
        %v6740 = vsub.f32 %v4088, %v6256
        %v6741 = vsub.f32 %v4199, %v6256
        %v6742 = vsub.f32 %v4201, %v6256
        %v6743 = vsub.f32 %v4312, %v6256
        %v6744 = vsub.f32 %v4314, %v6256
        %v6745 = vsub.f32 %v4425, %v6256
        %v6746 = vsub.f32 %v4427, %v6256
        %v6747 = vsub.f32 %v4538, %v6256
        %v6748 = vsub.f32 %v4540, %v6256
        %v6749 = vsub.f32 %v4651, %v6256
        %v6750 = vsub.f32 %v4653, %v6256
        %v6751 = vsub.f32 %v4764, %v6256
        %v6752 = vsub.f32 %v4766, %v6256
        %v6753 = vsub.f32 %v4877, %v6256
        %v6754 = vsub.f32 %v4879, %v6256
        %v6755 = vsub.f32 %v4990, %v6256
        %v6756 = vsub.f32 %v4992, %v6256
        %v6757 = vsub.f32 %v5103, %v6256
        %v6758 = vsub.f32 %v5105, %v6256
        %v6759 = vsub.f32 %v5216, %v6256
        %v6760 = vsub.f32 %v5218, %v6256
        %v6761 = vsub.f32 %v5329, %v6256
        %v6762 = vsub.f32 %v5331, %v6256
        %v6763 = vsub.f32 %v5442, %v6256
        %v6764 = vsub.f32 %v5444, %v6256
        %v6765 = vsub.f32 %v5555, %v6256
        %v6766 = vsub.f32 %v5557, %v6256
        %v6767 = vsub.f32 %v5668, %v6256
        %v6768 = vsub.f32 %v5670, %v6256
        %v6769 = vsub.f32 %v5781, %v6256
        %v6770 = vsub.f32 %v5783, %v6256
        %v6771 = vsub.f32 %v4092, %v6289
        %v6772 = vsub.f32 %v4094, %v6289
        %v6773 = vsub.f32 %v4205, %v6289
        %v6774 = vsub.f32 %v4207, %v6289
        %v6775 = vsub.f32 %v4318, %v6289
        %v6776 = vsub.f32 %v4320, %v6289
        %v6777 = vsub.f32 %v4431, %v6289
        %v6778 = vsub.f32 %v4433, %v6289
        %v6779 = vsub.f32 %v4544, %v6289
        %v6780 = vsub.f32 %v4546, %v6289
        %v6781 = vsub.f32 %v4657, %v6289
        %v6782 = vsub.f32 %v4659, %v6289
        %v6783 = vsub.f32 %v4770, %v6289
        %v6784 = vsub.f32 %v4772, %v6289
        %v6785 = vsub.f32 %v4883, %v6289
        %v6786 = vsub.f32 %v4885, %v6289
        %v6787 = vsub.f32 %v4996, %v6289
        %v6788 = vsub.f32 %v4998, %v6289
        %v6789 = vsub.f32 %v5109, %v6289
        %v6790 = vsub.f32 %v5111, %v6289
        %v6791 = vsub.f32 %v5222, %v6289
        %v6792 = vsub.f32 %v5224, %v6289
        %v6793 = vsub.f32 %v5335, %v6289
        %v6794 = vsub.f32 %v5337, %v6289
        %v6795 = vsub.f32 %v5448, %v6289
        %v6796 = vsub.f32 %v5450, %v6289
        %v6797 = vsub.f32 %v5561, %v6289
        %v6798 = vsub.f32 %v5563, %v6289
        %v6799 = vsub.f32 %v5674, %v6289
        %v6800 = vsub.f32 %v5676, %v6289
        %v6801 = vsub.f32 %v5787, %v6289
        %v6802 = vsub.f32 %v5789, %v6289
        %v6803 = vsub.f32 %v4096, %v6322
        %v6804 = vsub.f32 %v4098, %v6322
        %v6805 = vsub.f32 %v4209, %v6322
        %v6806 = vsub.f32 %v4211, %v6322
        %v6807 = vsub.f32 %v4322, %v6322
        %v6808 = vsub.f32 %v4324, %v6322
        %v6809 = vsub.f32 %v4435, %v6322
        %v6810 = vsub.f32 %v4437, %v6322
        %v6811 = vsub.f32 %v4548, %v6322
        %v6812 = vsub.f32 %v4550, %v6322
        %v6813 = vsub.f32 %v4661, %v6322
        %v6814 = vsub.f32 %v4663, %v6322
        %v6815 = vsub.f32 %v4774, %v6322
        %v6816 = vsub.f32 %v4776, %v6322
        %v6817 = vsub.f32 %v4887, %v6322
        %v6818 = vsub.f32 %v4889, %v6322
        %v6819 = vsub.f32 %v5000, %v6322
        %v6820 = vsub.f32 %v5002, %v6322
        %v6821 = vsub.f32 %v5113, %v6322
        %v6822 = vsub.f32 %v5115, %v6322
        %v6823 = vsub.f32 %v5226, %v6322
        %v6824 = vsub.f32 %v5228, %v6322
        %v6825 = vsub.f32 %v5339, %v6322
        %v6826 = vsub.f32 %v5341, %v6322
        %v6827 = vsub.f32 %v5452, %v6322
        %v6828 = vsub.f32 %v5454, %v6322
        %v6829 = vsub.f32 %v5565, %v6322
        %v6830 = vsub.f32 %v5567, %v6322
        %v6831 = vsub.f32 %v5678, %v6322
        %v6832 = vsub.f32 %v5680, %v6322
        %v6833 = vsub.f32 %v5791, %v6322
        %v6834 = vsub.f32 %v5793, %v6322
        %v6835 = vmul.f32 %v6323, 1.442695
        %v6836 = vpow.pop %v6835
        %v6837 = vmul.f32 %v6324, 1.442695
        %v6838 = vpow.pop %v6837
        %v6839 = vmul.f32 %v6325, 1.442695
        %v6840 = vpow.pop %v6839
        %v6841 = vmul.f32 %v6326, 1.442695
        %v6842 = vpow.pop %v6841
        %v6843 = vmul.f32 %v6327, 1.442695
        %v6844 = vpow.pop %v6843
        %v6845 = vmul.f32 %v6328, 1.442695
        %v6846 = vpow.pop %v6845
        %v6847 = vmul.f32 %v6329, 1.442695
        %v6848 = vpow.pop %v6847
        %v6849 = vmul.f32 %v6330, 1.442695
        %v6850 = vpow.pop %v6849
        %v6851 = vmul.f32 %v6331, 1.442695
        %v6852 = vpow.pop %v6851
        %v6853 = vmul.f32 %v6332, 1.442695
        %v6854 = vpow.pop %v6853
        %v6855 = vmul.f32 %v6333, 1.442695
        %v6856 = vpow.pop %v6855
        %v6857 = vmul.f32 %v6334, 1.442695
        %v6858 = vpow.pop %v6857
        %v6859 = vmul.f32 %v6335, 1.442695
        %v6860 = vpow.pop %v6859
        %v6861 = vmul.f32 %v6336, 1.442695
        %v6862 = vpow.pop %v6861
        %v6863 = vmul.f32 %v6337, 1.442695
        %v6864 = vpow.pop %v6863
        %v6865 = vmul.f32 %v6338, 1.442695
        %v6866 = vpow.pop %v6865
        %v6867 = vmul.f32 %v6339, 1.442695
        %v6868 = vpow.pop %v6867
        %v6869 = vmul.f32 %v6340, 1.442695
        %v6870 = vpow.pop %v6869
        %v6871 = vmul.f32 %v6341, 1.442695
        %v6872 = vpow.pop %v6871
        %v6873 = vmul.f32 %v6342, 1.442695
        %v6874 = vpow.pop %v6873
        %v6875 = vmul.f32 %v6343, 1.442695
        %v6876 = vpow.pop %v6875
        %v6877 = vmul.f32 %v6344, 1.442695
        %v6878 = vpow.pop %v6877
        %v6879 = vmul.f32 %v6345, 1.442695
        %v6880 = vpow.pop %v6879
        %v6881 = vmul.f32 %v6346, 1.442695
        %v6882 = vpow.pop %v6881
        %v6883 = vmul.f32 %v6347, 1.442695
        %v6884 = vpow.pop %v6883
        %v6885 = vmul.f32 %v6348, 1.442695
        %v6886 = vpow.pop %v6885
        %v6887 = vmul.f32 %v6349, 1.442695
        %v6888 = vpow.pop %v6887
        %v6889 = vmul.f32 %v6350, 1.442695
        %v6890 = vpow.pop %v6889
        %v6891 = vmul.f32 %v6351, 1.442695
        %v6892 = vpow.pop %v6891
        %v6893 = vmul.f32 %v6352, 1.442695
        %v6894 = vpow.pop %v6893
        %v6895 = vmul.f32 %v6353, 1.442695
        %v6896 = vpow.pop %v6895
        %v6897 = vmul.f32 %v6354, 1.442695
        %v6898 = vpow.pop %v6897
        %v6899 = vmul.f32 %v6355, 1.442695
        %v6900 = vpow.pop %v6899
        %v6901 = vmul.f32 %v6356, 1.442695
        %v6902 = vpow.pop %v6901
        %v6903 = vmul.f32 %v6357, 1.442695
        %v6904 = vpow.pop %v6903
        %v6905 = vmul.f32 %v6358, 1.442695
        %v6906 = vpow.pop %v6905
        %v6907 = vmul.f32 %v6359, 1.442695
        %v6908 = vpow.pop %v6907
        %v6909 = vmul.f32 %v6360, 1.442695
        %v6910 = vpow.pop %v6909
        %v6911 = vmul.f32 %v6361, 1.442695
        %v6912 = vpow.pop %v6911
        %v6913 = vmul.f32 %v6362, 1.442695
        %v6914 = vpow.pop %v6913
        %v6915 = vmul.f32 %v6363, 1.442695
        %v6916 = vpow.pop %v6915
        %v6917 = vmul.f32 %v6364, 1.442695
        %v6918 = vpow.pop %v6917
        %v6919 = vmul.f32 %v6365, 1.442695
        %v6920 = vpow.pop %v6919
        %v6921 = vmul.f32 %v6366, 1.442695
        %v6922 = vpow.pop %v6921
        %v6923 = vmul.f32 %v6367, 1.442695
        %v6924 = vpow.pop %v6923
        %v6925 = vmul.f32 %v6368, 1.442695
        %v6926 = vpow.pop %v6925
        %v6927 = vmul.f32 %v6369, 1.442695
        %v6928 = vpow.pop %v6927
        %v6929 = vmul.f32 %v6370, 1.442695
        %v6930 = vpow.pop %v6929
        %v6931 = vmul.f32 %v6371, 1.442695
        %v6932 = vpow.pop %v6931
        %v6933 = vmul.f32 %v6372, 1.442695
        %v6934 = vpow.pop %v6933
        %v6935 = vmul.f32 %v6373, 1.442695
        %v6936 = vpow.pop %v6935
        %v6937 = vmul.f32 %v6374, 1.442695
        %v6938 = vpow.pop %v6937
        %v6939 = vmul.f32 %v6375, 1.442695
        %v6940 = vpow.pop %v6939
        %v6941 = vmul.f32 %v6376, 1.442695
        %v6942 = vpow.pop %v6941
        %v6943 = vmul.f32 %v6377, 1.442695
        %v6944 = vpow.pop %v6943
        %v6945 = vmul.f32 %v6378, 1.442695
        %v6946 = vpow.pop %v6945
        %v6947 = vmul.f32 %v6379, 1.442695
        %v6948 = vpow.pop %v6947
        %v6949 = vmul.f32 %v6380, 1.442695
        %v6950 = vpow.pop %v6949
        %v6951 = vmul.f32 %v6381, 1.442695
        %v6952 = vpow.pop %v6951
        %v6953 = vmul.f32 %v6382, 1.442695
        %v6954 = vpow.pop %v6953
        %v6955 = vmul.f32 %v6383, 1.442695
        %v6956 = vpow.pop %v6955
        %v6957 = vmul.f32 %v6384, 1.442695
        %v6958 = vpow.pop %v6957
        %v6959 = vmul.f32 %v6385, 1.442695
        %v6960 = vpow.pop %v6959
        %v6961 = vmul.f32 %v6386, 1.442695
        %v6962 = vpow.pop %v6961
        %v6963 = vmul.f32 %v6387, 1.442695
        %v6964 = vpow.pop %v6963
        %v6965 = vmul.f32 %v6388, 1.442695
        %v6966 = vpow.pop %v6965
        %v6967 = vmul.f32 %v6389, 1.442695
        %v6968 = vpow.pop %v6967
        %v6969 = vmul.f32 %v6390, 1.442695
        %v6970 = vpow.pop %v6969
        %v6971 = vmul.f32 %v6391, 1.442695
        %v6972 = vpow.pop %v6971
        %v6973 = vmul.f32 %v6392, 1.442695
        %v6974 = vpow.pop %v6973
        %v6975 = vmul.f32 %v6393, 1.442695
        %v6976 = vpow.pop %v6975
        %v6977 = vmul.f32 %v6394, 1.442695
        %v6978 = vpow.pop %v6977
        %v6979 = vmul.f32 %v6395, 1.442695
        %v6980 = vpow.pop %v6979
        %v6981 = vmul.f32 %v6396, 1.442695
        %v6982 = vpow.pop %v6981
        %v6983 = vmul.f32 %v6397, 1.442695
        %v6984 = vpow.pop %v6983
        %v6985 = vmul.f32 %v6398, 1.442695
        %v6986 = vpow.pop %v6985
        %v6987 = vmul.f32 %v6399, 1.442695
        %v6988 = vpow.pop %v6987
        %v6989 = vmul.f32 %v6400, 1.442695
        %v6990 = vpow.pop %v6989
        %v6991 = vmul.f32 %v6401, 1.442695
        %v6992 = vpow.pop %v6991
        %v6993 = vmul.f32 %v6402, 1.442695
        %v6994 = vpow.pop %v6993
        %v6995 = vmul.f32 %v6403, 1.442695
        %v6996 = vpow.pop %v6995
        %v6997 = vmul.f32 %v6404, 1.442695
        %v6998 = vpow.pop %v6997
        %v6999 = vmul.f32 %v6405, 1.442695
        %v7000 = vpow.pop %v6999
        %v7001 = vmul.f32 %v6406, 1.442695
        %v7002 = vpow.pop %v7001
        %v7003 = vmul.f32 %v6407, 1.442695
        %v7004 = vpow.pop %v7003
        %v7005 = vmul.f32 %v6408, 1.442695
        %v7006 = vpow.pop %v7005
        %v7007 = vmul.f32 %v6409, 1.442695
        %v7008 = vpow.pop %v7007
        %v7009 = vmul.f32 %v6410, 1.442695
        %v7010 = vpow.pop %v7009
        %v7011 = vmul.f32 %v6411, 1.442695
        %v7012 = vpow.pop %v7011
        %v7013 = vmul.f32 %v6412, 1.442695
        %v7014 = vpow.pop %v7013
        %v7015 = vmul.f32 %v6413, 1.442695
        %v7016 = vpow.pop %v7015
        %v7017 = vmul.f32 %v6414, 1.442695
        %v7018 = vpow.pop %v7017
        %v7019 = vmul.f32 %v6415, 1.442695
        %v7020 = vpow.pop %v7019
        %v7021 = vmul.f32 %v6416, 1.442695
        %v7022 = vpow.pop %v7021
        %v7023 = vmul.f32 %v6417, 1.442695
        %v7024 = vpow.pop %v7023
        %v7025 = vmul.f32 %v6418, 1.442695
        %v7026 = vpow.pop %v7025
        %v7027 = vmul.f32 %v6419, 1.442695
        %v7028 = vpow.pop %v7027
        %v7029 = vmul.f32 %v6420, 1.442695
        %v7030 = vpow.pop %v7029
        %v7031 = vmul.f32 %v6421, 1.442695
        %v7032 = vpow.pop %v7031
        %v7033 = vmul.f32 %v6422, 1.442695
        %v7034 = vpow.pop %v7033
        %v7035 = vmul.f32 %v6423, 1.442695
        %v7036 = vpow.pop %v7035
        %v7037 = vmul.f32 %v6424, 1.442695
        %v7038 = vpow.pop %v7037
        %v7039 = vmul.f32 %v6425, 1.442695
        %v7040 = vpow.pop %v7039
        %v7041 = vmul.f32 %v6426, 1.442695
        %v7042 = vpow.pop %v7041
        %v7043 = vmul.f32 %v6427, 1.442695
        %v7044 = vpow.pop %v7043
        %v7045 = vmul.f32 %v6428, 1.442695
        %v7046 = vpow.pop %v7045
        %v7047 = vmul.f32 %v6429, 1.442695
        %v7048 = vpow.pop %v7047
        %v7049 = vmul.f32 %v6430, 1.442695
        %v7050 = vpow.pop %v7049
        %v7051 = vmul.f32 %v6431, 1.442695
        %v7052 = vpow.pop %v7051
        %v7053 = vmul.f32 %v6432, 1.442695
        %v7054 = vpow.pop %v7053
        %v7055 = vmul.f32 %v6433, 1.442695
        %v7056 = vpow.pop %v7055
        %v7057 = vmul.f32 %v6434, 1.442695
        %v7058 = vpow.pop %v7057
        %v7059 = vmul.f32 %v6435, 1.442695
        %v7060 = vpow.pop %v7059
        %v7061 = vmul.f32 %v6436, 1.442695
        %v7062 = vpow.pop %v7061
        %v7063 = vmul.f32 %v6437, 1.442695
        %v7064 = vpow.pop %v7063
        %v7065 = vmul.f32 %v6438, 1.442695
        %v7066 = vpow.pop %v7065
        %v7067 = vmul.f32 %v6439, 1.442695
        %v7068 = vpow.pop %v7067
        %v7069 = vmul.f32 %v6440, 1.442695
        %v7070 = vpow.pop %v7069
        %v7071 = vmul.f32 %v6441, 1.442695
        %v7072 = vpow.pop %v7071
        %v7073 = vmul.f32 %v6442, 1.442695
        %v7074 = vpow.pop %v7073
        %v7075 = vmul.f32 %v6443, 1.442695
        %v7076 = vpow.pop %v7075
        %v7077 = vmul.f32 %v6444, 1.442695
        %v7078 = vpow.pop %v7077
        %v7079 = vmul.f32 %v6445, 1.442695
        %v7080 = vpow.pop %v7079
        %v7081 = vmul.f32 %v6446, 1.442695
        %v7082 = vpow.pop %v7081
        %v7083 = vmul.f32 %v6447, 1.442695
        %v7084 = vpow.pop %v7083
        %v7085 = vmul.f32 %v6448, 1.442695
        %v7086 = vpow.pop %v7085
        %v7087 = vmul.f32 %v6449, 1.442695
        %v7088 = vpow.pop %v7087
        %v7089 = vmul.f32 %v6450, 1.442695
        %v7090 = vpow.pop %v7089
        %v7091 = vmul.f32 %v6451, 1.442695
        %v7092 = vpow.pop %v7091
        %v7093 = vmul.f32 %v6452, 1.442695
        %v7094 = vpow.pop %v7093
        %v7095 = vmul.f32 %v6453, 1.442695
        %v7096 = vpow.pop %v7095
        %v7097 = vmul.f32 %v6454, 1.442695
        %v7098 = vpow.pop %v7097
        %v7099 = vmul.f32 %v6455, 1.442695
        %v7100 = vpow.pop %v7099
        %v7101 = vmul.f32 %v6456, 1.442695
        %v7102 = vpow.pop %v7101
        %v7103 = vmul.f32 %v6457, 1.442695
        %v7104 = vpow.pop %v7103
        %v7105 = vmul.f32 %v6458, 1.442695
        %v7106 = vpow.pop %v7105
        %v7107 = vmul.f32 %v6459, 1.442695
        %v7108 = vpow.pop %v7107
        %v7109 = vmul.f32 %v6460, 1.442695
        %v7110 = vpow.pop %v7109
        %v7111 = vmul.f32 %v6461, 1.442695
        %v7112 = vpow.pop %v7111
        %v7113 = vmul.f32 %v6462, 1.442695
        %v7114 = vpow.pop %v7113
        %v7115 = vmul.f32 %v6463, 1.442695
        %v7116 = vpow.pop %v7115
        %v7117 = vmul.f32 %v6464, 1.442695
        %v7118 = vpow.pop %v7117
        %v7119 = vmul.f32 %v6465, 1.442695
        %v7120 = vpow.pop %v7119
        %v7121 = vmul.f32 %v6466, 1.442695
        %v7122 = vpow.pop %v7121
        %v7123 = vmul.f32 %v6467, 1.442695
        %v7124 = vpow.pop %v7123
        %v7125 = vmul.f32 %v6468, 1.442695
        %v7126 = vpow.pop %v7125
        %v7127 = vmul.f32 %v6469, 1.442695
        %v7128 = vpow.pop %v7127
        %v7129 = vmul.f32 %v6470, 1.442695
        %v7130 = vpow.pop %v7129
        %v7131 = vmul.f32 %v6471, 1.442695
        %v7132 = vpow.pop %v7131
        %v7133 = vmul.f32 %v6472, 1.442695
        %v7134 = vpow.pop %v7133
        %v7135 = vmul.f32 %v6473, 1.442695
        %v7136 = vpow.pop %v7135
        %v7137 = vmul.f32 %v6474, 1.442695
        %v7138 = vpow.pop %v7137
        %v7139 = vmul.f32 %v6475, 1.442695
        %v7140 = vpow.pop %v7139
        %v7141 = vmul.f32 %v6476, 1.442695
        %v7142 = vpow.pop %v7141
        %v7143 = vmul.f32 %v6477, 1.442695
        %v7144 = vpow.pop %v7143
        %v7145 = vmul.f32 %v6478, 1.442695
        %v7146 = vpow.pop %v7145
        %v7147 = vmul.f32 %v6479, 1.442695
        %v7148 = vpow.pop %v7147
        %v7149 = vmul.f32 %v6480, 1.442695
        %v7150 = vpow.pop %v7149
        %v7151 = vmul.f32 %v6481, 1.442695
        %v7152 = vpow.pop %v7151
        %v7153 = vmul.f32 %v6482, 1.442695
        %v7154 = vpow.pop %v7153
        %v7155 = vmul.f32 %v6483, 1.442695
        %v7156 = vpow.pop %v7155
        %v7157 = vmul.f32 %v6484, 1.442695
        %v7158 = vpow.pop %v7157
        %v7159 = vmul.f32 %v6485, 1.442695
        %v7160 = vpow.pop %v7159
        %v7161 = vmul.f32 %v6486, 1.442695
        %v7162 = vpow.pop %v7161
        %v7163 = vmul.f32 %v6487, 1.442695
        %v7164 = vpow.pop %v7163
        %v7165 = vmul.f32 %v6488, 1.442695
        %v7166 = vpow.pop %v7165
        %v7167 = vmul.f32 %v6489, 1.442695
        %v7168 = vpow.pop %v7167
        %v7169 = vmul.f32 %v6490, 1.442695
        %v7170 = vpow.pop %v7169
        %v7171 = vmul.f32 %v6491, 1.442695
        %v7172 = vpow.pop %v7171
        %v7173 = vmul.f32 %v6492, 1.442695
        %v7174 = vpow.pop %v7173
        %v7175 = vmul.f32 %v6493, 1.442695
        %v7176 = vpow.pop %v7175
        %v7177 = vmul.f32 %v6494, 1.442695
        %v7178 = vpow.pop %v7177
        %v7179 = vmul.f32 %v6495, 1.442695
        %v7180 = vpow.pop %v7179
        %v7181 = vmul.f32 %v6496, 1.442695
        %v7182 = vpow.pop %v7181
        %v7183 = vmul.f32 %v6497, 1.442695
        %v7184 = vpow.pop %v7183
        %v7185 = vmul.f32 %v6498, 1.442695
        %v7186 = vpow.pop %v7185
        %v7187 = vmul.f32 %v6499, 1.442695
        %v7188 = vpow.pop %v7187
        %v7189 = vmul.f32 %v6500, 1.442695
        %v7190 = vpow.pop %v7189
        %v7191 = vmul.f32 %v6501, 1.442695
        %v7192 = vpow.pop %v7191
        %v7193 = vmul.f32 %v6502, 1.442695
        %v7194 = vpow.pop %v7193
        %v7195 = vmul.f32 %v6503, 1.442695
        %v7196 = vpow.pop %v7195
        %v7197 = vmul.f32 %v6504, 1.442695
        %v7198 = vpow.pop %v7197
        %v7199 = vmul.f32 %v6505, 1.442695
        %v7200 = vpow.pop %v7199
        %v7201 = vmul.f32 %v6506, 1.442695
        %v7202 = vpow.pop %v7201
        %v7203 = vmul.f32 %v6507, 1.442695
        %v7204 = vpow.pop %v7203
        %v7205 = vmul.f32 %v6508, 1.442695
        %v7206 = vpow.pop %v7205
        %v7207 = vmul.f32 %v6509, 1.442695
        %v7208 = vpow.pop %v7207
        %v7209 = vmul.f32 %v6510, 1.442695
        %v7210 = vpow.pop %v7209
        %v7211 = vmul.f32 %v6511, 1.442695
        %v7212 = vpow.pop %v7211
        %v7213 = vmul.f32 %v6512, 1.442695
        %v7214 = vpow.pop %v7213
        %v7215 = vmul.f32 %v6513, 1.442695
        %v7216 = vpow.pop %v7215
        %v7217 = vmul.f32 %v6514, 1.442695
        %v7218 = vpow.pop %v7217
        %v7219 = vmul.f32 %v6515, 1.442695
        %v7220 = vpow.pop %v7219
        %v7221 = vmul.f32 %v6516, 1.442695
        %v7222 = vpow.pop %v7221
        %v7223 = vmul.f32 %v6517, 1.442695
        %v7224 = vpow.pop %v7223
        %v7225 = vmul.f32 %v6518, 1.442695
        %v7226 = vpow.pop %v7225
        %v7227 = vmul.f32 %v6519, 1.442695
        %v7228 = vpow.pop %v7227
        %v7229 = vmul.f32 %v6520, 1.442695
        %v7230 = vpow.pop %v7229
        %v7231 = vmul.f32 %v6521, 1.442695
        %v7232 = vpow.pop %v7231
        %v7233 = vmul.f32 %v6522, 1.442695
        %v7234 = vpow.pop %v7233
        %v7235 = vmul.f32 %v6523, 1.442695
        %v7236 = vpow.pop %v7235
        %v7237 = vmul.f32 %v6524, 1.442695
        %v7238 = vpow.pop %v7237
        %v7239 = vmul.f32 %v6525, 1.442695
        %v7240 = vpow.pop %v7239
        %v7241 = vmul.f32 %v6526, 1.442695
        %v7242 = vpow.pop %v7241
        %v7243 = vmul.f32 %v6527, 1.442695
        %v7244 = vpow.pop %v7243
        %v7245 = vmul.f32 %v6528, 1.442695
        %v7246 = vpow.pop %v7245
        %v7247 = vmul.f32 %v6529, 1.442695
        %v7248 = vpow.pop %v7247
        %v7249 = vmul.f32 %v6530, 1.442695
        %v7250 = vpow.pop %v7249
        %v7251 = vmul.f32 %v6531, 1.442695
        %v7252 = vpow.pop %v7251
        %v7253 = vmul.f32 %v6532, 1.442695
        %v7254 = vpow.pop %v7253
        %v7255 = vmul.f32 %v6533, 1.442695
        %v7256 = vpow.pop %v7255
        %v7257 = vmul.f32 %v6534, 1.442695
        %v7258 = vpow.pop %v7257
        %v7259 = vmul.f32 %v6535, 1.442695
        %v7260 = vpow.pop %v7259
        %v7261 = vmul.f32 %v6536, 1.442695
        %v7262 = vpow.pop %v7261
        %v7263 = vmul.f32 %v6537, 1.442695
        %v7264 = vpow.pop %v7263
        %v7265 = vmul.f32 %v6538, 1.442695
        %v7266 = vpow.pop %v7265
        %v7267 = vmul.f32 %v6539, 1.442695
        %v7268 = vpow.pop %v7267
        %v7269 = vmul.f32 %v6540, 1.442695
        %v7270 = vpow.pop %v7269
        %v7271 = vmul.f32 %v6541, 1.442695
        %v7272 = vpow.pop %v7271
        %v7273 = vmul.f32 %v6542, 1.442695
        %v7274 = vpow.pop %v7273
        %v7275 = vmul.f32 %v6543, 1.442695
        %v7276 = vpow.pop %v7275
        %v7277 = vmul.f32 %v6544, 1.442695
        %v7278 = vpow.pop %v7277
        %v7279 = vmul.f32 %v6545, 1.442695
        %v7280 = vpow.pop %v7279
        %v7281 = vmul.f32 %v6546, 1.442695
        %v7282 = vpow.pop %v7281
        %v7283 = vmul.f32 %v6547, 1.442695
        %v7284 = vpow.pop %v7283
        %v7285 = vmul.f32 %v6548, 1.442695
        %v7286 = vpow.pop %v7285
        %v7287 = vmul.f32 %v6549, 1.442695
        %v7288 = vpow.pop %v7287
        %v7289 = vmul.f32 %v6550, 1.442695
        %v7290 = vpow.pop %v7289
        %v7291 = vmul.f32 %v6551, 1.442695
        %v7292 = vpow.pop %v7291
        %v7293 = vmul.f32 %v6552, 1.442695
        %v7294 = vpow.pop %v7293
        %v7295 = vmul.f32 %v6553, 1.442695
        %v7296 = vpow.pop %v7295
        %v7297 = vmul.f32 %v6554, 1.442695
        %v7298 = vpow.pop %v7297
        %v7299 = vmul.f32 %v6555, 1.442695
        %v7300 = vpow.pop %v7299
        %v7301 = vmul.f32 %v6556, 1.442695
        %v7302 = vpow.pop %v7301
        %v7303 = vmul.f32 %v6557, 1.442695
        %v7304 = vpow.pop %v7303
        %v7305 = vmul.f32 %v6558, 1.442695
        %v7306 = vpow.pop %v7305
        %v7307 = vmul.f32 %v6559, 1.442695
        %v7308 = vpow.pop %v7307
        %v7309 = vmul.f32 %v6560, 1.442695
        %v7310 = vpow.pop %v7309
        %v7311 = vmul.f32 %v6561, 1.442695
        %v7312 = vpow.pop %v7311
        %v7313 = vmul.f32 %v6562, 1.442695
        %v7314 = vpow.pop %v7313
        %v7315 = vmul.f32 %v6563, 1.442695
        %v7316 = vpow.pop %v7315
        %v7317 = vmul.f32 %v6564, 1.442695
        %v7318 = vpow.pop %v7317
        %v7319 = vmul.f32 %v6565, 1.442695
        %v7320 = vpow.pop %v7319
        %v7321 = vmul.f32 %v6566, 1.442695
        %v7322 = vpow.pop %v7321
        %v7323 = vmul.f32 %v6567, 1.442695
        %v7324 = vpow.pop %v7323
        %v7325 = vmul.f32 %v6568, 1.442695
        %v7326 = vpow.pop %v7325
        %v7327 = vmul.f32 %v6569, 1.442695
        %v7328 = vpow.pop %v7327
        %v7329 = vmul.f32 %v6570, 1.442695
        %v7330 = vpow.pop %v7329
        %v7331 = vmul.f32 %v6571, 1.442695
        %v7332 = vpow.pop %v7331
        %v7333 = vmul.f32 %v6572, 1.442695
        %v7334 = vpow.pop %v7333
        %v7335 = vmul.f32 %v6573, 1.442695
        %v7336 = vpow.pop %v7335
        %v7337 = vmul.f32 %v6574, 1.442695
        %v7338 = vpow.pop %v7337
        %v7339 = vmul.f32 %v6575, 1.442695
        %v7340 = vpow.pop %v7339
        %v7341 = vmul.f32 %v6576, 1.442695
        %v7342 = vpow.pop %v7341
        %v7343 = vmul.f32 %v6577, 1.442695
        %v7344 = vpow.pop %v7343
        %v7345 = vmul.f32 %v6578, 1.442695
        %v7346 = vpow.pop %v7345
        %v7347 = vmul.f32 %v6579, 1.442695
        %v7348 = vpow.pop %v7347
        %v7349 = vmul.f32 %v6580, 1.442695
        %v7350 = vpow.pop %v7349
        %v7351 = vmul.f32 %v6581, 1.442695
        %v7352 = vpow.pop %v7351
        %v7353 = vmul.f32 %v6582, 1.442695
        %v7354 = vpow.pop %v7353
        %v7355 = vmul.f32 %v6583, 1.442695
        %v7356 = vpow.pop %v7355
        %v7357 = vmul.f32 %v6584, 1.442695
        %v7358 = vpow.pop %v7357
        %v7359 = vmul.f32 %v6585, 1.442695
        %v7360 = vpow.pop %v7359
        %v7361 = vmul.f32 %v6586, 1.442695
        %v7362 = vpow.pop %v7361
        %v7363 = vmul.f32 %v6587, 1.442695
        %v7364 = vpow.pop %v7363
        %v7365 = vmul.f32 %v6588, 1.442695
        %v7366 = vpow.pop %v7365
        %v7367 = vmul.f32 %v6589, 1.442695
        %v7368 = vpow.pop %v7367
        %v7369 = vmul.f32 %v6590, 1.442695
        %v7370 = vpow.pop %v7369
        %v7371 = vmul.f32 %v6591, 1.442695
        %v7372 = vpow.pop %v7371
        %v7373 = vmul.f32 %v6592, 1.442695
        %v7374 = vpow.pop %v7373
        %v7375 = vmul.f32 %v6593, 1.442695
        %v7376 = vpow.pop %v7375
        %v7377 = vmul.f32 %v6594, 1.442695
        %v7378 = vpow.pop %v7377
        %v7379 = vmul.f32 %v6595, 1.442695
        %v7380 = vpow.pop %v7379
        %v7381 = vmul.f32 %v6596, 1.442695
        %v7382 = vpow.pop %v7381
        %v7383 = vmul.f32 %v6597, 1.442695
        %v7384 = vpow.pop %v7383
        %v7385 = vmul.f32 %v6598, 1.442695
        %v7386 = vpow.pop %v7385
        %v7387 = vmul.f32 %v6599, 1.442695
        %v7388 = vpow.pop %v7387
        %v7389 = vmul.f32 %v6600, 1.442695
        %v7390 = vpow.pop %v7389
        %v7391 = vmul.f32 %v6601, 1.442695
        %v7392 = vpow.pop %v7391
        %v7393 = vmul.f32 %v6602, 1.442695
        %v7394 = vpow.pop %v7393
        %v7395 = vmul.f32 %v6603, 1.442695
        %v7396 = vpow.pop %v7395
        %v7397 = vmul.f32 %v6604, 1.442695
        %v7398 = vpow.pop %v7397
        %v7399 = vmul.f32 %v6605, 1.442695
        %v7400 = vpow.pop %v7399
        %v7401 = vmul.f32 %v6606, 1.442695
        %v7402 = vpow.pop %v7401
        %v7403 = vmul.f32 %v6607, 1.442695
        %v7404 = vpow.pop %v7403
        %v7405 = vmul.f32 %v6608, 1.442695
        %v7406 = vpow.pop %v7405
        %v7407 = vmul.f32 %v6609, 1.442695
        %v7408 = vpow.pop %v7407
        %v7409 = vmul.f32 %v6610, 1.442695
        %v7410 = vpow.pop %v7409
        %v7411 = vmul.f32 %v6611, 1.442695
        %v7412 = vpow.pop %v7411
        %v7413 = vmul.f32 %v6612, 1.442695
        %v7414 = vpow.pop %v7413
        %v7415 = vmul.f32 %v6613, 1.442695
        %v7416 = vpow.pop %v7415
        %v7417 = vmul.f32 %v6614, 1.442695
        %v7418 = vpow.pop %v7417
        %v7419 = vmul.f32 %v6615, 1.442695
        %v7420 = vpow.pop %v7419
        %v7421 = vmul.f32 %v6616, 1.442695
        %v7422 = vpow.pop %v7421
        %v7423 = vmul.f32 %v6617, 1.442695
        %v7424 = vpow.pop %v7423
        %v7425 = vmul.f32 %v6618, 1.442695
        %v7426 = vpow.pop %v7425
        %v7427 = vmul.f32 %v6619, 1.442695
        %v7428 = vpow.pop %v7427
        %v7429 = vmul.f32 %v6620, 1.442695
        %v7430 = vpow.pop %v7429
        %v7431 = vmul.f32 %v6621, 1.442695
        %v7432 = vpow.pop %v7431
        %v7433 = vmul.f32 %v6622, 1.442695
        %v7434 = vpow.pop %v7433
        %v7435 = vmul.f32 %v6623, 1.442695
        %v7436 = vpow.pop %v7435
        %v7437 = vmul.f32 %v6624, 1.442695
        %v7438 = vpow.pop %v7437
        %v7439 = vmul.f32 %v6625, 1.442695
        %v7440 = vpow.pop %v7439
        %v7441 = vmul.f32 %v6626, 1.442695
        %v7442 = vpow.pop %v7441
        %v7443 = vmul.f32 %v6627, 1.442695
        %v7444 = vpow.pop %v7443
        %v7445 = vmul.f32 %v6628, 1.442695
        %v7446 = vpow.pop %v7445
        %v7447 = vmul.f32 %v6629, 1.442695
        %v7448 = vpow.pop %v7447
        %v7449 = vmul.f32 %v6630, 1.442695
        %v7450 = vpow.pop %v7449
        %v7451 = vmul.f32 %v6631, 1.442695
        %v7452 = vpow.pop %v7451
        %v7453 = vmul.f32 %v6632, 1.442695
        %v7454 = vpow.pop %v7453
        %v7455 = vmul.f32 %v6633, 1.442695
        %v7456 = vpow.pop %v7455
        %v7457 = vmul.f32 %v6634, 1.442695
        %v7458 = vpow.pop %v7457
        %v7459 = vmul.f32 %v6635, 1.442695
        %v7460 = vpow.pop %v7459
        %v7461 = vmul.f32 %v6636, 1.442695
        %v7462 = vpow.pop %v7461
        %v7463 = vmul.f32 %v6637, 1.442695
        %v7464 = vpow.pop %v7463
        %v7465 = vmul.f32 %v6638, 1.442695
        %v7466 = vpow.pop %v7465
        %v7467 = vmul.f32 %v6639, 1.442695
        %v7468 = vpow.pop %v7467
        %v7469 = vmul.f32 %v6640, 1.442695
        %v7470 = vpow.pop %v7469
        %v7471 = vmul.f32 %v6641, 1.442695
        %v7472 = vpow.pop %v7471
        %v7473 = vmul.f32 %v6642, 1.442695
        %v7474 = vpow.pop %v7473
        %v7475 = vmul.f32 %v6643, 1.442695
        %v7476 = vpow.pop %v7475
        %v7477 = vmul.f32 %v6644, 1.442695
        %v7478 = vpow.pop %v7477
        %v7479 = vmul.f32 %v6645, 1.442695
        %v7480 = vpow.pop %v7479
        %v7481 = vmul.f32 %v6646, 1.442695
        %v7482 = vpow.pop %v7481
        %v7483 = vmul.f32 %v6647, 1.442695
        %v7484 = vpow.pop %v7483
        %v7485 = vmul.f32 %v6648, 1.442695
        %v7486 = vpow.pop %v7485
        %v7487 = vmul.f32 %v6649, 1.442695
        %v7488 = vpow.pop %v7487
        %v7489 = vmul.f32 %v6650, 1.442695
        %v7490 = vpow.pop %v7489
        %v7491 = vmul.f32 %v6651, 1.442695
        %v7492 = vpow.pop %v7491
        %v7493 = vmul.f32 %v6652, 1.442695
        %v7494 = vpow.pop %v7493
        %v7495 = vmul.f32 %v6653, 1.442695
        %v7496 = vpow.pop %v7495
        %v7497 = vmul.f32 %v6654, 1.442695
        %v7498 = vpow.pop %v7497
        %v7499 = vmul.f32 %v6655, 1.442695
        %v7500 = vpow.pop %v7499
        %v7501 = vmul.f32 %v6656, 1.442695
        %v7502 = vpow.pop %v7501
        %v7503 = vmul.f32 %v6657, 1.442695
        %v7504 = vpow.pop %v7503
        %v7505 = vmul.f32 %v6658, 1.442695
        %v7506 = vpow.pop %v7505
        %v7507 = vmul.f32 %v6659, 1.442695
        %v7508 = vpow.pop %v7507
        %v7509 = vmul.f32 %v6660, 1.442695
        %v7510 = vpow.pop %v7509
        %v7511 = vmul.f32 %v6661, 1.442695
        %v7512 = vpow.pop %v7511
        %v7513 = vmul.f32 %v6662, 1.442695
        %v7514 = vpow.pop %v7513
        %v7515 = vmul.f32 %v6663, 1.442695
        %v7516 = vpow.pop %v7515
        %v7517 = vmul.f32 %v6664, 1.442695
        %v7518 = vpow.pop %v7517
        %v7519 = vmul.f32 %v6665, 1.442695
        %v7520 = vpow.pop %v7519
        %v7521 = vmul.f32 %v6666, 1.442695
        %v7522 = vpow.pop %v7521
        %v7523 = vmul.f32 %v6667, 1.442695
        %v7524 = vpow.pop %v7523
        %v7525 = vmul.f32 %v6668, 1.442695
        %v7526 = vpow.pop %v7525
        %v7527 = vmul.f32 %v6669, 1.442695
        %v7528 = vpow.pop %v7527
        %v7529 = vmul.f32 %v6670, 1.442695
        %v7530 = vpow.pop %v7529
        %v7531 = vmul.f32 %v6671, 1.442695
        %v7532 = vpow.pop %v7531
        %v7533 = vmul.f32 %v6672, 1.442695
        %v7534 = vpow.pop %v7533
        %v7535 = vmul.f32 %v6673, 1.442695
        %v7536 = vpow.pop %v7535
        %v7537 = vmul.f32 %v6674, 1.442695
        %v7538 = vpow.pop %v7537
        %v7539 = vmul.f32 %v6675, 1.442695
        %v7540 = vpow.pop %v7539
        %v7541 = vmul.f32 %v6676, 1.442695
        %v7542 = vpow.pop %v7541
        %v7543 = vmul.f32 %v6677, 1.442695
        %v7544 = vpow.pop %v7543
        %v7545 = vmul.f32 %v6678, 1.442695
        %v7546 = vpow.pop %v7545
        %v7547 = vmul.f32 %v6679, 1.442695
        %v7548 = vpow.pop %v7547
        %v7549 = vmul.f32 %v6680, 1.442695
        %v7550 = vpow.pop %v7549
        %v7551 = vmul.f32 %v6681, 1.442695
        %v7552 = vpow.pop %v7551
        %v7553 = vmul.f32 %v6682, 1.442695
        %v7554 = vpow.pop %v7553
        %v7555 = vmul.f32 %v6683, 1.442695
        %v7556 = vpow.pop %v7555
        %v7557 = vmul.f32 %v6684, 1.442695
        %v7558 = vpow.pop %v7557
        %v7559 = vmul.f32 %v6685, 1.442695
        %v7560 = vpow.pop %v7559
        %v7561 = vmul.f32 %v6686, 1.442695
        %v7562 = vpow.pop %v7561
        %v7563 = vmul.f32 %v6687, 1.442695
        %v7564 = vpow.pop %v7563
        %v7565 = vmul.f32 %v6688, 1.442695
        %v7566 = vpow.pop %v7565
        %v7567 = vmul.f32 %v6689, 1.442695
        %v7568 = vpow.pop %v7567
        %v7569 = vmul.f32 %v6690, 1.442695
        %v7570 = vpow.pop %v7569
        %v7571 = vmul.f32 %v6691, 1.442695
        %v7572 = vpow.pop %v7571
        %v7573 = vmul.f32 %v6692, 1.442695
        %v7574 = vpow.pop %v7573
        %v7575 = vmul.f32 %v6693, 1.442695
        %v7576 = vpow.pop %v7575
        %v7577 = vmul.f32 %v6694, 1.442695
        %v7578 = vpow.pop %v7577
        %v7579 = vmul.f32 %v6695, 1.442695
        %v7580 = vpow.pop %v7579
        %v7581 = vmul.f32 %v6696, 1.442695
        %v7582 = vpow.pop %v7581
        %v7583 = vmul.f32 %v6697, 1.442695
        %v7584 = vpow.pop %v7583
        %v7585 = vmul.f32 %v6698, 1.442695
        %v7586 = vpow.pop %v7585
        %v7587 = vmul.f32 %v6699, 1.442695
        %v7588 = vpow.pop %v7587
        %v7589 = vmul.f32 %v6700, 1.442695
        %v7590 = vpow.pop %v7589
        %v7591 = vmul.f32 %v6701, 1.442695
        %v7592 = vpow.pop %v7591
        %v7593 = vmul.f32 %v6702, 1.442695
        %v7594 = vpow.pop %v7593
        %v7595 = vmul.f32 %v6703, 1.442695
        %v7596 = vpow.pop %v7595
        %v7597 = vmul.f32 %v6704, 1.442695
        %v7598 = vpow.pop %v7597
        %v7599 = vmul.f32 %v6705, 1.442695
        %v7600 = vpow.pop %v7599
        %v7601 = vmul.f32 %v6706, 1.442695
        %v7602 = vpow.pop %v7601
        %v7603 = vmul.f32 %v6707, 1.442695
        %v7604 = vpow.pop %v7603
        %v7605 = vmul.f32 %v6708, 1.442695
        %v7606 = vpow.pop %v7605
        %v7607 = vmul.f32 %v6709, 1.442695
        %v7608 = vpow.pop %v7607
        %v7609 = vmul.f32 %v6710, 1.442695
        %v7610 = vpow.pop %v7609
        %v7611 = vmul.f32 %v6711, 1.442695
        %v7612 = vpow.pop %v7611
        %v7613 = vmul.f32 %v6712, 1.442695
        %v7614 = vpow.pop %v7613
        %v7615 = vmul.f32 %v6713, 1.442695
        %v7616 = vpow.pop %v7615
        %v7617 = vmul.f32 %v6714, 1.442695
        %v7618 = vpow.pop %v7617
        %v7619 = vmul.f32 %v6715, 1.442695
        %v7620 = vpow.pop %v7619
        %v7621 = vmul.f32 %v6716, 1.442695
        %v7622 = vpow.pop %v7621
        %v7623 = vmul.f32 %v6717, 1.442695
        %v7624 = vpow.pop %v7623
        %v7625 = vmul.f32 %v6718, 1.442695
        %v7626 = vpow.pop %v7625
        %v7627 = vmul.f32 %v6719, 1.442695
        %v7628 = vpow.pop %v7627
        %v7629 = vmul.f32 %v6720, 1.442695
        %v7630 = vpow.pop %v7629
        %v7631 = vmul.f32 %v6721, 1.442695
        %v7632 = vpow.pop %v7631
        %v7633 = vmul.f32 %v6722, 1.442695
        %v7634 = vpow.pop %v7633
        %v7635 = vmul.f32 %v6723, 1.442695
        %v7636 = vpow.pop %v7635
        %v7637 = vmul.f32 %v6724, 1.442695
        %v7638 = vpow.pop %v7637
        %v7639 = vmul.f32 %v6725, 1.442695
        %v7640 = vpow.pop %v7639
        %v7641 = vmul.f32 %v6726, 1.442695
        %v7642 = vpow.pop %v7641
        %v7643 = vmul.f32 %v6727, 1.442695
        %v7644 = vpow.pop %v7643
        %v7645 = vmul.f32 %v6728, 1.442695
        %v7646 = vpow.pop %v7645
        %v7647 = vmul.f32 %v6729, 1.442695
        %v7648 = vpow.pop %v7647
        %v7649 = vmul.f32 %v6730, 1.442695
        %v7650 = vpow.pop %v7649
        %v7651 = vmul.f32 %v6731, 1.442695
        %v7652 = vpow.pop %v7651
        %v7653 = vmul.f32 %v6732, 1.442695
        %v7654 = vpow.pop %v7653
        %v7655 = vmul.f32 %v6733, 1.442695
        %v7656 = vpow.pop %v7655
        %v7657 = vmul.f32 %v6734, 1.442695
        %v7658 = vpow.pop %v7657
        %v7659 = vmul.f32 %v6735, 1.442695
        %v7660 = vpow.pop %v7659
        %v7661 = vmul.f32 %v6736, 1.442695
        %v7662 = vpow.pop %v7661
        %v7663 = vmul.f32 %v6737, 1.442695
        %v7664 = vpow.pop %v7663
        %v7665 = vmul.f32 %v6738, 1.442695
        %v7666 = vpow.pop %v7665
        %v7667 = vmul.f32 %v6739, 1.442695
        %v7668 = vpow.pop %v7667
        %v7669 = vmul.f32 %v6740, 1.442695
        %v7670 = vpow.pop %v7669
        %v7671 = vmul.f32 %v6741, 1.442695
        %v7672 = vpow.pop %v7671
        %v7673 = vmul.f32 %v6742, 1.442695
        %v7674 = vpow.pop %v7673
        %v7675 = vmul.f32 %v6743, 1.442695
        %v7676 = vpow.pop %v7675
        %v7677 = vmul.f32 %v6744, 1.442695
        %v7678 = vpow.pop %v7677
        %v7679 = vmul.f32 %v6745, 1.442695
        %v7680 = vpow.pop %v7679
        %v7681 = vmul.f32 %v6746, 1.442695
        %v7682 = vpow.pop %v7681
        %v7683 = vmul.f32 %v6747, 1.442695
        %v7684 = vpow.pop %v7683
        %v7685 = vmul.f32 %v6748, 1.442695
        %v7686 = vpow.pop %v7685
        %v7687 = vmul.f32 %v6749, 1.442695
        %v7688 = vpow.pop %v7687
        %v7689 = vmul.f32 %v6750, 1.442695
        %v7690 = vpow.pop %v7689
        %v7691 = vmul.f32 %v6751, 1.442695
        %v7692 = vpow.pop %v7691
        %v7693 = vmul.f32 %v6752, 1.442695
        %v7694 = vpow.pop %v7693
        %v7695 = vmul.f32 %v6753, 1.442695
        %v7696 = vpow.pop %v7695
        %v7697 = vmul.f32 %v6754, 1.442695
        %v7698 = vpow.pop %v7697
        %v7699 = vmul.f32 %v6755, 1.442695
        %v7700 = vpow.pop %v7699
        %v7701 = vmul.f32 %v6756, 1.442695
        %v7702 = vpow.pop %v7701
        %v7703 = vmul.f32 %v6757, 1.442695
        %v7704 = vpow.pop %v7703
        %v7705 = vmul.f32 %v6758, 1.442695
        %v7706 = vpow.pop %v7705
        %v7707 = vmul.f32 %v6759, 1.442695
        %v7708 = vpow.pop %v7707
        %v7709 = vmul.f32 %v6760, 1.442695
        %v7710 = vpow.pop %v7709
        %v7711 = vmul.f32 %v6761, 1.442695
        %v7712 = vpow.pop %v7711
        %v7713 = vmul.f32 %v6762, 1.442695
        %v7714 = vpow.pop %v7713
        %v7715 = vmul.f32 %v6763, 1.442695
        %v7716 = vpow.pop %v7715
        %v7717 = vmul.f32 %v6764, 1.442695
        %v7718 = vpow.pop %v7717
        %v7719 = vmul.f32 %v6765, 1.442695
        %v7720 = vpow.pop %v7719
        %v7721 = vmul.f32 %v6766, 1.442695
        %v7722 = vpow.pop %v7721
        %v7723 = vmul.f32 %v6767, 1.442695
        %v7724 = vpow.pop %v7723
        %v7725 = vmul.f32 %v6768, 1.442695
        %v7726 = vpow.pop %v7725
        %v7727 = vmul.f32 %v6769, 1.442695
        %v7728 = vpow.pop %v7727
        %v7729 = vmul.f32 %v6770, 1.442695
        %v7730 = vpow.pop %v7729
        %v7731 = vmul.f32 %v6771, 1.442695
        %v7732 = vpow.pop %v7731
        %v7733 = vmul.f32 %v6772, 1.442695
        %v7734 = vpow.pop %v7733
        %v7735 = vmul.f32 %v6773, 1.442695
        %v7736 = vpow.pop %v7735
        %v7737 = vmul.f32 %v6774, 1.442695
        %v7738 = vpow.pop %v7737
        %v7739 = vmul.f32 %v6775, 1.442695
        %v7740 = vpow.pop %v7739
        %v7741 = vmul.f32 %v6776, 1.442695
        %v7742 = vpow.pop %v7741
        %v7743 = vmul.f32 %v6777, 1.442695
        %v7744 = vpow.pop %v7743
        %v7745 = vmul.f32 %v6778, 1.442695
        %v7746 = vpow.pop %v7745
        %v7747 = vmul.f32 %v6779, 1.442695
        %v7748 = vpow.pop %v7747
        %v7749 = vmul.f32 %v6780, 1.442695
        %v7750 = vpow.pop %v7749
        %v7751 = vmul.f32 %v6781, 1.442695
        %v7752 = vpow.pop %v7751
        %v7753 = vmul.f32 %v6782, 1.442695
        %v7754 = vpow.pop %v7753
        %v7755 = vmul.f32 %v6783, 1.442695
        %v7756 = vpow.pop %v7755
        %v7757 = vmul.f32 %v6784, 1.442695
        %v7758 = vpow.pop %v7757
        %v7759 = vmul.f32 %v6785, 1.442695
        %v7760 = vpow.pop %v7759
        %v7761 = vmul.f32 %v6786, 1.442695
        %v7762 = vpow.pop %v7761
        %v7763 = vmul.f32 %v6787, 1.442695
        %v7764 = vpow.pop %v7763
        %v7765 = vmul.f32 %v6788, 1.442695
        %v7766 = vpow.pop %v7765
        %v7767 = vmul.f32 %v6789, 1.442695
        %v7768 = vpow.pop %v7767
        %v7769 = vmul.f32 %v6790, 1.442695
        %v7770 = vpow.pop %v7769
        %v7771 = vmul.f32 %v6791, 1.442695
        %v7772 = vpow.pop %v7771
        %v7773 = vmul.f32 %v6792, 1.442695
        %v7774 = vpow.pop %v7773
        %v7775 = vmul.f32 %v6793, 1.442695
        %v7776 = vpow.pop %v7775
        %v7777 = vmul.f32 %v6794, 1.442695
        %v7778 = vpow.pop %v7777
        %v7779 = vmul.f32 %v6795, 1.442695
        %v7780 = vpow.pop %v7779
        %v7781 = vmul.f32 %v6796, 1.442695
        %v7782 = vpow.pop %v7781
        %v7783 = vmul.f32 %v6797, 1.442695
        %v7784 = vpow.pop %v7783
        %v7785 = vmul.f32 %v6798, 1.442695
        %v7786 = vpow.pop %v7785
        %v7787 = vmul.f32 %v6799, 1.442695
        %v7788 = vpow.pop %v7787
        %v7789 = vmul.f32 %v6800, 1.442695
        %v7790 = vpow.pop %v7789
        %v7791 = vmul.f32 %v6801, 1.442695
        %v7792 = vpow.pop %v7791
        %v7793 = vmul.f32 %v6802, 1.442695
        %v7794 = vpow.pop %v7793
        %v7795 = vmul.f32 %v6803, 1.442695
        %v7796 = vpow.pop %v7795
        %v7797 = vmul.f32 %v6804, 1.442695
        %v7798 = vpow.pop %v7797
        %v7799 = vmul.f32 %v6805, 1.442695
        %v7800 = vpow.pop %v7799
        %v7801 = vmul.f32 %v6806, 1.442695
        %v7802 = vpow.pop %v7801
        %v7803 = vmul.f32 %v6807, 1.442695
        %v7804 = vpow.pop %v7803
        %v7805 = vmul.f32 %v6808, 1.442695
        %v7806 = vpow.pop %v7805
        %v7807 = vmul.f32 %v6809, 1.442695
        %v7808 = vpow.pop %v7807
        %v7809 = vmul.f32 %v6810, 1.442695
        %v7810 = vpow.pop %v7809
        %v7811 = vmul.f32 %v6811, 1.442695
        %v7812 = vpow.pop %v7811
        %v7813 = vmul.f32 %v6812, 1.442695
        %v7814 = vpow.pop %v7813
        %v7815 = vmul.f32 %v6813, 1.442695
        %v7816 = vpow.pop %v7815
        %v7817 = vmul.f32 %v6814, 1.442695
        %v7818 = vpow.pop %v7817
        %v7819 = vmul.f32 %v6815, 1.442695
        %v7820 = vpow.pop %v7819
        %v7821 = vmul.f32 %v6816, 1.442695
        %v7822 = vpow.pop %v7821
        %v7823 = vmul.f32 %v6817, 1.442695
        %v7824 = vpow.pop %v7823
        %v7825 = vmul.f32 %v6818, 1.442695
        %v7826 = vpow.pop %v7825
        %v7827 = vmul.f32 %v6819, 1.442695
        %v7828 = vpow.pop %v7827
        %v7829 = vmul.f32 %v6820, 1.442695
        %v7830 = vpow.pop %v7829
        %v7831 = vmul.f32 %v6821, 1.442695
        %v7832 = vpow.pop %v7831
        %v7833 = vmul.f32 %v6822, 1.442695
        %v7834 = vpow.pop %v7833
        %v7835 = vmul.f32 %v6823, 1.442695
        %v7836 = vpow.pop %v7835
        %v7837 = vmul.f32 %v6824, 1.442695
        %v7838 = vpow.pop %v7837
        %v7839 = vmul.f32 %v6825, 1.442695
        %v7840 = vpow.pop %v7839
        %v7841 = vmul.f32 %v6826, 1.442695
        %v7842 = vpow.pop %v7841
        %v7843 = vmul.f32 %v6827, 1.442695
        %v7844 = vpow.pop %v7843
        %v7845 = vmul.f32 %v6828, 1.442695
        %v7846 = vpow.pop %v7845
        %v7847 = vmul.f32 %v6829, 1.442695
        %v7848 = vpow.pop %v7847
        %v7849 = vmul.f32 %v6830, 1.442695
        %v7850 = vpow.pop %v7849
        %v7851 = vmul.f32 %v6831, 1.442695
        %v7852 = vpow.pop %v7851
        %v7853 = vmul.f32 %v6832, 1.442695
        %v7854 = vpow.pop %v7853
        %v7855 = vmul.f32 %v6833, 1.442695
        %v7856 = vpow.pop %v7855
        %v7857 = vmul.f32 %v6834, 1.442695
        %v7858 = vpow.pop %v7857
        %v7859 = vadd.f32 %v6836, %v6838
        %v7860 = vadd.f32 %v7859, %v6840
        %v7861 = vadd.f32 %v7860, %v6842
        %v7862 = vadd.f32 %v7861, %v6844
        %v7863 = vadd.f32 %v7862, %v6846
        %v7864 = vadd.f32 %v7863, %v6848
        %v7865 = vadd.f32 %v7864, %v6850
        %v7866 = vadd.f32 %v7865, %v6852
        %v7867 = vadd.f32 %v7866, %v6854
        %v7868 = vadd.f32 %v7867, %v6856
        %v7869 = vadd.f32 %v7868, %v6858
        %v7870 = vadd.f32 %v7869, %v6860
        %v7871 = vadd.f32 %v7870, %v6862
        %v7872 = vadd.f32 %v7871, %v6864
        %v7873 = vadd.f32 %v7872, %v6866
        %v7874 = vadd.f32 %v7873, %v6868
        %v7875 = vadd.f32 %v7874, %v6870
        %v7876 = vadd.f32 %v7875, %v6872
        %v7877 = vadd.f32 %v7876, %v6874
        %v7878 = vadd.f32 %v7877, %v6876
        %v7879 = vadd.f32 %v7878, %v6878
        %v7880 = vadd.f32 %v7879, %v6880
        %v7881 = vadd.f32 %v7880, %v6882
        %v7882 = vadd.f32 %v7881, %v6884
        %v7883 = vadd.f32 %v7882, %v6886
        %v7884 = vadd.f32 %v7883, %v6888
        %v7885 = vadd.f32 %v7884, %v6890
        %v7886 = vadd.f32 %v7885, %v6892
        %v7887 = vadd.f32 %v7886, %v6894
        %v7888 = vadd.f32 %v7887, %v6896
        %v7889 = vadd.f32 %v7888, %v6898
        %7890 = vadd.xlane.f32.xlu0 %v7889
        %v7891 = vpop.xlane.xlu0 %7890
        %v7892 = vadd.f32 %v6900, %v6902
        %v7893 = vadd.f32 %v7892, %v6904
        %v7894 = vadd.f32 %v7893, %v6906
        %v7895 = vadd.f32 %v7894, %v6908
        %v7896 = vadd.f32 %v7895, %v6910
        %v7897 = vadd.f32 %v7896, %v6912
        %v7898 = vadd.f32 %v7897, %v6914
        %v7899 = vadd.f32 %v7898, %v6916
        %v7900 = vadd.f32 %v7899, %v6918
        %v7901 = vadd.f32 %v7900, %v6920
        %v7902 = vadd.f32 %v7901, %v6922
        %v7903 = vadd.f32 %v7902, %v6924
        %v7904 = vadd.f32 %v7903, %v6926
        %v7905 = vadd.f32 %v7904, %v6928
        %v7906 = vadd.f32 %v7905, %v6930
        %v7907 = vadd.f32 %v7906, %v6932
        %v7908 = vadd.f32 %v7907, %v6934
        %v7909 = vadd.f32 %v7908, %v6936
        %v7910 = vadd.f32 %v7909, %v6938
        %v7911 = vadd.f32 %v7910, %v6940
        %v7912 = vadd.f32 %v7911, %v6942
        %v7913 = vadd.f32 %v7912, %v6944
        %v7914 = vadd.f32 %v7913, %v6946
        %v7915 = vadd.f32 %v7914, %v6948
        %v7916 = vadd.f32 %v7915, %v6950
        %v7917 = vadd.f32 %v7916, %v6952
        %v7918 = vadd.f32 %v7917, %v6954
        %v7919 = vadd.f32 %v7918, %v6956
        %v7920 = vadd.f32 %v7919, %v6958
        %v7921 = vadd.f32 %v7920, %v6960
        %v7922 = vadd.f32 %v7921, %v6962
        %7923 = vadd.xlane.f32.xlu0 %v7922
        %v7924 = vpop.xlane.xlu0 %7923
        %v7925 = vadd.f32 %v6964, %v6966
        %v7926 = vadd.f32 %v7925, %v6968
        %v7927 = vadd.f32 %v7926, %v6970
        %v7928 = vadd.f32 %v7927, %v6972
        %v7929 = vadd.f32 %v7928, %v6974
        %v7930 = vadd.f32 %v7929, %v6976
        %v7931 = vadd.f32 %v7930, %v6978
        %v7932 = vadd.f32 %v7931, %v6980
        %v7933 = vadd.f32 %v7932, %v6982
        %v7934 = vadd.f32 %v7933, %v6984
        %v7935 = vadd.f32 %v7934, %v6986
        %v7936 = vadd.f32 %v7935, %v6988
        %v7937 = vadd.f32 %v7936, %v6990
        %v7938 = vadd.f32 %v7937, %v6992
        %v7939 = vadd.f32 %v7938, %v6994
        %v7940 = vadd.f32 %v7939, %v6996
        %v7941 = vadd.f32 %v7940, %v6998
        %v7942 = vadd.f32 %v7941, %v7000
        %v7943 = vadd.f32 %v7942, %v7002
        %v7944 = vadd.f32 %v7943, %v7004
        %v7945 = vadd.f32 %v7944, %v7006
        %v7946 = vadd.f32 %v7945, %v7008
        %v7947 = vadd.f32 %v7946, %v7010
        %v7948 = vadd.f32 %v7947, %v7012
        %v7949 = vadd.f32 %v7948, %v7014
        %v7950 = vadd.f32 %v7949, %v7016
        %v7951 = vadd.f32 %v7950, %v7018
        %v7952 = vadd.f32 %v7951, %v7020
        %v7953 = vadd.f32 %v7952, %v7022
        %v7954 = vadd.f32 %v7953, %v7024
        %v7955 = vadd.f32 %v7954, %v7026
        %7956 = vadd.xlane.f32.xlu0 %v7955
        %v7957 = vpop.xlane.xlu0 %7956
        %v7958 = vadd.f32 %v7028, %v7030
        %v7959 = vadd.f32 %v7958, %v7032
        %v7960 = vadd.f32 %v7959, %v7034
        %v7961 = vadd.f32 %v7960, %v7036
        %v7962 = vadd.f32 %v7961, %v7038
        %v7963 = vadd.f32 %v7962, %v7040
        %v7964 = vadd.f32 %v7963, %v7042
        %v7965 = vadd.f32 %v7964, %v7044
        %v7966 = vadd.f32 %v7965, %v7046
        %v7967 = vadd.f32 %v7966, %v7048
        %v7968 = vadd.f32 %v7967, %v7050
        %v7969 = vadd.f32 %v7968, %v7052
        %v7970 = vadd.f32 %v7969, %v7054
        %v7971 = vadd.f32 %v7970, %v7056
        %v7972 = vadd.f32 %v7971, %v7058
        %v7973 = vadd.f32 %v7972, %v7060
        %v7974 = vadd.f32 %v7973, %v7062
        %v7975 = vadd.f32 %v7974, %v7064
        %v7976 = vadd.f32 %v7975, %v7066
        %v7977 = vadd.f32 %v7976, %v7068
        %v7978 = vadd.f32 %v7977, %v7070
        %v7979 = vadd.f32 %v7978, %v7072
        %v7980 = vadd.f32 %v7979, %v7074
        %v7981 = vadd.f32 %v7980, %v7076
        %v7982 = vadd.f32 %v7981, %v7078
        %v7983 = vadd.f32 %v7982, %v7080
        %v7984 = vadd.f32 %v7983, %v7082
        %v7985 = vadd.f32 %v7984, %v7084
        %v7986 = vadd.f32 %v7985, %v7086
        %v7987 = vadd.f32 %v7986, %v7088
        %v7988 = vadd.f32 %v7987, %v7090
        %7989 = vadd.xlane.f32.xlu0 %v7988
        %v7990 = vpop.xlane.xlu0 %7989
        %v7991 = vadd.f32 %v7092, %v7094
        %v7992 = vadd.f32 %v7991, %v7096
        %v7993 = vadd.f32 %v7992, %v7098
        %v7994 = vadd.f32 %v7993, %v7100
        %v7995 = vadd.f32 %v7994, %v7102
        %v7996 = vadd.f32 %v7995, %v7104
        %v7997 = vadd.f32 %v7996, %v7106
        %v7998 = vadd.f32 %v7997, %v7108
        %v7999 = vadd.f32 %v7998, %v7110
        %v8000 = vadd.f32 %v7999, %v7112
        %v8001 = vadd.f32 %v8000, %v7114
        %v8002 = vadd.f32 %v8001, %v7116
        %v8003 = vadd.f32 %v8002, %v7118
        %v8004 = vadd.f32 %v8003, %v7120
        %v8005 = vadd.f32 %v8004, %v7122
        %v8006 = vadd.f32 %v8005, %v7124
        %v8007 = vadd.f32 %v8006, %v7126
        %v8008 = vadd.f32 %v8007, %v7128
        %v8009 = vadd.f32 %v8008, %v7130
        %v8010 = vadd.f32 %v8009, %v7132
        %v8011 = vadd.f32 %v8010, %v7134
        %v8012 = vadd.f32 %v8011, %v7136
        %v8013 = vadd.f32 %v8012, %v7138
        %v8014 = vadd.f32 %v8013, %v7140
        %v8015 = vadd.f32 %v8014, %v7142
        %v8016 = vadd.f32 %v8015, %v7144
        %v8017 = vadd.f32 %v8016, %v7146
        %v8018 = vadd.f32 %v8017, %v7148
        %v8019 = vadd.f32 %v8018, %v7150
        %v8020 = vadd.f32 %v8019, %v7152
        %v8021 = vadd.f32 %v8020, %v7154
        %8022 = vadd.xlane.f32.xlu0 %v8021
        %v8023 = vpop.xlane.xlu0 %8022
        %v8024 = vadd.f32 %v7156, %v7158
        %v8025 = vadd.f32 %v8024, %v7160
        %v8026 = vadd.f32 %v8025, %v7162
        %v8027 = vadd.f32 %v8026, %v7164
        %v8028 = vadd.f32 %v8027, %v7166
        %v8029 = vadd.f32 %v8028, %v7168
        %v8030 = vadd.f32 %v8029, %v7170
        %v8031 = vadd.f32 %v8030, %v7172
        %v8032 = vadd.f32 %v8031, %v7174
        %v8033 = vadd.f32 %v8032, %v7176
        %v8034 = vadd.f32 %v8033, %v7178
        %v8035 = vadd.f32 %v8034, %v7180
        %v8036 = vadd.f32 %v8035, %v7182
        %v8037 = vadd.f32 %v8036, %v7184
        %v8038 = vadd.f32 %v8037, %v7186
        %v8039 = vadd.f32 %v8038, %v7188
        %v8040 = vadd.f32 %v8039, %v7190
        %v8041 = vadd.f32 %v8040, %v7192
        %v8042 = vadd.f32 %v8041, %v7194
        %v8043 = vadd.f32 %v8042, %v7196
        %v8044 = vadd.f32 %v8043, %v7198
        %v8045 = vadd.f32 %v8044, %v7200
        %v8046 = vadd.f32 %v8045, %v7202
        %v8047 = vadd.f32 %v8046, %v7204
        %v8048 = vadd.f32 %v8047, %v7206
        %v8049 = vadd.f32 %v8048, %v7208
        %v8050 = vadd.f32 %v8049, %v7210
        %v8051 = vadd.f32 %v8050, %v7212
        %v8052 = vadd.f32 %v8051, %v7214
        %v8053 = vadd.f32 %v8052, %v7216
        %v8054 = vadd.f32 %v8053, %v7218
        %8055 = vadd.xlane.f32.xlu0 %v8054
        %v8056 = vpop.xlane.xlu0 %8055
        %v8057 = vadd.f32 %v7220, %v7222
        %v8058 = vadd.f32 %v8057, %v7224
        %v8059 = vadd.f32 %v8058, %v7226
        %v8060 = vadd.f32 %v8059, %v7228
        %v8061 = vadd.f32 %v8060, %v7230
        %v8062 = vadd.f32 %v8061, %v7232
        %v8063 = vadd.f32 %v8062, %v7234
        %v8064 = vadd.f32 %v8063, %v7236
        %v8065 = vadd.f32 %v8064, %v7238
        %v8066 = vadd.f32 %v8065, %v7240
        %v8067 = vadd.f32 %v8066, %v7242
        %v8068 = vadd.f32 %v8067, %v7244
        %v8069 = vadd.f32 %v8068, %v7246
        %v8070 = vadd.f32 %v8069, %v7248
        %v8071 = vadd.f32 %v8070, %v7250
        %v8072 = vadd.f32 %v8071, %v7252
        %v8073 = vadd.f32 %v8072, %v7254
        %v8074 = vadd.f32 %v8073, %v7256
        %v8075 = vadd.f32 %v8074, %v7258
        %v8076 = vadd.f32 %v8075, %v7260
        %v8077 = vadd.f32 %v8076, %v7262
        %v8078 = vadd.f32 %v8077, %v7264
        %v8079 = vadd.f32 %v8078, %v7266
        %v8080 = vadd.f32 %v8079, %v7268
        %v8081 = vadd.f32 %v8080, %v7270
        %v8082 = vadd.f32 %v8081, %v7272
        %v8083 = vadd.f32 %v8082, %v7274
        %v8084 = vadd.f32 %v8083, %v7276
        %v8085 = vadd.f32 %v8084, %v7278
        %v8086 = vadd.f32 %v8085, %v7280
        %v8087 = vadd.f32 %v8086, %v7282
        %8088 = vadd.xlane.f32.xlu0 %v8087
        %v8089 = vpop.xlane.xlu0 %8088
        %v8090 = vadd.f32 %v7284, %v7286
        %v8091 = vadd.f32 %v8090, %v7288
        %v8092 = vadd.f32 %v8091, %v7290
        %v8093 = vadd.f32 %v8092, %v7292
        %v8094 = vadd.f32 %v8093, %v7294
        %v8095 = vadd.f32 %v8094, %v7296
        %v8096 = vadd.f32 %v8095, %v7298
        %v8097 = vadd.f32 %v8096, %v7300
        %v8098 = vadd.f32 %v8097, %v7302
        %v8099 = vadd.f32 %v8098, %v7304
        %v8100 = vadd.f32 %v8099, %v7306
        %v8101 = vadd.f32 %v8100, %v7308
        %v8102 = vadd.f32 %v8101, %v7310
        %v8103 = vadd.f32 %v8102, %v7312
        %v8104 = vadd.f32 %v8103, %v7314
        %v8105 = vadd.f32 %v8104, %v7316
        %v8106 = vadd.f32 %v8105, %v7318
        %v8107 = vadd.f32 %v8106, %v7320
        %v8108 = vadd.f32 %v8107, %v7322
        %v8109 = vadd.f32 %v8108, %v7324
        %v8110 = vadd.f32 %v8109, %v7326
        %v8111 = vadd.f32 %v8110, %v7328
        %v8112 = vadd.f32 %v8111, %v7330
        %v8113 = vadd.f32 %v8112, %v7332
        %v8114 = vadd.f32 %v8113, %v7334
        %v8115 = vadd.f32 %v8114, %v7336
        %v8116 = vadd.f32 %v8115, %v7338
        %v8117 = vadd.f32 %v8116, %v7340
        %v8118 = vadd.f32 %v8117, %v7342
        %v8119 = vadd.f32 %v8118, %v7344
        %v8120 = vadd.f32 %v8119, %v7346
        %8121 = vadd.xlane.f32.xlu0 %v8120
        %v8122 = vpop.xlane.xlu0 %8121
        %v8123 = vadd.f32 %v7348, %v7350
        %v8124 = vadd.f32 %v8123, %v7352
        %v8125 = vadd.f32 %v8124, %v7354
        %v8126 = vadd.f32 %v8125, %v7356
        %v8127 = vadd.f32 %v8126, %v7358
        %v8128 = vadd.f32 %v8127, %v7360
        %v8129 = vadd.f32 %v8128, %v7362
        %v8130 = vadd.f32 %v8129, %v7364
        %v8131 = vadd.f32 %v8130, %v7366
        %v8132 = vadd.f32 %v8131, %v7368
        %v8133 = vadd.f32 %v8132, %v7370
        %v8134 = vadd.f32 %v8133, %v7372
        %v8135 = vadd.f32 %v8134, %v7374
        %v8136 = vadd.f32 %v8135, %v7376
        %v8137 = vadd.f32 %v8136, %v7378
        %v8138 = vadd.f32 %v8137, %v7380
        %v8139 = vadd.f32 %v8138, %v7382
        %v8140 = vadd.f32 %v8139, %v7384
        %v8141 = vadd.f32 %v8140, %v7386
        %v8142 = vadd.f32 %v8141, %v7388
        %v8143 = vadd.f32 %v8142, %v7390
        %v8144 = vadd.f32 %v8143, %v7392
        %v8145 = vadd.f32 %v8144, %v7394
        %v8146 = vadd.f32 %v8145, %v7396
        %v8147 = vadd.f32 %v8146, %v7398
        %v8148 = vadd.f32 %v8147, %v7400
        %v8149 = vadd.f32 %v8148, %v7402
        %v8150 = vadd.f32 %v8149, %v7404
        %v8151 = vadd.f32 %v8150, %v7406
        %v8152 = vadd.f32 %v8151, %v7408
        %v8153 = vadd.f32 %v8152, %v7410
        %8154 = vadd.xlane.f32.xlu0 %v8153
        %v8155 = vpop.xlane.xlu0 %8154
        %v8156 = vadd.f32 %v7412, %v7414
        %v8157 = vadd.f32 %v8156, %v7416
        %v8158 = vadd.f32 %v8157, %v7418
        %v8159 = vadd.f32 %v8158, %v7420
        %v8160 = vadd.f32 %v8159, %v7422
        %v8161 = vadd.f32 %v8160, %v7424
        %v8162 = vadd.f32 %v8161, %v7426
        %v8163 = vadd.f32 %v8162, %v7428
        %v8164 = vadd.f32 %v8163, %v7430
        %v8165 = vadd.f32 %v8164, %v7432
        %v8166 = vadd.f32 %v8165, %v7434
        %v8167 = vadd.f32 %v8166, %v7436
        %v8168 = vadd.f32 %v8167, %v7438
        %v8169 = vadd.f32 %v8168, %v7440
        %v8170 = vadd.f32 %v8169, %v7442
        %v8171 = vadd.f32 %v8170, %v7444
        %v8172 = vadd.f32 %v8171, %v7446
        %v8173 = vadd.f32 %v8172, %v7448
        %v8174 = vadd.f32 %v8173, %v7450
        %v8175 = vadd.f32 %v8174, %v7452
        %v8176 = vadd.f32 %v8175, %v7454
        %v8177 = vadd.f32 %v8176, %v7456
        %v8178 = vadd.f32 %v8177, %v7458
        %v8179 = vadd.f32 %v8178, %v7460
        %v8180 = vadd.f32 %v8179, %v7462
        %v8181 = vadd.f32 %v8180, %v7464
        %v8182 = vadd.f32 %v8181, %v7466
        %v8183 = vadd.f32 %v8182, %v7468
        %v8184 = vadd.f32 %v8183, %v7470
        %v8185 = vadd.f32 %v8184, %v7472
        %v8186 = vadd.f32 %v8185, %v7474
        %8187 = vadd.xlane.f32.xlu0 %v8186
        %v8188 = vpop.xlane.xlu0 %8187
        %v8189 = vadd.f32 %v7476, %v7478
        %v8190 = vadd.f32 %v8189, %v7480
        %v8191 = vadd.f32 %v8190, %v7482
        %v8192 = vadd.f32 %v8191, %v7484
        %v8193 = vadd.f32 %v8192, %v7486
        %v8194 = vadd.f32 %v8193, %v7488
        %v8195 = vadd.f32 %v8194, %v7490
        %v8196 = vadd.f32 %v8195, %v7492
        %v8197 = vadd.f32 %v8196, %v7494
        %v8198 = vadd.f32 %v8197, %v7496
        %v8199 = vadd.f32 %v8198, %v7498
        %v8200 = vadd.f32 %v8199, %v7500
        %v8201 = vadd.f32 %v8200, %v7502
        %v8202 = vadd.f32 %v8201, %v7504
        %v8203 = vadd.f32 %v8202, %v7506
        %v8204 = vadd.f32 %v8203, %v7508
        %v8205 = vadd.f32 %v8204, %v7510
        %v8206 = vadd.f32 %v8205, %v7512
        %v8207 = vadd.f32 %v8206, %v7514
        %v8208 = vadd.f32 %v8207, %v7516
        %v8209 = vadd.f32 %v8208, %v7518
        %v8210 = vadd.f32 %v8209, %v7520
        %v8211 = vadd.f32 %v8210, %v7522
        %v8212 = vadd.f32 %v8211, %v7524
        %v8213 = vadd.f32 %v8212, %v7526
        %v8214 = vadd.f32 %v8213, %v7528
        %v8215 = vadd.f32 %v8214, %v7530
        %v8216 = vadd.f32 %v8215, %v7532
        %v8217 = vadd.f32 %v8216, %v7534
        %v8218 = vadd.f32 %v8217, %v7536
        %v8219 = vadd.f32 %v8218, %v7538
        %8220 = vadd.xlane.f32.xlu0 %v8219
        %v8221 = vpop.xlane.xlu0 %8220
        %v8222 = vadd.f32 %v7540, %v7542
        %v8223 = vadd.f32 %v8222, %v7544
        %v8224 = vadd.f32 %v8223, %v7546
        %v8225 = vadd.f32 %v8224, %v7548
        %v8226 = vadd.f32 %v8225, %v7550
        %v8227 = vadd.f32 %v8226, %v7552
        %v8228 = vadd.f32 %v8227, %v7554
        %v8229 = vadd.f32 %v8228, %v7556
        %v8230 = vadd.f32 %v8229, %v7558
        %v8231 = vadd.f32 %v8230, %v7560
        %v8232 = vadd.f32 %v8231, %v7562
        %v8233 = vadd.f32 %v8232, %v7564
        %v8234 = vadd.f32 %v8233, %v7566
        %v8235 = vadd.f32 %v8234, %v7568
        %v8236 = vadd.f32 %v8235, %v7570
        %v8237 = vadd.f32 %v8236, %v7572
        %v8238 = vadd.f32 %v8237, %v7574
        %v8239 = vadd.f32 %v8238, %v7576
        %v8240 = vadd.f32 %v8239, %v7578
        %v8241 = vadd.f32 %v8240, %v7580
        %v8242 = vadd.f32 %v8241, %v7582
        %v8243 = vadd.f32 %v8242, %v7584
        %v8244 = vadd.f32 %v8243, %v7586
        %v8245 = vadd.f32 %v8244, %v7588
        %v8246 = vadd.f32 %v8245, %v7590
        %v8247 = vadd.f32 %v8246, %v7592
        %v8248 = vadd.f32 %v8247, %v7594
        %v8249 = vadd.f32 %v8248, %v7596
        %v8250 = vadd.f32 %v8249, %v7598
        %v8251 = vadd.f32 %v8250, %v7600
        %v8252 = vadd.f32 %v8251, %v7602
        %8253 = vadd.xlane.f32.xlu0 %v8252
        %v8254 = vpop.xlane.xlu0 %8253
        %v8255 = vadd.f32 %v7604, %v7606
        %v8256 = vadd.f32 %v8255, %v7608
        %v8257 = vadd.f32 %v8256, %v7610
        %v8258 = vadd.f32 %v8257, %v7612
        %v8259 = vadd.f32 %v8258, %v7614
        %v8260 = vadd.f32 %v8259, %v7616
        %v8261 = vadd.f32 %v8260, %v7618
        %v8262 = vadd.f32 %v8261, %v7620
        %v8263 = vadd.f32 %v8262, %v7622
        %v8264 = vadd.f32 %v8263, %v7624
        %v8265 = vadd.f32 %v8264, %v7626
        %v8266 = vadd.f32 %v8265, %v7628
        %v8267 = vadd.f32 %v8266, %v7630
        %v8268 = vadd.f32 %v8267, %v7632
        %v8269 = vadd.f32 %v8268, %v7634
        %v8270 = vadd.f32 %v8269, %v7636
        %v8271 = vadd.f32 %v8270, %v7638
        %v8272 = vadd.f32 %v8271, %v7640
        %v8273 = vadd.f32 %v8272, %v7642
        %v8274 = vadd.f32 %v8273, %v7644
        %v8275 = vadd.f32 %v8274, %v7646
        %v8276 = vadd.f32 %v8275, %v7648
        %v8277 = vadd.f32 %v8276, %v7650
        %v8278 = vadd.f32 %v8277, %v7652
        %v8279 = vadd.f32 %v8278, %v7654
        %v8280 = vadd.f32 %v8279, %v7656
        %v8281 = vadd.f32 %v8280, %v7658
        %v8282 = vadd.f32 %v8281, %v7660
        %v8283 = vadd.f32 %v8282, %v7662
        %v8284 = vadd.f32 %v8283, %v7664
        %v8285 = vadd.f32 %v8284, %v7666
        %8286 = vadd.xlane.f32.xlu0 %v8285
        %v8287 = vpop.xlane.xlu0 %8286
        %v8288 = vadd.f32 %v7668, %v7670
        %v8289 = vadd.f32 %v8288, %v7672
        %v8290 = vadd.f32 %v8289, %v7674
        %v8291 = vadd.f32 %v8290, %v7676
        %v8292 = vadd.f32 %v8291, %v7678
        %v8293 = vadd.f32 %v8292, %v7680
        %v8294 = vadd.f32 %v8293, %v7682
        %v8295 = vadd.f32 %v8294, %v7684
        %v8296 = vadd.f32 %v8295, %v7686
        %v8297 = vadd.f32 %v8296, %v7688
        %v8298 = vadd.f32 %v8297, %v7690
        %v8299 = vadd.f32 %v8298, %v7692
        %v8300 = vadd.f32 %v8299, %v7694
        %v8301 = vadd.f32 %v8300, %v7696
        %v8302 = vadd.f32 %v8301, %v7698
        %v8303 = vadd.f32 %v8302, %v7700
        %v8304 = vadd.f32 %v8303, %v7702
        %v8305 = vadd.f32 %v8304, %v7704
        %v8306 = vadd.f32 %v8305, %v7706
        %v8307 = vadd.f32 %v8306, %v7708
        %v8308 = vadd.f32 %v8307, %v7710
        %v8309 = vadd.f32 %v8308, %v7712
        %v8310 = vadd.f32 %v8309, %v7714
        %v8311 = vadd.f32 %v8310, %v7716
        %v8312 = vadd.f32 %v8311, %v7718
        %v8313 = vadd.f32 %v8312, %v7720
        %v8314 = vadd.f32 %v8313, %v7722
        %v8315 = vadd.f32 %v8314, %v7724
        %v8316 = vadd.f32 %v8315, %v7726
        %v8317 = vadd.f32 %v8316, %v7728
        %v8318 = vadd.f32 %v8317, %v7730
        %8319 = vadd.xlane.f32.xlu0 %v8318
        %v8320 = vpop.xlane.xlu0 %8319
        %v8321 = vadd.f32 %v7732, %v7734
        %v8322 = vadd.f32 %v8321, %v7736
        %v8323 = vadd.f32 %v8322, %v7738
        %v8324 = vadd.f32 %v8323, %v7740
        %v8325 = vadd.f32 %v8324, %v7742
        %v8326 = vadd.f32 %v8325, %v7744
        %v8327 = vadd.f32 %v8326, %v7746
        %v8328 = vadd.f32 %v8327, %v7748
        %v8329 = vadd.f32 %v8328, %v7750
        %v8330 = vadd.f32 %v8329, %v7752
        %v8331 = vadd.f32 %v8330, %v7754
        %v8332 = vadd.f32 %v8331, %v7756
        %v8333 = vadd.f32 %v8332, %v7758
        %v8334 = vadd.f32 %v8333, %v7760
        %v8335 = vadd.f32 %v8334, %v7762
        %v8336 = vadd.f32 %v8335, %v7764
        %v8337 = vadd.f32 %v8336, %v7766
        %v8338 = vadd.f32 %v8337, %v7768
        %v8339 = vadd.f32 %v8338, %v7770
        %v8340 = vadd.f32 %v8339, %v7772
        %v8341 = vadd.f32 %v8340, %v7774
        %v8342 = vadd.f32 %v8341, %v7776
        %v8343 = vadd.f32 %v8342, %v7778
        %v8344 = vadd.f32 %v8343, %v7780
        %v8345 = vadd.f32 %v8344, %v7782
        %v8346 = vadd.f32 %v8345, %v7784
        %v8347 = vadd.f32 %v8346, %v7786
        %v8348 = vadd.f32 %v8347, %v7788
        %v8349 = vadd.f32 %v8348, %v7790
        %v8350 = vadd.f32 %v8349, %v7792
        %v8351 = vadd.f32 %v8350, %v7794
        %8352 = vadd.xlane.f32.xlu0 %v8351
        %v8353 = vpop.xlane.xlu0 %8352
        %v8354 = vadd.f32 %v7796, %v7798
        %v8355 = vadd.f32 %v8354, %v7800
        %v8356 = vadd.f32 %v8355, %v7802
        %v8357 = vadd.f32 %v8356, %v7804
        %v8358 = vadd.f32 %v8357, %v7806
        %v8359 = vadd.f32 %v8358, %v7808
        %v8360 = vadd.f32 %v8359, %v7810
        %v8361 = vadd.f32 %v8360, %v7812
        %v8362 = vadd.f32 %v8361, %v7814
        %v8363 = vadd.f32 %v8362, %v7816
        %v8364 = vadd.f32 %v8363, %v7818
        %v8365 = vadd.f32 %v8364, %v7820
        %v8366 = vadd.f32 %v8365, %v7822
        %v8367 = vadd.f32 %v8366, %v7824
        %v8368 = vadd.f32 %v8367, %v7826
        %v8369 = vadd.f32 %v8368, %v7828
        %v8370 = vadd.f32 %v8369, %v7830
        %v8371 = vadd.f32 %v8370, %v7832
        %v8372 = vadd.f32 %v8371, %v7834
        %v8373 = vadd.f32 %v8372, %v7836
        %v8374 = vadd.f32 %v8373, %v7838
        %v8375 = vadd.f32 %v8374, %v7840
        %v8376 = vadd.f32 %v8375, %v7842
        %v8377 = vadd.f32 %v8376, %v7844
        %v8378 = vadd.f32 %v8377, %v7846
        %v8379 = vadd.f32 %v8378, %v7848
        %v8380 = vadd.f32 %v8379, %v7850
        %v8381 = vadd.f32 %v8380, %v7852
        %v8382 = vadd.f32 %v8381, %v7854
        %v8383 = vadd.f32 %v8382, %v7856
        %v8384 = vadd.f32 %v8383, %v7858
        %8385 = vadd.xlane.f32.xlu0 %v8384
        %v8386 = vpop.xlane.xlu0 %8385
        %v8387 = vrcp.pop %v7891
        %v8388 = vrcp.pop %v7924
        %v8389 = vrcp.pop %v7957
        %v8390 = vrcp.pop %v7990
        %v8391 = vrcp.pop %v8023
        %v8392 = vrcp.pop %v8056
        %v8393 = vrcp.pop %v8089
        %v8394 = vrcp.pop %v8122
        %v8395 = vrcp.pop %v8155
        %v8396 = vrcp.pop %v8188
        %v8397 = vrcp.pop %v8221
        %v8398 = vrcp.pop %v8254
        %v8399 = vrcp.pop %v8287
        %v8400 = vrcp.pop %v8320
        %v8401 = vrcp.pop %v8353
        %v8402 = vrcp.pop %v8386
        %v8403 = vmul.f32 %v8387, 4096.0
        %v8404 = vmul.f32 %v8388, 4096.0
        %v8405 = vmul.f32 %v8389, 4096.0
        %v8406 = vmul.f32 %v8390, 4096.0
        %v8407 = vmul.f32 %v8391, 4096.0
        %v8408 = vmul.f32 %v8392, 4096.0
        %v8409 = vmul.f32 %v8393, 4096.0
        %v8410 = vmul.f32 %v8394, 4096.0
        %v8411 = vmul.f32 %v8395, 4096.0
        %v8412 = vmul.f32 %v8396, 4096.0
        %v8413 = vmul.f32 %v8397, 4096.0
        %v8414 = vmul.f32 %v8398, 4096.0
        %v8415 = vmul.f32 %v8399, 4096.0
        %v8416 = vmul.f32 %v8400, 4096.0
        %v8417 = vmul.f32 %v8401, 4096.0
        %v8418 = vmul.f32 %v8402, 4096.0
        %v8419 = vmul.f32 %v6836, %v8403
        %v8420 = vmul.f32 %v6838, %v8403
        %v8421 = vmul.f32 %v6840, %v8403
        %v8422 = vmul.f32 %v6842, %v8403
        %v8423 = vmul.f32 %v6844, %v8403
        %v8424 = vmul.f32 %v6846, %v8403
        %v8425 = vmul.f32 %v6848, %v8403
        %v8426 = vmul.f32 %v6850, %v8403
        %v8427 = vmul.f32 %v6852, %v8403
        %v8428 = vmul.f32 %v6854, %v8403
        %v8429 = vmul.f32 %v6856, %v8403
        %v8430 = vmul.f32 %v6858, %v8403
        %v8431 = vmul.f32 %v6860, %v8403
        %v8432 = vmul.f32 %v6862, %v8403
        %v8433 = vmul.f32 %v6864, %v8403
        %v8434 = vmul.f32 %v6866, %v8403
        %v8435 = vmul.f32 %v6868, %v8403
        %v8436 = vmul.f32 %v6870, %v8403
        %v8437 = vmul.f32 %v6872, %v8403
        %v8438 = vmul.f32 %v6874, %v8403
        %v8439 = vmul.f32 %v6876, %v8403
        %v8440 = vmul.f32 %v6878, %v8403
        %v8441 = vmul.f32 %v6880, %v8403
        %v8442 = vmul.f32 %v6882, %v8403
        %v8443 = vmul.f32 %v6884, %v8403
        %v8444 = vmul.f32 %v6886, %v8403
        %v8445 = vmul.f32 %v6888, %v8403
        %v8446 = vmul.f32 %v6890, %v8403
        %v8447 = vmul.f32 %v6892, %v8403
        %v8448 = vmul.f32 %v6894, %v8403
        %v8449 = vmul.f32 %v6896, %v8403
        %v8450 = vmul.f32 %v6898, %v8403
        %v8451 = vmul.f32 %v6900, %v8404
        %v8452 = vmul.f32 %v6902, %v8404
        %v8453 = vmul.f32 %v6904, %v8404
        %v8454 = vmul.f32 %v6906, %v8404
        %v8455 = vmul.f32 %v6908, %v8404
        %v8456 = vmul.f32 %v6910, %v8404
        %v8457 = vmul.f32 %v6912, %v8404
        %v8458 = vmul.f32 %v6914, %v8404
        %v8459 = vmul.f32 %v6916, %v8404
        %v8460 = vmul.f32 %v6918, %v8404
        %v8461 = vmul.f32 %v6920, %v8404
        %v8462 = vmul.f32 %v6922, %v8404
        %v8463 = vmul.f32 %v6924, %v8404
        %v8464 = vmul.f32 %v6926, %v8404
        %v8465 = vmul.f32 %v6928, %v8404
        %v8466 = vmul.f32 %v6930, %v8404
        %v8467 = vmul.f32 %v6932, %v8404
        %v8468 = vmul.f32 %v6934, %v8404
        %v8469 = vmul.f32 %v6936, %v8404
        %v8470 = vmul.f32 %v6938, %v8404
        %v8471 = vmul.f32 %v6940, %v8404
        %v8472 = vmul.f32 %v6942, %v8404
        %v8473 = vmul.f32 %v6944, %v8404
        %v8474 = vmul.f32 %v6946, %v8404
        %v8475 = vmul.f32 %v6948, %v8404
        %v8476 = vmul.f32 %v6950, %v8404
        %v8477 = vmul.f32 %v6952, %v8404
        %v8478 = vmul.f32 %v6954, %v8404
        %v8479 = vmul.f32 %v6956, %v8404
        %v8480 = vmul.f32 %v6958, %v8404
        %v8481 = vmul.f32 %v6960, %v8404
        %v8482 = vmul.f32 %v6962, %v8404
        %v8483 = vmul.f32 %v6964, %v8405
        %v8484 = vmul.f32 %v6966, %v8405
        %v8485 = vmul.f32 %v6968, %v8405
        %v8486 = vmul.f32 %v6970, %v8405
        %v8487 = vmul.f32 %v6972, %v8405
        %v8488 = vmul.f32 %v6974, %v8405
        %v8489 = vmul.f32 %v6976, %v8405
        %v8490 = vmul.f32 %v6978, %v8405
        %v8491 = vmul.f32 %v6980, %v8405
        %v8492 = vmul.f32 %v6982, %v8405
        %v8493 = vmul.f32 %v6984, %v8405
        %v8494 = vmul.f32 %v6986, %v8405
        %v8495 = vmul.f32 %v6988, %v8405
        %v8496 = vmul.f32 %v6990, %v8405
        %v8497 = vmul.f32 %v6992, %v8405
        %v8498 = vmul.f32 %v6994, %v8405
        %v8499 = vmul.f32 %v6996, %v8405
        %v8500 = vmul.f32 %v6998, %v8405
        %v8501 = vmul.f32 %v7000, %v8405
        %v8502 = vmul.f32 %v7002, %v8405
        %v8503 = vmul.f32 %v7004, %v8405
        %v8504 = vmul.f32 %v7006, %v8405
        %v8505 = vmul.f32 %v7008, %v8405
        %v8506 = vmul.f32 %v7010, %v8405
        %v8507 = vmul.f32 %v7012, %v8405
        %v8508 = vmul.f32 %v7014, %v8405
        %v8509 = vmul.f32 %v7016, %v8405
        %v8510 = vmul.f32 %v7018, %v8405
        %v8511 = vmul.f32 %v7020, %v8405
        %v8512 = vmul.f32 %v7022, %v8405
        %v8513 = vmul.f32 %v7024, %v8405
        %v8514 = vmul.f32 %v7026, %v8405
        %v8515 = vmul.f32 %v7028, %v8406
        %v8516 = vmul.f32 %v7030, %v8406
        %v8517 = vmul.f32 %v7032, %v8406
        %v8518 = vmul.f32 %v7034, %v8406
        %v8519 = vmul.f32 %v7036, %v8406
        %v8520 = vmul.f32 %v7038, %v8406
        %v8521 = vmul.f32 %v7040, %v8406
        %v8522 = vmul.f32 %v7042, %v8406
        %v8523 = vmul.f32 %v7044, %v8406
        %v8524 = vmul.f32 %v7046, %v8406
        %v8525 = vmul.f32 %v7048, %v8406
        %v8526 = vmul.f32 %v7050, %v8406
        %v8527 = vmul.f32 %v7052, %v8406
        %v8528 = vmul.f32 %v7054, %v8406
        %v8529 = vmul.f32 %v7056, %v8406
        %v8530 = vmul.f32 %v7058, %v8406
        %v8531 = vmul.f32 %v7060, %v8406
        %v8532 = vmul.f32 %v7062, %v8406
        %v8533 = vmul.f32 %v7064, %v8406
        %v8534 = vmul.f32 %v7066, %v8406
        %v8535 = vmul.f32 %v7068, %v8406
        %v8536 = vmul.f32 %v7070, %v8406
        %v8537 = vmul.f32 %v7072, %v8406
        %v8538 = vmul.f32 %v7074, %v8406
        %v8539 = vmul.f32 %v7076, %v8406
        %v8540 = vmul.f32 %v7078, %v8406
        %v8541 = vmul.f32 %v7080, %v8406
        %v8542 = vmul.f32 %v7082, %v8406
        %v8543 = vmul.f32 %v7084, %v8406
        %v8544 = vmul.f32 %v7086, %v8406
        %v8545 = vmul.f32 %v7088, %v8406
        %v8546 = vmul.f32 %v7090, %v8406
        %v8547 = vmul.f32 %v7092, %v8407
        %v8548 = vmul.f32 %v7094, %v8407
        %v8549 = vmul.f32 %v7096, %v8407
        %v8550 = vmul.f32 %v7098, %v8407
        %v8551 = vmul.f32 %v7100, %v8407
        %v8552 = vmul.f32 %v7102, %v8407
        %v8553 = vmul.f32 %v7104, %v8407
        %v8554 = vmul.f32 %v7106, %v8407
        %v8555 = vmul.f32 %v7108, %v8407
        %v8556 = vmul.f32 %v7110, %v8407
        %v8557 = vmul.f32 %v7112, %v8407
        %v8558 = vmul.f32 %v7114, %v8407
        %v8559 = vmul.f32 %v7116, %v8407
        %v8560 = vmul.f32 %v7118, %v8407
        %v8561 = vmul.f32 %v7120, %v8407
        %v8562 = vmul.f32 %v7122, %v8407
        %v8563 = vmul.f32 %v7124, %v8407
        %v8564 = vmul.f32 %v7126, %v8407
        %v8565 = vmul.f32 %v7128, %v8407
        %v8566 = vmul.f32 %v7130, %v8407
        %v8567 = vmul.f32 %v7132, %v8407
        %v8568 = vmul.f32 %v7134, %v8407
        %v8569 = vmul.f32 %v7136, %v8407
        %v8570 = vmul.f32 %v7138, %v8407
        %v8571 = vmul.f32 %v7140, %v8407
        %v8572 = vmul.f32 %v7142, %v8407
        %v8573 = vmul.f32 %v7144, %v8407
        %v8574 = vmul.f32 %v7146, %v8407
        %v8575 = vmul.f32 %v7148, %v8407
        %v8576 = vmul.f32 %v7150, %v8407
        %v8577 = vmul.f32 %v7152, %v8407
        %v8578 = vmul.f32 %v7154, %v8407
        %v8579 = vmul.f32 %v7156, %v8408
        %v8580 = vmul.f32 %v7158, %v8408
        %v8581 = vmul.f32 %v7160, %v8408
        %v8582 = vmul.f32 %v7162, %v8408
        %v8583 = vmul.f32 %v7164, %v8408
        %v8584 = vmul.f32 %v7166, %v8408
        %v8585 = vmul.f32 %v7168, %v8408
        %v8586 = vmul.f32 %v7170, %v8408
        %v8587 = vmul.f32 %v7172, %v8408
        %v8588 = vmul.f32 %v7174, %v8408
        %v8589 = vmul.f32 %v7176, %v8408
        %v8590 = vmul.f32 %v7178, %v8408
        %v8591 = vmul.f32 %v7180, %v8408
        %v8592 = vmul.f32 %v7182, %v8408
        %v8593 = vmul.f32 %v7184, %v8408
        %v8594 = vmul.f32 %v7186, %v8408
        %v8595 = vmul.f32 %v7188, %v8408
        %v8596 = vmul.f32 %v7190, %v8408
        %v8597 = vmul.f32 %v7192, %v8408
        %v8598 = vmul.f32 %v7194, %v8408
        %v8599 = vmul.f32 %v7196, %v8408
        %v8600 = vmul.f32 %v7198, %v8408
        %v8601 = vmul.f32 %v7200, %v8408
        %v8602 = vmul.f32 %v7202, %v8408
        %v8603 = vmul.f32 %v7204, %v8408
        %v8604 = vmul.f32 %v7206, %v8408
        %v8605 = vmul.f32 %v7208, %v8408
        %v8606 = vmul.f32 %v7210, %v8408
        %v8607 = vmul.f32 %v7212, %v8408
        %v8608 = vmul.f32 %v7214, %v8408
        %v8609 = vmul.f32 %v7216, %v8408
        %v8610 = vmul.f32 %v7218, %v8408
        %v8611 = vmul.f32 %v7220, %v8409
        %v8612 = vmul.f32 %v7222, %v8409
        %v8613 = vmul.f32 %v7224, %v8409
        %v8614 = vmul.f32 %v7226, %v8409
        %v8615 = vmul.f32 %v7228, %v8409
        %v8616 = vmul.f32 %v7230, %v8409
        %v8617 = vmul.f32 %v7232, %v8409
        %v8618 = vmul.f32 %v7234, %v8409
        %v8619 = vmul.f32 %v7236, %v8409
        %v8620 = vmul.f32 %v7238, %v8409
        %v8621 = vmul.f32 %v7240, %v8409
        %v8622 = vmul.f32 %v7242, %v8409
        %v8623 = vmul.f32 %v7244, %v8409
        %v8624 = vmul.f32 %v7246, %v8409
        %v8625 = vmul.f32 %v7248, %v8409
        %v8626 = vmul.f32 %v7250, %v8409
        %v8627 = vmul.f32 %v7252, %v8409
        %v8628 = vmul.f32 %v7254, %v8409
        %v8629 = vmul.f32 %v7256, %v8409
        %v8630 = vmul.f32 %v7258, %v8409
        %v8631 = vmul.f32 %v7260, %v8409
        %v8632 = vmul.f32 %v7262, %v8409
        %v8633 = vmul.f32 %v7264, %v8409
        %v8634 = vmul.f32 %v7266, %v8409
        %v8635 = vmul.f32 %v7268, %v8409
        %v8636 = vmul.f32 %v7270, %v8409
        %v8637 = vmul.f32 %v7272, %v8409
        %v8638 = vmul.f32 %v7274, %v8409
        %v8639 = vmul.f32 %v7276, %v8409
        %v8640 = vmul.f32 %v7278, %v8409
        %v8641 = vmul.f32 %v7280, %v8409
        %v8642 = vmul.f32 %v7282, %v8409
        %v8643 = vmul.f32 %v7284, %v8410
        %v8644 = vmul.f32 %v7286, %v8410
        %v8645 = vmul.f32 %v7288, %v8410
        %v8646 = vmul.f32 %v7290, %v8410
        %v8647 = vmul.f32 %v7292, %v8410
        %v8648 = vmul.f32 %v7294, %v8410
        %v8649 = vmul.f32 %v7296, %v8410
        %v8650 = vmul.f32 %v7298, %v8410
        %v8651 = vmul.f32 %v7300, %v8410
        %v8652 = vmul.f32 %v7302, %v8410
        %v8653 = vmul.f32 %v7304, %v8410
        %v8654 = vmul.f32 %v7306, %v8410
        %v8655 = vmul.f32 %v7308, %v8410
        %v8656 = vmul.f32 %v7310, %v8410
        %v8657 = vmul.f32 %v7312, %v8410
        %v8658 = vmul.f32 %v7314, %v8410
        %v8659 = vmul.f32 %v7316, %v8410
        %v8660 = vmul.f32 %v7318, %v8410
        %v8661 = vmul.f32 %v7320, %v8410
        %v8662 = vmul.f32 %v7322, %v8410
        %v8663 = vmul.f32 %v7324, %v8410
        %v8664 = vmul.f32 %v7326, %v8410
        %v8665 = vmul.f32 %v7328, %v8410
        %v8666 = vmul.f32 %v7330, %v8410
        %v8667 = vmul.f32 %v7332, %v8410
        %v8668 = vmul.f32 %v7334, %v8410
        %v8669 = vmul.f32 %v7336, %v8410
        %v8670 = vmul.f32 %v7338, %v8410
        %v8671 = vmul.f32 %v7340, %v8410
        %v8672 = vmul.f32 %v7342, %v8410
        %v8673 = vmul.f32 %v7344, %v8410
        %v8674 = vmul.f32 %v7346, %v8410
        %v8675 = vmul.f32 %v7348, %v8411
        %v8676 = vmul.f32 %v7350, %v8411
        %v8677 = vmul.f32 %v7352, %v8411
        %v8678 = vmul.f32 %v7354, %v8411
        %v8679 = vmul.f32 %v7356, %v8411
        %v8680 = vmul.f32 %v7358, %v8411
        %v8681 = vmul.f32 %v7360, %v8411
        %v8682 = vmul.f32 %v7362, %v8411
        %v8683 = vmul.f32 %v7364, %v8411
        %v8684 = vmul.f32 %v7366, %v8411
        %v8685 = vmul.f32 %v7368, %v8411
        %v8686 = vmul.f32 %v7370, %v8411
        %v8687 = vmul.f32 %v7372, %v8411
        %v8688 = vmul.f32 %v7374, %v8411
        %v8689 = vmul.f32 %v7376, %v8411
        %v8690 = vmul.f32 %v7378, %v8411
        %v8691 = vmul.f32 %v7380, %v8411
        %v8692 = vmul.f32 %v7382, %v8411
        %v8693 = vmul.f32 %v7384, %v8411
        %v8694 = vmul.f32 %v7386, %v8411
        %v8695 = vmul.f32 %v7388, %v8411
        %v8696 = vmul.f32 %v7390, %v8411
        %v8697 = vmul.f32 %v7392, %v8411
        %v8698 = vmul.f32 %v7394, %v8411
        %v8699 = vmul.f32 %v7396, %v8411
        %v8700 = vmul.f32 %v7398, %v8411
        %v8701 = vmul.f32 %v7400, %v8411
        %v8702 = vmul.f32 %v7402, %v8411
        %v8703 = vmul.f32 %v7404, %v8411
        %v8704 = vmul.f32 %v7406, %v8411
        %v8705 = vmul.f32 %v7408, %v8411
        %v8706 = vmul.f32 %v7410, %v8411
        %v8707 = vmul.f32 %v7412, %v8412
        %v8708 = vmul.f32 %v7414, %v8412
        %v8709 = vmul.f32 %v7416, %v8412
        %v8710 = vmul.f32 %v7418, %v8412
        %v8711 = vmul.f32 %v7420, %v8412
        %v8712 = vmul.f32 %v7422, %v8412
        %v8713 = vmul.f32 %v7424, %v8412
        %v8714 = vmul.f32 %v7426, %v8412
        %v8715 = vmul.f32 %v7428, %v8412
        %v8716 = vmul.f32 %v7430, %v8412
        %v8717 = vmul.f32 %v7432, %v8412
        %v8718 = vmul.f32 %v7434, %v8412
        %v8719 = vmul.f32 %v7436, %v8412
        %v8720 = vmul.f32 %v7438, %v8412
        %v8721 = vmul.f32 %v7440, %v8412
        %v8722 = vmul.f32 %v7442, %v8412
        %v8723 = vmul.f32 %v7444, %v8412
        %v8724 = vmul.f32 %v7446, %v8412
        %v8725 = vmul.f32 %v7448, %v8412
        %v8726 = vmul.f32 %v7450, %v8412
        %v8727 = vmul.f32 %v7452, %v8412
        %v8728 = vmul.f32 %v7454, %v8412
        %v8729 = vmul.f32 %v7456, %v8412
        %v8730 = vmul.f32 %v7458, %v8412
        %v8731 = vmul.f32 %v7460, %v8412
        %v8732 = vmul.f32 %v7462, %v8412
        %v8733 = vmul.f32 %v7464, %v8412
        %v8734 = vmul.f32 %v7466, %v8412
        %v8735 = vmul.f32 %v7468, %v8412
        %v8736 = vmul.f32 %v7470, %v8412
        %v8737 = vmul.f32 %v7472, %v8412
        %v8738 = vmul.f32 %v7474, %v8412
        %v8739 = vmul.f32 %v7476, %v8413
        %v8740 = vmul.f32 %v7478, %v8413
        %v8741 = vmul.f32 %v7480, %v8413
        %v8742 = vmul.f32 %v7482, %v8413
        %v8743 = vmul.f32 %v7484, %v8413
        %v8744 = vmul.f32 %v7486, %v8413
        %v8745 = vmul.f32 %v7488, %v8413
        %v8746 = vmul.f32 %v7490, %v8413
        %v8747 = vmul.f32 %v7492, %v8413
        %v8748 = vmul.f32 %v7494, %v8413
        %v8749 = vmul.f32 %v7496, %v8413
        %v8750 = vmul.f32 %v7498, %v8413
        %v8751 = vmul.f32 %v7500, %v8413
        %v8752 = vmul.f32 %v7502, %v8413
        %v8753 = vmul.f32 %v7504, %v8413
        %v8754 = vmul.f32 %v7506, %v8413
        %v8755 = vmul.f32 %v7508, %v8413
        %v8756 = vmul.f32 %v7510, %v8413
        %v8757 = vmul.f32 %v7512, %v8413
        %v8758 = vmul.f32 %v7514, %v8413
        %v8759 = vmul.f32 %v7516, %v8413
        %v8760 = vmul.f32 %v7518, %v8413
        %v8761 = vmul.f32 %v7520, %v8413
        %v8762 = vmul.f32 %v7522, %v8413
        %v8763 = vmul.f32 %v7524, %v8413
        %v8764 = vmul.f32 %v7526, %v8413
        %v8765 = vmul.f32 %v7528, %v8413
        %v8766 = vmul.f32 %v7530, %v8413
        %v8767 = vmul.f32 %v7532, %v8413
        %v8768 = vmul.f32 %v7534, %v8413
        %v8769 = vmul.f32 %v7536, %v8413
        %v8770 = vmul.f32 %v7538, %v8413
        %v8771 = vmul.f32 %v7540, %v8414
        %v8772 = vmul.f32 %v7542, %v8414
        %v8773 = vmul.f32 %v7544, %v8414
        %v8774 = vmul.f32 %v7546, %v8414
        %v8775 = vmul.f32 %v7548, %v8414
        %v8776 = vmul.f32 %v7550, %v8414
        %v8777 = vmul.f32 %v7552, %v8414
        %v8778 = vmul.f32 %v7554, %v8414
        %v8779 = vmul.f32 %v7556, %v8414
        %v8780 = vmul.f32 %v7558, %v8414
        %v8781 = vmul.f32 %v7560, %v8414
        %v8782 = vmul.f32 %v7562, %v8414
        %v8783 = vmul.f32 %v7564, %v8414
        %v8784 = vmul.f32 %v7566, %v8414
        %v8785 = vmul.f32 %v7568, %v8414
        %v8786 = vmul.f32 %v7570, %v8414
        %v8787 = vmul.f32 %v7572, %v8414
        %v8788 = vmul.f32 %v7574, %v8414
        %v8789 = vmul.f32 %v7576, %v8414
        %v8790 = vmul.f32 %v7578, %v8414
        %v8791 = vmul.f32 %v7580, %v8414
        %v8792 = vmul.f32 %v7582, %v8414
        %v8793 = vmul.f32 %v7584, %v8414
        %v8794 = vmul.f32 %v7586, %v8414
        %v8795 = vmul.f32 %v7588, %v8414
        %v8796 = vmul.f32 %v7590, %v8414
        %v8797 = vmul.f32 %v7592, %v8414
        %v8798 = vmul.f32 %v7594, %v8414
        %v8799 = vmul.f32 %v7596, %v8414
        %v8800 = vmul.f32 %v7598, %v8414
        %v8801 = vmul.f32 %v7600, %v8414
        %v8802 = vmul.f32 %v7602, %v8414
        %v8803 = vmul.f32 %v7604, %v8415
        %v8804 = vmul.f32 %v7606, %v8415
        %v8805 = vmul.f32 %v7608, %v8415
        %v8806 = vmul.f32 %v7610, %v8415
        %v8807 = vmul.f32 %v7612, %v8415
        %v8808 = vmul.f32 %v7614, %v8415
        %v8809 = vmul.f32 %v7616, %v8415
        %v8810 = vmul.f32 %v7618, %v8415
        %v8811 = vmul.f32 %v7620, %v8415
        %v8812 = vmul.f32 %v7622, %v8415
        %v8813 = vmul.f32 %v7624, %v8415
        %v8814 = vmul.f32 %v7626, %v8415
        %v8815 = vmul.f32 %v7628, %v8415
        %v8816 = vmul.f32 %v7630, %v8415
        %v8817 = vmul.f32 %v7632, %v8415
        %v8818 = vmul.f32 %v7634, %v8415
        %v8819 = vmul.f32 %v7636, %v8415
        %v8820 = vmul.f32 %v7638, %v8415
        %v8821 = vmul.f32 %v7640, %v8415
        %v8822 = vmul.f32 %v7642, %v8415
        %v8823 = vmul.f32 %v7644, %v8415
        %v8824 = vmul.f32 %v7646, %v8415
        %v8825 = vmul.f32 %v7648, %v8415
        %v8826 = vmul.f32 %v7650, %v8415
        %v8827 = vmul.f32 %v7652, %v8415
        %v8828 = vmul.f32 %v7654, %v8415
        %v8829 = vmul.f32 %v7656, %v8415
        %v8830 = vmul.f32 %v7658, %v8415
        %v8831 = vmul.f32 %v7660, %v8415
        %v8832 = vmul.f32 %v7662, %v8415
        %v8833 = vmul.f32 %v7664, %v8415
        %v8834 = vmul.f32 %v7666, %v8415
        %v8835 = vmul.f32 %v7668, %v8416
        %v8836 = vmul.f32 %v7670, %v8416
        %v8837 = vmul.f32 %v7672, %v8416
        %v8838 = vmul.f32 %v7674, %v8416
        %v8839 = vmul.f32 %v7676, %v8416
        %v8840 = vmul.f32 %v7678, %v8416
        %v8841 = vmul.f32 %v7680, %v8416
        %v8842 = vmul.f32 %v7682, %v8416
        %v8843 = vmul.f32 %v7684, %v8416
        %v8844 = vmul.f32 %v7686, %v8416
        %v8845 = vmul.f32 %v7688, %v8416
        %v8846 = vmul.f32 %v7690, %v8416
        %v8847 = vmul.f32 %v7692, %v8416
        %v8848 = vmul.f32 %v7694, %v8416
        %v8849 = vmul.f32 %v7696, %v8416
        %v8850 = vmul.f32 %v7698, %v8416
        %v8851 = vmul.f32 %v7700, %v8416
        %v8852 = vmul.f32 %v7702, %v8416
        %v8853 = vmul.f32 %v7704, %v8416
        %v8854 = vmul.f32 %v7706, %v8416
        %v8855 = vmul.f32 %v7708, %v8416
        %v8856 = vmul.f32 %v7710, %v8416
        %v8857 = vmul.f32 %v7712, %v8416
        %v8858 = vmul.f32 %v7714, %v8416
        %v8859 = vmul.f32 %v7716, %v8416
        %v8860 = vmul.f32 %v7718, %v8416
        %v8861 = vmul.f32 %v7720, %v8416
        %v8862 = vmul.f32 %v7722, %v8416
        %v8863 = vmul.f32 %v7724, %v8416
        %v8864 = vmul.f32 %v7726, %v8416
        %v8865 = vmul.f32 %v7728, %v8416
        %v8866 = vmul.f32 %v7730, %v8416
        %v8867 = vmul.f32 %v7732, %v8417
        %v8868 = vmul.f32 %v7734, %v8417
        %v8869 = vmul.f32 %v7736, %v8417
        %v8870 = vmul.f32 %v7738, %v8417
        %v8871 = vmul.f32 %v7740, %v8417
        %v8872 = vmul.f32 %v7742, %v8417
        %v8873 = vmul.f32 %v7744, %v8417
        %v8874 = vmul.f32 %v7746, %v8417
        %v8875 = vmul.f32 %v7748, %v8417
        %v8876 = vmul.f32 %v7750, %v8417
        %v8877 = vmul.f32 %v7752, %v8417
        %v8878 = vmul.f32 %v7754, %v8417
        %v8879 = vmul.f32 %v7756, %v8417
        %v8880 = vmul.f32 %v7758, %v8417
        %v8881 = vmul.f32 %v7760, %v8417
        %v8882 = vmul.f32 %v7762, %v8417
        %v8883 = vmul.f32 %v7764, %v8417
        %v8884 = vmul.f32 %v7766, %v8417
        %v8885 = vmul.f32 %v7768, %v8417
        %v8886 = vmul.f32 %v7770, %v8417
        %v8887 = vmul.f32 %v7772, %v8417
        %v8888 = vmul.f32 %v7774, %v8417
        %v8889 = vmul.f32 %v7776, %v8417
        %v8890 = vmul.f32 %v7778, %v8417
        %v8891 = vmul.f32 %v7780, %v8417
        %v8892 = vmul.f32 %v7782, %v8417
        %v8893 = vmul.f32 %v7784, %v8417
        %v8894 = vmul.f32 %v7786, %v8417
        %v8895 = vmul.f32 %v7788, %v8417
        %v8896 = vmul.f32 %v7790, %v8417
        %v8897 = vmul.f32 %v7792, %v8417
        %v8898 = vmul.f32 %v7794, %v8417
        %v8899 = vmul.f32 %v7796, %v8418
        %v8900 = vmul.f32 %v7798, %v8418
        %v8901 = vmul.f32 %v7800, %v8418
        %v8902 = vmul.f32 %v7802, %v8418
        %v8903 = vmul.f32 %v7804, %v8418
        %v8904 = vmul.f32 %v7806, %v8418
        %v8905 = vmul.f32 %v7808, %v8418
        %v8906 = vmul.f32 %v7810, %v8418
        %v8907 = vmul.f32 %v7812, %v8418
        %v8908 = vmul.f32 %v7814, %v8418
        %v8909 = vmul.f32 %v7816, %v8418
        %v8910 = vmul.f32 %v7818, %v8418
        %v8911 = vmul.f32 %v7820, %v8418
        %v8912 = vmul.f32 %v7822, %v8418
        %v8913 = vmul.f32 %v7824, %v8418
        %v8914 = vmul.f32 %v7826, %v8418
        %v8915 = vmul.f32 %v7828, %v8418
        %v8916 = vmul.f32 %v7830, %v8418
        %v8917 = vmul.f32 %v7832, %v8418
        %v8918 = vmul.f32 %v7834, %v8418
        %v8919 = vmul.f32 %v7836, %v8418
        %v8920 = vmul.f32 %v7838, %v8418
        %v8921 = vmul.f32 %v7840, %v8418
        %v8922 = vmul.f32 %v7842, %v8418
        %v8923 = vmul.f32 %v7844, %v8418
        %v8924 = vmul.f32 %v7846, %v8418
        %v8925 = vmul.f32 %v7848, %v8418
        %v8926 = vmul.f32 %v7850, %v8418
        %v8927 = vmul.f32 %v7852, %v8418
        %v8928 = vmul.f32 %v7854, %v8418
        %v8929 = vmul.f32 %v7856, %v8418
        %v8930 = vmul.f32 %v7858, %v8418
        %8931 = vst [vmem:[%s338] sm:$0xff] %v8419
        %8932 = vst [vmem:[%s338 + $0x8] sm:$0xff] %v8420
        %8933 = vst [vmem:[%s338 + $0x10] sm:$0xff] %v8421
        %8934 = vst [vmem:[%s338 + $0x18] sm:$0xff] %v8422
        %8935 = vst [vmem:[%s338 + $0x20] sm:$0xff] %v8423
        %8936 = vst [vmem:[%s338 + $0x28] sm:$0xff] %v8424
        %8937 = vst [vmem:[%s338 + $0x30] sm:$0xff] %v8425
        %8938 = vst [vmem:[%s338 + $0x38] sm:$0xff] %v8426
        %8939 = vst [vmem:[%s338 + $0x40] sm:$0xff] %v8427
        %8940 = vst [vmem:[%s338 + $0x48] sm:$0xff] %v8428
        %8941 = vst [vmem:[%s338 + $0x50] sm:$0xff] %v8429
        %8942 = vst [vmem:[%s338 + $0x58] sm:$0xff] %v8430
        %8943 = vst [vmem:[%s338 + $0x60] sm:$0xff] %v8431
        %8944 = vst [vmem:[%s338 + $0x68] sm:$0xff] %v8432
        %8945 = vst [vmem:[%s338 + $0x70] sm:$0xff] %v8433
        %8946 = vst [vmem:[%s338 + $0x78] sm:$0xff] %v8434
        %8947 = vst [vmem:[%s338 + $0x80] sm:$0xff] %v8435
        %8948 = vst [vmem:[%s338 + $0x88] sm:$0xff] %v8436
        %8949 = vst [vmem:[%s338 + $0x90] sm:$0xff] %v8437
        %8950 = vst [vmem:[%s338 + $0x98] sm:$0xff] %v8438
        %8951 = vst [vmem:[%s338 + $0xa0] sm:$0xff] %v8439
        %8952 = vst [vmem:[%s338 + $0xa8] sm:$0xff] %v8440
        %8953 = vst [vmem:[%s338 + $0xb0] sm:$0xff] %v8441
        %8954 = vst [vmem:[%s338 + $0xb8] sm:$0xff] %v8442
        %8955 = vst [vmem:[%s338 + $0xc0] sm:$0xff] %v8443
        %8956 = vst [vmem:[%s338 + $0xc8] sm:$0xff] %v8444
        %8957 = vst [vmem:[%s338 + $0xd0] sm:$0xff] %v8445
        %8958 = vst [vmem:[%s338 + $0xd8] sm:$0xff] %v8446
        %8959 = vst [vmem:[%s338 + $0xe0] sm:$0xff] %v8447
        %8960 = vst [vmem:[%s338 + $0xe8] sm:$0xff] %v8448
        %8961 = vst [vmem:[%s338 + $0xf0] sm:$0xff] %v8449
        %8962 = vst [vmem:[%s338 + $0xf8] sm:$0xff] %v8450
        %8963 = vst [vmem:[%s338 + $0x100] sm:$0xff] %v8451
        %8964 = vst [vmem:[%s338 + $0x108] sm:$0xff] %v8452
        %8965 = vst [vmem:[%s338 + $0x110] sm:$0xff] %v8453
        %8966 = vst [vmem:[%s338 + $0x118] sm:$0xff] %v8454
        %8967 = vst [vmem:[%s338 + $0x120] sm:$0xff] %v8455
        %8968 = vst [vmem:[%s338 + $0x128] sm:$0xff] %v8456
        %8969 = vst [vmem:[%s338 + $0x130] sm:$0xff] %v8457
        %8970 = vst [vmem:[%s338 + $0x138] sm:$0xff] %v8458
        %8971 = vst [vmem:[%s338 + $0x140] sm:$0xff] %v8459
        %8972 = vst [vmem:[%s338 + $0x148] sm:$0xff] %v8460
        %8973 = vst [vmem:[%s338 + $0x150] sm:$0xff] %v8461
        %8974 = vst [vmem:[%s338 + $0x158] sm:$0xff] %v8462
        %8975 = vst [vmem:[%s338 + $0x160] sm:$0xff] %v8463
        %8976 = vst [vmem:[%s338 + $0x168] sm:$0xff] %v8464
        %8977 = vst [vmem:[%s338 + $0x170] sm:$0xff] %v8465
        %8978 = vst [vmem:[%s338 + $0x178] sm:$0xff] %v8466
        %8979 = vst [vmem:[%s338 + $0x180] sm:$0xff] %v8467
        %8980 = vst [vmem:[%s338 + $0x188] sm:$0xff] %v8468
        %8981 = vst [vmem:[%s338 + $0x190] sm:$0xff] %v8469
        %8982 = vst [vmem:[%s338 + $0x198] sm:$0xff] %v8470
        %8983 = vst [vmem:[%s338 + $0x1a0] sm:$0xff] %v8471
        %8984 = vst [vmem:[%s338 + $0x1a8] sm:$0xff] %v8472
        %8985 = vst [vmem:[%s338 + $0x1b0] sm:$0xff] %v8473
        %8986 = vst [vmem:[%s338 + $0x1b8] sm:$0xff] %v8474
        %8987 = vst [vmem:[%s338 + $0x1c0] sm:$0xff] %v8475
        %8988 = vst [vmem:[%s338 + $0x1c8] sm:$0xff] %v8476
        %8989 = vst [vmem:[%s338 + $0x1d0] sm:$0xff] %v8477
        %8990 = vst [vmem:[%s338 + $0x1d8] sm:$0xff] %v8478
        %8991 = vst [vmem:[%s338 + $0x1e0] sm:$0xff] %v8479
        %8992 = vst [vmem:[%s338 + $0x1e8] sm:$0xff] %v8480
        %8993 = vst [vmem:[%s338 + $0x1f0] sm:$0xff] %v8481
        %8994 = vst [vmem:[%s338 + $0x1f8] sm:$0xff] %v8482
        %8995 = vst [vmem:[%s338 + $0x200] sm:$0xff] %v8483
        %8996 = vst [vmem:[%s338 + $0x208] sm:$0xff] %v8484
        %8997 = vst [vmem:[%s338 + $0x210] sm:$0xff] %v8485
        %8998 = vst [vmem:[%s338 + $0x218] sm:$0xff] %v8486
        %8999 = vst [vmem:[%s338 + $0x220] sm:$0xff] %v8487
        %9000 = vst [vmem:[%s338 + $0x228] sm:$0xff] %v8488
        %9001 = vst [vmem:[%s338 + $0x230] sm:$0xff] %v8489
        %9002 = vst [vmem:[%s338 + $0x238] sm:$0xff] %v8490
        %9003 = vst [vmem:[%s338 + $0x240] sm:$0xff] %v8491
        %9004 = vst [vmem:[%s338 + $0x248] sm:$0xff] %v8492
        %9005 = vst [vmem:[%s338 + $0x250] sm:$0xff] %v8493
        %9006 = vst [vmem:[%s338 + $0x258] sm:$0xff] %v8494
        %9007 = vst [vmem:[%s338 + $0x260] sm:$0xff] %v8495
        %9008 = vst [vmem:[%s338 + $0x268] sm:$0xff] %v8496
        %9009 = vst [vmem:[%s338 + $0x270] sm:$0xff] %v8497
        %9010 = vst [vmem:[%s338 + $0x278] sm:$0xff] %v8498
        %9011 = vst [vmem:[%s338 + $0x280] sm:$0xff] %v8499
        %9012 = vst [vmem:[%s338 + $0x288] sm:$0xff] %v8500
        %9013 = vst [vmem:[%s338 + $0x290] sm:$0xff] %v8501
        %9014 = vst [vmem:[%s338 + $0x298] sm:$0xff] %v8502
        %9015 = vst [vmem:[%s338 + $0x2a0] sm:$0xff] %v8503
        %9016 = vst [vmem:[%s338 + $0x2a8] sm:$0xff] %v8504
        %9017 = vst [vmem:[%s338 + $0x2b0] sm:$0xff] %v8505
        %9018 = vst [vmem:[%s338 + $0x2b8] sm:$0xff] %v8506
        %9019 = vst [vmem:[%s338 + $0x2c0] sm:$0xff] %v8507
        %9020 = vst [vmem:[%s338 + $0x2c8] sm:$0xff] %v8508
        %9021 = vst [vmem:[%s338 + $0x2d0] sm:$0xff] %v8509
        %9022 = vst [vmem:[%s338 + $0x2d8] sm:$0xff] %v8510
        %9023 = vst [vmem:[%s338 + $0x2e0] sm:$0xff] %v8511
        %9024 = vst [vmem:[%s338 + $0x2e8] sm:$0xff] %v8512
        %9025 = vst [vmem:[%s338 + $0x2f0] sm:$0xff] %v8513
        %9026 = vst [vmem:[%s338 + $0x2f8] sm:$0xff] %v8514
        %9027 = vst [vmem:[%s338 + $0x300] sm:$0xff] %v8515
        %9028 = vst [vmem:[%s338 + $0x308] sm:$0xff] %v8516
        %9029 = vst [vmem:[%s338 + $0x310] sm:$0xff] %v8517
        %9030 = vst [vmem:[%s338 + $0x318] sm:$0xff] %v8518
        %9031 = vst [vmem:[%s338 + $0x320] sm:$0xff] %v8519
        %9032 = vst [vmem:[%s338 + $0x328] sm:$0xff] %v8520
        %9033 = vst [vmem:[%s338 + $0x330] sm:$0xff] %v8521
        %9034 = vst [vmem:[%s338 + $0x338] sm:$0xff] %v8522
        %9035 = vst [vmem:[%s338 + $0x340] sm:$0xff] %v8523
        %9036 = vst [vmem:[%s338 + $0x348] sm:$0xff] %v8524
        %9037 = vst [vmem:[%s338 + $0x350] sm:$0xff] %v8525
        %9038 = vst [vmem:[%s338 + $0x358] sm:$0xff] %v8526
        %9039 = vst [vmem:[%s338 + $0x360] sm:$0xff] %v8527
        %9040 = vst [vmem:[%s338 + $0x368] sm:$0xff] %v8528
        %9041 = vst [vmem:[%s338 + $0x370] sm:$0xff] %v8529
        %9042 = vst [vmem:[%s338 + $0x378] sm:$0xff] %v8530
        %9043 = vst [vmem:[%s338 + $0x380] sm:$0xff] %v8531
        %9044 = vst [vmem:[%s338 + $0x388] sm:$0xff] %v8532
        %9045 = vst [vmem:[%s338 + $0x390] sm:$0xff] %v8533
        %9046 = vst [vmem:[%s338 + $0x398] sm:$0xff] %v8534
        %9047 = vst [vmem:[%s338 + $0x3a0] sm:$0xff] %v8535
        %9048 = vst [vmem:[%s338 + $0x3a8] sm:$0xff] %v8536
        %9049 = vst [vmem:[%s338 + $0x3b0] sm:$0xff] %v8537
        %9050 = vst [vmem:[%s338 + $0x3b8] sm:$0xff] %v8538
        %9051 = vst [vmem:[%s338 + $0x3c0] sm:$0xff] %v8539
        %9052 = vst [vmem:[%s338 + $0x3c8] sm:$0xff] %v8540
        %9053 = vst [vmem:[%s338 + $0x3d0] sm:$0xff] %v8541
        %9054 = vst [vmem:[%s338 + $0x3d8] sm:$0xff] %v8542
        %9055 = vst [vmem:[%s338 + $0x3e0] sm:$0xff] %v8543
        %9056 = vst [vmem:[%s338 + $0x3e8] sm:$0xff] %v8544
        %9057 = vst [vmem:[%s338 + $0x3f0] sm:$0xff] %v8545
        %9058 = vst [vmem:[%s338 + $0x3f8] sm:$0xff] %v8546
        %9059 = vst [vmem:[%s338 + $0x400] sm:$0xff] %v8547
        %9060 = vst [vmem:[%s338 + $0x408] sm:$0xff] %v8548
        %9061 = vst [vmem:[%s338 + $0x410] sm:$0xff] %v8549
        %9062 = vst [vmem:[%s338 + $0x418] sm:$0xff] %v8550
        %9063 = vst [vmem:[%s338 + $0x420] sm:$0xff] %v8551
        %9064 = vst [vmem:[%s338 + $0x428] sm:$0xff] %v8552
        %9065 = vst [vmem:[%s338 + $0x430] sm:$0xff] %v8553
        %9066 = vst [vmem:[%s338 + $0x438] sm:$0xff] %v8554
        %9067 = vst [vmem:[%s338 + $0x440] sm:$0xff] %v8555
        %9068 = vst [vmem:[%s338 + $0x448] sm:$0xff] %v8556
        %9069 = vst [vmem:[%s338 + $0x450] sm:$0xff] %v8557
        %9070 = vst [vmem:[%s338 + $0x458] sm:$0xff] %v8558
        %9071 = vst [vmem:[%s338 + $0x460] sm:$0xff] %v8559
        %9072 = vst [vmem:[%s338 + $0x468] sm:$0xff] %v8560
        %9073 = vst [vmem:[%s338 + $0x470] sm:$0xff] %v8561
        %9074 = vst [vmem:[%s338 + $0x478] sm:$0xff] %v8562
        %9075 = vst [vmem:[%s338 + $0x480] sm:$0xff] %v8563
        %9076 = vst [vmem:[%s338 + $0x488] sm:$0xff] %v8564
        %9077 = vst [vmem:[%s338 + $0x490] sm:$0xff] %v8565
        %9078 = vst [vmem:[%s338 + $0x498] sm:$0xff] %v8566
        %9079 = vst [vmem:[%s338 + $0x4a0] sm:$0xff] %v8567
        %9080 = vst [vmem:[%s338 + $0x4a8] sm:$0xff] %v8568
        %9081 = vst [vmem:[%s338 + $0x4b0] sm:$0xff] %v8569
        %9082 = vst [vmem:[%s338 + $0x4b8] sm:$0xff] %v8570
        %9083 = vst [vmem:[%s338 + $0x4c0] sm:$0xff] %v8571
        %9084 = vst [vmem:[%s338 + $0x4c8] sm:$0xff] %v8572
        %9085 = vst [vmem:[%s338 + $0x4d0] sm:$0xff] %v8573
        %9086 = vst [vmem:[%s338 + $0x4d8] sm:$0xff] %v8574
        %9087 = vst [vmem:[%s338 + $0x4e0] sm:$0xff] %v8575
        %9088 = vst [vmem:[%s338 + $0x4e8] sm:$0xff] %v8576
        %9089 = vst [vmem:[%s338 + $0x4f0] sm:$0xff] %v8577
        %9090 = vst [vmem:[%s338 + $0x4f8] sm:$0xff] %v8578
        %9091 = vst [vmem:[%s338 + $0x500] sm:$0xff] %v8579
        %9092 = vst [vmem:[%s338 + $0x508] sm:$0xff] %v8580
        %9093 = vst [vmem:[%s338 + $0x510] sm:$0xff] %v8581
        %9094 = vst [vmem:[%s338 + $0x518] sm:$0xff] %v8582
        %9095 = vst [vmem:[%s338 + $0x520] sm:$0xff] %v8583
        %9096 = vst [vmem:[%s338 + $0x528] sm:$0xff] %v8584
        %9097 = vst [vmem:[%s338 + $0x530] sm:$0xff] %v8585
        %9098 = vst [vmem:[%s338 + $0x538] sm:$0xff] %v8586
        %9099 = vst [vmem:[%s338 + $0x540] sm:$0xff] %v8587
        %9100 = vst [vmem:[%s338 + $0x548] sm:$0xff] %v8588
        %9101 = vst [vmem:[%s338 + $0x550] sm:$0xff] %v8589
        %9102 = vst [vmem:[%s338 + $0x558] sm:$0xff] %v8590
        %9103 = vst [vmem:[%s338 + $0x560] sm:$0xff] %v8591
        %9104 = vst [vmem:[%s338 + $0x568] sm:$0xff] %v8592
        %9105 = vst [vmem:[%s338 + $0x570] sm:$0xff] %v8593
        %9106 = vst [vmem:[%s338 + $0x578] sm:$0xff] %v8594
        %9107 = vst [vmem:[%s338 + $0x580] sm:$0xff] %v8595
        %9108 = vst [vmem:[%s338 + $0x588] sm:$0xff] %v8596
        %9109 = vst [vmem:[%s338 + $0x590] sm:$0xff] %v8597
        %9110 = vst [vmem:[%s338 + $0x598] sm:$0xff] %v8598
        %9111 = vst [vmem:[%s338 + $0x5a0] sm:$0xff] %v8599
        %9112 = vst [vmem:[%s338 + $0x5a8] sm:$0xff] %v8600
        %9113 = vst [vmem:[%s338 + $0x5b0] sm:$0xff] %v8601
        %9114 = vst [vmem:[%s338 + $0x5b8] sm:$0xff] %v8602
        %9115 = vst [vmem:[%s338 + $0x5c0] sm:$0xff] %v8603
        %9116 = vst [vmem:[%s338 + $0x5c8] sm:$0xff] %v8604
        %9117 = vst [vmem:[%s338 + $0x5d0] sm:$0xff] %v8605
        %9118 = vst [vmem:[%s338 + $0x5d8] sm:$0xff] %v8606
        %9119 = vst [vmem:[%s338 + $0x5e0] sm:$0xff] %v8607
        %9120 = vst [vmem:[%s338 + $0x5e8] sm:$0xff] %v8608
        %9121 = vst [vmem:[%s338 + $0x5f0] sm:$0xff] %v8609
        %9122 = vst [vmem:[%s338 + $0x5f8] sm:$0xff] %v8610
        %9123 = vst [vmem:[%s338 + $0x600] sm:$0xff] %v8611
        %9124 = vst [vmem:[%s338 + $0x608] sm:$0xff] %v8612
        %9125 = vst [vmem:[%s338 + $0x610] sm:$0xff] %v8613
        %9126 = vst [vmem:[%s338 + $0x618] sm:$0xff] %v8614
        %9127 = vst [vmem:[%s338 + $0x620] sm:$0xff] %v8615
        %9128 = vst [vmem:[%s338 + $0x628] sm:$0xff] %v8616
        %9129 = vst [vmem:[%s338 + $0x630] sm:$0xff] %v8617
        %9130 = vst [vmem:[%s338 + $0x638] sm:$0xff] %v8618
        %9131 = vst [vmem:[%s338 + $0x640] sm:$0xff] %v8619
        %9132 = vst [vmem:[%s338 + $0x648] sm:$0xff] %v8620
        %9133 = vst [vmem:[%s338 + $0x650] sm:$0xff] %v8621
        %9134 = vst [vmem:[%s338 + $0x658] sm:$0xff] %v8622
        %9135 = vst [vmem:[%s338 + $0x660] sm:$0xff] %v8623
        %9136 = vst [vmem:[%s338 + $0x668] sm:$0xff] %v8624
        %9137 = vst [vmem:[%s338 + $0x670] sm:$0xff] %v8625
        %9138 = vst [vmem:[%s338 + $0x678] sm:$0xff] %v8626
        %9139 = vst [vmem:[%s338 + $0x680] sm:$0xff] %v8627
        %9140 = vst [vmem:[%s338 + $0x688] sm:$0xff] %v8628
        %9141 = vst [vmem:[%s338 + $0x690] sm:$0xff] %v8629
        %9142 = vst [vmem:[%s338 + $0x698] sm:$0xff] %v8630
        %9143 = vst [vmem:[%s338 + $0x6a0] sm:$0xff] %v8631
        %9144 = vst [vmem:[%s338 + $0x6a8] sm:$0xff] %v8632
        %9145 = vst [vmem:[%s338 + $0x6b0] sm:$0xff] %v8633
        %9146 = vst [vmem:[%s338 + $0x6b8] sm:$0xff] %v8634
        %9147 = vst [vmem:[%s338 + $0x6c0] sm:$0xff] %v8635
        %9148 = vst [vmem:[%s338 + $0x6c8] sm:$0xff] %v8636
        %9149 = vst [vmem:[%s338 + $0x6d0] sm:$0xff] %v8637
        %9150 = vst [vmem:[%s338 + $0x6d8] sm:$0xff] %v8638
        %9151 = vst [vmem:[%s338 + $0x6e0] sm:$0xff] %v8639
        %9152 = vst [vmem:[%s338 + $0x6e8] sm:$0xff] %v8640
        %9153 = vst [vmem:[%s338 + $0x6f0] sm:$0xff] %v8641
        %9154 = vst [vmem:[%s338 + $0x6f8] sm:$0xff] %v8642
        %9155 = vst [vmem:[%s338 + $0x700] sm:$0xff] %v8643
        %9156 = vst [vmem:[%s338 + $0x708] sm:$0xff] %v8644
        %9157 = vst [vmem:[%s338 + $0x710] sm:$0xff] %v8645
        %9158 = vst [vmem:[%s338 + $0x718] sm:$0xff] %v8646
        %9159 = vst [vmem:[%s338 + $0x720] sm:$0xff] %v8647
        %9160 = vst [vmem:[%s338 + $0x728] sm:$0xff] %v8648
        %9161 = vst [vmem:[%s338 + $0x730] sm:$0xff] %v8649
        %9162 = vst [vmem:[%s338 + $0x738] sm:$0xff] %v8650
        %9163 = vst [vmem:[%s338 + $0x740] sm:$0xff] %v8651
        %9164 = vst [vmem:[%s338 + $0x748] sm:$0xff] %v8652
        %9165 = vst [vmem:[%s338 + $0x750] sm:$0xff] %v8653
        %9166 = vst [vmem:[%s338 + $0x758] sm:$0xff] %v8654
        %9167 = vst [vmem:[%s338 + $0x760] sm:$0xff] %v8655
        %9168 = vst [vmem:[%s338 + $0x768] sm:$0xff] %v8656
        %9169 = vst [vmem:[%s338 + $0x770] sm:$0xff] %v8657
        %9170 = vst [vmem:[%s338 + $0x778] sm:$0xff] %v8658
        %9171 = vst [vmem:[%s338 + $0x780] sm:$0xff] %v8659
        %9172 = vst [vmem:[%s338 + $0x788] sm:$0xff] %v8660
        %9173 = vst [vmem:[%s338 + $0x790] sm:$0xff] %v8661
        %9174 = vst [vmem:[%s338 + $0x798] sm:$0xff] %v8662
        %9175 = vst [vmem:[%s338 + $0x7a0] sm:$0xff] %v8663
        %9176 = vst [vmem:[%s338 + $0x7a8] sm:$0xff] %v8664
        %9177 = vst [vmem:[%s338 + $0x7b0] sm:$0xff] %v8665
        %9178 = vst [vmem:[%s338 + $0x7b8] sm:$0xff] %v8666
        %9179 = vst [vmem:[%s338 + $0x7c0] sm:$0xff] %v8667
        %9180 = vst [vmem:[%s338 + $0x7c8] sm:$0xff] %v8668
        %9181 = vst [vmem:[%s338 + $0x7d0] sm:$0xff] %v8669
        %9182 = vst [vmem:[%s338 + $0x7d8] sm:$0xff] %v8670
        %9183 = vst [vmem:[%s338 + $0x7e0] sm:$0xff] %v8671
        %9184 = vst [vmem:[%s338 + $0x7e8] sm:$0xff] %v8672
        %9185 = vst [vmem:[%s338 + $0x7f0] sm:$0xff] %v8673
        %9186 = vst [vmem:[%s338 + $0x7f8] sm:$0xff] %v8674
        %9187 = vst [vmem:[%s338 + $0x800] sm:$0xff] %v8675
        %9188 = vst [vmem:[%s338 + $0x808] sm:$0xff] %v8676
        %9189 = vst [vmem:[%s338 + $0x810] sm:$0xff] %v8677
        %9190 = vst [vmem:[%s338 + $0x818] sm:$0xff] %v8678
        %9191 = vst [vmem:[%s338 + $0x820] sm:$0xff] %v8679
        %9192 = vst [vmem:[%s338 + $0x828] sm:$0xff] %v8680
        %9193 = vst [vmem:[%s338 + $0x830] sm:$0xff] %v8681
        %9194 = vst [vmem:[%s338 + $0x838] sm:$0xff] %v8682
        %9195 = vst [vmem:[%s338 + $0x840] sm:$0xff] %v8683
        %9196 = vst [vmem:[%s338 + $0x848] sm:$0xff] %v8684
        %9197 = vst [vmem:[%s338 + $0x850] sm:$0xff] %v8685
        %9198 = vst [vmem:[%s338 + $0x858] sm:$0xff] %v8686
        %9199 = vst [vmem:[%s338 + $0x860] sm:$0xff] %v8687
        %9200 = vst [vmem:[%s338 + $0x868] sm:$0xff] %v8688
        %9201 = vst [vmem:[%s338 + $0x870] sm:$0xff] %v8689
        %9202 = vst [vmem:[%s338 + $0x878] sm:$0xff] %v8690
        %9203 = vst [vmem:[%s338 + $0x880] sm:$0xff] %v8691
        %9204 = vst [vmem:[%s338 + $0x888] sm:$0xff] %v8692
        %9205 = vst [vmem:[%s338 + $0x890] sm:$0xff] %v8693
        %9206 = vst [vmem:[%s338 + $0x898] sm:$0xff] %v8694
        %9207 = vst [vmem:[%s338 + $0x8a0] sm:$0xff] %v8695
        %9208 = vst [vmem:[%s338 + $0x8a8] sm:$0xff] %v8696
        %9209 = vst [vmem:[%s338 + $0x8b0] sm:$0xff] %v8697
        %9210 = vst [vmem:[%s338 + $0x8b8] sm:$0xff] %v8698
        %9211 = vst [vmem:[%s338 + $0x8c0] sm:$0xff] %v8699
        %9212 = vst [vmem:[%s338 + $0x8c8] sm:$0xff] %v8700
        %9213 = vst [vmem:[%s338 + $0x8d0] sm:$0xff] %v8701
        %9214 = vst [vmem:[%s338 + $0x8d8] sm:$0xff] %v8702
        %9215 = vst [vmem:[%s338 + $0x8e0] sm:$0xff] %v8703
        %9216 = vst [vmem:[%s338 + $0x8e8] sm:$0xff] %v8704
        %9217 = vst [vmem:[%s338 + $0x8f0] sm:$0xff] %v8705
        %9218 = vst [vmem:[%s338 + $0x8f8] sm:$0xff] %v8706
        %9219 = vst [vmem:[%s338 + $0x900] sm:$0xff] %v8707
        %9220 = vst [vmem:[%s338 + $0x908] sm:$0xff] %v8708
        %9221 = vst [vmem:[%s338 + $0x910] sm:$0xff] %v8709
        %9222 = vst [vmem:[%s338 + $0x918] sm:$0xff] %v8710
        %9223 = vst [vmem:[%s338 + $0x920] sm:$0xff] %v8711
        %9224 = vst [vmem:[%s338 + $0x928] sm:$0xff] %v8712
        %9225 = vst [vmem:[%s338 + $0x930] sm:$0xff] %v8713
        %9226 = vst [vmem:[%s338 + $0x938] sm:$0xff] %v8714
        %9227 = vst [vmem:[%s338 + $0x940] sm:$0xff] %v8715
        %9228 = vst [vmem:[%s338 + $0x948] sm:$0xff] %v8716
        %9229 = vst [vmem:[%s338 + $0x950] sm:$0xff] %v8717
        %9230 = vst [vmem:[%s338 + $0x958] sm:$0xff] %v8718
        %9231 = vst [vmem:[%s338 + $0x960] sm:$0xff] %v8719
        %9232 = vst [vmem:[%s338 + $0x968] sm:$0xff] %v8720
        %9233 = vst [vmem:[%s338 + $0x970] sm:$0xff] %v8721
        %9234 = vst [vmem:[%s338 + $0x978] sm:$0xff] %v8722
        %9235 = vst [vmem:[%s338 + $0x980] sm:$0xff] %v8723
        %9236 = vst [vmem:[%s338 + $0x988] sm:$0xff] %v8724
        %9237 = vst [vmem:[%s338 + $0x990] sm:$0xff] %v8725
        %9238 = vst [vmem:[%s338 + $0x998] sm:$0xff] %v8726
        %9239 = vst [vmem:[%s338 + $0x9a0] sm:$0xff] %v8727
        %9240 = vst [vmem:[%s338 + $0x9a8] sm:$0xff] %v8728
        %9241 = vst [vmem:[%s338 + $0x9b0] sm:$0xff] %v8729
        %9242 = vst [vmem:[%s338 + $0x9b8] sm:$0xff] %v8730
        %9243 = vst [vmem:[%s338 + $0x9c0] sm:$0xff] %v8731
        %9244 = vst [vmem:[%s338 + $0x9c8] sm:$0xff] %v8732
        %9245 = vst [vmem:[%s338 + $0x9d0] sm:$0xff] %v8733
        %9246 = vst [vmem:[%s338 + $0x9d8] sm:$0xff] %v8734
        %9247 = vst [vmem:[%s338 + $0x9e0] sm:$0xff] %v8735
        %9248 = vst [vmem:[%s338 + $0x9e8] sm:$0xff] %v8736
        %9249 = vst [vmem:[%s338 + $0x9f0] sm:$0xff] %v8737
        %9250 = vst [vmem:[%s338 + $0x9f8] sm:$0xff] %v8738
        %9251 = vst [vmem:[%s338 + $0xa00] sm:$0xff] %v8739
        %9252 = vst [vmem:[%s338 + $0xa08] sm:$0xff] %v8740
        %9253 = vst [vmem:[%s338 + $0xa10] sm:$0xff] %v8741
        %9254 = vst [vmem:[%s338 + $0xa18] sm:$0xff] %v8742
        %9255 = vst [vmem:[%s338 + $0xa20] sm:$0xff] %v8743
        %9256 = vst [vmem:[%s338 + $0xa28] sm:$0xff] %v8744
        %9257 = vst [vmem:[%s338 + $0xa30] sm:$0xff] %v8745
        %9258 = vst [vmem:[%s338 + $0xa38] sm:$0xff] %v8746
        %9259 = vst [vmem:[%s338 + $0xa40] sm:$0xff] %v8747
        %9260 = vst [vmem:[%s338 + $0xa48] sm:$0xff] %v8748
        %9261 = vst [vmem:[%s338 + $0xa50] sm:$0xff] %v8749
        %9262 = vst [vmem:[%s338 + $0xa58] sm:$0xff] %v8750
        %9263 = vst [vmem:[%s338 + $0xa60] sm:$0xff] %v8751
        %9264 = vst [vmem:[%s338 + $0xa68] sm:$0xff] %v8752
        %9265 = vst [vmem:[%s338 + $0xa70] sm:$0xff] %v8753
        %9266 = vst [vmem:[%s338 + $0xa78] sm:$0xff] %v8754
        %9267 = vst [vmem:[%s338 + $0xa80] sm:$0xff] %v8755
        %9268 = vst [vmem:[%s338 + $0xa88] sm:$0xff] %v8756
        %9269 = vst [vmem:[%s338 + $0xa90] sm:$0xff] %v8757
        %9270 = vst [vmem:[%s338 + $0xa98] sm:$0xff] %v8758
        %9271 = vst [vmem:[%s338 + $0xaa0] sm:$0xff] %v8759
        %9272 = vst [vmem:[%s338 + $0xaa8] sm:$0xff] %v8760
        %9273 = vst [vmem:[%s338 + $0xab0] sm:$0xff] %v8761
        %9274 = vst [vmem:[%s338 + $0xab8] sm:$0xff] %v8762
        %9275 = vst [vmem:[%s338 + $0xac0] sm:$0xff] %v8763
        %9276 = vst [vmem:[%s338 + $0xac8] sm:$0xff] %v8764
        %9277 = vst [vmem:[%s338 + $0xad0] sm:$0xff] %v8765
        %9278 = vst [vmem:[%s338 + $0xad8] sm:$0xff] %v8766
        %9279 = vst [vmem:[%s338 + $0xae0] sm:$0xff] %v8767
        %9280 = vst [vmem:[%s338 + $0xae8] sm:$0xff] %v8768
        %9281 = vst [vmem:[%s338 + $0xaf0] sm:$0xff] %v8769
        %9282 = vst [vmem:[%s338 + $0xaf8] sm:$0xff] %v8770
        %9283 = vst [vmem:[%s338 + $0xb00] sm:$0xff] %v8771
        %9284 = vst [vmem:[%s338 + $0xb08] sm:$0xff] %v8772
        %9285 = vst [vmem:[%s338 + $0xb10] sm:$0xff] %v8773
        %9286 = vst [vmem:[%s338 + $0xb18] sm:$0xff] %v8774
        %9287 = vst [vmem:[%s338 + $0xb20] sm:$0xff] %v8775
        %9288 = vst [vmem:[%s338 + $0xb28] sm:$0xff] %v8776
        %9289 = vst [vmem:[%s338 + $0xb30] sm:$0xff] %v8777
        %9290 = vst [vmem:[%s338 + $0xb38] sm:$0xff] %v8778
        %9291 = vst [vmem:[%s338 + $0xb40] sm:$0xff] %v8779
        %9292 = vst [vmem:[%s338 + $0xb48] sm:$0xff] %v8780
        %9293 = vst [vmem:[%s338 + $0xb50] sm:$0xff] %v8781
        %9294 = vst [vmem:[%s338 + $0xb58] sm:$0xff] %v8782
        %9295 = vst [vmem:[%s338 + $0xb60] sm:$0xff] %v8783
        %9296 = vst [vmem:[%s338 + $0xb68] sm:$0xff] %v8784
        %9297 = vst [vmem:[%s338 + $0xb70] sm:$0xff] %v8785
        %9298 = vst [vmem:[%s338 + $0xb78] sm:$0xff] %v8786
        %9299 = vst [vmem:[%s338 + $0xb80] sm:$0xff] %v8787
        %9300 = vst [vmem:[%s338 + $0xb88] sm:$0xff] %v8788
        %9301 = vst [vmem:[%s338 + $0xb90] sm:$0xff] %v8789
        %9302 = vst [vmem:[%s338 + $0xb98] sm:$0xff] %v8790
        %9303 = vst [vmem:[%s338 + $0xba0] sm:$0xff] %v8791
        %9304 = vst [vmem:[%s338 + $0xba8] sm:$0xff] %v8792
        %9305 = vst [vmem:[%s338 + $0xbb0] sm:$0xff] %v8793
        %9306 = vst [vmem:[%s338 + $0xbb8] sm:$0xff] %v8794
        %9307 = vst [vmem:[%s338 + $0xbc0] sm:$0xff] %v8795
        %9308 = vst [vmem:[%s338 + $0xbc8] sm:$0xff] %v8796
        %9309 = vst [vmem:[%s338 + $0xbd0] sm:$0xff] %v8797
        %9310 = vst [vmem:[%s338 + $0xbd8] sm:$0xff] %v8798
        %9311 = vst [vmem:[%s338 + $0xbe0] sm:$0xff] %v8799
        %9312 = vst [vmem:[%s338 + $0xbe8] sm:$0xff] %v8800
        %9313 = vst [vmem:[%s338 + $0xbf0] sm:$0xff] %v8801
        %9314 = vst [vmem:[%s338 + $0xbf8] sm:$0xff] %v8802
        %9315 = vst [vmem:[%s338 + $0xc00] sm:$0xff] %v8803
        %9316 = vst [vmem:[%s338 + $0xc08] sm:$0xff] %v8804
        %9317 = vst [vmem:[%s338 + $0xc10] sm:$0xff] %v8805
        %9318 = vst [vmem:[%s338 + $0xc18] sm:$0xff] %v8806
        %9319 = vst [vmem:[%s338 + $0xc20] sm:$0xff] %v8807
        %9320 = vst [vmem:[%s338 + $0xc28] sm:$0xff] %v8808
        %9321 = vst [vmem:[%s338 + $0xc30] sm:$0xff] %v8809
        %9322 = vst [vmem:[%s338 + $0xc38] sm:$0xff] %v8810
        %9323 = vst [vmem:[%s338 + $0xc40] sm:$0xff] %v8811
        %9324 = vst [vmem:[%s338 + $0xc48] sm:$0xff] %v8812
        %9325 = vst [vmem:[%s338 + $0xc50] sm:$0xff] %v8813
        %9326 = vst [vmem:[%s338 + $0xc58] sm:$0xff] %v8814
        %9327 = vst [vmem:[%s338 + $0xc60] sm:$0xff] %v8815
        %9328 = vst [vmem:[%s338 + $0xc68] sm:$0xff] %v8816
        %9329 = vst [vmem:[%s338 + $0xc70] sm:$0xff] %v8817
        %9330 = vst [vmem:[%s338 + $0xc78] sm:$0xff] %v8818
        %9331 = vst [vmem:[%s338 + $0xc80] sm:$0xff] %v8819
        %9332 = vst [vmem:[%s338 + $0xc88] sm:$0xff] %v8820
        %9333 = vst [vmem:[%s338 + $0xc90] sm:$0xff] %v8821
        %9334 = vst [vmem:[%s338 + $0xc98] sm:$0xff] %v8822
        %9335 = vst [vmem:[%s338 + $0xca0] sm:$0xff] %v8823
        %9336 = vst [vmem:[%s338 + $0xca8] sm:$0xff] %v8824
        %9337 = vst [vmem:[%s338 + $0xcb0] sm:$0xff] %v8825
        %9338 = vst [vmem:[%s338 + $0xcb8] sm:$0xff] %v8826
        %9339 = vst [vmem:[%s338 + $0xcc0] sm:$0xff] %v8827
        %9340 = vst [vmem:[%s338 + $0xcc8] sm:$0xff] %v8828
        %9341 = vst [vmem:[%s338 + $0xcd0] sm:$0xff] %v8829
        %9342 = vst [vmem:[%s338 + $0xcd8] sm:$0xff] %v8830
        %9343 = vst [vmem:[%s338 + $0xce0] sm:$0xff] %v8831
        %9344 = vst [vmem:[%s338 + $0xce8] sm:$0xff] %v8832
        %9345 = vst [vmem:[%s338 + $0xcf0] sm:$0xff] %v8833
        %9346 = vst [vmem:[%s338 + $0xcf8] sm:$0xff] %v8834
        %9347 = vst [vmem:[%s338 + $0xd00] sm:$0xff] %v8835
        %9348 = vst [vmem:[%s338 + $0xd08] sm:$0xff] %v8836
        %9349 = vst [vmem:[%s338 + $0xd10] sm:$0xff] %v8837
        %9350 = vst [vmem:[%s338 + $0xd18] sm:$0xff] %v8838
        %9351 = vst [vmem:[%s338 + $0xd20] sm:$0xff] %v8839
        %9352 = vst [vmem:[%s338 + $0xd28] sm:$0xff] %v8840
        %9353 = vst [vmem:[%s338 + $0xd30] sm:$0xff] %v8841
        %9354 = vst [vmem:[%s338 + $0xd38] sm:$0xff] %v8842
        %9355 = vst [vmem:[%s338 + $0xd40] sm:$0xff] %v8843
        %9356 = vst [vmem:[%s338 + $0xd48] sm:$0xff] %v8844
        %9357 = vst [vmem:[%s338 + $0xd50] sm:$0xff] %v8845
        %9358 = vst [vmem:[%s338 + $0xd58] sm:$0xff] %v8846
        %9359 = vst [vmem:[%s338 + $0xd60] sm:$0xff] %v8847
        %9360 = vst [vmem:[%s338 + $0xd68] sm:$0xff] %v8848
        %9361 = vst [vmem:[%s338 + $0xd70] sm:$0xff] %v8849
        %9362 = vst [vmem:[%s338 + $0xd78] sm:$0xff] %v8850
        %9363 = vst [vmem:[%s338 + $0xd80] sm:$0xff] %v8851
        %9364 = vst [vmem:[%s338 + $0xd88] sm:$0xff] %v8852
        %9365 = vst [vmem:[%s338 + $0xd90] sm:$0xff] %v8853
        %9366 = vst [vmem:[%s338 + $0xd98] sm:$0xff] %v8854
        %9367 = vst [vmem:[%s338 + $0xda0] sm:$0xff] %v8855
        %9368 = vst [vmem:[%s338 + $0xda8] sm:$0xff] %v8856
        %9369 = vst [vmem:[%s338 + $0xdb0] sm:$0xff] %v8857
        %9370 = vst [vmem:[%s338 + $0xdb8] sm:$0xff] %v8858
        %9371 = vst [vmem:[%s338 + $0xdc0] sm:$0xff] %v8859
        %9372 = vst [vmem:[%s338 + $0xdc8] sm:$0xff] %v8860
        %9373 = vst [vmem:[%s338 + $0xdd0] sm:$0xff] %v8861
        %9374 = vst [vmem:[%s338 + $0xdd8] sm:$0xff] %v8862
        %9375 = vst [vmem:[%s338 + $0xde0] sm:$0xff] %v8863
        %9376 = vst [vmem:[%s338 + $0xde8] sm:$0xff] %v8864
        %9377 = vst [vmem:[%s338 + $0xdf0] sm:$0xff] %v8865
        %9378 = vst [vmem:[%s338 + $0xdf8] sm:$0xff] %v8866
        %9379 = vst [vmem:[%s338 + $0xe00] sm:$0xff] %v8867
        %9380 = vst [vmem:[%s338 + $0xe08] sm:$0xff] %v8868
        %9381 = vst [vmem:[%s338 + $0xe10] sm:$0xff] %v8869
        %9382 = vst [vmem:[%s338 + $0xe18] sm:$0xff] %v8870
        %9383 = vst [vmem:[%s338 + $0xe20] sm:$0xff] %v8871
        %9384 = vst [vmem:[%s338 + $0xe28] sm:$0xff] %v8872
        %9385 = vst [vmem:[%s338 + $0xe30] sm:$0xff] %v8873
        %9386 = vst [vmem:[%s338 + $0xe38] sm:$0xff] %v8874
        %9387 = vst [vmem:[%s338 + $0xe40] sm:$0xff] %v8875
        %9388 = vst [vmem:[%s338 + $0xe48] sm:$0xff] %v8876
        %9389 = vst [vmem:[%s338 + $0xe50] sm:$0xff] %v8877
        %9390 = vst [vmem:[%s338 + $0xe58] sm:$0xff] %v8878
        %9391 = vst [vmem:[%s338 + $0xe60] sm:$0xff] %v8879
        %9392 = vst [vmem:[%s338 + $0xe68] sm:$0xff] %v8880
        %9393 = vst [vmem:[%s338 + $0xe70] sm:$0xff] %v8881
        %9394 = vst [vmem:[%s338 + $0xe78] sm:$0xff] %v8882
        %9395 = vst [vmem:[%s338 + $0xe80] sm:$0xff] %v8883
        %9396 = vst [vmem:[%s338 + $0xe88] sm:$0xff] %v8884
        %9397 = vst [vmem:[%s338 + $0xe90] sm:$0xff] %v8885
        %9398 = vst [vmem:[%s338 + $0xe98] sm:$0xff] %v8886
        %9399 = vst [vmem:[%s338 + $0xea0] sm:$0xff] %v8887
        %9400 = vst [vmem:[%s338 + $0xea8] sm:$0xff] %v8888
        %9401 = vst [vmem:[%s338 + $0xeb0] sm:$0xff] %v8889
        %9402 = vst [vmem:[%s338 + $0xeb8] sm:$0xff] %v8890
        %9403 = vst [vmem:[%s338 + $0xec0] sm:$0xff] %v8891
        %9404 = vst [vmem:[%s338 + $0xec8] sm:$0xff] %v8892
        %9405 = vst [vmem:[%s338 + $0xed0] sm:$0xff] %v8893
        %9406 = vst [vmem:[%s338 + $0xed8] sm:$0xff] %v8894
        %9407 = vst [vmem:[%s338 + $0xee0] sm:$0xff] %v8895
        %9408 = vst [vmem:[%s338 + $0xee8] sm:$0xff] %v8896
        %9409 = vst [vmem:[%s338 + $0xef0] sm:$0xff] %v8897
        %9410 = vst [vmem:[%s338 + $0xef8] sm:$0xff] %v8898
        %9411 = vst [vmem:[%s338 + $0xf00] sm:$0xff] %v8899
        %9412 = vst [vmem:[%s338 + $0xf08] sm:$0xff] %v8900
        %9413 = vst [vmem:[%s338 + $0xf10] sm:$0xff] %v8901
        %9414 = vst [vmem:[%s338 + $0xf18] sm:$0xff] %v8902
        %9415 = vst [vmem:[%s338 + $0xf20] sm:$0xff] %v8903
        %9416 = vst [vmem:[%s338 + $0xf28] sm:$0xff] %v8904
        %9417 = vst [vmem:[%s338 + $0xf30] sm:$0xff] %v8905
        %9418 = vst [vmem:[%s338 + $0xf38] sm:$0xff] %v8906
        %9419 = vst [vmem:[%s338 + $0xf40] sm:$0xff] %v8907
        %9420 = vst [vmem:[%s338 + $0xf48] sm:$0xff] %v8908
        %9421 = vst [vmem:[%s338 + $0xf50] sm:$0xff] %v8909
        %9422 = vst [vmem:[%s338 + $0xf58] sm:$0xff] %v8910
        %9423 = vst [vmem:[%s338 + $0xf60] sm:$0xff] %v8911
        %9424 = vst [vmem:[%s338 + $0xf68] sm:$0xff] %v8912
        %9425 = vst [vmem:[%s338 + $0xf70] sm:$0xff] %v8913
        %9426 = vst [vmem:[%s338 + $0xf78] sm:$0xff] %v8914
        %9427 = vst [vmem:[%s338 + $0xf80] sm:$0xff] %v8915
        %9428 = vst [vmem:[%s338 + $0xf88] sm:$0xff] %v8916
        %9429 = vst [vmem:[%s338 + $0xf90] sm:$0xff] %v8917
        %9430 = vst [vmem:[%s338 + $0xf98] sm:$0xff] %v8918
        %9431 = vst [vmem:[%s338 + $0xfa0] sm:$0xff] %v8919
        %9432 = vst [vmem:[%s338 + $0xfa8] sm:$0xff] %v8920
        %9433 = vst [vmem:[%s338 + $0xfb0] sm:$0xff] %v8921
        %9434 = vst [vmem:[%s338 + $0xfb8] sm:$0xff] %v8922
        %9435 = vst [vmem:[%s338 + $0xfc0] sm:$0xff] %v8923
        %9436 = vst [vmem:[%s338 + $0xfc8] sm:$0xff] %v8924
        %9437 = vst [vmem:[%s338 + $0xfd0] sm:$0xff] %v8925
        %9438 = vst [vmem:[%s338 + $0xfd8] sm:$0xff] %v8926
        %9439 = vst [vmem:[%s338 + $0xfe0] sm:$0xff] %v8927
        %9440 = vst [vmem:[%s338 + $0xfe8] sm:$0xff] %v8928
        %9441 = vst [vmem:[%s338 + $0xff0] sm:$0xff] %v8929
        %9442 = vst [vmem:[%s338 + $0xff8] sm:$0xff] %v8930
        %s9443 = sand.u32 %s165, 1
        %s9444 = scalar_lea.sflag [#allocation4], %s9443
        %s9445 = sand.u32 %s165, 1
        %s9446 = smul.addr %s9445, 4096
        %s9447 = scalar_lea.vmem [#allocation13], %s9446
        // Predicated region
        $region69: #{tpu_custom_call.1} parent=43 // pred_check
          %p9448 = pneg %p175
        $region70: #{tpu_custom_call.1} parent=43 // pred_check_branch
          %9450 = sbr.rel (%p9448) target = $region72
        $region71: #{tpu_custom_call.1} parent=43 // pred_region
          %s9451 = smul.u32 16, %s26
          %s9453 = ssub.s32 65536, 65536
          %9454 = vsyncadd %s9444, %s9453
          %s9455 = smul.addr %s9451, 32
          %s9456 = smul.addr %s9455, 128
          %s9457 = scalar_lea.hbm %s6, %s9456
          %s9458 = sshll.u32 %s9447, 4
          %s9459 = int_to_ptr.vmem [resolvable:$true] %s9458
          %9464 = dma.vmem_to_hbm [thread:$0]  %s9459, 65536, %s9457, %s9444, 4096, 4096, 256
        $region72: #{tpu_custom_call.1} parent=43 // pred_fallthru
          _
      $region44: #{tpu_custom_call.1} parent=5 // pred_fallthru
        _
      %p9465 = scmp.le.s32.totalorder 2, %s21
      // Predicated region
      $region73: #{tpu_custom_call.1} parent=5 // pred_check
        %p9466 = pneg %p9465
      $region74: #{tpu_custom_call.1} parent=5 // pred_check_branch
        %9468 = sbr.rel (%p9466) target = $region76
      $region75: #{tpu_custom_call.1} parent=5 // pred_region
        %s9469 = ssub.s32 %s21, 2
        // Predicated region
        $region77: #{tpu_custom_call.1} parent=75 // pred_check
          %p9470 = pneg %p181
        $region78: #{tpu_custom_call.1} parent=75 // pred_check_branch
          %9472 = sbr.rel (%p9470) target = $region80
        $region79: #{tpu_custom_call.1} parent=75 // pred_region
          %s9473 = sand.u32 %s166, 1
          %s9474 = scalar_lea.sflag [#allocation4], %s9473
          %s9475 = sand.u32 %s166, 1
          %s9476 = smul.addr %s9475, 4096
          %s9477 = scalar_lea.vmem [#allocation13], %s9476
          %9478 = dma.done %s9474, 65536
        $region80: #{tpu_custom_call.1} parent=75 // pred_fallthru
          _
      $region76: #{tpu_custom_call.1} parent=5 // pred_fallthru
        _
    $region6: #{tpu_custom_call.1} parent=1 // loop_footer
      %s25 = sadd.s32 1, %s21
    $region7: #{tpu_custom_call.1} parent=1 // loop_footer_branch
      %20 = sbr.rel target = $region3
    $region8: #{tpu_custom_call.1} parent=1 // loop_exit
      _
    %9479 = vsyncpa [#allocation3], 1
    %s9480 = scalar_lea.sflag [#allocation3], 1
    %9481 = vsyncpa %s9480, 1
    %9482 = vsyncpa [#allocation6], 1
    %9483 = vsyncpa [#allocation9], 1
    %9484 = vsyncpa [#allocation12], 1
    %9485 = vsyncpa [#allocation4], 1
    %s9486 = scalar_lea.sflag [#allocation4], 1
    %9487 = vsyncpa %s9486, 1

</llo_original>
